<compile_context>
chip_gen: v7x
topology: tpu7x:2x2x1
jax: 0.10.0
libtpu: 0.0.40
codegen_flags: <defaults>
</compile_context>

<pallas_src>
import functools

import jax
import jax.numpy as jnp
from jax import lax
from jax.experimental import pallas as pl
from jax.experimental.pallas import tpu as pltpu

_EPS = 1e-5
_LANE = 128

# 3x3 taps consumed in pairs -> K = 2*C per dot (fills the 256-deep v6e/v7x MXU).
_TAP_PAIRS = ((0, 1), (2, 3), (4, 5), (6, 7), (8,))


def _round_up(n, m):
    return (n + m - 1) // m * m


# --------------------------------------------------------------------------
# Shared in-kernel helpers
# --------------------------------------------------------------------------
def _conv3x3_acc(xpad, w, *, H, W):
    """3x3 'same' conv of a spatially pre-padded NHWC block as accumulated MXU dots.

    Avoids materializing the 9x im2col patches buffer; taps are contracted in
    pairs (K = 2*C), bf16 operands, f32 accumulation.
    xpad: (Bt, H+2, W+2, C) value; w: (9*C, Cout_p) bf16 value.
    Returns (Bt*H*W, Cout_p) float32.
    """
    Bt, _, _, C = xpad.shape
    n_pix = Bt * H * W
    acc = None
    for group in _TAP_PAIRS:
        parts = []
        for t in group:
            ky, kx = divmod(t, 3)
            tap = xpad[:, ky:ky + H, kx:kx + W, :]
            parts.append(tap.reshape(n_pix, C).astype(jnp.bfloat16))
        lhs = parts[0] if len(parts) == 1 else jnp.concatenate(parts, axis=-1)
        rhs = w[group[0] * C:(group[-1] + 1) * C, :]
        contrib = jnp.dot(lhs, rhs, preferred_element_type=jnp.float32)
        acc = contrib if acc is None else acc + contrib
    return acc


def _emit_stats(acc, sums_ref):
    """Per-block BN partials: [sum, mean-centered sum of squares] per channel (f32)."""
    inv_n = 1.0 / acc.shape[0]
    s = jnp.sum(acc, axis=0, keepdims=True)          # (1, Cp)
    mu = s * inv_n
    d = acc - mu
    sums_ref[0, 0:1, :] = s
    sums_ref[0, 1:2, :] = jnp.sum(d * d, axis=0, keepdims=True)


# --------------------------------------------------------------------------
# Kernel 1: 3x3 conv (input spatially pre-padded, channel lane-padded, bf16)
#           + per-block partial statistics for training-mode BN1.
# --------------------------------------------------------------------------
def _conv3x3_stats_kernel(xpad_ref, w_ref, y_ref, sums_ref):
    _, Hp2, Wp2, _ = xpad_ref.shape
    H, W = Hp2 - 2, Wp2 - 2
    acc = _conv3x3_acc(xpad_ref[...], w_ref[...], H=H, W=W)
    y_ref[...] = acc.reshape(y_ref.shape).astype(y_ref.dtype)
    _emit_stats(acc, sums_ref)


# --------------------------------------------------------------------------
# Kernel 2: apply folded BN1 (scale/shift) + ReLU, build zero-halo activation
#           in VMEM scratch (only the border is re-zeroed each step),
#           3x3 conv2 (accumulated dots) + BN2 partial statistics.
# --------------------------------------------------------------------------
def _bn_relu_conv3x3_stats_kernel(y1_ref, sc_ref, sh_ref, w_ref,
                                  y2_ref, sums_ref, apad_ref):
    Bt, H, W, Cp = y1_ref.shape
    s = sc_ref[...].reshape(1, 1, 1, Cp)
    t = sh_ref[...].reshape(1, 1, 1, Cp)
    act = jnp.maximum(y1_ref[...].astype(jnp.float32) * s + t, 0.0)

    # Zero only the 1-px halo (cheap); the interior is overwritten every step.
    zrow = jnp.zeros((Bt, 1, W + 2, Cp), apad_ref.dtype)
    zcol = jnp.zeros((Bt, H + 2, 1, Cp), apad_ref.dtype)
    apad_ref[:, 0:1, :, :] = zrow
    apad_ref[:, H + 1:H + 2, :, :] = zrow
    apad_ref[:, :, 0:1, :] = zcol
    apad_ref[:, :, W + 1:W + 2, :] = zcol
    apad_ref[:, 1:H + 1, 1:W + 1, :] = act

    acc = _conv3x3_acc(apad_ref[...], w_ref[...], H=H, W=W)
    y2_ref[...] = acc.reshape(y2_ref.shape).astype(y2_ref.dtype)
    _emit_stats(acc, sums_ref)


# --------------------------------------------------------------------------
# Kernel 3: apply folded BN2 + residual add + ReLU (identity or fused 1x1 conv).
#           Skip input arrives un-haloed and lane-padded (bf16).
# --------------------------------------------------------------------------
def _bn_add_relu_identity_kernel(y2_ref, sc_ref, sh_ref, x_ref, out_ref):
    Cp = y2_ref.shape[-1]
    s = sc_ref[...].reshape(1, 1, 1, Cp)
    t = sh_ref[...].reshape(1, 1, 1, Cp)
    y = y2_ref[...].astype(jnp.float32)
    skip = x_ref[...].astype(jnp.float32)
    out_ref[...] = jnp.maximum(y * s + t + skip, 0.0).astype(out_ref.dtype)


def _bn_add_relu_proj_kernel(y2_ref, sc_ref, sh_ref, x_ref, w3_ref, b3_ref, out_ref):
    Bt, H, W, Cp = y2_ref.shape
    s = sc_ref[...].reshape(1, 1, 1, Cp)
    t = sh_ref[...].reshape(1, 1, 1, Cp)
    xin = x_ref[...].reshape(Bt * H * W, x_ref.shape[-1])        # bf16 already
    skip = jnp.dot(xin, w3_ref[...], preferred_element_type=jnp.float32) + b3_ref[...]
    out = y2_ref[...].astype(jnp.float32) * s + t + skip.reshape(Bt, H, W, Cp)
    out_ref[...] = jnp.maximum(out, 0.0).astype(out_ref.dtype)


# --------------------------------------------------------------------------
# Host-side glue
# --------------------------------------------------------------------------
def _compiler_params():
    # Scoped-VMEM cap re-derived per generation: ~3/4 of physical VMEM, capped at
    # 96 MiB (v5e/v6e: 128 MiB -> 96 MiB; v7x: 64 MiB -> 48 MiB).
    try:
        phys = int(pltpu.get_tpu_info().vmem_capacity_bytes)
    except Exception:  # interpret mode / older jax: fall back to a safe value
        phys = 128 * 1024 * 1024
    limit = min(phys * 3 // 4, 96 * 1024 * 1024)
    return pltpu.CompilerParams(
        dimension_semantics=("parallel",),          # batch axis -> megacore on v7x
        vmem_limit_bytes=int(limit),
    )


def _pick_batch_tile(B, H, W, c_p):
    """Largest batch tile that divides B, keeps >= 2 grid steps when B >= 2
    (megacore / pipelining), and keeps the bf16 activation block <= ~4 MiB."""
    per_img = H * W * c_p * 2
    best = 1
    for cand in range(1, B + 1):
        if B % cand:
            continue
        if B >= 2 and B // cand < 2:
            continue
        if cand * per_img <= 4 * 1024 * 1024:
            best = cand
    return best


def _fold_bn(sums, gamma_p, beta_p, n_block, n_total):
    """Fold training-mode BN (batch stats) into per-channel scale/shift.

    Per-block partials are [sum, mean-centered M2]; merged with the parallel
    variance formula (numerically stable, all in f32)."""
    s_b = sums[:, 0, :]                             # (nblk, Cp)
    m2_b = sums[:, 1, :]
    mean = jnp.sum(s_b, axis=0) / n_total
    mean_b = s_b / n_block
    m2 = jnp.sum(m2_b, axis=0) + n_block * jnp.sum((mean_b - mean) ** 2, axis=0)
    var = jnp.maximum(m2 / n_total, 0.0)
    scale = gamma_p * lax.rsqrt(var + _EPS)
    shift = beta_p - mean * scale
    return scale.reshape(1, -1), shift.reshape(1, -1)


@functools.partial(jax.jit, static_argnames=("use_1x1", "stride"))
def residual_forward(x_nchw, params, *, use_1x1, stride=1):
    if stride != 1:
        raise NotImplementedError("stride > 1 not implemented")  # TODO(synk)
    B, Cin, H, W = x_nchw.shape
    Cout = params["w1"].shape[-1]
    Cin_p = _round_up(Cin, _LANE)
    Cout_p = _round_up(Cout, _LANE)
    Bt = _pick_batch_tile(B, H, W, Cout_p)
    nblk = B // Bt
    n_block = float(Bt * H * W)
    n_total = float(B * H * W)

    # NCHW -> NHWC in bf16, lane-pad channels. One un-haloed copy (stage-3 skip)
    # and one spatially haloed copy (conv1 input).
    x_nhwc = jnp.transpose(x_nchw, (0, 2, 3, 1)).astype(jnp.bfloat16)
    x_np = jnp.pad(x_nhwc, ((0, 0), (0, 0), (0, 0), (0, Cin_p - Cin)))
    x_pad = jnp.pad(x_np, ((0, 0), (1, 1), (1, 1), (0, 0)))

    # im2col weights (9*C_in_p, C_out_p) in bf16.  Conv biases b1/b2 are dropped:
    # a per-channel constant before training-mode BN is cancelled by the mean.
    w1p = jnp.pad(params["w1"],
                  ((0, 0), (0, 0), (0, Cin_p - Cin), (0, Cout_p - Cout))
                  ).reshape(9 * Cin_p, Cout_p).astype(jnp.bfloat16)
    w2p = jnp.pad(params["w2"],
                  ((0, 0), (0, 0), (0, Cout_p - Cout), (0, Cout_p - Cout))
                  ).reshape(9 * Cout_p, Cout_p).astype(jnp.bfloat16)
    # gamma/beta zero-padded -> padded lanes stay exactly 0 through the block.
    g1p = jnp.pad(params["g1"].reshape(-1), (0, Cout_p - Cout))
    be1p = jnp.pad(params["be1"].reshape(-1), (0, Cout_p - Cout))
    g2p = jnp.pad(params["g2"].reshape(-1), (0, Cout_p - Cout))
    be2p = jnp.pad(params["be2"].reshape(-1), (0, Cout_p - Cout))

    cp = _compiler_params()

    # ---- stage 1: conv1 + BN1 partial statistics ----------------------------
    y1, sums1 = pl.pallas_call(
        _conv3x3_stats_kernel,
        grid=(nblk,),
        in_specs=[
            pl.BlockSpec((Bt, H + 2, W + 2, Cin_p), lambda b: (b, 0, 0, 0)),
            pl.BlockSpec((9 * Cin_p, Cout_p), lambda b: (0, 0)),
        ],
        out_specs=[
            pl.BlockSpec((Bt, H, W, Cout_p), lambda b: (b, 0, 0, 0)),
            pl.BlockSpec((1, 2, Cout_p), lambda b: (b, 0, 0)),
        ],
        out_shape=[
            jax.ShapeDtypeStruct((B, H, W, Cout_p), jnp.bfloat16),
            jax.ShapeDtypeStruct((nblk, 2, Cout_p), jnp.float32),
        ],
        compiler_params=cp,
    )(x_pad, w1p)

    scale1, shift1 = _fold_bn(sums1, g1p, be1p, n_block, n_total)

    # ---- stage 2: BN1 apply + ReLU + conv2 + BN2 partial stats --------------
    y2, sums2 = pl.pallas_call(
        _bn_relu_conv3x3_stats_kernel,
        grid=(nblk,),
        in_specs=[
            pl.BlockSpec((Bt, H, W, Cout_p), lambda b: (b, 0, 0, 0)),
            pl.BlockSpec((1, Cout_p), lambda b: (0, 0)),
            pl.BlockSpec((1, Cout_p), lambda b: (0, 0)),
            pl.BlockSpec((9 * Cout_p, Cout_p), lambda b: (0, 0)),
        ],
        out_specs=[
            pl.BlockSpec((Bt, H, W, Cout_p), lambda b: (b, 0, 0, 0)),
            pl.BlockSpec((1, 2, Cout_p), lambda b: (b, 0, 0)),
        ],
        out_shape=[
            jax.ShapeDtypeStruct((B, H, W, Cout_p), jnp.bfloat16),
            jax.ShapeDtypeStruct((nblk, 2, Cout_p), jnp.float32),
        ],
        scratch_shapes=[pltpu.VMEM((Bt, H + 2, W + 2, Cout_p), jnp.float32)],
        compiler_params=cp,
    )(y1, scale1, shift1, w2p)

    scale2, shift2 = _fold_bn(sums2, g2p, be2p, n_block, n_total)

    # ---- stage 3: BN2 apply + skip (+ fused 1x1 conv) + ReLU ----------------
    if use_1x1:
        w3p = jnp.pad(params["w3"],
                      ((0, Cin_p - Cin), (0, Cout_p - Cout))).astype(jnp.bfloat16)
        b3p = jnp.pad(params["b3"].reshape(1, -1), ((0, 0), (0, Cout_p - Cout)))
        out_p = pl.pallas_call(
            _bn_add_relu_proj_kernel,
            grid=(nblk,),
            in_specs=[
                pl.BlockSpec((Bt, H, W, Cout_p), lambda b: (b, 0, 0, 0)),
                pl.BlockSpec((1, Cout_p), lambda b: (0, 0)),
                pl.BlockSpec((1, Cout_p), lambda b: (0, 0)),
                pl.BlockSpec((Bt, H, W, Cin_p), lambda b: (b, 0, 0, 0)),
                pl.BlockSpec((Cin_p, Cout_p), lambda b: (0, 0)),
                pl.BlockSpec((1, Cout_p), lambda b: (0, 0)),
            ],
            out_specs=pl.BlockSpec((Bt, H, W, Cout_p), lambda b: (b, 0, 0, 0)),
            out_shape=jax.ShapeDtypeStruct((B, H, W, Cout_p), jnp.float32),
            compiler_params=cp,
        )(y2, scale2, shift2, x_np, w3p, b3p)
    else:
        assert Cin == Cout, "identity skip requires Cin == Cout"
        out_p = pl.pallas_call(
            _bn_add_relu_identity_kernel,
            grid=(nblk,),
            in_specs=[
                pl.BlockSpec((Bt, H, W, Cout_p), lambda b: (b, 0, 0, 0)),
                pl.BlockSpec((1, Cout_p), lambda b: (0, 0)),
                pl.BlockSpec((1, Cout_p), lambda b: (0, 0)),
                pl.BlockSpec((Bt, H, W, Cin_p), lambda b: (b, 0, 0, 0)),
            ],
            out_specs=pl.BlockSpec((Bt, H, W, Cout_p), lambda b: (b, 0, 0, 0)),
            out_shape=jax.ShapeDtypeStruct((B, H, W, Cout_p), jnp.float32),
            compiler_params=cp,
        )(y2, scale2, shift2, x_np)

    out = out_p[:, :, :, :Cout]                           # drop lane padding
    return jnp.transpose(out, (0, 3, 1, 2))               # NHWC -> NCHW


# ----------------------------- reference (pure JAX, f32) --------------------
def _conv_ref(x_nchw, w_hwio, b, padding):
    out = lax.conv_general_dilated(
        x_nchw, w_hwio, window_strides=(1, 1),
        padding=[(padding, padding), (padding, padding)],
        dimension_numbers=("NCHW", "HWIO", "NCHW"))
    return out + b.reshape(1, -1, 1, 1)


def _bn_ref(x_nchw, gamma, beta):
    mean = x_nchw.mean(axis=(0, 2, 3), keepdims=True)
    var = ((x_nchw - mean) ** 2).mean(axis=(0, 2, 3), keepdims=True)
    return (x_nchw - mean) * lax.rsqrt(var + _EPS) * gamma.reshape(1, -1, 1, 1) \
        + beta.reshape(1, -1, 1, 1)


def residual_reference(x_nchw, params, *, use_1x1):
    y = jax.nn.relu(_bn_ref(_conv_ref(x_nchw, params["w1"], params["b1"].reshape(-1), 1),
                            params["g1"].reshape(-1), params["be1"].reshape(-1)))
    y = _bn_ref(_conv_ref(y, params["w2"], params["b2"].reshape(-1), 1),
                params["g2"].reshape(-1), params["be2"].reshape(-1))
    if use_1x1:
        cin, cout = params["w3"].shape
        skip = _conv_ref(x_nchw, params["w3"].reshape(1, 1, cin, cout),
                         params["b3"].reshape(-1), 0)
    else:
        skip = x_nchw
    return jax.nn.relu(y + skip)


# ----------------------------- deterministic params -------------------------
def make_params(key, Cin, Cout, use_1x1):
    ks = jax.random.split(key, 6)
    p = {
        "w1": jax.random.normal(ks[0], (3, 3, Cin, Cout), jnp.float32) * 0.1,
        "b1": jax.random.normal(ks[1], (1, Cout), jnp.float32) * 0.1,
        "g1": jnp.ones((1, Cout), jnp.float32),
        "be1": jnp.zeros((1, Cout), jnp.float32),
        "w2": jax.random.normal(ks[2], (3, 3, Cout, Cout), jnp.float32) * 0.1,
        "b2": jax.random.normal(ks[3], (1, Cout), jnp.float32) * 0.1,
        "g2": jnp.ones((1, Cout), jnp.float32),
        "be2": jnp.zeros((1, Cout), jnp.float32),
    }
    if use_1x1:
        p["w3"] = jax.random.normal(ks[4], (Cin, Cout), jnp.float32) * 0.1
        p["b3"] = jax.random.normal(ks[5], (1, Cout), jnp.float32) * 0.1
    else:
        p["w3"] = jnp.zeros((Cin, Cout), jnp.float32)   # unused (identity skip)
        p["b3"] = jnp.zeros((1, Cout), jnp.float32)
    return p


if __name__ == "__main__":
    key = jax.random.PRNGKey(0)
    kx, kp1, kp2 = jax.random.split(key, 3)

    # bf16 intermediates (y1/y2/x) + bf16 MXU operands vs f32 reference, and BN
    # rescales the small-magnitude conv outputs back to unit variance -> relaxed
    # tolerance relative to an all-f32 pipeline.
    ATOL, RTOL = 7e-2, 7e-2

    # Config A: defaults (use_1x1=False, stride=1), Cin == Cout
    B, Cin, H, W = 2, 4, 16, 16
    x = jax.random.normal(kx, (B, Cin, H, W), jnp.float32)

    params_a = make_params(kp1, Cin, Cin, use_1x1=False)
    out_a = jax.block_until_ready(residual_forward(x, params_a, use_1x1=False))
    ref_a = residual_reference(x, params_a, use_1x1=False)
    assert out_a.shape == (B, Cin, H, W)
    assert jnp.allclose(out_a, ref_a, atol=ATOL, rtol=RTOL), "mismatch (use_1x1=False)"

    # Config B: projection skip (use_1x1=True), Cout != Cin
    Cout = 8
    params_b = make_params(kp2, Cin, Cout, use_1x1=True)
    out_b = jax.block_until_ready(residual_forward(x, params_b, use_1x1=True))
    ref_b = residual_reference(x, params_b, use_1x1=True)
    assert out_b.shape == (B, Cout, H, W)
    assert jnp.allclose(out_b, ref_b, atol=ATOL, rtol=RTOL), "mismatch (use_1x1=True)"

    print("KERNEL_OK")
</pallas_src>

<mosaic_0001>
module attributes {stable_mosaic.version = 11 : i64} {
  func.func @_conv3x3_stats_kernel(%arg0: i32, %arg1: memref<1x18x18x128xbf16, #tpu.memory_space<vmem>>, %arg2: memref<1152x128xbf16, #tpu.memory_space<vmem>>, %arg3: memref<1x16x16x128xbf16, #tpu.memory_space<vmem>>, %arg4: memref<1x2x128xf32, #tpu.memory_space<vmem>>) attributes {dimension_semantics = [#tpu.dimension_semantics<parallel>], iteration_bounds = array<i64: 2>, scalar_prefetch = 0 : i64, scratch_operands = 0 : i64, tpu.core_type = #tpu.core_type<tc>, window_params = [{transform_indices = @transform_0, window_bounds = array<i64: 1, 18, 18, 128>}, {pipeline_mode = #tpu.pipeline_mode<synchronous>, transform_indices = @transform_1, window_bounds = array<i64: 1152, 128>}, {transform_indices = @transform_2, window_bounds = array<i64: 1, 16, 16, 128>}, {transform_indices = @transform_3, window_bounds = array<i64: 1, 2, 128>}]} {
    %c0 = arith.constant 0 : index
    %c0_0 = arith.constant 0 : index
    %c0_1 = arith.constant 0 : index
    %c0_2 = arith.constant 0 : index
    %0 = vector.load %arg1[%c0, %c0_0, %c0_1, %c0_2] : memref<1x18x18x128xbf16, #tpu.memory_space<vmem>>, vector<1x18x18x128xbf16>
    %c0_3 = arith.constant 0 : index
    %c0_4 = arith.constant 0 : index
    %1 = vector.load %arg2[%c0_3, %c0_4] : memref<1152x128xbf16, #tpu.memory_space<vmem>>, vector<1152x128xbf16>
    %2 = vector.extract_strided_slice %0 {offsets = [0, 0, 0, 0], sizes = [1, 16, 16, 128], strides = [1, 1, 1, 1]} : vector<1x18x18x128xbf16> to vector<1x16x16x128xbf16>
    %3 = vector.shape_cast %2 : vector<1x16x16x128xbf16> to vector<256x128xbf16>
    %4 = vector.extract_strided_slice %0 {offsets = [0, 0, 1, 0], sizes = [1, 16, 16, 128], strides = [1, 1, 1, 1]} : vector<1x18x18x128xbf16> to vector<1x16x16x128xbf16>
    %5 = vector.shape_cast %4 : vector<1x16x16x128xbf16> to vector<256x128xbf16>
    %6 = tpu.concatenate %3, %5 in 1 : vector<256x128xbf16>, vector<256x128xbf16> -> vector<256x256xbf16>
    %7 = vector.extract_strided_slice %1 {offsets = [0, 0], sizes = [256, 128], strides = [1, 1]} : vector<1152x128xbf16> to vector<256x128xbf16>
    %cst = arith.constant dense<0.000000e+00> : vector<256x128xf32>
    %8 = tpu.matmul %6, %7, %cst {dimension_numbers = #tpu.dot_dimension_numbers<[1], [0], [0], [1], [0, 0, 1, 1], [], []>} : vector<256x256xbf16>, vector<256x128xbf16>, vector<256x128xf32> -> vector<256x128xf32>
    %9 = vector.extract_strided_slice %0 {offsets = [0, 0, 2, 0], sizes = [1, 16, 16, 128], strides = [1, 1, 1, 1]} : vector<1x18x18x128xbf16> to vector<1x16x16x128xbf16>
    %10 = vector.shape_cast %9 : vector<1x16x16x128xbf16> to vector<256x128xbf16>
    %11 = vector.extract_strided_slice %0 {offsets = [0, 1, 0, 0], sizes = [1, 16, 16, 128], strides = [1, 1, 1, 1]} : vector<1x18x18x128xbf16> to vector<1x16x16x128xbf16>
    %12 = vector.shape_cast %11 : vector<1x16x16x128xbf16> to vector<256x128xbf16>
    %13 = tpu.concatenate %10, %12 in 1 : vector<256x128xbf16>, vector<256x128xbf16> -> vector<256x256xbf16>
    %14 = vector.extract_strided_slice %1 {offsets = [256, 0], sizes = [256, 128], strides = [1, 1]} : vector<1152x128xbf16> to vector<256x128xbf16>
    %cst_5 = arith.constant dense<0.000000e+00> : vector<256x128xf32>
    %15 = tpu.matmul %13, %14, %cst_5 {dimension_numbers = #tpu.dot_dimension_numbers<[1], [0], [0], [1], [0, 0, 1, 1], [], []>} : vector<256x256xbf16>, vector<256x128xbf16>, vector<256x128xf32> -> vector<256x128xf32>
    %16 = arith.addf %8, %15 : vector<256x128xf32>
    %17 = vector.extract_strided_slice %0 {offsets = [0, 1, 1, 0], sizes = [1, 16, 16, 128], strides = [1, 1, 1, 1]} : vector<1x18x18x128xbf16> to vector<1x16x16x128xbf16>
    %18 = vector.shape_cast %17 : vector<1x16x16x128xbf16> to vector<256x128xbf16>
    %19 = vector.extract_strided_slice %0 {offsets = [0, 1, 2, 0], sizes = [1, 16, 16, 128], strides = [1, 1, 1, 1]} : vector<1x18x18x128xbf16> to vector<1x16x16x128xbf16>
    %20 = vector.shape_cast %19 : vector<1x16x16x128xbf16> to vector<256x128xbf16>
    %21 = tpu.concatenate %18, %20 in 1 : vector<256x128xbf16>, vector<256x128xbf16> -> vector<256x256xbf16>
    %22 = vector.extract_strided_slice %1 {offsets = [512, 0], sizes = [256, 128], strides = [1, 1]} : vector<1152x128xbf16> to vector<256x128xbf16>
    %cst_6 = arith.constant dense<0.000000e+00> : vector<256x128xf32>
    %23 = tpu.matmul %21, %22, %cst_6 {dimension_numbers = #tpu.dot_dimension_numbers<[1], [0], [0], [1], [0, 0, 1, 1], [], []>} : vector<256x256xbf16>, vector<256x128xbf16>, vector<256x128xf32> -> vector<256x128xf32>
    %24 = arith.addf %16, %23 : vector<256x128xf32>
    %25 = vector.extract_strided_slice %0 {offsets = [0, 2, 0, 0], sizes = [1, 16, 16, 128], strides = [1, 1, 1, 1]} : vector<1x18x18x128xbf16> to vector<1x16x16x128xbf16>
    %26 = vector.shape_cast %25 : vector<1x16x16x128xbf16> to vector<256x128xbf16>
    %27 = vector.extract_strided_slice %0 {offsets = [0, 2, 1, 0], sizes = [1, 16, 16, 128], strides = [1, 1, 1, 1]} : vector<1x18x18x128xbf16> to vector<1x16x16x128xbf16>
    %28 = vector.shape_cast %27 : vector<1x16x16x128xbf16> to vector<256x128xbf16>
    %29 = tpu.concatenate %26, %28 in 1 : vector<256x128xbf16>, vector<256x128xbf16> -> vector<256x256xbf16>
    %30 = vector.extract_strided_slice %1 {offsets = [768, 0], sizes = [256, 128], strides = [1, 1]} : vector<1152x128xbf16> to vector<256x128xbf16>
    %cst_7 = arith.constant dense<0.000000e+00> : vector<256x128xf32>
    %31 = tpu.matmul %29, %30, %cst_7 {dimension_numbers = #tpu.dot_dimension_numbers<[1], [0], [0], [1], [0, 0, 1, 1], [], []>} : vector<256x256xbf16>, vector<256x128xbf16>, vector<256x128xf32> -> vector<256x128xf32>
    %32 = arith.addf %24, %31 : vector<256x128xf32>
    %33 = vector.extract_strided_slice %0 {offsets = [0, 2, 2, 0], sizes = [1, 16, 16, 128], strides = [1, 1, 1, 1]} : vector<1x18x18x128xbf16> to vector<1x16x16x128xbf16>
    %34 = vector.shape_cast %33 : vector<1x16x16x128xbf16> to vector<256x128xbf16>
    %35 = vector.extract_strided_slice %1 {offsets = [1024, 0], sizes = [128, 128], strides = [1, 1]} : vector<1152x128xbf16> to vector<128x128xbf16>
    %cst_8 = arith.constant dense<0.000000e+00> : vector<256x128xf32>
    %36 = tpu.matmul %34, %35, %cst_8 {dimension_numbers = #tpu.dot_dimension_numbers<[1], [0], [0], [1], [0, 0, 1, 1], [], []>} : vector<256x128xbf16>, vector<128x128xbf16>, vector<256x128xf32> -> vector<256x128xf32>
    %37 = arith.addf %32, %36 : vector<256x128xf32>
    %38 = vector.shape_cast %37 : vector<256x128xf32> to vector<1x16x16x128xf32>
    %39 = arith.truncf %38 : vector<1x16x16x128xf32> to vector<1x16x16x128xbf16>
    %c0_9 = arith.constant 0 : index
    %c0_10 = arith.constant 0 : index
    %c0_11 = arith.constant 0 : index
    %c0_12 = arith.constant 0 : index
    %40 = vector.load %arg3[%c0_9, %c0_10, %c0_11, %c0_12] : memref<1x16x16x128xbf16, #tpu.memory_space<vmem>>, vector<1x16x16x128xbf16>
    tpu.vector_store %arg3[%c0_9, %c0_10, %c0_11, %c0_12], %39 {strides = array<i32>} : memref<1x16x16x128xbf16, #tpu.memory_space<vmem>>, vector<1x16x16x128xbf16>,
    %cst_13 = arith.constant dense<0.000000e+00> : vector<128xf32>
    %41 = vector.multi_reduction <add>, %37, %cst_13 [0] : vector<256x128xf32> to vector<128xf32>
    %42 = vector.shape_cast %41 : vector<128xf32> to vector<1x128xf32>
    %cst_14 = arith.constant 3.906250e-03 : f32
    %43 = vector.broadcast %cst_14 : f32 to vector<1x128xf32>
    %44 = arith.mulf %42, %43 : vector<1x128xf32>
    %45 = vector.broadcast %44 : vector<1x128xf32> to vector<256x128xf32>
    %46 = arith.subf %37, %45 : vector<256x128xf32>
    %c0_15 = arith.constant 0 : index
    %c0_16 = arith.constant 0 : index
    %c0_17 = arith.constant 0 : index
    %47 = vector.load %arg4[%c0_15, %c0_16, %c0_17] : memref<1x2x128xf32, #tpu.memory_space<vmem>>, vector<1x1x128xf32>
    %48 = vector.shape_cast %47 : vector<1x1x128xf32> to vector<1x128xf32>
    %49 = vector.shape_cast %42 : vector<1x128xf32> to vector<1x1x128xf32>
    tpu.vector_store %arg4[%c0_15, %c0_16, %c0_17], %49 {strides = array<i32>} : memref<1x2x128xf32, #tpu.memory_space<vmem>>, vector<1x1x128xf32>,
    %50 = arith.mulf %46, %46 : vector<256x128xf32>
    %cst_18 = arith.constant dense<0.000000e+00> : vector<128xf32>
    %51 = vector.multi_reduction <add>, %50, %cst_18 [0] : vector<256x128xf32> to vector<128xf32>
    %52 = vector.shape_cast %51 : vector<128xf32> to vector<1x128xf32>
    %c0_19 = arith.constant 0 : index
    %c1 = arith.constant 1 : index
    %c0_20 = arith.constant 0 : index
    %53 = vector.load %arg4[%c0_19, %c1, %c0_20] : memref<1x2x128xf32, #tpu.memory_space<vmem>>, vector<1x1x128xf32>
    %54 = vector.shape_cast %53 : vector<1x1x128xf32> to vector<1x128xf32>
    %55 = vector.shape_cast %52 : vector<1x128xf32> to vector<1x1x128xf32>
    tpu.vector_store %arg4[%c0_19, %c1, %c0_20], %55 {strides = array<i32>} : memref<1x2x128xf32, #tpu.memory_space<vmem>>, vector<1x1x128xf32>,
    return
  }
  func.func @transform_0(%arg0: i32) -> (i32, i32, i32, i32) {
    %c0_i32 = arith.constant 0 : i32
    %c0_i32_0 = arith.constant 0 : i32
    %c0_i32_1 = arith.constant 0 : i32
    %c0_i32_2 = arith.constant 0 : i32
    return %arg0, %c0_i32, %c0_i32_0, %c0_i32_1 : i32, i32, i32, i32
  }
  func.func @transform_1(%arg0: i32) -> (i32, i32) {
    %c0_i32 = arith.constant 0 : i32
    %c0_i32_0 = arith.constant 0 : i32
    %c0_i32_1 = arith.constant 0 : i32
    return %c0_i32, %c0_i32_0 : i32, i32
  }
  func.func @transform_2(%arg0: i32) -> (i32, i32, i32, i32) {
    %c0_i32 = arith.constant 0 : i32
    %c0_i32_0 = arith.constant 0 : i32
    %c0_i32_1 = arith.constant 0 : i32
    %c0_i32_2 = arith.constant 0 : i32
    return %arg0, %c0_i32, %c0_i32_0, %c0_i32_1 : i32, i32, i32, i32
  }
  func.func @transform_3(%arg0: i32) -> (i32, i32, i32) {
    %c0_i32 = arith.constant 0 : i32
    %c0_i32_0 = arith.constant 0 : i32
    %c0_i32_1 = arith.constant 0 : i32
    return %arg0, %c0_i32, %c0_i32_0 : i32, i32, i32
  }
}

module attributes {stable_mosaic.version = 11 : i64} {
  func.func @_bn_add_relu_identity_kernel(%arg0: i32, %arg1: memref<1x16x16x128xbf16, #tpu.memory_space<vmem>>, %arg2: memref<1x128xf32, #tpu.memory_space<vmem>>, %arg3: memref<1x128xf32, #tpu.memory_space<vmem>>, %arg4: memref<1x16x16x128xbf16, #tpu.memory_space<vmem>>, %arg5: memref<1x16x16x128xf32, #tpu.memory_space<vmem>>) attributes {dimension_semantics = [#tpu.dimension_semantics<parallel>], iteration_bounds = array<i64: 2>, scalar_prefetch = 0 : i64, scratch_operands = 0 : i64, tpu.core_type = #tpu.core_type<tc>, window_params = [{transform_indices = @transform_0, window_bounds = array<i64: 1, 16, 16, 128>}, {pipeline_mode = #tpu.pipeline_mode<synchronous>, transform_indices = @transform_1, window_bounds = array<i64: 1, 128>}, {pipeline_mode = #tpu.pipeline_mode<synchronous>, transform_indices = @transform_2, window_bounds = array<i64: 1, 128>}, {transform_indices = @transform_3, window_bounds = array<i64: 1, 16, 16, 128>}, {transform_indices = @transform_4, window_bounds = array<i64: 1, 16, 16, 128>}]} {
    %c0 = arith.constant 0 : index
    %c0_0 = arith.constant 0 : index
    %0 = vector.load %arg2[%c0, %c0_0] : memref<1x128xf32, #tpu.memory_space<vmem>>, vector<1x128xf32>
    %1 = vector.shape_cast %0 : vector<1x128xf32> to vector<1x1x1x128xf32>
    %c0_1 = arith.constant 0 : index
    %c0_2 = arith.constant 0 : index
    %2 = vector.load %arg3[%c0_1, %c0_2] : memref<1x128xf32, #tpu.memory_space<vmem>>, vector<1x128xf32>
    %3 = vector.shape_cast %2 : vector<1x128xf32> to vector<1x1x1x128xf32>
    %c0_3 = arith.constant 0 : index
    %c0_4 = arith.constant 0 : index
    %c0_5 = arith.constant 0 : index
    %c0_6 = arith.constant 0 : index
    %4 = vector.load %arg1[%c0_3, %c0_4, %c0_5, %c0_6] : memref<1x16x16x128xbf16, #tpu.memory_space<vmem>>, vector<1x16x16x128xbf16>
    %5 = arith.extf %4 : vector<1x16x16x128xbf16> to vector<1x16x16x128xf32>
    %c0_7 = arith.constant 0 : index
    %c0_8 = arith.constant 0 : index
    %c0_9 = arith.constant 0 : index
    %c0_10 = arith.constant 0 : index
    %6 = vector.load %arg4[%c0_7, %c0_8, %c0_9, %c0_10] : memref<1x16x16x128xbf16, #tpu.memory_space<vmem>>, vector<1x16x16x128xbf16>
    %7 = arith.extf %6 : vector<1x16x16x128xbf16> to vector<1x16x16x128xf32>
    %8 = vector.broadcast %1 : vector<1x1x1x128xf32> to vector<1x16x16x128xf32>
    %9 = arith.mulf %5, %8 : vector<1x16x16x128xf32>
    %10 = vector.broadcast %3 : vector<1x1x1x128xf32> to vector<1x16x16x128xf32>
    %11 = arith.addf %9, %10 : vector<1x16x16x128xf32>
    %12 = arith.addf %11, %7 : vector<1x16x16x128xf32>
    %cst = arith.constant 0.000000e+00 : f32
    %13 = vector.broadcast %cst : f32 to vector<1x16x16x128xf32>
    %14 = arith.maximumf %12, %13 : vector<1x16x16x128xf32>
    %c0_11 = arith.constant 0 : index
    %c0_12 = arith.constant 0 : index
    %c0_13 = arith.constant 0 : index
    %c0_14 = arith.constant 0 : index
    %15 = vector.load %arg5[%c0_11, %c0_12, %c0_13, %c0_14] : memref<1x16x16x128xf32, #tpu.memory_space<vmem>>, vector<1x16x16x128xf32>
    tpu.vector_store %arg5[%c0_11, %c0_12, %c0_13, %c0_14], %14 {strides = array<i32>} : memref<1x16x16x128xf32, #tpu.memory_space<vmem>>, vector<1x16x16x128xf32>,
    return
  }
  func.func @transform_0(%arg0: i32) -> (i32, i32, i32, i32) {
    %c0_i32 = arith.constant 0 : i32
    %c0_i32_0 = arith.constant 0 : i32
    %c0_i32_1 = arith.constant 0 : i32
    %c0_i32_2 = arith.constant 0 : i32
    return %arg0, %c0_i32, %c0_i32_0, %c0_i32_1 : i32, i32, i32, i32
  }
  func.func @transform_1(%arg0: i32) -> (i32, i32) {
    %c0_i32 = arith.constant 0 : i32
    %c0_i32_0 = arith.constant 0 : i32
    %c0_i32_1 = arith.constant 0 : i32
    return %c0_i32, %c0_i32_0 : i32, i32
  }
  func.func @transform_2(%arg0: i32) -> (i32, i32) {
    %c0_i32 = arith.constant 0 : i32
    %c0_i32_0 = arith.constant 0 : i32
    %c0_i32_1 = arith.constant 0 : i32
    return %c0_i32, %c0_i32_0 : i32, i32
  }
  func.func @transform_3(%arg0: i32) -> (i32, i32, i32, i32) {
    %c0_i32 = arith.constant 0 : i32
    %c0_i32_0 = arith.constant 0 : i32
    %c0_i32_1 = arith.constant 0 : i32
    %c0_i32_2 = arith.constant 0 : i32
    return %arg0, %c0_i32, %c0_i32_0, %c0_i32_1 : i32, i32, i32, i32
  }
  func.func @transform_4(%arg0: i32) -> (i32, i32, i32, i32) {
    %c0_i32 = arith.constant 0 : i32
    %c0_i32_0 = arith.constant 0 : i32
    %c0_i32_1 = arith.constant 0 : i32
    %c0_i32_2 = arith.constant 0 : i32
    return %arg0, %c0_i32, %c0_i32_0, %c0_i32_1 : i32, i32, i32, i32
  }
}

module attributes {stable_mosaic.version = 11 : i64} {
  func.func @_bn_relu_conv3x3_stats_kernel(%arg0: i32, %arg1: memref<1x16x16x128xbf16, #tpu.memory_space<vmem>>, %arg2: memref<1x128xf32, #tpu.memory_space<vmem>>, %arg3: memref<1x128xf32, #tpu.memory_space<vmem>>, %arg4: memref<1152x128xbf16, #tpu.memory_space<vmem>>, %arg5: memref<1x16x16x128xbf16, #tpu.memory_space<vmem>>, %arg6: memref<1x2x128xf32, #tpu.memory_space<vmem>>, %arg7: memref<1x18x18x128xf32, #tpu.memory_space<vmem>>) attributes {dimension_semantics = [#tpu.dimension_semantics<parallel>], iteration_bounds = array<i64: 2>, scalar_prefetch = 0 : i64, scratch_operands = 1 : i64, tpu.core_type = #tpu.core_type<tc>, window_params = [{transform_indices = @transform_0, window_bounds = array<i64: 1, 16, 16, 128>}, {pipeline_mode = #tpu.pipeline_mode<synchronous>, transform_indices = @transform_1, window_bounds = array<i64: 1, 128>}, {pipeline_mode = #tpu.pipeline_mode<synchronous>, transform_indices = @transform_2, window_bounds = array<i64: 1, 128>}, {pipeline_mode = #tpu.pipeline_mode<synchronous>, transform_indices = @transform_3, window_bounds = array<i64: 1152, 128>}, {transform_indices = @transform_4, window_bounds = array<i64: 1, 16, 16, 128>}, {transform_indices = @transform_5, window_bounds = array<i64: 1, 2, 128>}]} {
    %c0 = arith.constant 0 : index
    %c0_0 = arith.constant 0 : index
    %0 = vector.load %arg2[%c0, %c0_0] : memref<1x128xf32, #tpu.memory_space<vmem>>, vector<1x128xf32>
    %1 = vector.shape_cast %0 : vector<1x128xf32> to vector<1x1x1x128xf32>
    %c0_1 = arith.constant 0 : index
    %c0_2 = arith.constant 0 : index
    %2 = vector.load %arg3[%c0_1, %c0_2] : memref<1x128xf32, #tpu.memory_space<vmem>>, vector<1x128xf32>
    %3 = vector.shape_cast %2 : vector<1x128xf32> to vector<1x1x1x128xf32>
    %c0_3 = arith.constant 0 : index
    %c0_4 = arith.constant 0 : index
    %c0_5 = arith.constant 0 : index
    %c0_6 = arith.constant 0 : index
    %4 = vector.load %arg1[%c0_3, %c0_4, %c0_5, %c0_6] : memref<1x16x16x128xbf16, #tpu.memory_space<vmem>>, vector<1x16x16x128xbf16>
    %5 = arith.extf %4 : vector<1x16x16x128xbf16> to vector<1x16x16x128xf32>
    %6 = vector.broadcast %1 : vector<1x1x1x128xf32> to vector<1x16x16x128xf32>
    %7 = arith.mulf %5, %6 : vector<1x16x16x128xf32>
    %8 = vector.broadcast %3 : vector<1x1x1x128xf32> to vector<1x16x16x128xf32>
    %9 = arith.addf %7, %8 : vector<1x16x16x128xf32>
    %cst = arith.constant 0.000000e+00 : f32
    %10 = vector.broadcast %cst : f32 to vector<1x16x16x128xf32>
    %11 = arith.maximumf %9, %10 : vector<1x16x16x128xf32>
    %cst_7 = arith.constant 0.000000e+00 : f32
    %12 = vector.broadcast %cst_7 : f32 to vector<1x1x18x128xf32>
    %cst_8 = arith.constant 0.000000e+00 : f32
    %13 = vector.broadcast %cst_8 : f32 to vector<1x18x1x128xf32>
    %c0_9 = arith.constant 0 : index
    %c0_10 = arith.constant 0 : index
    %c0_11 = arith.constant 0 : index
    %c0_12 = arith.constant 0 : index
    %14 = vector.load %arg7[%c0_9, %c0_10, %c0_11, %c0_12] : memref<1x18x18x128xf32, #tpu.memory_space<vmem>>, vector<1x1x18x128xf32>
    tpu.vector_store %arg7[%c0_9, %c0_10, %c0_11, %c0_12], %12 {strides = array<i32>} : memref<1x18x18x128xf32, #tpu.memory_space<vmem>>, vector<1x1x18x128xf32>,
    %c0_13 = arith.constant 0 : index
    %c17 = arith.constant 17 : index
    %c0_14 = arith.constant 0 : index
    %c0_15 = arith.constant 0 : index
    %15 = vector.load %arg7[%c0_13, %c17, %c0_14, %c0_15] : memref<1x18x18x128xf32, #tpu.memory_space<vmem>>, vector<1x1x18x128xf32>
    tpu.vector_store %arg7[%c0_13, %c17, %c0_14, %c0_15], %12 {strides = array<i32>} : memref<1x18x18x128xf32, #tpu.memory_space<vmem>>, vector<1x1x18x128xf32>,
    %c0_16 = arith.constant 0 : index
    %c0_17 = arith.constant 0 : index
    %c0_18 = arith.constant 0 : index
    %c0_19 = arith.constant 0 : index
    %16 = vector.load %arg7[%c0_16, %c0_17, %c0_18, %c0_19] : memref<1x18x18x128xf32, #tpu.memory_space<vmem>>, vector<1x18x1x128xf32>
    tpu.vector_store %arg7[%c0_16, %c0_17, %c0_18, %c0_19], %13 {strides = array<i32>} : memref<1x18x18x128xf32, #tpu.memory_space<vmem>>, vector<1x18x1x128xf32>,
    %c0_20 = arith.constant 0 : index
    %c0_21 = arith.constant 0 : index
    %c17_22 = arith.constant 17 : index
    %c0_23 = arith.constant 0 : index
    %17 = vector.load %arg7[%c0_20, %c0_21, %c17_22, %c0_23] : memref<1x18x18x128xf32, #tpu.memory_space<vmem>>, vector<1x18x1x128xf32>
    tpu.vector_store %arg7[%c0_20, %c0_21, %c17_22, %c0_23], %13 {strides = array<i32>} : memref<1x18x18x128xf32, #tpu.memory_space<vmem>>, vector<1x18x1x128xf32>,
    %c0_24 = arith.constant 0 : index
    %c1 = arith.constant 1 : index
    %c1_25 = arith.constant 1 : index
    %c0_26 = arith.constant 0 : index
    %18 = vector.load %arg7[%c0_24, %c1, %c1_25, %c0_26] : memref<1x18x18x128xf32, #tpu.memory_space<vmem>>, vector<1x16x16x128xf32>
    tpu.vector_store %arg7[%c0_24, %c1, %c1_25, %c0_26], %11 {strides = array<i32>} : memref<1x18x18x128xf32, #tpu.memory_space<vmem>>, vector<1x16x16x128xf32>,
    %c0_27 = arith.constant 0 : index
    %c0_28 = arith.constant 0 : index
    %c0_29 = arith.constant 0 : index
    %c0_30 = arith.constant 0 : index
    %19 = vector.load %arg7[%c0_27, %c0_28, %c0_29, %c0_30] : memref<1x18x18x128xf32, #tpu.memory_space<vmem>>, vector<1x18x18x128xf32>
    %c0_31 = arith.constant 0 : index
    %c0_32 = arith.constant 0 : index
    %20 = vector.load %arg4[%c0_31, %c0_32] : memref<1152x128xbf16, #tpu.memory_space<vmem>>, vector<1152x128xbf16>
    %21 = vector.extract_strided_slice %19 {offsets = [0, 0, 0, 0], sizes = [1, 16, 16, 128], strides = [1, 1, 1, 1]} : vector<1x18x18x128xf32> to vector<1x16x16x128xf32>
    %22 = vector.shape_cast %21 : vector<1x16x16x128xf32> to vector<256x128xf32>
    %23 = arith.truncf %22 : vector<256x128xf32> to vector<256x128xbf16>
    %24 = vector.extract_strided_slice %19 {offsets = [0, 0, 1, 0], sizes = [1, 16, 16, 128], strides = [1, 1, 1, 1]} : vector<1x18x18x128xf32> to vector<1x16x16x128xf32>
    %25 = vector.shape_cast %24 : vector<1x16x16x128xf32> to vector<256x128xf32>
    %26 = arith.truncf %25 : vector<256x128xf32> to vector<256x128xbf16>
    %27 = tpu.concatenate %23, %26 in 1 : vector<256x128xbf16>, vector<256x128xbf16> -> vector<256x256xbf16>
    %28 = vector.extract_strided_slice %20 {offsets = [0, 0], sizes = [256, 128], strides = [1, 1]} : vector<1152x128xbf16> to vector<256x128xbf16>
    %cst_33 = arith.constant dense<0.000000e+00> : vector<256x128xf32>
    %29 = tpu.matmul %27, %28, %cst_33 {dimension_numbers = #tpu.dot_dimension_numbers<[1], [0], [0], [1], [0, 0, 1, 1], [], []>} : vector<256x256xbf16>, vector<256x128xbf16>, vector<256x128xf32> -> vector<256x128xf32>
    %30 = vector.extract_strided_slice %19 {offsets = [0, 0, 2, 0], sizes = [1, 16, 16, 128], strides = [1, 1, 1, 1]} : vector<1x18x18x128xf32> to vector<1x16x16x128xf32>
    %31 = vector.shape_cast %30 : vector<1x16x16x128xf32> to vector<256x128xf32>
    %32 = arith.truncf %31 : vector<256x128xf32> to vector<256x128xbf16>
    %33 = vector.extract_strided_slice %19 {offsets = [0, 1, 0, 0], sizes = [1, 16, 16, 128], strides = [1, 1, 1, 1]} : vector<1x18x18x128xf32> to vector<1x16x16x128xf32>
    %34 = vector.shape_cast %33 : vector<1x16x16x128xf32> to vector<256x128xf32>
    %35 = arith.truncf %34 : vector<256x128xf32> to vector<256x128xbf16>
    %36 = tpu.concatenate %32, %35 in 1 : vector<256x128xbf16>, vector<256x128xbf16> -> vector<256x256xbf16>
    %37 = vector.extract_strided_slice %20 {offsets = [256, 0], sizes = [256, 128], strides = [1, 1]} : vector<1152x128xbf16> to vector<256x128xbf16>
    %cst_34 = arith.constant dense<0.000000e+00> : vector<256x128xf32>
    %38 = tpu.matmul %36, %37, %cst_34 {dimension_numbers = #tpu.dot_dimension_numbers<[1], [0], [0], [1], [0, 0, 1, 1], [], []>} : vector<256x256xbf16>, vector<256x128xbf16>, vector<256x128xf32> -> vector<256x128xf32>
    %39 = arith.addf %29, %38 : vector<256x128xf32>
    %40 = vector.extract_strided_slice %19 {offsets = [0, 1, 1, 0], sizes = [1, 16, 16, 128], strides = [1, 1, 1, 1]} : vector<1x18x18x128xf32> to vector<1x16x16x128xf32>
    %41 = vector.shape_cast %40 : vector<1x16x16x128xf32> to vector<256x128xf32>
    %42 = arith.truncf %41 : vector<256x128xf32> to vector<256x128xbf16>
    %43 = vector.extract_strided_slice %19 {offsets = [0, 1, 2, 0], sizes = [1, 16, 16, 128], strides = [1, 1, 1, 1]} : vector<1x18x18x128xf32> to vector<1x16x16x128xf32>
    %44 = vector.shape_cast %43 : vector<1x16x16x128xf32> to vector<256x128xf32>
    %45 = arith.truncf %44 : vector<256x128xf32> to vector<256x128xbf16>
    %46 = tpu.concatenate %42, %45 in 1 : vector<256x128xbf16>, vector<256x128xbf16> -> vector<256x256xbf16>
    %47 = vector.extract_strided_slice %20 {offsets = [512, 0], sizes = [256, 128], strides = [1, 1]} : vector<1152x128xbf16> to vector<256x128xbf16>
    %cst_35 = arith.constant dense<0.000000e+00> : vector<256x128xf32>
    %48 = tpu.matmul %46, %47, %cst_35 {dimension_numbers = #tpu.dot_dimension_numbers<[1], [0], [0], [1], [0, 0, 1, 1], [], []>} : vector<256x256xbf16>, vector<256x128xbf16>, vector<256x128xf32> -> vector<256x128xf32>
    %49 = arith.addf %39, %48 : vector<256x128xf32>
    %50 = vector.extract_strided_slice %19 {offsets = [0, 2, 0, 0], sizes = [1, 16, 16, 128], strides = [1, 1, 1, 1]} : vector<1x18x18x128xf32> to vector<1x16x16x128xf32>
    %51 = vector.shape_cast %50 : vector<1x16x16x128xf32> to vector<256x128xf32>
    %52 = arith.truncf %51 : vector<256x128xf32> to vector<256x128xbf16>
    %53 = vector.extract_strided_slice %19 {offsets = [0, 2, 1, 0], sizes = [1, 16, 16, 128], strides = [1, 1, 1, 1]} : vector<1x18x18x128xf32> to vector<1x16x16x128xf32>
    %54 = vector.shape_cast %53 : vector<1x16x16x128xf32> to vector<256x128xf32>
    %55 = arith.truncf %54 : vector<256x128xf32> to vector<256x128xbf16>
    %56 = tpu.concatenate %52, %55 in 1 : vector<256x128xbf16>, vector<256x128xbf16> -> vector<256x256xbf16>
    %57 = vector.extract_strided_slice %20 {offsets = [768, 0], sizes = [256, 128], strides = [1, 1]} : vector<1152x128xbf16> to vector<256x128xbf16>
    %cst_36 = arith.constant dense<0.000000e+00> : vector<256x128xf32>
    %58 = tpu.matmul %56, %57, %cst_36 {dimension_numbers = #tpu.dot_dimension_numbers<[1], [0], [0], [1], [0, 0, 1, 1], [], []>} : vector<256x256xbf16>, vector<256x128xbf16>, vector<256x128xf32> -> vector<256x128xf32>
    %59 = arith.addf %49, %58 : vector<256x128xf32>
    %60 = vector.extract_strided_slice %19 {offsets = [0, 2, 2, 0], sizes = [1, 16, 16, 128], strides = [1, 1, 1, 1]} : vector<1x18x18x128xf32> to vector<1x16x16x128xf32>
    %61 = vector.shape_cast %60 : vector<1x16x16x128xf32> to vector<256x128xf32>
    %62 = arith.truncf %61 : vector<256x128xf32> to vector<256x128xbf16>
    %63 = vector.extract_strided_slice %20 {offsets = [1024, 0], sizes = [128, 128], strides = [1, 1]} : vector<1152x128xbf16> to vector<128x128xbf16>
    %cst_37 = arith.constant dense<0.000000e+00> : vector<256x128xf32>
    %64 = tpu.matmul %62, %63, %cst_37 {dimension_numbers = #tpu.dot_dimension_numbers<[1], [0], [0], [1], [0, 0, 1, 1], [], []>} : vector<256x128xbf16>, vector<128x128xbf16>, vector<256x128xf32> -> vector<256x128xf32>
    %65 = arith.addf %59, %64 : vector<256x128xf32>
    %66 = vector.shape_cast %65 : vector<256x128xf32> to vector<1x16x16x128xf32>
    %67 = arith.truncf %66 : vector<1x16x16x128xf32> to vector<1x16x16x128xbf16>
    %c0_38 = arith.constant 0 : index
    %c0_39 = arith.constant 0 : index
    %c0_40 = arith.constant 0 : index
    %c0_41 = arith.constant 0 : index
    %68 = vector.load %arg5[%c0_38, %c0_39, %c0_40, %c0_41] : memref<1x16x16x128xbf16, #tpu.memory_space<vmem>>, vector<1x16x16x128xbf16>
    tpu.vector_store %arg5[%c0_38, %c0_39, %c0_40, %c0_41], %67 {strides = array<i32>} : memref<1x16x16x128xbf16, #tpu.memory_space<vmem>>, vector<1x16x16x128xbf16>,
    %cst_42 = arith.constant dense<0.000000e+00> : vector<128xf32>
    %69 = vector.multi_reduction <add>, %65, %cst_42 [0] : vector<256x128xf32> to vector<128xf32>
    %70 = vector.shape_cast %69 : vector<128xf32> to vector<1x128xf32>
    %cst_43 = arith.constant 3.906250e-03 : f32
    %71 = vector.broadcast %cst_43 : f32 to vector<1x128xf32>
    %72 = arith.mulf %70, %71 : vector<1x128xf32>
    %73 = vector.broadcast %72 : vector<1x128xf32> to vector<256x128xf32>
    %74 = arith.subf %65, %73 : vector<256x128xf32>
    %c0_44 = arith.constant 0 : index
    %c0_45 = arith.constant 0 : index
    %c0_46 = arith.constant 0 : index
    %75 = vector.load %arg6[%c0_44, %c0_45, %c0_46] : memref<1x2x128xf32, #tpu.memory_space<vmem>>, vector<1x1x128xf32>
    %76 = vector.shape_cast %75 : vector<1x1x128xf32> to vector<1x128xf32>
    %77 = vector.shape_cast %70 : vector<1x128xf32> to vector<1x1x128xf32>
    tpu.vector_store %arg6[%c0_44, %c0_45, %c0_46], %77 {strides = array<i32>} : memref<1x2x128xf32, #tpu.memory_space<vmem>>, vector<1x1x128xf32>,
    %78 = arith.mulf %74, %74 : vector<256x128xf32>
    %cst_47 = arith.constant dense<0.000000e+00> : vector<128xf32>
    %79 = vector.multi_reduction <add>, %78, %cst_47 [0] : vector<256x128xf32> to vector<128xf32>
    %80 = vector.shape_cast %79 : vector<128xf32> to vector<1x128xf32>
    %c0_48 = arith.constant 0 : index
    %c1_49 = arith.constant 1 : index
    %c0_50 = arith.constant 0 : index
    %81 = vector.load %arg6[%c0_48, %c1_49, %c0_50] : memref<1x2x128xf32, #tpu.memory_space<vmem>>, vector<1x1x128xf32>
    %82 = vector.shape_cast %81 : vector<1x1x128xf32> to vector<1x128xf32>
    %83 = vector.shape_cast %80 : vector<1x128xf32> to vector<1x1x128xf32>
    tpu.vector_store %arg6[%c0_48, %c1_49, %c0_50], %83 {strides = array<i32>} : memref<1x2x128xf32, #tpu.memory_space<vmem>>, vector<1x1x128xf32>,
    return
  }
  func.func @transform_0(%arg0: i32) -> (i32, i32, i32, i32) {
    %c0_i32 = arith.constant 0 : i32
    %c0_i32_0 = arith.constant 0 : i32
    %c0_i32_1 = arith.constant 0 : i32
    %c0_i32_2 = arith.constant 0 : i32
    return %arg0, %c0_i32, %c0_i32_0, %c0_i32_1 : i32, i32, i32, i32
  }
  func.func @transform_1(%arg0: i32) -> (i32, i32) {
    %c0_i32 = arith.constant 0 : i32
    %c0_i32_0 = arith.constant 0 : i32
    %c0_i32_1 = arith.constant 0 : i32
    return %c0_i32, %c0_i32_0 : i32, i32
  }
  func.func @transform_2(%arg0: i32) -> (i32, i32) {
    %c0_i32 = arith.constant 0 : i32
    %c0_i32_0 = arith.constant 0 : i32
    %c0_i32_1 = arith.constant 0 : i32
    return %c0_i32, %c0_i32_0 : i32, i32
  }
  func.func @transform_3(%arg0: i32) -> (i32, i32) {
    %c0_i32 = arith.constant 0 : i32
    %c0_i32_0 = arith.constant 0 : i32
    %c0_i32_1 = arith.constant 0 : i32
    return %c0_i32, %c0_i32_0 : i32, i32
  }
  func.func @transform_4(%arg0: i32) -> (i32, i32, i32, i32) {
    %c0_i32 = arith.constant 0 : i32
    %c0_i32_0 = arith.constant 0 : i32
    %c0_i32_1 = arith.constant 0 : i32
    %c0_i32_2 = arith.constant 0 : i32
    return %arg0, %c0_i32, %c0_i32_0, %c0_i32_1 : i32, i32, i32, i32
  }
  func.func @transform_5(%arg0: i32) -> (i32, i32, i32) {
    %c0_i32 = arith.constant 0 : i32
    %c0_i32_0 = arith.constant 0 : i32
    %c0_i32_1 = arith.constant 0 : i32
    return %arg0, %c0_i32, %c0_i32_0 : i32, i32, i32
  }
}

</mosaic_0001>

<llo_original>
// kernel: residual_forward.5
$region0: #{residual_forward.5}
  #allocation0 [shape = 'u32[]', space=smem, size = 0x4, offset = 0x4, fixed_abs, tag = 'smem constant byte address 0x4 - core index']
  #allocation1 [shape = 'u32[144,128]{1,0:T(1,128)}', space=vmem, size = 0x12000, scoped, tag = 'internal scratch']
  %s0 = inlined_call_operand.hbm [shape: bf16[2,16,16,128], index: 0, kind: input, shape index: {}]
  %s1 = inlined_call_operand.hbm [shape: f32[1,128], index: 1, kind: input, shape index: {}]
  %s2 = inlined_call_operand.hbm [shape: f32[1,128], index: 2, kind: input, shape index: {}]
  %s3 = inlined_call_operand.hbm [shape: bf16[2,16,16,128], index: 3, kind: input, shape index: {}]
  %s4 = inlined_call_operand.hbm [shape: f32[2,16,16,128], index: 4, kind: output, shape index: {}]
  %s5 = sld [smem:[#allocation0]]
  $region65: #{residual_forward.5} parent=0
    _
  %s7 = ssub.s32 1, %s5
  %s8 = scalar_select 0, %s7, %s5
  $region1: #{residual_forward.5} parent=0
    #allocation2 [shape = 'u8[131072]{0}', space=vmem, size = 0x20000, scoped, tag = 'input window, operand 0']
    #allocation3 [shape = 's32[2]{0}', space=sflag, size = 0x8, scoped, tag = 'scoped memory for residual_forward.5']
    #allocation4 [shape = 's32[2]{0}', space=sflag, size = 0x8, scoped, tag = 'scoped memory for residual_forward.5']
    #allocation5 [shape = 'u8[512]{0}', space=vmem, size = 0x400, scoped, tag = 'input window, operand 1, single buffered']
    #allocation6 [shape = 's32[1]{0}', space=sflag, size = 0x4, scoped, tag = 'scoped memory for residual_forward.5']
    #allocation7 [shape = 'u8[512]{0}', space=vmem, size = 0x400, scoped, tag = 'input window, operand 2, single buffered']
    #allocation8 [shape = 'u8[131072]{0}', space=vmem, size = 0x20000, scoped, tag = 'input window, operand 3']
    #allocation9 [shape = 's32[2]{0}', space=sflag, size = 0x8, scoped, tag = 'scoped memory for residual_forward.5']
    #allocation10 [shape = 'u8[262144]{0}', space=vmem, size = 0x40000, scoped, tag = 'output window, operand 0']
    %9 = vsyncpa [#allocation3], 0
    %s10 = scalar_lea.sflag [#allocation3], 1
    %11 = vsyncpa %s10, 0
    %12 = vsyncpa [#allocation6], 0
    %13 = vsyncpa [#allocation9], 0
    %s14 = scalar_lea.sflag [#allocation9], 1
    %15 = vsyncpa %s14, 0
    %16 = vsyncpa [#allocation4], 0
    %s17 = scalar_lea.sflag [#allocation4], 1
    %18 = vsyncpa %s17, 0
    loop: start=0, step=1, limit=4
    $region2: #{residual_forward.5} parent=1 // loop_pre_header
      _
    $region3: #{residual_forward.5} parent=1 // loop_header
      %s20 = sphi 0, %s24
      %p21 = scmp.ge.s32.totalorder %s20, 4
      %s30 = sphi 0, %s32
      %s33 = sphi 0, %s30
      %s34 = sphi 0, %s33
      %s50 = sphi 0, %s34
      %s54 = sphi 0, %s54
      %s56 = sphi 0, %s54
      %s57 = sphi 0, %s56
      %s71 = sphi 0, %s57
      %s75 = sphi 0, %s75
      %s77 = sphi 0, %s75
      %s78 = sphi 0, %s77
      %s92 = sphi 0, %s78
      %s98 = sphi 0, %s100
      %s101 = sphi 0, %s98
      %s102 = sphi 0, %s101
      %s118 = sphi 0, %s102
      %s124 = sphi 0, %s126
      %s127 = sphi 0, %s124
      %s128 = sphi 0, %s127
      %s144 = sphi 0, %s128
    $region4: #{residual_forward.5} parent=1 // loop_header_branch
      %23 = sbr.rel (%p21) target = $region8
    $region5: #{residual_forward.5} parent=1 // loop_body
      %s25 = ssub.s32 %s20, 1
      %s26 = ssub.s32 %s20, 2
      %s27 = sadd.s32 %s20, 1
      %s28 = ssub.s32 %s20, %s27
      %p29 = scmp.eq.s32.totalorder %s28, 0
      %s31 = sadd.s32 %s30, 1
      %s32 = scalar_select %p29, %s30, %s31
      %p35 = pneg %p29
      %p36 = scmp.eq.s32.totalorder %s20, 1
      %p37 = por %p35, %p36
      %p38 = scmp.ne.s32.totalorder %s30, %s33
      %p39 = scmp.eq.s32.totalorder %s20, 0
      %p40 = por %p38, %p39
      %p41 = scmp.ne.s32.totalorder %s30, %s33
      %p42 = scmp.eq.s32.totalorder %s25, 1
      %p43 = por %p41, %p42
      %p44 = scmp.ne.s32.totalorder %s33, %s34
      %p45 = scmp.eq.s32.totalorder %s25, 0
      %p46 = por %p44, %p45
      %p47 = scmp.ne.s32.totalorder %s33, %s34
      %p48 = scmp.eq.s32.totalorder %s26, 1
      %p49 = por %p47, %p48
      %p51 = scmp.ne.s32.totalorder %s34, %s50
      %p52 = scmp.eq.s32.totalorder %s26, 0
      %p53 = por %p51, %p52
      %s55 = sadd.s32 %s54, 1
      %p58 = scmp.eq.s32.totalorder %s20, 1
      %p59 = scmp.ne.s32.totalorder %s54, %s56
      %p60 = scmp.eq.s32.totalorder %s20, 0
      %p61 = por %p59, %p60
      %p62 = scmp.ne.s32.totalorder %s54, %s56
      %p63 = scmp.eq.s32.totalorder %s25, 1
      %p64 = por %p62, %p63
      %p65 = scmp.ne.s32.totalorder %s56, %s57
      %p66 = scmp.eq.s32.totalorder %s25, 0
      %p67 = por %p65, %p66
      %p68 = scmp.ne.s32.totalorder %s56, %s57
      %p69 = scmp.eq.s32.totalorder %s26, 1
      %p70 = por %p68, %p69
      %p72 = scmp.ne.s32.totalorder %s57, %s71
      %p73 = scmp.eq.s32.totalorder %s26, 0
      %p74 = por %p72, %p73
      %s76 = sadd.s32 %s75, 1
      %p79 = scmp.eq.s32.totalorder %s20, 1
      %p80 = scmp.ne.s32.totalorder %s75, %s77
      %p81 = scmp.eq.s32.totalorder %s20, 0
      %p82 = por %p80, %p81
      %p83 = scmp.ne.s32.totalorder %s75, %s77
      %p84 = scmp.eq.s32.totalorder %s25, 1
      %p85 = por %p83, %p84
      %p86 = scmp.ne.s32.totalorder %s77, %s78
      %p87 = scmp.eq.s32.totalorder %s25, 0
      %p88 = por %p86, %p87
      %p89 = scmp.ne.s32.totalorder %s77, %s78
      %p90 = scmp.eq.s32.totalorder %s26, 1
      %p91 = por %p89, %p90
      %p93 = scmp.ne.s32.totalorder %s78, %s92
      %p94 = scmp.eq.s32.totalorder %s26, 0
      %p95 = por %p93, %p94
      %s96 = ssub.s32 %s20, %s27
      %p97 = scmp.eq.s32.totalorder %s96, 0
      %s99 = sadd.s32 %s98, 1
      %s100 = scalar_select %p97, %s98, %s99
      %p103 = pneg %p97
      %p104 = scmp.eq.s32.totalorder %s20, 1
      %p105 = por %p103, %p104
      %p106 = scmp.ne.s32.totalorder %s98, %s101
      %p107 = scmp.eq.s32.totalorder %s20, 0
      %p108 = por %p106, %p107
      %p109 = scmp.ne.s32.totalorder %s98, %s101
      %p110 = scmp.eq.s32.totalorder %s25, 1
      %p111 = por %p109, %p110
      %p112 = scmp.ne.s32.totalorder %s101, %s102
      %p113 = scmp.eq.s32.totalorder %s25, 0
      %p114 = por %p112, %p113
      %p115 = scmp.ne.s32.totalorder %s101, %s102
      %p116 = scmp.eq.s32.totalorder %s26, 1
      %p117 = por %p115, %p116
      %p119 = scmp.ne.s32.totalorder %s102, %s118
      %p120 = scmp.eq.s32.totalorder %s26, 0
      %p121 = por %p119, %p120
      %s122 = ssub.s32 %s20, %s27
      %p123 = scmp.eq.s32.totalorder %s122, 0
      %s125 = sadd.s32 %s124, 1
      %s126 = scalar_select %p123, %s124, %s125
      %p129 = pneg %p123
      %p130 = scmp.eq.s32.totalorder %s20, 1
      %p131 = por %p129, %p130
      %p132 = scmp.ne.s32.totalorder %s124, %s127
      %p133 = scmp.eq.s32.totalorder %s20, 0
      %p134 = por %p132, %p133
      %p135 = scmp.ne.s32.totalorder %s124, %s127
      %p136 = scmp.eq.s32.totalorder %s25, 1
      %p137 = por %p135, %p136
      %p138 = scmp.ne.s32.totalorder %s127, %s128
      %p139 = scmp.eq.s32.totalorder %s25, 0
      %p140 = por %p138, %p139
      %p141 = scmp.ne.s32.totalorder %s127, %s128
      %p142 = scmp.eq.s32.totalorder %s26, 1
      %p143 = por %p141, %p142
      %p145 = scmp.ne.s32.totalorder %s128, %s144
      %p146 = scmp.eq.s32.totalorder %s26, 0
      %p147 = por %p145, %p146
      %p148 = scmp.le.s32.totalorder 1, %s20
      %p149 = scmp.lt.s32.totalorder %s20, 3
      %p150 = pnand %p148, %p149
      %p151 = pneg %p150
      // Predicated region
      $region9: #{residual_forward.5} parent=5 // pred_check
        _
      $region10: #{residual_forward.5} parent=5 // pred_check_branch
        %153 = sbr.rel (%p150) target = $region12
      $region11: #{residual_forward.5} parent=5 // pred_region
        %s154 = ssub.s32 %s20, 1
        // Predicated region
        $region13: #{residual_forward.5} parent=11 // pred_check
          %p155 = pneg %p67
        $region14: #{residual_forward.5} parent=11 // pred_check_branch
          %157 = sbr.rel (%p155) target = $region16
        $region15: #{residual_forward.5} parent=11 // pred_region
          %s159 = ssub.s32 16, 16
          %160 = vsyncadd [#allocation6], %s159
          %s162 = sshll.u32 [#allocation5], 4
          %s163 = int_to_ptr.vmem [resolvable:$true] %s162
          %165 = dma.hbm_to_vmem [thread:$0]  %s1, 16, %s163, [#allocation6]
        $region16: #{residual_forward.5} parent=11 // pred_fallthru
          _
        // Predicated region
        $region17: #{residual_forward.5} parent=11 // pred_check
          %p166 = pneg %p88
        $region18: #{residual_forward.5} parent=11 // pred_check_branch
          %168 = sbr.rel (%p166) target = $region20
        $region19: #{residual_forward.5} parent=11 // pred_region
          %s170 = ssub.s32 16, 16
          %171 = vsyncadd [#allocation6], %s170
          %s173 = sshll.u32 [#allocation7], 4
          %s174 = int_to_ptr.vmem [resolvable:$true] %s173
          %176 = dma.hbm_to_vmem [thread:$0]  %s2, 16, %s174, [#allocation6]
        $region20: #{residual_forward.5} parent=11 // pred_fallthru
          _
      $region12: #{residual_forward.5} parent=5 // pred_fallthru
        _
      %p177 = scmp.lt.s32.totalorder %s20, 2
      // Predicated region
      $region21: #{residual_forward.5} parent=5 // pred_check
        %p178 = pneg %p177
      $region22: #{residual_forward.5} parent=5 // pred_check_branch
        %180 = sbr.rel (%p178) target = $region24
      $region23: #{residual_forward.5} parent=5 // pred_region
        // Predicated region
        $region25: #{residual_forward.5} parent=23 // pred_check
          %p181 = pneg %p40
        $region26: #{residual_forward.5} parent=23 // pred_check_branch
          %183 = sbr.rel (%p181) target = $region28
        $region27: #{residual_forward.5} parent=23 // pred_region
          %s184 = sand.u32 %s30, 1
          %s185 = scalar_lea.sflag [#allocation3], %s184
          %s186 = sand.u32 %s30, 1
          %s187 = smul.addr %s186, 128
          %s188 = scalar_lea.vmem [#allocation2], %s187
          %s190 = ssub.s32 2048, 2048
          %191 = vsyncadd %s185, %s190
          %s192 = smul.addr %s20, 32
          %s193 = smul.addr %s192, 64
          %s194 = scalar_lea.hbm %s0, %s193
          %s195 = sshll.u32 %s188, 4
          %s196 = int_to_ptr.vmem [resolvable:$true] %s195
          %201 = dma.hbm_to_vmem [thread:$0]  %s194, 2048, %s196, %s185, 64, 64, 4
        $region28: #{residual_forward.5} parent=23 // pred_fallthru
          _
        // Predicated region
        $region29: #{residual_forward.5} parent=23 // pred_check
          %p202 = pneg %p108
        $region30: #{residual_forward.5} parent=23 // pred_check_branch
          %204 = sbr.rel (%p202) target = $region32
        $region31: #{residual_forward.5} parent=23 // pred_region
          %s205 = sand.u32 %s98, 1
          %s206 = scalar_lea.sflag [#allocation9], %s205
          %s207 = sand.u32 %s98, 1
          %s208 = smul.addr %s207, 128
          %s209 = scalar_lea.vmem [#allocation8], %s208
          %s211 = ssub.s32 2048, 2048
          %212 = vsyncadd %s206, %s211
          %s213 = smul.addr %s20, 32
          %s214 = smul.addr %s213, 64
          %s215 = scalar_lea.hbm %s3, %s214
          %s216 = sshll.u32 %s209, 4
          %s217 = int_to_ptr.vmem [resolvable:$true] %s216
          %222 = dma.hbm_to_vmem [thread:$0]  %s215, 2048, %s217, %s206, 64, 64, 4
        $region32: #{residual_forward.5} parent=23 // pred_fallthru
          _
      $region24: #{residual_forward.5} parent=5 // pred_fallthru
        _
      %p223 = scmp.le.s32.totalorder 1, %s20
      %p224 = scmp.lt.s32.totalorder %s20, 3
      %p225 = pnand %p223, %p224
      %p226 = pneg %p225
      // Predicated region
      $region33: #{residual_forward.5} parent=5 // pred_check
        _
      $region34: #{residual_forward.5} parent=5 // pred_check_branch
        %228 = sbr.rel (%p225) target = $region36
      $region35: #{residual_forward.5} parent=5 // pred_region
        %s229 = ssub.s32 %s20, 1
        %s230 = sand.u32 %s33, 1
        %s231 = scalar_lea.sflag [#allocation3], %s230
        %s232 = sand.u32 %s33, 1
        %s233 = smul.addr %s232, 128
        %s234 = scalar_lea.vmem [#allocation2], %s233
        // Predicated region
        $region37: #{residual_forward.5} parent=35 // pred_check
          %p235 = pneg %p46
        $region38: #{residual_forward.5} parent=35 // pred_check_branch
          %237 = sbr.rel (%p235) target = $region40
        $region39: #{residual_forward.5} parent=35 // pred_region
          %238 = dma.done %s231, 2048
        $region40: #{residual_forward.5} parent=35 // pred_fallthru
          _
        // Predicated region
        $region41: #{residual_forward.5} parent=35 // pred_check
          %p239 = pneg %p67
        $region42: #{residual_forward.5} parent=35 // pred_check_branch
          %241 = sbr.rel (%p239) target = $region44
        $region43: #{residual_forward.5} parent=35 // pred_region
          %242 = dma.done [#allocation6], 16
        $region44: #{residual_forward.5} parent=35 // pred_fallthru
          _
        // Predicated region
        $region45: #{residual_forward.5} parent=35 // pred_check
          %p243 = pneg %p88
        $region46: #{residual_forward.5} parent=35 // pred_check_branch
          %245 = sbr.rel (%p243) target = $region48
        $region47: #{residual_forward.5} parent=35 // pred_region
          %246 = dma.done [#allocation6], 16
        $region48: #{residual_forward.5} parent=35 // pred_fallthru
          _
        %s247 = sand.u32 %s101, 1
        %s248 = scalar_lea.sflag [#allocation9], %s247
        %s249 = sand.u32 %s101, 1
        %s250 = smul.addr %s249, 128
        %s251 = scalar_lea.vmem [#allocation8], %s250
        // Predicated region
        $region49: #{residual_forward.5} parent=35 // pred_check
          %p252 = pneg %p114
        $region50: #{residual_forward.5} parent=35 // pred_check_branch
          %254 = sbr.rel (%p252) target = $region52
        $region51: #{residual_forward.5} parent=35 // pred_region
          %255 = dma.done %s248, 2048
        $region52: #{residual_forward.5} parent=35 // pred_fallthru
          _
        %s256 = sand.u32 %s33, 1
        %s257 = scalar_lea.sflag [#allocation3], %s256
        %s258 = sand.u32 %s33, 1
        %s259 = smul.addr %s258, 128
        %s260 = scalar_lea.vmem [#allocation2], %s259
        %p261 = pneg %p46
        %p262 = pneg %p43
        %p263 = pneg %p67
        %p264 = pneg %p64
        %p265 = pneg %p88
        %p266 = pneg %p85
        %s267 = sand.u32 %s101, 1
        %s268 = scalar_lea.sflag [#allocation9], %s267
        %s269 = sand.u32 %s101, 1
        %s270 = smul.addr %s269, 128
        %s271 = scalar_lea.vmem [#allocation8], %s270
        %p272 = pneg %p114
        %p273 = pneg %p111
        %p274 = pneg %p140
        %p275 = pneg %p137
        %s276 = sand.u32 %s127, 1
        %s277 = scalar_lea.sflag [#allocation4], %s276
        %s278 = sand.u32 %s127, 1
        %s279 = smul.addr %s278, 256
        %s280 = scalar_lea.vmem [#allocation10], %s279
        %v281 = vld [vmem:[#allocation5] sm:$0x1]
        %v282 = vld [vmem:[#allocation7] sm:$0x1]
        %v283 = vld [vmem:[%s234] sm:$0xf]
        %v284 = vld [vmem:[%s234 + $0x4] sm:$0xf]
        %v285 = vld [vmem:[%s234 + $0x8] sm:$0xf]
        %v286 = vld [vmem:[%s234 + $0xc] sm:$0xf]
        %v287 = vld [vmem:[%s234 + $0x10] sm:$0xf]
        %v288 = vld [vmem:[%s234 + $0x14] sm:$0xf]
        %v289 = vld [vmem:[%s234 + $0x18] sm:$0xf]
        %v290 = vld [vmem:[%s234 + $0x1c] sm:$0xf]
        %v291 = vld [vmem:[%s234 + $0x20] sm:$0xf]
        %v292 = vld [vmem:[%s234 + $0x24] sm:$0xf]
        %v293 = vld [vmem:[%s234 + $0x28] sm:$0xf]
        %v294 = vld [vmem:[%s234 + $0x2c] sm:$0xf]
        %v295 = vld [vmem:[%s234 + $0x30] sm:$0xf]
        %v296 = vld [vmem:[%s234 + $0x34] sm:$0xf]
        %v297 = vld [vmem:[%s234 + $0x38] sm:$0xf]
        %v298 = vld [vmem:[%s234 + $0x3c] sm:$0xf]
        %v299 = vld [vmem:[%s234 + $0x40] sm:$0xf]
        %v300 = vld [vmem:[%s234 + $0x44] sm:$0xf]
        %v301 = vld [vmem:[%s234 + $0x48] sm:$0xf]
        %v302 = vld [vmem:[%s234 + $0x4c] sm:$0xf]
        %v303 = vld [vmem:[%s234 + $0x50] sm:$0xf]
        %v304 = vld [vmem:[%s234 + $0x54] sm:$0xf]
        %v305 = vld [vmem:[%s234 + $0x58] sm:$0xf]
        %v306 = vld [vmem:[%s234 + $0x5c] sm:$0xf]
        %v307 = vld [vmem:[%s234 + $0x60] sm:$0xf]
        %v308 = vld [vmem:[%s234 + $0x64] sm:$0xf]
        %v309 = vld [vmem:[%s234 + $0x68] sm:$0xf]
        %v310 = vld [vmem:[%s234 + $0x6c] sm:$0xf]
        %v311 = vld [vmem:[%s234 + $0x70] sm:$0xf]
        %v312 = vld [vmem:[%s234 + $0x74] sm:$0xf]
        %v313 = vld [vmem:[%s234 + $0x78] sm:$0xf]
        %v314 = vld [vmem:[%s234 + $0x7c] sm:$0xf]
        %v315 = vunpack.c.l.bf16 %v283
        %v316 = vunpack.c.l.bf16 %v284
        %v317 = vunpack.c.l.bf16 %v285
        %v318 = vunpack.c.l.bf16 %v286
        %v319 = vunpack.c.l.bf16 %v287
        %v320 = vunpack.c.l.bf16 %v288
        %v321 = vunpack.c.l.bf16 %v289
        %v322 = vunpack.c.l.bf16 %v290
        %v323 = vunpack.c.l.bf16 %v291
        %v324 = vunpack.c.l.bf16 %v292
        %v325 = vunpack.c.l.bf16 %v293
        %v326 = vunpack.c.l.bf16 %v294
        %v327 = vunpack.c.l.bf16 %v295
        %v328 = vunpack.c.l.bf16 %v296
        %v329 = vunpack.c.l.bf16 %v297
        %v330 = vunpack.c.l.bf16 %v298
        %v331 = vunpack.c.l.bf16 %v299
        %v332 = vunpack.c.l.bf16 %v300
        %v333 = vunpack.c.l.bf16 %v301
        %v334 = vunpack.c.l.bf16 %v302
        %v335 = vunpack.c.l.bf16 %v303
        %v336 = vunpack.c.l.bf16 %v304
        %v337 = vunpack.c.l.bf16 %v305
        %v338 = vunpack.c.l.bf16 %v306
        %v339 = vunpack.c.l.bf16 %v307
        %v340 = vunpack.c.l.bf16 %v308
        %v341 = vunpack.c.l.bf16 %v309
        %v342 = vunpack.c.l.bf16 %v310
        %v343 = vunpack.c.l.bf16 %v311
        %v344 = vunpack.c.l.bf16 %v312
        %v345 = vunpack.c.l.bf16 %v313
        %v346 = vunpack.c.l.bf16 %v314
        %v347 = vld [vmem:[%s251] sm:$0xf]
        %v348 = vld [vmem:[%s251 + $0x4] sm:$0xf]
        %v349 = vld [vmem:[%s251 + $0x8] sm:$0xf]
        %v350 = vld [vmem:[%s251 + $0xc] sm:$0xf]
        %v351 = vld [vmem:[%s251 + $0x10] sm:$0xf]
        %v352 = vld [vmem:[%s251 + $0x14] sm:$0xf]
        %v353 = vld [vmem:[%s251 + $0x18] sm:$0xf]
        %v354 = vld [vmem:[%s251 + $0x1c] sm:$0xf]
        %v355 = vld [vmem:[%s251 + $0x20] sm:$0xf]
        %v356 = vld [vmem:[%s251 + $0x24] sm:$0xf]
        %v357 = vld [vmem:[%s251 + $0x28] sm:$0xf]
        %v358 = vld [vmem:[%s251 + $0x2c] sm:$0xf]
        %v359 = vld [vmem:[%s251 + $0x30] sm:$0xf]
        %v360 = vld [vmem:[%s251 + $0x34] sm:$0xf]
        %v361 = vld [vmem:[%s251 + $0x38] sm:$0xf]
        %v362 = vld [vmem:[%s251 + $0x3c] sm:$0xf]
        %v363 = vld [vmem:[%s251 + $0x40] sm:$0xf]
        %v364 = vld [vmem:[%s251 + $0x44] sm:$0xf]
        %v365 = vld [vmem:[%s251 + $0x48] sm:$0xf]
        %v366 = vld [vmem:[%s251 + $0x4c] sm:$0xf]
        %v367 = vld [vmem:[%s251 + $0x50] sm:$0xf]
        %v368 = vld [vmem:[%s251 + $0x54] sm:$0xf]
        %v369 = vld [vmem:[%s251 + $0x58] sm:$0xf]
        %v370 = vld [vmem:[%s251 + $0x5c] sm:$0xf]
        %v371 = vld [vmem:[%s251 + $0x60] sm:$0xf]
        %v372 = vld [vmem:[%s251 + $0x64] sm:$0xf]
        %v373 = vld [vmem:[%s251 + $0x68] sm:$0xf]
        %v374 = vld [vmem:[%s251 + $0x6c] sm:$0xf]
        %v375 = vld [vmem:[%s251 + $0x70] sm:$0xf]
        %v376 = vld [vmem:[%s251 + $0x74] sm:$0xf]
        %v377 = vld [vmem:[%s251 + $0x78] sm:$0xf]
        %v378 = vld [vmem:[%s251 + $0x7c] sm:$0xf]
        %v379 = vunpack.c.l.bf16 %v347
        %v380 = vunpack.c.l.bf16 %v348
        %v381 = vunpack.c.l.bf16 %v349
        %v382 = vunpack.c.l.bf16 %v350
        %v383 = vunpack.c.l.bf16 %v351
        %v384 = vunpack.c.l.bf16 %v352
        %v385 = vunpack.c.l.bf16 %v353
        %v386 = vunpack.c.l.bf16 %v354
        %v387 = vunpack.c.l.bf16 %v355
        %v388 = vunpack.c.l.bf16 %v356
        %v389 = vunpack.c.l.bf16 %v357
        %v390 = vunpack.c.l.bf16 %v358
        %v391 = vunpack.c.l.bf16 %v359
        %v392 = vunpack.c.l.bf16 %v360
        %v393 = vunpack.c.l.bf16 %v361
        %v394 = vunpack.c.l.bf16 %v362
        %v395 = vunpack.c.l.bf16 %v363
        %v396 = vunpack.c.l.bf16 %v364
        %v397 = vunpack.c.l.bf16 %v365
        %v398 = vunpack.c.l.bf16 %v366
        %v399 = vunpack.c.l.bf16 %v367
        %v400 = vunpack.c.l.bf16 %v368
        %v401 = vunpack.c.l.bf16 %v369
        %v402 = vunpack.c.l.bf16 %v370
        %v403 = vunpack.c.l.bf16 %v371
        %v404 = vunpack.c.l.bf16 %v372
        %v405 = vunpack.c.l.bf16 %v373
        %v406 = vunpack.c.l.bf16 %v374
        %v407 = vunpack.c.l.bf16 %v375
        %v408 = vunpack.c.l.bf16 %v376
        %v409 = vunpack.c.l.bf16 %v377
        %v410 = vunpack.c.l.bf16 %v378
        %v412 = vlaneseq
        %v413 = vshrl.u32 %v412, 7
        %v414 = vsub.s32 0, %v413
        %v415 = vrot.slane %v281, %v414
        %v417 = vmul.f32 %v315, %v415
        %v418 = vmul.f32 %v316, %v415
        %v419 = vmul.f32 %v317, %v415
        %v420 = vmul.f32 %v318, %v415
        %v421 = vmul.f32 %v319, %v415
        %v422 = vmul.f32 %v320, %v415
        %v423 = vmul.f32 %v321, %v415
        %v424 = vmul.f32 %v322, %v415
        %v425 = vmul.f32 %v323, %v415
        %v426 = vmul.f32 %v324, %v415
        %v427 = vmul.f32 %v325, %v415
        %v428 = vmul.f32 %v326, %v415
        %v429 = vmul.f32 %v327, %v415
        %v430 = vmul.f32 %v328, %v415
        %v431 = vmul.f32 %v329, %v415
        %v432 = vmul.f32 %v330, %v415
        %v433 = vmul.f32 %v331, %v415
        %v434 = vmul.f32 %v332, %v415
        %v435 = vmul.f32 %v333, %v415
        %v436 = vmul.f32 %v334, %v415
        %v437 = vmul.f32 %v335, %v415
        %v438 = vmul.f32 %v336, %v415
        %v439 = vmul.f32 %v337, %v415
        %v440 = vmul.f32 %v338, %v415
        %v441 = vmul.f32 %v339, %v415
        %v442 = vmul.f32 %v340, %v415
        %v443 = vmul.f32 %v341, %v415
        %v444 = vmul.f32 %v342, %v415
        %v445 = vmul.f32 %v343, %v415
        %v446 = vmul.f32 %v344, %v415
        %v447 = vmul.f32 %v345, %v415
        %v448 = vmul.f32 %v346, %v415
        %v450 = vlaneseq
        %v451 = vshrl.u32 %v450, 7
        %v452 = vsub.s32 0, %v451
        %v453 = vrot.slane %v282, %v452
        %v455 = vadd.f32 %v417, %v453
        %v456 = vadd.f32 %v418, %v453
        %v457 = vadd.f32 %v419, %v453
        %v458 = vadd.f32 %v420, %v453
        %v459 = vadd.f32 %v421, %v453
        %v460 = vadd.f32 %v422, %v453
        %v461 = vadd.f32 %v423, %v453
        %v462 = vadd.f32 %v424, %v453
        %v463 = vadd.f32 %v425, %v453
        %v464 = vadd.f32 %v426, %v453
        %v465 = vadd.f32 %v427, %v453
        %v466 = vadd.f32 %v428, %v453
        %v467 = vadd.f32 %v429, %v453
        %v468 = vadd.f32 %v430, %v453
        %v469 = vadd.f32 %v431, %v453
        %v470 = vadd.f32 %v432, %v453
        %v471 = vadd.f32 %v433, %v453
        %v472 = vadd.f32 %v434, %v453
        %v473 = vadd.f32 %v435, %v453
        %v474 = vadd.f32 %v436, %v453
        %v475 = vadd.f32 %v437, %v453
        %v476 = vadd.f32 %v438, %v453
        %v477 = vadd.f32 %v439, %v453
        %v478 = vadd.f32 %v440, %v453
        %v479 = vadd.f32 %v441, %v453
        %v480 = vadd.f32 %v442, %v453
        %v481 = vadd.f32 %v443, %v453
        %v482 = vadd.f32 %v444, %v453
        %v483 = vadd.f32 %v445, %v453
        %v484 = vadd.f32 %v446, %v453
        %v485 = vadd.f32 %v447, %v453
        %v486 = vadd.f32 %v448, %v453
        %v487 = vadd.f32 %v455, %v379
        %v488 = vadd.f32 %v456, %v380
        %v489 = vadd.f32 %v457, %v381
        %v490 = vadd.f32 %v458, %v382
        %v491 = vadd.f32 %v459, %v383
        %v492 = vadd.f32 %v460, %v384
        %v493 = vadd.f32 %v461, %v385
        %v494 = vadd.f32 %v462, %v386
        %v495 = vadd.f32 %v463, %v387
        %v496 = vadd.f32 %v464, %v388
        %v497 = vadd.f32 %v465, %v389
        %v498 = vadd.f32 %v466, %v390
        %v499 = vadd.f32 %v467, %v391
        %v500 = vadd.f32 %v468, %v392
        %v501 = vadd.f32 %v469, %v393
        %v502 = vadd.f32 %v470, %v394
        %v503 = vadd.f32 %v471, %v395
        %v504 = vadd.f32 %v472, %v396
        %v505 = vadd.f32 %v473, %v397
        %v506 = vadd.f32 %v474, %v398
        %v507 = vadd.f32 %v475, %v399
        %v508 = vadd.f32 %v476, %v400
        %v509 = vadd.f32 %v477, %v401
        %v510 = vadd.f32 %v478, %v402
        %v511 = vadd.f32 %v479, %v403
        %v512 = vadd.f32 %v480, %v404
        %v513 = vadd.f32 %v481, %v405
        %v514 = vadd.f32 %v482, %v406
        %v515 = vadd.f32 %v483, %v407
        %v516 = vadd.f32 %v484, %v408
        %v517 = vadd.f32 %v485, %v409
        %v518 = vadd.f32 %v486, %v410
        %v519 = vmax.f32 %v487, 0.0
        %v520 = vmax.f32 %v488, 0.0
        %v521 = vmax.f32 %v489, 0.0
        %v522 = vmax.f32 %v490, 0.0
        %v523 = vmax.f32 %v491, 0.0
        %v524 = vmax.f32 %v492, 0.0
        %v525 = vmax.f32 %v493, 0.0
        %v526 = vmax.f32 %v494, 0.0
        %v527 = vmax.f32 %v495, 0.0
        %v528 = vmax.f32 %v496, 0.0
        %v529 = vmax.f32 %v497, 0.0
        %v530 = vmax.f32 %v498, 0.0
        %v531 = vmax.f32 %v499, 0.0
        %v532 = vmax.f32 %v500, 0.0
        %v533 = vmax.f32 %v501, 0.0
        %v534 = vmax.f32 %v502, 0.0
        %v535 = vmax.f32 %v503, 0.0
        %v536 = vmax.f32 %v504, 0.0
        %v537 = vmax.f32 %v505, 0.0
        %v538 = vmax.f32 %v506, 0.0
        %v539 = vmax.f32 %v507, 0.0
        %v540 = vmax.f32 %v508, 0.0
        %v541 = vmax.f32 %v509, 0.0
        %v542 = vmax.f32 %v510, 0.0
        %v543 = vmax.f32 %v511, 0.0
        %v544 = vmax.f32 %v512, 0.0
        %v545 = vmax.f32 %v513, 0.0
        %v546 = vmax.f32 %v514, 0.0
        %v547 = vmax.f32 %v515, 0.0
        %v548 = vmax.f32 %v516, 0.0
        %v549 = vmax.f32 %v517, 0.0
        %v550 = vmax.f32 %v518, 0.0
        %551 = vst [vmem:[%s280] sm:$0xff] %v519
        %552 = vst [vmem:[%s280 + $0x8] sm:$0xff] %v520
        %553 = vst [vmem:[%s280 + $0x10] sm:$0xff] %v521
        %554 = vst [vmem:[%s280 + $0x18] sm:$0xff] %v522
        %555 = vst [vmem:[%s280 + $0x20] sm:$0xff] %v523
        %556 = vst [vmem:[%s280 + $0x28] sm:$0xff] %v524
        %557 = vst [vmem:[%s280 + $0x30] sm:$0xff] %v525
        %558 = vst [vmem:[%s280 + $0x38] sm:$0xff] %v526
        %559 = vst [vmem:[%s280 + $0x40] sm:$0xff] %v527
        %560 = vst [vmem:[%s280 + $0x48] sm:$0xff] %v528
        %561 = vst [vmem:[%s280 + $0x50] sm:$0xff] %v529
        %562 = vst [vmem:[%s280 + $0x58] sm:$0xff] %v530
        %563 = vst [vmem:[%s280 + $0x60] sm:$0xff] %v531
        %564 = vst [vmem:[%s280 + $0x68] sm:$0xff] %v532
        %565 = vst [vmem:[%s280 + $0x70] sm:$0xff] %v533
        %566 = vst [vmem:[%s280 + $0x78] sm:$0xff] %v534
        %567 = vst [vmem:[%s280 + $0x80] sm:$0xff] %v535
        %568 = vst [vmem:[%s280 + $0x88] sm:$0xff] %v536
        %569 = vst [vmem:[%s280 + $0x90] sm:$0xff] %v537
        %570 = vst [vmem:[%s280 + $0x98] sm:$0xff] %v538
        %571 = vst [vmem:[%s280 + $0xa0] sm:$0xff] %v539
        %572 = vst [vmem:[%s280 + $0xa8] sm:$0xff] %v540
        %573 = vst [vmem:[%s280 + $0xb0] sm:$0xff] %v541
        %574 = vst [vmem:[%s280 + $0xb8] sm:$0xff] %v542
        %575 = vst [vmem:[%s280 + $0xc0] sm:$0xff] %v543
        %576 = vst [vmem:[%s280 + $0xc8] sm:$0xff] %v544
        %577 = vst [vmem:[%s280 + $0xd0] sm:$0xff] %v545
        %578 = vst [vmem:[%s280 + $0xd8] sm:$0xff] %v546
        %579 = vst [vmem:[%s280 + $0xe0] sm:$0xff] %v547
        %580 = vst [vmem:[%s280 + $0xe8] sm:$0xff] %v548
        %581 = vst [vmem:[%s280 + $0xf0] sm:$0xff] %v549
        %582 = vst [vmem:[%s280 + $0xf8] sm:$0xff] %v550
        %s583 = sand.u32 %s127, 1
        %s584 = scalar_lea.sflag [#allocation4], %s583
        %s585 = sand.u32 %s127, 1
        %s586 = smul.addr %s585, 256
        %s587 = scalar_lea.vmem [#allocation10], %s586
        // Predicated region
        $region53: #{residual_forward.5} parent=35 // pred_check
          %p588 = pneg %p137
        $region54: #{residual_forward.5} parent=35 // pred_check_branch
          %590 = sbr.rel (%p588) target = $region56
        $region55: #{residual_forward.5} parent=35 // pred_region
          %s592 = ssub.s32 4096, 4096
          %593 = vsyncadd %s584, %s592
          %s594 = smul.addr %s25, 32
          %s595 = smul.addr %s594, 128
          %s596 = scalar_lea.hbm %s4, %s595
          %s597 = sshll.u32 %s587, 4
          %s598 = int_to_ptr.vmem [resolvable:$true] %s597
          %603 = dma.vmem_to_hbm [thread:$0]  %s598, 4096, %s596, %s584, 128, 128, 8
        $region56: #{residual_forward.5} parent=35 // pred_fallthru
          _
      $region36: #{residual_forward.5} parent=5 // pred_fallthru
        _
      %p604 = scmp.le.s32.totalorder 2, %s20
      // Predicated region
      $region57: #{residual_forward.5} parent=5 // pred_check
        %p605 = pneg %p604
      $region58: #{residual_forward.5} parent=5 // pred_check_branch
        %607 = sbr.rel (%p605) target = $region60
      $region59: #{residual_forward.5} parent=5 // pred_region
        %s608 = ssub.s32 %s20, 2
        // Predicated region
        $region61: #{residual_forward.5} parent=59 // pred_check
          %p609 = pneg %p143
        $region62: #{residual_forward.5} parent=59 // pred_check_branch
          %611 = sbr.rel (%p609) target = $region64
        $region63: #{residual_forward.5} parent=59 // pred_region
          %s612 = sand.u32 %s128, 1
          %s613 = scalar_lea.sflag [#allocation4], %s612
          %s614 = sand.u32 %s128, 1
          %s615 = smul.addr %s614, 256
          %s616 = scalar_lea.vmem [#allocation10], %s615
          %617 = dma.done %s613, 4096
        $region64: #{residual_forward.5} parent=59 // pred_fallthru
          _
      $region60: #{residual_forward.5} parent=5 // pred_fallthru
        _
    $region6: #{residual_forward.5} parent=1 // loop_footer
      %s24 = sadd.s32 1, %s20
    $region7: #{residual_forward.5} parent=1 // loop_footer_branch
      %19 = sbr.rel target = $region3
    $region8: #{residual_forward.5} parent=1 // loop_exit
      _
    %618 = vsyncpa [#allocation3], 1
    %s619 = scalar_lea.sflag [#allocation3], 1
    %620 = vsyncpa %s619, 1
    %621 = vsyncpa [#allocation6], 1
    %622 = vsyncpa [#allocation9], 1
    %s623 = scalar_lea.sflag [#allocation9], 1
    %624 = vsyncpa %s623, 1
    %625 = vsyncpa [#allocation4], 1
    %s626 = scalar_lea.sflag [#allocation4], 1
    %627 = vsyncpa %s626, 1

// kernel: residual_forward.3
$region0: #{residual_forward.3}
  #allocation0 [shape = 'u32[]', space=smem, size = 0x4, offset = 0x4, fixed_abs, tag = 'smem constant byte address 0x4 - core index']
  #allocation1 [shape = 'u32[144,128]{1,0:T(1,128)}', space=vmem, size = 0x12000, scoped, tag = 'internal scratch']
  %s0 = inlined_call_operand.hbm [shape: bf16[2,18,18,128], index: 0, kind: input, shape index: {}]
  %s1 = inlined_call_operand.hbm [shape: bf16[1152,128], index: 1, kind: input, shape index: {}]
  %s2 = inlined_call_operand.hbm [shape: bf16[2,16,16,128], index: 2, kind: output, shape index: {0}]
  %s3 = inlined_call_operand.hbm [shape: f32[2,2,128], index: 3, kind: output, shape index: {1}]
  %4 = xla_tuple %s2, %s3
  %s5 = sld [smem:[#allocation0]]
  $region57: #{residual_forward.3} parent=0
    _
  %s7 = ssub.s32 1, %s5
  %s8 = scalar_select 0, %s7, %s5
  $region1: #{residual_forward.3} parent=0
    #allocation2 [shape = 'u8[221184]{0}', space=vmem, size = 0x36000, scoped, tag = 'input window, operand 0']
    #allocation3 [shape = 's32[2]{0}', space=sflag, size = 0x8, scoped, tag = 'scoped memory for residual_forward.3']
    #allocation4 [shape = 's32[2]{0}', space=sflag, size = 0x8, scoped, tag = 'scoped memory for residual_forward.3']
    #allocation5 [shape = 'u8[294912]{0}', space=vmem, size = 0x48000, scoped, tag = 'input window, operand 1, single buffered']
    #allocation6 [shape = 's32[1]{0}', space=sflag, size = 0x4, scoped, tag = 'scoped memory for residual_forward.3']
    #allocation7 [shape = 'u8[131072]{0}', space=vmem, size = 0x20000, scoped, tag = 'output window, operand 0']
    #allocation8 [shape = 'u8[2048]{0}', space=vmem, size = 0x800, scoped, tag = 'output window, operand 1']
    #allocation9 [shape = 's32[2]{0}', space=sflag, size = 0x8, scoped, tag = 'scoped memory for residual_forward.3']
    %9 = vsyncpa [#allocation3], 0
    %s10 = scalar_lea.sflag [#allocation3], 1
    %11 = vsyncpa %s10, 0
    %12 = vsyncpa [#allocation6], 0
    %13 = vsyncpa [#allocation4], 0
    %s14 = scalar_lea.sflag [#allocation4], 1
    %15 = vsyncpa %s14, 0
    %16 = vsyncpa [#allocation9], 0
    %s17 = scalar_lea.sflag [#allocation9], 1
    %18 = vsyncpa %s17, 0
    loop: start=0, step=1, limit=4
    $region2: #{residual_forward.3} parent=1 // loop_pre_header
      _
    $region3: #{residual_forward.3} parent=1 // loop_header
      %s20 = sphi 0, %s24
      %p21 = scmp.ge.s32.totalorder %s20, 4
      %s30 = sphi 0, %s32
      %s33 = sphi 0, %s30
      %s34 = sphi 0, %s33
      %s50 = sphi 0, %s34
      %s54 = sphi 0, %s54
      %s56 = sphi 0, %s54
      %s57 = sphi 0, %s56
      %s71 = sphi 0, %s57
      %s77 = sphi 0, %s79
      %s80 = sphi 0, %s77
      %s81 = sphi 0, %s80
      %s97 = sphi 0, %s81
      %s103 = sphi 0, %s105
      %s106 = sphi 0, %s103
      %s107 = sphi 0, %s106
      %s123 = sphi 0, %s107
    $region4: #{residual_forward.3} parent=1 // loop_header_branch
      %23 = sbr.rel (%p21) target = $region8
    $region5: #{residual_forward.3} parent=1 // loop_body
      %s25 = ssub.s32 %s20, 1
      %s26 = ssub.s32 %s20, 2
      %s27 = sadd.s32 %s20, 1
      %s28 = ssub.s32 %s20, %s27
      %p29 = scmp.eq.s32.totalorder %s28, 0
      %s31 = sadd.s32 %s30, 1
      %s32 = scalar_select %p29, %s30, %s31
      %p35 = pneg %p29
      %p36 = scmp.eq.s32.totalorder %s20, 1
      %p37 = por %p35, %p36
      %p38 = scmp.ne.s32.totalorder %s30, %s33
      %p39 = scmp.eq.s32.totalorder %s20, 0
      %p40 = por %p38, %p39
      %p41 = scmp.ne.s32.totalorder %s30, %s33
      %p42 = scmp.eq.s32.totalorder %s25, 1
      %p43 = por %p41, %p42
      %p44 = scmp.ne.s32.totalorder %s33, %s34
      %p45 = scmp.eq.s32.totalorder %s25, 0
      %p46 = por %p44, %p45
      %p47 = scmp.ne.s32.totalorder %s33, %s34
      %p48 = scmp.eq.s32.totalorder %s26, 1
      %p49 = por %p47, %p48
      %p51 = scmp.ne.s32.totalorder %s34, %s50
      %p52 = scmp.eq.s32.totalorder %s26, 0
      %p53 = por %p51, %p52
      %s55 = sadd.s32 %s54, 1
      %p58 = scmp.eq.s32.totalorder %s20, 1
      %p59 = scmp.ne.s32.totalorder %s54, %s56
      %p60 = scmp.eq.s32.totalorder %s20, 0
      %p61 = por %p59, %p60
      %p62 = scmp.ne.s32.totalorder %s54, %s56
      %p63 = scmp.eq.s32.totalorder %s25, 1
      %p64 = por %p62, %p63
      %p65 = scmp.ne.s32.totalorder %s56, %s57
      %p66 = scmp.eq.s32.totalorder %s25, 0
      %p67 = por %p65, %p66
      %p68 = scmp.ne.s32.totalorder %s56, %s57
      %p69 = scmp.eq.s32.totalorder %s26, 1
      %p70 = por %p68, %p69
      %p72 = scmp.ne.s32.totalorder %s57, %s71
      %p73 = scmp.eq.s32.totalorder %s26, 0
      %p74 = por %p72, %p73
      %s75 = ssub.s32 %s20, %s27
      %p76 = scmp.eq.s32.totalorder %s75, 0
      %s78 = sadd.s32 %s77, 1
      %s79 = scalar_select %p76, %s77, %s78
      %p82 = pneg %p76
      %p83 = scmp.eq.s32.totalorder %s20, 1
      %p84 = por %p82, %p83
      %p85 = scmp.ne.s32.totalorder %s77, %s80
      %p86 = scmp.eq.s32.totalorder %s20, 0
      %p87 = por %p85, %p86
      %p88 = scmp.ne.s32.totalorder %s77, %s80
      %p89 = scmp.eq.s32.totalorder %s25, 1
      %p90 = por %p88, %p89
      %p91 = scmp.ne.s32.totalorder %s80, %s81
      %p92 = scmp.eq.s32.totalorder %s25, 0
      %p93 = por %p91, %p92
      %p94 = scmp.ne.s32.totalorder %s80, %s81
      %p95 = scmp.eq.s32.totalorder %s26, 1
      %p96 = por %p94, %p95
      %p98 = scmp.ne.s32.totalorder %s81, %s97
      %p99 = scmp.eq.s32.totalorder %s26, 0
      %p100 = por %p98, %p99
      %s101 = ssub.s32 %s20, %s27
      %p102 = scmp.eq.s32.totalorder %s101, 0
      %s104 = sadd.s32 %s103, 1
      %s105 = scalar_select %p102, %s103, %s104
      %p108 = pneg %p102
      %p109 = scmp.eq.s32.totalorder %s20, 1
      %p110 = por %p108, %p109
      %p111 = scmp.ne.s32.totalorder %s103, %s106
      %p112 = scmp.eq.s32.totalorder %s20, 0
      %p113 = por %p111, %p112
      %p114 = scmp.ne.s32.totalorder %s103, %s106
      %p115 = scmp.eq.s32.totalorder %s25, 1
      %p116 = por %p114, %p115
      %p117 = scmp.ne.s32.totalorder %s106, %s107
      %p118 = scmp.eq.s32.totalorder %s25, 0
      %p119 = por %p117, %p118
      %p120 = scmp.ne.s32.totalorder %s106, %s107
      %p121 = scmp.eq.s32.totalorder %s26, 1
      %p122 = por %p120, %p121
      %p124 = scmp.ne.s32.totalorder %s107, %s123
      %p125 = scmp.eq.s32.totalorder %s26, 0
      %p126 = por %p124, %p125
      %p127 = scmp.le.s32.totalorder 1, %s20
      %p128 = scmp.lt.s32.totalorder %s20, 3
      %p129 = pnand %p127, %p128
      %p130 = pneg %p129
      // Predicated region
      $region9: #{residual_forward.3} parent=5 // pred_check
        _
      $region10: #{residual_forward.3} parent=5 // pred_check_branch
        %132 = sbr.rel (%p129) target = $region12
      $region11: #{residual_forward.3} parent=5 // pred_region
        %s133 = ssub.s32 %s20, 1
        // Predicated region
        $region13: #{residual_forward.3} parent=11 // pred_check
          %p134 = pneg %p67
        $region14: #{residual_forward.3} parent=11 // pred_check_branch
          %136 = sbr.rel (%p134) target = $region16
        $region15: #{residual_forward.3} parent=11 // pred_region
          %s138 = ssub.s32 9216, 9216
          %139 = vsyncadd [#allocation6], %s138
          %s140 = sshll.u32 [#allocation5], 4
          %s141 = int_to_ptr.vmem [resolvable:$true] %s140
          %146 = dma.hbm_to_vmem [thread:$0]  %s1, 9216, %s141, [#allocation6], 64, 64, 4
        $region16: #{residual_forward.3} parent=11 // pred_fallthru
          _
      $region12: #{residual_forward.3} parent=5 // pred_fallthru
        _
      %p147 = scmp.lt.s32.totalorder %s20, 2
      // Predicated region
      $region17: #{residual_forward.3} parent=5 // pred_check
        %p148 = pneg %p147
      $region18: #{residual_forward.3} parent=5 // pred_check_branch
        %150 = sbr.rel (%p148) target = $region20
      $region19: #{residual_forward.3} parent=5 // pred_region
        // Predicated region
        $region21: #{residual_forward.3} parent=19 // pred_check
          %p151 = pneg %p40
        $region22: #{residual_forward.3} parent=19 // pred_check_branch
          %153 = sbr.rel (%p151) target = $region24
        $region23: #{residual_forward.3} parent=19 // pred_region
          %s154 = sand.u32 %s30, 1
          %s155 = scalar_lea.sflag [#allocation3], %s154
          %s156 = sand.u32 %s30, 1
          %s157 = smul.addr %s156, 216
          %s158 = scalar_lea.vmem [#allocation2], %s157
          %s160 = ssub.s32 3456, 3456
          %161 = vsyncadd %s155, %s160
          %s162 = smul.addr %s20, 54
          %s163 = smul.addr %s162, 64
          %s164 = scalar_lea.hbm %s0, %s163
          %s165 = sshll.u32 %s158, 4
          %s166 = int_to_ptr.vmem [resolvable:$true] %s165
          %171 = dma.hbm_to_vmem [thread:$0]  %s164, 3456, %s166, %s155, 64, 64, 4
        $region24: #{residual_forward.3} parent=19 // pred_fallthru
          _
      $region20: #{residual_forward.3} parent=5 // pred_fallthru
        _
      %p172 = scmp.le.s32.totalorder 1, %s20
      %p173 = scmp.lt.s32.totalorder %s20, 3
      %p174 = pnand %p172, %p173
      %p175 = pneg %p174
      // Predicated region
      $region25: #{residual_forward.3} parent=5 // pred_check
        _
      $region26: #{residual_forward.3} parent=5 // pred_check_branch
        %177 = sbr.rel (%p174) target = $region28
      $region27: #{residual_forward.3} parent=5 // pred_region
        %s178 = ssub.s32 %s20, 1
        %s179 = sand.u32 %s33, 1
        %s180 = scalar_lea.sflag [#allocation3], %s179
        %s181 = sand.u32 %s33, 1
        %s182 = smul.addr %s181, 216
        %s183 = scalar_lea.vmem [#allocation2], %s182
        // Predicated region
        $region29: #{residual_forward.3} parent=27 // pred_check
          %p184 = pneg %p46
        $region30: #{residual_forward.3} parent=27 // pred_check_branch
          %186 = sbr.rel (%p184) target = $region32
        $region31: #{residual_forward.3} parent=27 // pred_region
          %187 = dma.done %s180, 3456
        $region32: #{residual_forward.3} parent=27 // pred_fallthru
          _
        // Predicated region
        $region33: #{residual_forward.3} parent=27 // pred_check
          %p188 = pneg %p67
        $region34: #{residual_forward.3} parent=27 // pred_check_branch
          %190 = sbr.rel (%p188) target = $region36
        $region35: #{residual_forward.3} parent=27 // pred_region
          %191 = dma.done [#allocation6], 9216
        $region36: #{residual_forward.3} parent=27 // pred_fallthru
          _
        %s192 = sand.u32 %s33, 1
        %s193 = scalar_lea.sflag [#allocation3], %s192
        %s194 = sand.u32 %s33, 1
        %s195 = smul.addr %s194, 216
        %s196 = scalar_lea.vmem [#allocation2], %s195
        %p197 = pneg %p46
        %p198 = pneg %p43
        %p199 = pneg %p67
        %p200 = pneg %p64
        %p201 = pneg %p93
        %p202 = pneg %p90
        %s203 = sand.u32 %s80, 1
        %s204 = scalar_lea.sflag [#allocation4], %s203
        %s205 = sand.u32 %s80, 1
        %s206 = smul.addr %s205, 128
        %s207 = scalar_lea.vmem [#allocation7], %s206
        %p208 = pneg %p119
        %p209 = pneg %p116
        %s210 = sand.u32 %s106, 1
        %s211 = scalar_lea.sflag [#allocation9], %s210
        %s212 = sand.u32 %s106, 1
        %s213 = smul.addr %s212, 2
        %s214 = scalar_lea.vmem [#allocation8], %s213
        %v216 = vld [vmem:[%s183] sm:$0xf]
        %v217 = vld [vmem:[%s183 + $0x4] sm:$0xf]
        %v218 = vld [vmem:[%s183 + $0x8] sm:$0x1]
        %v219 = vld [vmem:[%s183 + $0xc] sm:$0xf]
        %v220 = vld [vmem:[%s183 + $0x10] sm:$0xf]
        %v221 = vld [vmem:[%s183 + $0x14] sm:$0x1]
        %v222 = vld [vmem:[%s183 + $0x18] sm:$0xf]
        %v223 = vld [vmem:[%s183 + $0x1c] sm:$0xf]
        %v224 = vld [vmem:[%s183 + $0x20] sm:$0x1]
        %v225 = vld [vmem:[%s183 + $0x24] sm:$0xf]
        %v226 = vld [vmem:[%s183 + $0x28] sm:$0xf]
        %v227 = vld [vmem:[%s183 + $0x2c] sm:$0x1]
        %v228 = vld [vmem:[%s183 + $0x30] sm:$0xf]
        %v229 = vld [vmem:[%s183 + $0x34] sm:$0xf]
        %v230 = vld [vmem:[%s183 + $0x38] sm:$0x1]
        %v231 = vld [vmem:[%s183 + $0x3c] sm:$0xf]
        %v232 = vld [vmem:[%s183 + $0x40] sm:$0xf]
        %v233 = vld [vmem:[%s183 + $0x44] sm:$0x1]
        %v234 = vld [vmem:[%s183 + $0x48] sm:$0xf]
        %v235 = vld [vmem:[%s183 + $0x4c] sm:$0xf]
        %v236 = vld [vmem:[%s183 + $0x50] sm:$0x1]
        %v237 = vld [vmem:[%s183 + $0x54] sm:$0xf]
        %v238 = vld [vmem:[%s183 + $0x58] sm:$0xf]
        %v239 = vld [vmem:[%s183 + $0x5c] sm:$0x1]
        %v240 = vld [vmem:[%s183 + $0x60] sm:$0xf]
        %v241 = vld [vmem:[%s183 + $0x64] sm:$0xf]
        %v242 = vld [vmem:[%s183 + $0x68] sm:$0x1]
        %v243 = vld [vmem:[%s183 + $0x6c] sm:$0xf]
        %v244 = vld [vmem:[%s183 + $0x70] sm:$0xf]
        %v245 = vld [vmem:[%s183 + $0x74] sm:$0x1]
        %v246 = vld [vmem:[%s183 + $0x78] sm:$0xf]
        %v247 = vld [vmem:[%s183 + $0x7c] sm:$0xf]
        %v248 = vld [vmem:[%s183 + $0x80] sm:$0x1]
        %v249 = vld [vmem:[%s183 + $0x84] sm:$0xf]
        %v250 = vld [vmem:[%s183 + $0x88] sm:$0xf]
        %v251 = vld [vmem:[%s183 + $0x8c] sm:$0x1]
        %v252 = vld [vmem:[%s183 + $0x90] sm:$0xf]
        %v253 = vld [vmem:[%s183 + $0x94] sm:$0xf]
        %v254 = vld [vmem:[%s183 + $0x98] sm:$0x1]
        %v255 = vld [vmem:[%s183 + $0x9c] sm:$0xf]
        %v256 = vld [vmem:[%s183 + $0xa0] sm:$0xf]
        %v257 = vld [vmem:[%s183 + $0xa4] sm:$0x1]
        %v258 = vld [vmem:[%s183 + $0xa8] sm:$0xf]
        %v259 = vld [vmem:[%s183 + $0xac] sm:$0xf]
        %v260 = vld [vmem:[%s183 + $0xb0] sm:$0x1]
        %v261 = vld [vmem:[%s183 + $0xb4] sm:$0xf]
        %v262 = vld [vmem:[%s183 + $0xb8] sm:$0xf]
        %v263 = vld [vmem:[%s183 + $0xbc] sm:$0x1]
        %v264 = vld [vmem:[%s183 + $0xc0] sm:$0xf]
        %v265 = vld [vmem:[%s183 + $0xc4] sm:$0xf]
        %v266 = vld [vmem:[%s183 + $0xc8] sm:$0x1]
        %v267 = vld [vmem:[%s183 + $0xcc] sm:$0xf]
        %v268 = vld [vmem:[%s183 + $0xd0] sm:$0xf]
        %v269 = vld [vmem:[%s183 + $0xd4] sm:$0x1]
        %v270 = vld [vmem:[#allocation5] sm:$0xf]
        %v271 = vld [vmem:[#allocation5 + $0x4] sm:$0xf]
        %v272 = vld [vmem:[#allocation5 + $0x8] sm:$0xf]
        %v273 = vld [vmem:[#allocation5 + $0xc] sm:$0xf]
        %v274 = vld [vmem:[#allocation5 + $0x10] sm:$0xf]
        %v275 = vld [vmem:[#allocation5 + $0x14] sm:$0xf]
        %v276 = vld [vmem:[#allocation5 + $0x18] sm:$0xf]
        %v277 = vld [vmem:[#allocation5 + $0x1c] sm:$0xf]
        %v278 = vld [vmem:[#allocation5 + $0x20] sm:$0xf]
        %v279 = vld [vmem:[#allocation5 + $0x24] sm:$0xf]
        %v280 = vld [vmem:[#allocation5 + $0x28] sm:$0xf]
        %v281 = vld [vmem:[#allocation5 + $0x2c] sm:$0xf]
        %v282 = vld [vmem:[#allocation5 + $0x30] sm:$0xf]
        %v283 = vld [vmem:[#allocation5 + $0x34] sm:$0xf]
        %v284 = vld [vmem:[#allocation5 + $0x38] sm:$0xf]
        %v285 = vld [vmem:[#allocation5 + $0x3c] sm:$0xf]
        %v286 = vld [vmem:[#allocation5 + $0x40] sm:$0xf]
        %v287 = vld [vmem:[#allocation5 + $0x44] sm:$0xf]
        %v288 = vld [vmem:[#allocation5 + $0x48] sm:$0xf]
        %v289 = vld [vmem:[#allocation5 + $0x4c] sm:$0xf]
        %v290 = vld [vmem:[#allocation5 + $0x50] sm:$0xf]
        %v291 = vld [vmem:[#allocation5 + $0x54] sm:$0xf]
        %v292 = vld [vmem:[#allocation5 + $0x58] sm:$0xf]
        %v293 = vld [vmem:[#allocation5 + $0x5c] sm:$0xf]
        %v294 = vld [vmem:[#allocation5 + $0x60] sm:$0xf]
        %v295 = vld [vmem:[#allocation5 + $0x64] sm:$0xf]
        %v296 = vld [vmem:[#allocation5 + $0x68] sm:$0xf]
        %v297 = vld [vmem:[#allocation5 + $0x6c] sm:$0xf]
        %v298 = vld [vmem:[#allocation5 + $0x70] sm:$0xf]
        %v299 = vld [vmem:[#allocation5 + $0x74] sm:$0xf]
        %v300 = vld [vmem:[#allocation5 + $0x78] sm:$0xf]
        %v301 = vld [vmem:[#allocation5 + $0x7c] sm:$0xf]
        %v302 = vld [vmem:[#allocation5 + $0x80] sm:$0xf]
        %v303 = vld [vmem:[#allocation5 + $0x84] sm:$0xf]
        %v304 = vld [vmem:[#allocation5 + $0x88] sm:$0xf]
        %v305 = vld [vmem:[#allocation5 + $0x8c] sm:$0xf]
        %v306 = vld [vmem:[#allocation5 + $0x90] sm:$0xf]
        %v307 = vld [vmem:[#allocation5 + $0x94] sm:$0xf]
        %v308 = vld [vmem:[#allocation5 + $0x98] sm:$0xf]
        %v309 = vld [vmem:[#allocation5 + $0x9c] sm:$0xf]
        %v310 = vld [vmem:[#allocation5 + $0xa0] sm:$0xf]
        %v311 = vld [vmem:[#allocation5 + $0xa4] sm:$0xf]
        %v312 = vld [vmem:[#allocation5 + $0xa8] sm:$0xf]
        %v313 = vld [vmem:[#allocation5 + $0xac] sm:$0xf]
        %v314 = vld [vmem:[#allocation5 + $0xb0] sm:$0xf]
        %v315 = vld [vmem:[#allocation5 + $0xb4] sm:$0xf]
        %v316 = vld [vmem:[#allocation5 + $0xb8] sm:$0xf]
        %v317 = vld [vmem:[#allocation5 + $0xbc] sm:$0xf]
        %v318 = vld [vmem:[#allocation5 + $0xc0] sm:$0xf]
        %v319 = vld [vmem:[#allocation5 + $0xc4] sm:$0xf]
        %v320 = vld [vmem:[#allocation5 + $0xc8] sm:$0xf]
        %v321 = vld [vmem:[#allocation5 + $0xcc] sm:$0xf]
        %v322 = vld [vmem:[#allocation5 + $0xd0] sm:$0xf]
        %v323 = vld [vmem:[#allocation5 + $0xd4] sm:$0xf]
        %v324 = vld [vmem:[#allocation5 + $0xd8] sm:$0xf]
        %v325 = vld [vmem:[#allocation5 + $0xdc] sm:$0xf]
        %v326 = vld [vmem:[#allocation5 + $0xe0] sm:$0xf]
        %v327 = vld [vmem:[#allocation5 + $0xe4] sm:$0xf]
        %v328 = vld [vmem:[#allocation5 + $0xe8] sm:$0xf]
        %v329 = vld [vmem:[#allocation5 + $0xec] sm:$0xf]
        %v330 = vld [vmem:[#allocation5 + $0xf0] sm:$0xf]
        %v331 = vld [vmem:[#allocation5 + $0xf4] sm:$0xf]
        %v332 = vld [vmem:[#allocation5 + $0xf8] sm:$0xf]
        %v333 = vld [vmem:[#allocation5 + $0xfc] sm:$0xf]
        %v334 = vld [vmem:[#allocation5 + $0x100] sm:$0xf]
        %v335 = vld [vmem:[#allocation5 + $0x104] sm:$0xf]
        %v336 = vld [vmem:[#allocation5 + $0x108] sm:$0xf]
        %v337 = vld [vmem:[#allocation5 + $0x10c] sm:$0xf]
        %v338 = vld [vmem:[#allocation5 + $0x110] sm:$0xf]
        %v339 = vld [vmem:[#allocation5 + $0x114] sm:$0xf]
        %v340 = vld [vmem:[#allocation5 + $0x118] sm:$0xf]
        %v341 = vld [vmem:[#allocation5 + $0x11c] sm:$0xf]
        %v342 = vld [vmem:[#allocation5 + $0x120] sm:$0xf]
        %v343 = vld [vmem:[#allocation5 + $0x124] sm:$0xf]
        %v344 = vld [vmem:[#allocation5 + $0x128] sm:$0xf]
        %v345 = vld [vmem:[#allocation5 + $0x12c] sm:$0xf]
        %v346 = vld [vmem:[#allocation5 + $0x130] sm:$0xf]
        %v347 = vld [vmem:[#allocation5 + $0x134] sm:$0xf]
        %v348 = vld [vmem:[#allocation5 + $0x138] sm:$0xf]
        %v349 = vld [vmem:[#allocation5 + $0x13c] sm:$0xf]
        %v350 = vld [vmem:[#allocation5 + $0x140] sm:$0xf]
        %v351 = vld [vmem:[#allocation5 + $0x144] sm:$0xf]
        %v352 = vld [vmem:[#allocation5 + $0x148] sm:$0xf]
        %v353 = vld [vmem:[#allocation5 + $0x14c] sm:$0xf]
        %v354 = vld [vmem:[#allocation5 + $0x150] sm:$0xf]
        %v355 = vld [vmem:[#allocation5 + $0x154] sm:$0xf]
        %v356 = vld [vmem:[#allocation5 + $0x158] sm:$0xf]
        %v357 = vld [vmem:[#allocation5 + $0x15c] sm:$0xf]
        %v358 = vld [vmem:[#allocation5 + $0x160] sm:$0xf]
        %v359 = vld [vmem:[#allocation5 + $0x164] sm:$0xf]
        %v360 = vld [vmem:[#allocation5 + $0x168] sm:$0xf]
        %v361 = vld [vmem:[#allocation5 + $0x16c] sm:$0xf]
        %v362 = vld [vmem:[#allocation5 + $0x170] sm:$0xf]
        %v363 = vld [vmem:[#allocation5 + $0x174] sm:$0xf]
        %v364 = vld [vmem:[#allocation5 + $0x178] sm:$0xf]
        %v365 = vld [vmem:[#allocation5 + $0x17c] sm:$0xf]
        %v366 = vld [vmem:[#allocation5 + $0x180] sm:$0xf]
        %v367 = vld [vmem:[#allocation5 + $0x184] sm:$0xf]
        %v368 = vld [vmem:[#allocation5 + $0x188] sm:$0xf]
        %v369 = vld [vmem:[#allocation5 + $0x18c] sm:$0xf]
        %v370 = vld [vmem:[#allocation5 + $0x190] sm:$0xf]
        %v371 = vld [vmem:[#allocation5 + $0x194] sm:$0xf]
        %v372 = vld [vmem:[#allocation5 + $0x198] sm:$0xf]
        %v373 = vld [vmem:[#allocation5 + $0x19c] sm:$0xf]
        %v374 = vld [vmem:[#allocation5 + $0x1a0] sm:$0xf]
        %v375 = vld [vmem:[#allocation5 + $0x1a4] sm:$0xf]
        %v376 = vld [vmem:[#allocation5 + $0x1a8] sm:$0xf]
        %v377 = vld [vmem:[#allocation5 + $0x1ac] sm:$0xf]
        %v378 = vld [vmem:[#allocation5 + $0x1b0] sm:$0xf]
        %v379 = vld [vmem:[#allocation5 + $0x1b4] sm:$0xf]
        %v380 = vld [vmem:[#allocation5 + $0x1b8] sm:$0xf]
        %v381 = vld [vmem:[#allocation5 + $0x1bc] sm:$0xf]
        %v382 = vld [vmem:[#allocation5 + $0x1c0] sm:$0xf]
        %v383 = vld [vmem:[#allocation5 + $0x1c4] sm:$0xf]
        %v384 = vld [vmem:[#allocation5 + $0x1c8] sm:$0xf]
        %v385 = vld [vmem:[#allocation5 + $0x1cc] sm:$0xf]
        %v386 = vld [vmem:[#allocation5 + $0x1d0] sm:$0xf]
        %v387 = vld [vmem:[#allocation5 + $0x1d4] sm:$0xf]
        %v388 = vld [vmem:[#allocation5 + $0x1d8] sm:$0xf]
        %v389 = vld [vmem:[#allocation5 + $0x1dc] sm:$0xf]
        %v390 = vld [vmem:[#allocation5 + $0x1e0] sm:$0xf]
        %v391 = vld [vmem:[#allocation5 + $0x1e4] sm:$0xf]
        %v392 = vld [vmem:[#allocation5 + $0x1e8] sm:$0xf]
        %v393 = vld [vmem:[#allocation5 + $0x1ec] sm:$0xf]
        %v394 = vld [vmem:[#allocation5 + $0x1f0] sm:$0xf]
        %v395 = vld [vmem:[#allocation5 + $0x1f4] sm:$0xf]
        %v396 = vld [vmem:[#allocation5 + $0x1f8] sm:$0xf]
        %v397 = vld [vmem:[#allocation5 + $0x1fc] sm:$0xf]
        %v398 = vld [vmem:[#allocation5 + $0x200] sm:$0xf]
        %v399 = vld [vmem:[#allocation5 + $0x204] sm:$0xf]
        %v400 = vld [vmem:[#allocation5 + $0x208] sm:$0xf]
        %v401 = vld [vmem:[#allocation5 + $0x20c] sm:$0xf]
        %v402 = vld [vmem:[#allocation5 + $0x210] sm:$0xf]
        %v403 = vld [vmem:[#allocation5 + $0x214] sm:$0xf]
        %v404 = vld [vmem:[#allocation5 + $0x218] sm:$0xf]
        %v405 = vld [vmem:[#allocation5 + $0x21c] sm:$0xf]
        %v406 = vld [vmem:[#allocation5 + $0x220] sm:$0xf]
        %v407 = vld [vmem:[#allocation5 + $0x224] sm:$0xf]
        %v408 = vld [vmem:[#allocation5 + $0x228] sm:$0xf]
        %v409 = vld [vmem:[#allocation5 + $0x22c] sm:$0xf]
        %v410 = vld [vmem:[#allocation5 + $0x230] sm:$0xf]
        %v411 = vld [vmem:[#allocation5 + $0x234] sm:$0xf]
        %v412 = vld [vmem:[#allocation5 + $0x238] sm:$0xf]
        %v413 = vld [vmem:[#allocation5 + $0x23c] sm:$0xf]
        %vm414 = vsmask.f32 3328
        %vm415 = vsmask.f32 7440
        %vm416 = vmor %vm414, %vm415
        %v418 = vshrl.u32 %v216, 16
        %v420 = vrot.slane %v418, 4
        %v421 = vshll.u32 %v216, 16
        %v423 = vrot.slane %v421, 5
        %v424 = vor.u32 %v420, %v423
        %v425 = vrot.slane %v424, 4
        %v427 = vshll.u32 %v217, 16
        %v429 = vrot.slane %v427, 5
        %v430 = vsel %vm416, %v425, %v429
        %v431 = vshrl.u32 %v217, 16
        %v433 = vrot.slane %v431, 4
        %v434 = vor.u32 %v433, %v429
        %v435 = vrot.slane %v434, 4
        %v437 = vshll.u32 %v218, 16
        %v439 = vrot.slane %v437, 5
        %v440 = vsel %vm416, %v435, %v439
        %v442 = vshrl.u32 %v219, 16
        %v444 = vrot.slane %v442, 4
        %v445 = vshll.u32 %v219, 16
        %v447 = vrot.slane %v445, 5
        %v448 = vor.u32 %v444, %v447
        %v449 = vrot.slane %v448, 4
        %v451 = vshll.u32 %v220, 16
        %v453 = vrot.slane %v451, 5
        %v454 = vsel %vm416, %v449, %v453
        %v455 = vshrl.u32 %v220, 16
        %v457 = vrot.slane %v455, 4
        %v458 = vor.u32 %v457, %v453
        %v459 = vrot.slane %v458, 4
        %v461 = vshll.u32 %v221, 16
        %v463 = vrot.slane %v461, 5
        %v464 = vsel %vm416, %v459, %v463
        %v466 = vshrl.u32 %v222, 16
        %v468 = vrot.slane %v466, 4
        %v469 = vshll.u32 %v222, 16
        %v471 = vrot.slane %v469, 5
        %v472 = vor.u32 %v468, %v471
        %v473 = vrot.slane %v472, 4
        %v475 = vshll.u32 %v223, 16
        %v477 = vrot.slane %v475, 5
        %v478 = vsel %vm416, %v473, %v477
        %v479 = vshrl.u32 %v223, 16
        %v481 = vrot.slane %v479, 4
        %v482 = vor.u32 %v481, %v477
        %v483 = vrot.slane %v482, 4
        %v485 = vshll.u32 %v224, 16
        %v487 = vrot.slane %v485, 5
        %v488 = vsel %vm416, %v483, %v487
        %v490 = vshrl.u32 %v225, 16
        %v492 = vrot.slane %v490, 4
        %v493 = vshll.u32 %v225, 16
        %v495 = vrot.slane %v493, 5
        %v496 = vor.u32 %v492, %v495
        %v497 = vrot.slane %v496, 4
        %v499 = vshll.u32 %v226, 16
        %v501 = vrot.slane %v499, 5
        %v502 = vsel %vm416, %v497, %v501
        %v503 = vshrl.u32 %v226, 16
        %v505 = vrot.slane %v503, 4
        %v506 = vor.u32 %v505, %v501
        %v507 = vrot.slane %v506, 4
        %v509 = vshll.u32 %v227, 16
        %v511 = vrot.slane %v509, 5
        %v512 = vsel %vm416, %v507, %v511
        %v514 = vshrl.u32 %v228, 16
        %v516 = vrot.slane %v514, 4
        %v517 = vshll.u32 %v228, 16
        %v519 = vrot.slane %v517, 5
        %v520 = vor.u32 %v516, %v519
        %v521 = vrot.slane %v520, 4
        %v523 = vshll.u32 %v229, 16
        %v525 = vrot.slane %v523, 5
        %v526 = vsel %vm416, %v521, %v525
        %v527 = vshrl.u32 %v229, 16
        %v529 = vrot.slane %v527, 4
        %v530 = vor.u32 %v529, %v525
        %v531 = vrot.slane %v530, 4
        %v533 = vshll.u32 %v230, 16
        %v535 = vrot.slane %v533, 5
        %v536 = vsel %vm416, %v531, %v535
        %v538 = vshrl.u32 %v231, 16
        %v540 = vrot.slane %v538, 4
        %v541 = vshll.u32 %v231, 16
        %v543 = vrot.slane %v541, 5
        %v544 = vor.u32 %v540, %v543
        %v545 = vrot.slane %v544, 4
        %v547 = vshll.u32 %v232, 16
        %v549 = vrot.slane %v547, 5
        %v550 = vsel %vm416, %v545, %v549
        %v551 = vshrl.u32 %v232, 16
        %v553 = vrot.slane %v551, 4
        %v554 = vor.u32 %v553, %v549
        %v555 = vrot.slane %v554, 4
        %v557 = vshll.u32 %v233, 16
        %v559 = vrot.slane %v557, 5
        %v560 = vsel %vm416, %v555, %v559
        %v562 = vshrl.u32 %v234, 16
        %v564 = vrot.slane %v562, 4
        %v565 = vshll.u32 %v234, 16
        %v567 = vrot.slane %v565, 5
        %v568 = vor.u32 %v564, %v567
        %v569 = vrot.slane %v568, 4
        %v571 = vshll.u32 %v235, 16
        %v573 = vrot.slane %v571, 5
        %v574 = vsel %vm416, %v569, %v573
        %v575 = vshrl.u32 %v235, 16
        %v577 = vrot.slane %v575, 4
        %v578 = vor.u32 %v577, %v573
        %v579 = vrot.slane %v578, 4
        %v581 = vshll.u32 %v236, 16
        %v583 = vrot.slane %v581, 5
        %v584 = vsel %vm416, %v579, %v583
        %v586 = vshrl.u32 %v237, 16
        %v588 = vrot.slane %v586, 4
        %v589 = vshll.u32 %v237, 16
        %v591 = vrot.slane %v589, 5
        %v592 = vor.u32 %v588, %v591
        %v593 = vrot.slane %v592, 4
        %v595 = vshll.u32 %v238, 16
        %v597 = vrot.slane %v595, 5
        %v598 = vsel %vm416, %v593, %v597
        %v599 = vshrl.u32 %v238, 16
        %v601 = vrot.slane %v599, 4
        %v602 = vor.u32 %v601, %v597
        %v603 = vrot.slane %v602, 4
        %v605 = vshll.u32 %v239, 16
        %v607 = vrot.slane %v605, 5
        %v608 = vsel %vm416, %v603, %v607
        %v610 = vshrl.u32 %v240, 16
        %v612 = vrot.slane %v610, 4
        %v613 = vshll.u32 %v240, 16
        %v615 = vrot.slane %v613, 5
        %v616 = vor.u32 %v612, %v615
        %v617 = vrot.slane %v616, 4
        %v619 = vshll.u32 %v241, 16
        %v621 = vrot.slane %v619, 5
        %v622 = vsel %vm416, %v617, %v621
        %v623 = vshrl.u32 %v241, 16
        %v625 = vrot.slane %v623, 4
        %v626 = vor.u32 %v625, %v621
        %v627 = vrot.slane %v626, 4
        %v629 = vshll.u32 %v242, 16
        %v631 = vrot.slane %v629, 5
        %v632 = vsel %vm416, %v627, %v631
        %v634 = vshrl.u32 %v243, 16
        %v636 = vrot.slane %v634, 4
        %v637 = vshll.u32 %v243, 16
        %v639 = vrot.slane %v637, 5
        %v640 = vor.u32 %v636, %v639
        %v641 = vrot.slane %v640, 4
        %v643 = vshll.u32 %v244, 16
        %v645 = vrot.slane %v643, 5
        %v646 = vsel %vm416, %v641, %v645
        %v647 = vshrl.u32 %v244, 16
        %v649 = vrot.slane %v647, 4
        %v650 = vor.u32 %v649, %v645
        %v651 = vrot.slane %v650, 4
        %v653 = vshll.u32 %v245, 16
        %v655 = vrot.slane %v653, 5
        %v656 = vsel %vm416, %v651, %v655
        %v658 = vshrl.u32 %v246, 16
        %v660 = vrot.slane %v658, 4
        %v661 = vshll.u32 %v246, 16
        %v663 = vrot.slane %v661, 5
        %v664 = vor.u32 %v660, %v663
        %v665 = vrot.slane %v664, 4
        %v667 = vshll.u32 %v247, 16
        %v669 = vrot.slane %v667, 5
        %v670 = vsel %vm416, %v665, %v669
        %v671 = vshrl.u32 %v247, 16
        %v673 = vrot.slane %v671, 4
        %v674 = vor.u32 %v673, %v669
        %v675 = vrot.slane %v674, 4
        %v677 = vshll.u32 %v248, 16
        %v679 = vrot.slane %v677, 5
        %v680 = vsel %vm416, %v675, %v679
        %v682 = vshrl.u32 %v249, 16
        %v684 = vrot.slane %v682, 4
        %v685 = vshll.u32 %v249, 16
        %v687 = vrot.slane %v685, 5
        %v688 = vor.u32 %v684, %v687
        %v689 = vrot.slane %v688, 4
        %v691 = vshll.u32 %v250, 16
        %v693 = vrot.slane %v691, 5
        %v694 = vsel %vm416, %v689, %v693
        %v695 = vshrl.u32 %v250, 16
        %v697 = vrot.slane %v695, 4
        %v698 = vor.u32 %v697, %v693
        %v699 = vrot.slane %v698, 4
        %v701 = vshll.u32 %v251, 16
        %v703 = vrot.slane %v701, 5
        %v704 = vsel %vm416, %v699, %v703
        %v706 = vshrl.u32 %v252, 16
        %v708 = vrot.slane %v706, 4
        %v709 = vshll.u32 %v252, 16
        %v711 = vrot.slane %v709, 5
        %v712 = vor.u32 %v708, %v711
        %v713 = vrot.slane %v712, 4
        %v715 = vshll.u32 %v253, 16
        %v717 = vrot.slane %v715, 5
        %v718 = vsel %vm416, %v713, %v717
        %v719 = vshrl.u32 %v253, 16
        %v721 = vrot.slane %v719, 4
        %v722 = vor.u32 %v721, %v717
        %v723 = vrot.slane %v722, 4
        %v725 = vshll.u32 %v254, 16
        %v727 = vrot.slane %v725, 5
        %v728 = vsel %vm416, %v723, %v727
        %v730 = vshrl.u32 %v255, 16
        %v732 = vrot.slane %v730, 4
        %v733 = vshll.u32 %v255, 16
        %v735 = vrot.slane %v733, 5
        %v736 = vor.u32 %v732, %v735
        %v737 = vrot.slane %v736, 4
        %v739 = vshll.u32 %v256, 16
        %v741 = vrot.slane %v739, 5
        %v742 = vsel %vm416, %v737, %v741
        %v743 = vshrl.u32 %v256, 16
        %v745 = vrot.slane %v743, 4
        %v746 = vor.u32 %v745, %v741
        %v747 = vrot.slane %v746, 4
        %v749 = vshll.u32 %v257, 16
        %v751 = vrot.slane %v749, 5
        %v752 = vsel %vm416, %v747, %v751
        %v754 = vshrl.u32 %v258, 16
        %v756 = vrot.slane %v754, 4
        %v757 = vshll.u32 %v258, 16
        %v759 = vrot.slane %v757, 5
        %v760 = vor.u32 %v756, %v759
        %v761 = vrot.slane %v760, 4
        %v763 = vshll.u32 %v259, 16
        %v765 = vrot.slane %v763, 5
        %v766 = vsel %vm416, %v761, %v765
        %v767 = vshrl.u32 %v259, 16
        %v769 = vrot.slane %v767, 4
        %v770 = vor.u32 %v769, %v765
        %v771 = vrot.slane %v770, 4
        %v773 = vshll.u32 %v260, 16
        %v775 = vrot.slane %v773, 5
        %v776 = vsel %vm416, %v771, %v775
        %v778 = vshrl.u32 %v261, 16
        %v780 = vrot.slane %v778, 4
        %v781 = vshll.u32 %v261, 16
        %v783 = vrot.slane %v781, 5
        %v784 = vor.u32 %v780, %v783
        %v785 = vrot.slane %v784, 4
        %v787 = vshll.u32 %v262, 16
        %v789 = vrot.slane %v787, 5
        %v790 = vsel %vm416, %v785, %v789
        %v791 = vshrl.u32 %v262, 16
        %v793 = vrot.slane %v791, 4
        %v794 = vor.u32 %v793, %v789
        %v795 = vrot.slane %v794, 4
        %v797 = vshll.u32 %v263, 16
        %v799 = vrot.slane %v797, 5
        %v800 = vsel %vm416, %v795, %v799
        %v833 = vunpack.c.l.b16 %v216
        %v834 = vunpack.c.l.b16 %v217
        %v835 = vunpack.c.l.b16 %v219
        %v836 = vunpack.c.l.b16 %v220
        %v837 = vunpack.c.l.b16 %v222
        %v838 = vunpack.c.l.b16 %v223
        %v839 = vunpack.c.l.b16 %v225
        %v840 = vunpack.c.l.b16 %v226
        %v841 = vunpack.c.l.b16 %v228
        %v842 = vunpack.c.l.b16 %v229
        %v843 = vunpack.c.l.b16 %v231
        %v844 = vunpack.c.l.b16 %v232
        %v845 = vunpack.c.l.b16 %v234
        %v846 = vunpack.c.l.b16 %v235
        %v847 = vunpack.c.l.b16 %v237
        %v848 = vunpack.c.l.b16 %v238
        %v849 = vunpack.c.l.b16 %v240
        %v850 = vunpack.c.l.b16 %v241
        %v851 = vunpack.c.l.b16 %v243
        %v852 = vunpack.c.l.b16 %v244
        %v853 = vunpack.c.l.b16 %v246
        %v854 = vunpack.c.l.b16 %v247
        %v855 = vunpack.c.l.b16 %v249
        %v856 = vunpack.c.l.b16 %v250
        %v857 = vunpack.c.l.b16 %v252
        %v858 = vunpack.c.l.b16 %v253
        %v859 = vunpack.c.l.b16 %v255
        %v860 = vunpack.c.l.b16 %v256
        %v861 = vunpack.c.l.b16 %v258
        %v862 = vunpack.c.l.b16 %v259
        %v863 = vunpack.c.l.b16 %v261
        %v864 = vunpack.c.l.b16 %v262
        %v865 = vpack.c.b16 %v834, %v833
        %v866 = vpack.c.b16 %v836, %v835
        %v867 = vpack.c.b16 %v838, %v837
        %v868 = vpack.c.b16 %v840, %v839
        %v869 = vpack.c.b16 %v842, %v841
        %v870 = vpack.c.b16 %v844, %v843
        %v871 = vpack.c.b16 %v846, %v845
        %v872 = vpack.c.b16 %v848, %v847
        %v873 = vpack.c.b16 %v850, %v849
        %v874 = vpack.c.b16 %v852, %v851
        %v875 = vpack.c.b16 %v854, %v853
        %v876 = vpack.c.b16 %v856, %v855
        %v877 = vpack.c.b16 %v858, %v857
        %v878 = vpack.c.b16 %v860, %v859
        %v879 = vpack.c.b16 %v862, %v861
        %v880 = vpack.c.b16 %v864, %v863
        %v897 = vunpack.c.l.b16 %v430
        %v898 = vunpack.c.l.b16 %v440
        %v899 = vunpack.c.l.b16 %v454
        %v900 = vunpack.c.l.b16 %v464
        %v901 = vunpack.c.l.b16 %v478
        %v902 = vunpack.c.l.b16 %v488
        %v903 = vunpack.c.l.b16 %v502
        %v904 = vunpack.c.l.b16 %v512
        %v905 = vunpack.c.l.b16 %v526
        %v906 = vunpack.c.l.b16 %v536
        %v907 = vunpack.c.l.b16 %v550
        %v908 = vunpack.c.l.b16 %v560
        %v909 = vunpack.c.l.b16 %v574
        %v910 = vunpack.c.l.b16 %v584
        %v911 = vunpack.c.l.b16 %v598
        %v912 = vunpack.c.l.b16 %v608
        %v913 = vunpack.c.l.b16 %v622
        %v914 = vunpack.c.l.b16 %v632
        %v915 = vunpack.c.l.b16 %v646
        %v916 = vunpack.c.l.b16 %v656
        %v917 = vunpack.c.l.b16 %v670
        %v918 = vunpack.c.l.b16 %v680
        %v919 = vunpack.c.l.b16 %v694
        %v920 = vunpack.c.l.b16 %v704
        %v921 = vunpack.c.l.b16 %v718
        %v922 = vunpack.c.l.b16 %v728
        %v923 = vunpack.c.l.b16 %v742
        %v924 = vunpack.c.l.b16 %v752
        %v925 = vunpack.c.l.b16 %v766
        %v926 = vunpack.c.l.b16 %v776
        %v927 = vunpack.c.l.b16 %v790
        %v928 = vunpack.c.l.b16 %v800
        %v929 = vpack.c.b16 %v898, %v897
        %v930 = vpack.c.b16 %v900, %v899
        %v931 = vpack.c.b16 %v902, %v901
        %v932 = vpack.c.b16 %v904, %v903
        %v933 = vpack.c.b16 %v906, %v905
        %v934 = vpack.c.b16 %v908, %v907
        %v935 = vpack.c.b16 %v910, %v909
        %v936 = vpack.c.b16 %v912, %v911
        %v937 = vpack.c.b16 %v914, %v913
        %v938 = vpack.c.b16 %v916, %v915
        %v939 = vpack.c.b16 %v918, %v917
        %v940 = vpack.c.b16 %v920, %v919
        %v941 = vpack.c.b16 %v922, %v921
        %v942 = vpack.c.b16 %v924, %v923
        %v943 = vpack.c.b16 %v926, %v925
        %v944 = vpack.c.b16 %v928, %v927
        %vm977 = vcmask 1042432
        %vm978 = vcmask 1046532
        %vm979 = vmor %vm977, %vm978
        %v980 = vrot.slane %v216, 5
        %v981 = vrot.slane %v980, 4
        %v982 = vrot.slane %v217, 5
        %v983 = vsel %vm979, %v981, %v982
        %v984 = vrot.slane %v982, 4
        %v985 = vrot.slane %v218, 5
        %v986 = vsel %vm979, %v984, %v985
        %v987 = vrot.slane %v219, 5
        %v988 = vrot.slane %v987, 4
        %v989 = vrot.slane %v220, 5
        %v990 = vsel %vm979, %v988, %v989
        %v991 = vrot.slane %v989, 4
        %v992 = vrot.slane %v221, 5
        %v993 = vsel %vm979, %v991, %v992
        %v994 = vrot.slane %v222, 5
        %v995 = vrot.slane %v994, 4
        %v996 = vrot.slane %v223, 5
        %v997 = vsel %vm979, %v995, %v996
        %v998 = vrot.slane %v996, 4
        %v999 = vrot.slane %v224, 5
        %v1000 = vsel %vm979, %v998, %v999
        %v1001 = vrot.slane %v225, 5
        %v1002 = vrot.slane %v1001, 4
        %v1003 = vrot.slane %v226, 5
        %v1004 = vsel %vm979, %v1002, %v1003
        %v1005 = vrot.slane %v1003, 4
        %v1006 = vrot.slane %v227, 5
        %v1007 = vsel %vm979, %v1005, %v1006
        %v1008 = vrot.slane %v228, 5
        %v1009 = vrot.slane %v1008, 4
        %v1010 = vrot.slane %v229, 5
        %v1011 = vsel %vm979, %v1009, %v1010
        %v1012 = vrot.slane %v1010, 4
        %v1013 = vrot.slane %v230, 5
        %v1014 = vsel %vm979, %v1012, %v1013
        %v1015 = vrot.slane %v231, 5
        %v1016 = vrot.slane %v1015, 4
        %v1017 = vrot.slane %v232, 5
        %v1018 = vsel %vm979, %v1016, %v1017
        %v1019 = vrot.slane %v1017, 4
        %v1020 = vrot.slane %v233, 5
        %v1021 = vsel %vm979, %v1019, %v1020
        %v1022 = vrot.slane %v234, 5
        %v1023 = vrot.slane %v1022, 4
        %v1024 = vrot.slane %v235, 5
        %v1025 = vsel %vm979, %v1023, %v1024
        %v1026 = vrot.slane %v1024, 4
        %v1027 = vrot.slane %v236, 5
        %v1028 = vsel %vm979, %v1026, %v1027
        %v1029 = vrot.slane %v237, 5
        %v1030 = vrot.slane %v1029, 4
        %v1031 = vrot.slane %v238, 5
        %v1032 = vsel %vm979, %v1030, %v1031
        %v1033 = vrot.slane %v1031, 4
        %v1034 = vrot.slane %v239, 5
        %v1035 = vsel %vm979, %v1033, %v1034
        %v1036 = vrot.slane %v240, 5
        %v1037 = vrot.slane %v1036, 4
        %v1038 = vrot.slane %v241, 5
        %v1039 = vsel %vm979, %v1037, %v1038
        %v1040 = vrot.slane %v1038, 4
        %v1041 = vrot.slane %v242, 5
        %v1042 = vsel %vm979, %v1040, %v1041
        %v1043 = vrot.slane %v243, 5
        %v1044 = vrot.slane %v1043, 4
        %v1045 = vrot.slane %v244, 5
        %v1046 = vsel %vm979, %v1044, %v1045
        %v1047 = vrot.slane %v1045, 4
        %v1048 = vrot.slane %v245, 5
        %v1049 = vsel %vm979, %v1047, %v1048
        %v1050 = vrot.slane %v246, 5
        %v1051 = vrot.slane %v1050, 4
        %v1052 = vrot.slane %v247, 5
        %v1053 = vsel %vm979, %v1051, %v1052
        %v1054 = vrot.slane %v1052, 4
        %v1055 = vrot.slane %v248, 5
        %v1056 = vsel %vm979, %v1054, %v1055
        %v1057 = vrot.slane %v249, 5
        %v1058 = vrot.slane %v1057, 4
        %v1059 = vrot.slane %v250, 5
        %v1060 = vsel %vm979, %v1058, %v1059
        %v1061 = vrot.slane %v1059, 4
        %v1062 = vrot.slane %v251, 5
        %v1063 = vsel %vm979, %v1061, %v1062
        %v1064 = vrot.slane %v252, 5
        %v1065 = vrot.slane %v1064, 4
        %v1066 = vrot.slane %v253, 5
        %v1067 = vsel %vm979, %v1065, %v1066
        %v1068 = vrot.slane %v1066, 4
        %v1069 = vrot.slane %v254, 5
        %v1070 = vsel %vm979, %v1068, %v1069
        %v1071 = vrot.slane %v255, 5
        %v1072 = vrot.slane %v1071, 4
        %v1073 = vrot.slane %v256, 5
        %v1074 = vsel %vm979, %v1072, %v1073
        %v1075 = vrot.slane %v1073, 4
        %v1076 = vrot.slane %v257, 5
        %v1077 = vsel %vm979, %v1075, %v1076
        %v1078 = vrot.slane %v258, 5
        %v1079 = vrot.slane %v1078, 4
        %v1080 = vrot.slane %v259, 5
        %v1081 = vsel %vm979, %v1079, %v1080
        %v1082 = vrot.slane %v1080, 4
        %v1083 = vrot.slane %v260, 5
        %v1084 = vsel %vm979, %v1082, %v1083
        %v1085 = vrot.slane %v261, 5
        %v1086 = vrot.slane %v1085, 4
        %v1087 = vrot.slane %v262, 5
        %v1088 = vsel %vm979, %v1086, %v1087
        %v1089 = vrot.slane %v1087, 4
        %v1090 = vrot.slane %v263, 5
        %v1091 = vsel %vm979, %v1089, %v1090
        %v1092 = vunpack.c.l.b16 %v983
        %v1093 = vunpack.c.l.b16 %v986
        %v1094 = vunpack.c.l.b16 %v990
        %v1095 = vunpack.c.l.b16 %v993
        %v1096 = vunpack.c.l.b16 %v997
        %v1097 = vunpack.c.l.b16 %v1000
        %v1098 = vunpack.c.l.b16 %v1004
        %v1099 = vunpack.c.l.b16 %v1007
        %v1100 = vunpack.c.l.b16 %v1011
        %v1101 = vunpack.c.l.b16 %v1014
        %v1102 = vunpack.c.l.b16 %v1018
        %v1103 = vunpack.c.l.b16 %v1021
        %v1104 = vunpack.c.l.b16 %v1025
        %v1105 = vunpack.c.l.b16 %v1028
        %v1106 = vunpack.c.l.b16 %v1032
        %v1107 = vunpack.c.l.b16 %v1035
        %v1108 = vunpack.c.l.b16 %v1039
        %v1109 = vunpack.c.l.b16 %v1042
        %v1110 = vunpack.c.l.b16 %v1046
        %v1111 = vunpack.c.l.b16 %v1049
        %v1112 = vunpack.c.l.b16 %v1053
        %v1113 = vunpack.c.l.b16 %v1056
        %v1114 = vunpack.c.l.b16 %v1060
        %v1115 = vunpack.c.l.b16 %v1063
        %v1116 = vunpack.c.l.b16 %v1067
        %v1117 = vunpack.c.l.b16 %v1070
        %v1118 = vunpack.c.l.b16 %v1074
        %v1119 = vunpack.c.l.b16 %v1077
        %v1120 = vunpack.c.l.b16 %v1081
        %v1121 = vunpack.c.l.b16 %v1084
        %v1122 = vunpack.c.l.b16 %v1088
        %v1123 = vunpack.c.l.b16 %v1091
        %v1124 = vpack.c.b16 %v1093, %v1092
        %v1125 = vpack.c.b16 %v1095, %v1094
        %v1126 = vpack.c.b16 %v1097, %v1096
        %v1127 = vpack.c.b16 %v1099, %v1098
        %v1128 = vpack.c.b16 %v1101, %v1100
        %v1129 = vpack.c.b16 %v1103, %v1102
        %v1130 = vpack.c.b16 %v1105, %v1104
        %v1131 = vpack.c.b16 %v1107, %v1106
        %v1132 = vpack.c.b16 %v1109, %v1108
        %v1133 = vpack.c.b16 %v1111, %v1110
        %v1134 = vpack.c.b16 %v1113, %v1112
        %v1135 = vpack.c.b16 %v1115, %v1114
        %v1136 = vpack.c.b16 %v1117, %v1116
        %v1137 = vpack.c.b16 %v1119, %v1118
        %v1138 = vpack.c.b16 %v1121, %v1120
        %v1139 = vpack.c.b16 %v1123, %v1122
        %v1158 = vunpack.c.l.b16 %v264
        %v1159 = vunpack.c.l.b16 %v265
        %v1160 = vpack.c.b16 %v1159, %v1158
        %v1194 = vunpack.c.l.b16 %v302
        %v1195 = vunpack.c.l.b16 %v303
        %v1196 = vunpack.c.l.b16 %v304
        %v1197 = vunpack.c.l.b16 %v305
        %v1198 = vunpack.c.l.b16 %v306
        %v1199 = vunpack.c.l.b16 %v307
        %v1200 = vunpack.c.l.b16 %v308
        %v1201 = vunpack.c.l.b16 %v309
        %v1202 = vunpack.c.l.b16 %v310
        %v1203 = vunpack.c.l.b16 %v311
        %v1204 = vunpack.c.l.b16 %v312
        %v1205 = vunpack.c.l.b16 %v313
        %v1206 = vunpack.c.l.b16 %v314
        %v1207 = vunpack.c.l.b16 %v315
        %v1208 = vunpack.c.l.b16 %v316
        %v1209 = vunpack.c.l.b16 %v317
        %v1210 = vunpack.c.l.b16 %v318
        %v1211 = vunpack.c.l.b16 %v319
        %v1212 = vunpack.c.l.b16 %v320
        %v1213 = vunpack.c.l.b16 %v321
        %v1214 = vunpack.c.l.b16 %v322
        %v1215 = vunpack.c.l.b16 %v323
        %v1216 = vunpack.c.l.b16 %v324
        %v1217 = vunpack.c.l.b16 %v325
        %v1218 = vunpack.c.l.b16 %v326
        %v1219 = vunpack.c.l.b16 %v327
        %v1220 = vunpack.c.l.b16 %v328
        %v1221 = vunpack.c.l.b16 %v329
        %v1222 = vunpack.c.l.b16 %v330
        %v1223 = vunpack.c.l.b16 %v331
        %v1224 = vunpack.c.l.b16 %v332
        %v1225 = vunpack.c.l.b16 %v333
        %v1226 = vpack.c.b16 %v1195, %v1194
        %v1227 = vpack.c.b16 %v1197, %v1196
        %v1228 = vpack.c.b16 %v1199, %v1198
        %v1229 = vpack.c.b16 %v1201, %v1200
        %v1230 = vpack.c.b16 %v1203, %v1202
        %v1231 = vpack.c.b16 %v1205, %v1204
        %v1232 = vpack.c.b16 %v1207, %v1206
        %v1233 = vpack.c.b16 %v1209, %v1208
        %v1234 = vpack.c.b16 %v1211, %v1210
        %v1235 = vpack.c.b16 %v1213, %v1212
        %v1236 = vpack.c.b16 %v1215, %v1214
        %v1237 = vpack.c.b16 %v1217, %v1216
        %v1238 = vpack.c.b16 %v1219, %v1218
        %v1239 = vpack.c.b16 %v1221, %v1220
        %v1240 = vpack.c.b16 %v1223, %v1222
        %v1241 = vpack.c.b16 %v1225, %v1224
        %1258 = vmatprep.subr.bf16.mxu0 0
        %1259 = vmatpush1.bf16.msra.mxu0 %v1226
        %1260 = vmatprep.subr.bf16.mxu0 0
        %1261 = vmatpush1.bf16.msra.mxu0 %v1227
        %1262 = vmatprep.subr.bf16.mxu0 0
        %1263 = vmatpush1.bf16.msra.mxu0 %v1228
        %1264 = vmatprep.subr.bf16.mxu0 0
        %1265 = vmatpush1.bf16.msra.mxu0 %v1229
        %1266 = vmatprep.subr.bf16.mxu0 0
        %1267 = vmatpush1.bf16.msra.mxu0 %v1230
        %1268 = vmatprep.subr.bf16.mxu0 0
        %1269 = vmatpush1.bf16.msra.mxu0 %v1231
        %1270 = vmatprep.subr.bf16.mxu0 0
        %1271 = vmatpush1.bf16.msra.mxu0 %v1232
        %1272 = vmatprep.subr.bf16.mxu0 0
        %1273 = vmatpush1.bf16.msra.mxu0 %v1233
        %1274 = vmatprep.subr.bf16.mxu0 0
        %1275 = vmatpush1.bf16.msra.mxu0 %v1234
        %1276 = vmatprep.subr.bf16.mxu0 0
        %1277 = vmatpush1.bf16.msra.mxu0 %v1235
        %1278 = vmatprep.subr.bf16.mxu0 0
        %1279 = vmatpush1.bf16.msra.mxu0 %v1236
        %1280 = vmatprep.subr.bf16.mxu0 0
        %1281 = vmatpush1.bf16.msra.mxu0 %v1237
        %1282 = vmatprep.subr.bf16.mxu0 0
        %1283 = vmatpush1.bf16.msra.mxu0 %v1238
        %1284 = vmatprep.subr.bf16.mxu0 0
        %1285 = vmatpush1.bf16.msra.mxu0 %v1239
        %1286 = vmatprep.subr.bf16.mxu0 0
        %1287 = vmatpush1.bf16.msra.mxu0 %v1240
        %1288 = vmatprep.subr.bf16.mxu0 0
        %1289 = vmatpush1.bf16.msra.mxu0 %v1241
        %1290 = vmatprep.mubr.bf16.mxu0 %v866
        %1291 = vmatmul.mubr.bf16.gmra.mrb[0].mxu0 %v1124
        %v1292 = vpop.f32.mrb[0].mxu0
        %v1293 = vadd.f32 0.0, %v1292
        %v1294 = vpop.f32.mrb[0].mxu0
        %v1295 = vpop.f32.mrb[0].mxu0
        %v1296 = vadd.f32 0.0, %v1295
        %v1297 = vpop.f32.mrb[0].mxu0
        %1298 = vmatprep.mubr.bf16.mxu0 %v867
        %1299 = vmatmul.mubr.bf16.gmra.mrb[0].mxu0 %v1125
        %v1300 = vpop.f32.mrb[0].mxu0
        %v1301 = vadd.f32 0.0, %v1300
        %v1302 = vpop.f32.mrb[0].mxu0
        %v1303 = vpop.f32.mrb[0].mxu0
        %v1304 = vadd.f32 0.0, %v1303
        %v1305 = vpop.f32.mrb[0].mxu0
        %1306 = vmatprep.mubr.bf16.mxu0 %v868
        %1307 = vmatmul.mubr.bf16.gmra.mrb[0].mxu0 %v1126
        %v1308 = vpop.f32.mrb[0].mxu0
        %v1309 = vadd.f32 0.0, %v1308
        %v1310 = vpop.f32.mrb[0].mxu0
        %v1311 = vpop.f32.mrb[0].mxu0
        %v1312 = vadd.f32 0.0, %v1311
        %v1313 = vpop.f32.mrb[0].mxu0
        %1314 = vmatprep.mubr.bf16.mxu0 %v869
        %1315 = vmatmul.mubr.bf16.gmra.mrb[0].mxu0 %v1127
        %v1316 = vpop.f32.mrb[0].mxu0
        %v1317 = vadd.f32 0.0, %v1316
        %v1318 = vpop.f32.mrb[0].mxu0
        %v1319 = vpop.f32.mrb[0].mxu0
        %v1320 = vadd.f32 0.0, %v1319
        %v1321 = vpop.f32.mrb[0].mxu0
        %1322 = vmatprep.mubr.bf16.mxu0 %v870
        %1323 = vmatmul.mubr.bf16.gmra.mrb[0].mxu0 %v1128
        %v1324 = vpop.f32.mrb[0].mxu0
        %v1325 = vadd.f32 0.0, %v1324
        %v1326 = vpop.f32.mrb[0].mxu0
        %v1327 = vpop.f32.mrb[0].mxu0
        %v1328 = vadd.f32 0.0, %v1327
        %v1329 = vpop.f32.mrb[0].mxu0
        %1330 = vmatprep.mubr.bf16.mxu0 %v871
        %1331 = vmatmul.mubr.bf16.gmra.mrb[0].mxu0 %v1129
        %v1332 = vpop.f32.mrb[0].mxu0
        %v1333 = vadd.f32 0.0, %v1332
        %v1334 = vpop.f32.mrb[0].mxu0
        %v1335 = vpop.f32.mrb[0].mxu0
        %v1336 = vadd.f32 0.0, %v1335
        %v1337 = vpop.f32.mrb[0].mxu0
        %1338 = vmatprep.mubr.bf16.mxu0 %v872
        %1339 = vmatmul.mubr.bf16.gmra.mrb[0].mxu0 %v1130
        %v1340 = vpop.f32.mrb[0].mxu0
        %v1341 = vadd.f32 0.0, %v1340
        %v1342 = vpop.f32.mrb[0].mxu0
        %v1343 = vpop.f32.mrb[0].mxu0
        %v1344 = vadd.f32 0.0, %v1343
        %v1345 = vpop.f32.mrb[0].mxu0
        %1346 = vmatprep.mubr.bf16.mxu0 %v873
        %1347 = vmatmul.mubr.bf16.gmra.mrb[0].mxu0 %v1131
        %v1348 = vpop.f32.mrb[0].mxu0
        %v1349 = vadd.f32 0.0, %v1348
        %v1350 = vpop.f32.mrb[0].mxu0
        %v1351 = vpop.f32.mrb[0].mxu0
        %v1352 = vadd.f32 0.0, %v1351
        %v1353 = vpop.f32.mrb[0].mxu0
        %1354 = vmatprep.mubr.bf16.mxu0 %v874
        %1355 = vmatmul.mubr.bf16.gmra.mrb[0].mxu0 %v1132
        %v1356 = vpop.f32.mrb[0].mxu0
        %v1357 = vadd.f32 0.0, %v1356
        %v1358 = vpop.f32.mrb[0].mxu0
        %v1359 = vpop.f32.mrb[0].mxu0
        %v1360 = vadd.f32 0.0, %v1359
        %v1361 = vpop.f32.mrb[0].mxu0
        %1362 = vmatprep.mubr.bf16.mxu0 %v875
        %1363 = vmatmul.mubr.bf16.gmra.mrb[0].mxu0 %v1133
        %v1364 = vpop.f32.mrb[0].mxu0
        %v1365 = vadd.f32 0.0, %v1364
        %v1366 = vpop.f32.mrb[0].mxu0
        %v1367 = vpop.f32.mrb[0].mxu0
        %v1368 = vadd.f32 0.0, %v1367
        %v1369 = vpop.f32.mrb[0].mxu0
        %1370 = vmatprep.mubr.bf16.mxu0 %v876
        %1371 = vmatmul.mubr.bf16.gmra.mrb[0].mxu0 %v1134
        %v1372 = vpop.f32.mrb[0].mxu0
        %v1373 = vadd.f32 0.0, %v1372
        %v1374 = vpop.f32.mrb[0].mxu0
        %v1375 = vpop.f32.mrb[0].mxu0
        %v1376 = vadd.f32 0.0, %v1375
        %v1377 = vpop.f32.mrb[0].mxu0
        %1378 = vmatprep.mubr.bf16.mxu0 %v877
        %1379 = vmatmul.mubr.bf16.gmra.mrb[0].mxu0 %v1135
        %v1380 = vpop.f32.mrb[0].mxu0
        %v1381 = vadd.f32 0.0, %v1380
        %v1382 = vpop.f32.mrb[0].mxu0
        %v1383 = vpop.f32.mrb[0].mxu0
        %v1384 = vadd.f32 0.0, %v1383
        %v1385 = vpop.f32.mrb[0].mxu0
        %1386 = vmatprep.mubr.bf16.mxu0 %v878
        %1387 = vmatmul.mubr.bf16.gmra.mrb[0].mxu0 %v1136
        %v1388 = vpop.f32.mrb[0].mxu0
        %v1389 = vadd.f32 0.0, %v1388
        %v1390 = vpop.f32.mrb[0].mxu0
        %v1391 = vpop.f32.mrb[0].mxu0
        %v1392 = vadd.f32 0.0, %v1391
        %v1393 = vpop.f32.mrb[0].mxu0
        %1394 = vmatprep.mubr.bf16.mxu0 %v879
        %1395 = vmatmul.mubr.bf16.gmra.mrb[0].mxu0 %v1137
        %v1396 = vpop.f32.mrb[0].mxu0
        %v1397 = vadd.f32 0.0, %v1396
        %v1398 = vpop.f32.mrb[0].mxu0
        %v1399 = vpop.f32.mrb[0].mxu0
        %v1400 = vadd.f32 0.0, %v1399
        %v1401 = vpop.f32.mrb[0].mxu0
        %1402 = vmatprep.mubr.bf16.mxu0 %v880
        %1403 = vmatmul.mubr.bf16.gmra.mrb[0].mxu0 %v1138
        %v1404 = vpop.f32.mrb[0].mxu0
        %v1405 = vadd.f32 0.0, %v1404
        %v1406 = vpop.f32.mrb[0].mxu0
        %v1407 = vpop.f32.mrb[0].mxu0
        %v1408 = vadd.f32 0.0, %v1407
        %v1409 = vpop.f32.mrb[0].mxu0
        %1410 = vmatprep.mubr.bf16.mxu0 %v1160
        %1411 = vmatmul.mubr.bf16.gmra.mrb[0].mxu0 %v1139
        %v1412 = vpop.f32.mrb[0].mxu0
        %v1413 = vadd.f32 0.0, %v1412
        %v1414 = vpop.f32.mrb[0].mxu0
        %v1415 = vpop.f32.mrb[0].mxu0
        %v1416 = vadd.f32 0.0, %v1415
        %v1417 = vpop.f32.mrb[0].mxu0
        %1418 = vdwg.mxu0
        %v1451 = vunpack.c.l.b16 %v270
        %v1452 = vunpack.c.l.b16 %v271
        %v1453 = vunpack.c.l.b16 %v272
        %v1454 = vunpack.c.l.b16 %v273
        %v1455 = vunpack.c.l.b16 %v274
        %v1456 = vunpack.c.l.b16 %v275
        %v1457 = vunpack.c.l.b16 %v276
        %v1458 = vunpack.c.l.b16 %v277
        %v1459 = vunpack.c.l.b16 %v278
        %v1460 = vunpack.c.l.b16 %v279
        %v1461 = vunpack.c.l.b16 %v280
        %v1462 = vunpack.c.l.b16 %v281
        %v1463 = vunpack.c.l.b16 %v282
        %v1464 = vunpack.c.l.b16 %v283
        %v1465 = vunpack.c.l.b16 %v284
        %v1466 = vunpack.c.l.b16 %v285
        %v1467 = vunpack.c.l.b16 %v286
        %v1468 = vunpack.c.l.b16 %v287
        %v1469 = vunpack.c.l.b16 %v288
        %v1470 = vunpack.c.l.b16 %v289
        %v1471 = vunpack.c.l.b16 %v290
        %v1472 = vunpack.c.l.b16 %v291
        %v1473 = vunpack.c.l.b16 %v292
        %v1474 = vunpack.c.l.b16 %v293
        %v1475 = vunpack.c.l.b16 %v294
        %v1476 = vunpack.c.l.b16 %v295
        %v1477 = vunpack.c.l.b16 %v296
        %v1478 = vunpack.c.l.b16 %v297
        %v1479 = vunpack.c.l.b16 %v298
        %v1480 = vunpack.c.l.b16 %v299
        %v1481 = vunpack.c.l.b16 %v300
        %v1482 = vunpack.c.l.b16 %v301
        %v1483 = vpack.c.b16 %v1452, %v1451
        %v1484 = vpack.c.b16 %v1454, %v1453
        %v1485 = vpack.c.b16 %v1456, %v1455
        %v1486 = vpack.c.b16 %v1458, %v1457
        %v1487 = vpack.c.b16 %v1460, %v1459
        %v1488 = vpack.c.b16 %v1462, %v1461
        %v1489 = vpack.c.b16 %v1464, %v1463
        %v1490 = vpack.c.b16 %v1466, %v1465
        %v1491 = vpack.c.b16 %v1468, %v1467
        %v1492 = vpack.c.b16 %v1470, %v1469
        %v1493 = vpack.c.b16 %v1472, %v1471
        %v1494 = vpack.c.b16 %v1474, %v1473
        %v1495 = vpack.c.b16 %v1476, %v1475
        %v1496 = vpack.c.b16 %v1478, %v1477
        %v1497 = vpack.c.b16 %v1480, %v1479
        %v1498 = vpack.c.b16 %v1482, %v1481
        %1515 = vmatprep.subr.bf16.mxu0 0
        %1516 = vmatpush1.bf16.msra.mxu0 %v1483
        %1517 = vmatprep.subr.bf16.mxu0 0
        %1518 = vmatpush1.bf16.msra.mxu0 %v1484
        %1519 = vmatprep.subr.bf16.mxu0 0
        %1520 = vmatpush1.bf16.msra.mxu0 %v1485
        %1521 = vmatprep.subr.bf16.mxu0 0
        %1522 = vmatpush1.bf16.msra.mxu0 %v1486
        %1523 = vmatprep.subr.bf16.mxu0 0
        %1524 = vmatpush1.bf16.msra.mxu0 %v1487
        %1525 = vmatprep.subr.bf16.mxu0 0
        %1526 = vmatpush1.bf16.msra.mxu0 %v1488
        %1527 = vmatprep.subr.bf16.mxu0 0
        %1528 = vmatpush1.bf16.msra.mxu0 %v1489
        %1529 = vmatprep.subr.bf16.mxu0 0
        %1530 = vmatpush1.bf16.msra.mxu0 %v1490
        %1531 = vmatprep.subr.bf16.mxu0 0
        %1532 = vmatpush1.bf16.msra.mxu0 %v1491
        %1533 = vmatprep.subr.bf16.mxu0 0
        %1534 = vmatpush1.bf16.msra.mxu0 %v1492
        %1535 = vmatprep.subr.bf16.mxu0 0
        %1536 = vmatpush1.bf16.msra.mxu0 %v1493
        %1537 = vmatprep.subr.bf16.mxu0 0
        %1538 = vmatpush1.bf16.msra.mxu0 %v1494
        %1539 = vmatprep.subr.bf16.mxu0 0
        %1540 = vmatpush1.bf16.msra.mxu0 %v1495
        %1541 = vmatprep.subr.bf16.mxu0 0
        %1542 = vmatpush1.bf16.msra.mxu0 %v1496
        %1543 = vmatprep.subr.bf16.mxu0 0
        %1544 = vmatpush1.bf16.msra.mxu0 %v1497
        %1545 = vmatprep.subr.bf16.mxu0 0
        %1546 = vmatpush1.bf16.msra.mxu0 %v1498
        %1547 = vmatprep.mubr.bf16.mxu0 %v929
        %1548 = vmatmul.mubr.bf16.gmra.mrb[0].mxu0 %v865
        %v1549 = vpop.f32.mrb[0].mxu0
        %v1550 = vadd.f32 %v1293, %v1549
        %v1551 = vpop.f32.mrb[0].mxu0
        %v1552 = vpop.f32.mrb[0].mxu0
        %v1553 = vadd.f32 %v1296, %v1552
        %v1554 = vpop.f32.mrb[0].mxu0
        %1555 = vmatprep.mubr.bf16.mxu0 %v930
        %1556 = vmatmul.mubr.bf16.gmra.mrb[0].mxu0 %v866
        %v1557 = vpop.f32.mrb[0].mxu0
        %v1558 = vadd.f32 %v1301, %v1557
        %v1559 = vpop.f32.mrb[0].mxu0
        %v1560 = vpop.f32.mrb[0].mxu0
        %v1561 = vadd.f32 %v1304, %v1560
        %v1562 = vpop.f32.mrb[0].mxu0
        %1563 = vmatprep.mubr.bf16.mxu0 %v931
        %1564 = vmatmul.mubr.bf16.gmra.mrb[0].mxu0 %v867
        %v1565 = vpop.f32.mrb[0].mxu0
        %v1566 = vadd.f32 %v1309, %v1565
        %v1567 = vpop.f32.mrb[0].mxu0
        %v1568 = vpop.f32.mrb[0].mxu0
        %v1569 = vadd.f32 %v1312, %v1568
        %v1570 = vpop.f32.mrb[0].mxu0
        %1571 = vmatprep.mubr.bf16.mxu0 %v932
        %1572 = vmatmul.mubr.bf16.gmra.mrb[0].mxu0 %v868
        %v1573 = vpop.f32.mrb[0].mxu0
        %v1574 = vadd.f32 %v1317, %v1573
        %v1575 = vpop.f32.mrb[0].mxu0
        %v1576 = vpop.f32.mrb[0].mxu0
        %v1577 = vadd.f32 %v1320, %v1576
        %v1578 = vpop.f32.mrb[0].mxu0
        %1579 = vmatprep.mubr.bf16.mxu0 %v933
        %1580 = vmatmul.mubr.bf16.gmra.mrb[0].mxu0 %v869
        %v1581 = vpop.f32.mrb[0].mxu0
        %v1582 = vadd.f32 %v1325, %v1581
        %v1583 = vpop.f32.mrb[0].mxu0
        %v1584 = vpop.f32.mrb[0].mxu0
        %v1585 = vadd.f32 %v1328, %v1584
        %v1586 = vpop.f32.mrb[0].mxu0
        %1587 = vmatprep.mubr.bf16.mxu0 %v934
        %1588 = vmatmul.mubr.bf16.gmra.mrb[0].mxu0 %v870
        %v1589 = vpop.f32.mrb[0].mxu0
        %v1590 = vadd.f32 %v1333, %v1589
        %v1591 = vpop.f32.mrb[0].mxu0
        %v1592 = vpop.f32.mrb[0].mxu0
        %v1593 = vadd.f32 %v1336, %v1592
        %v1594 = vpop.f32.mrb[0].mxu0
        %1595 = vmatprep.mubr.bf16.mxu0 %v935
        %1596 = vmatmul.mubr.bf16.gmra.mrb[0].mxu0 %v871
        %v1597 = vpop.f32.mrb[0].mxu0
        %v1598 = vadd.f32 %v1341, %v1597
        %v1599 = vpop.f32.mrb[0].mxu0
        %v1600 = vpop.f32.mrb[0].mxu0
        %v1601 = vadd.f32 %v1344, %v1600
        %v1602 = vpop.f32.mrb[0].mxu0
        %1603 = vmatprep.mubr.bf16.mxu0 %v936
        %1604 = vmatmul.mubr.bf16.gmra.mrb[0].mxu0 %v872
        %v1605 = vpop.f32.mrb[0].mxu0
        %v1606 = vadd.f32 %v1349, %v1605
        %v1607 = vpop.f32.mrb[0].mxu0
        %v1608 = vpop.f32.mrb[0].mxu0
        %v1609 = vadd.f32 %v1352, %v1608
        %v1610 = vpop.f32.mrb[0].mxu0
        %1611 = vmatprep.mubr.bf16.mxu0 %v937
        %1612 = vmatmul.mubr.bf16.gmra.mrb[0].mxu0 %v873
        %v1613 = vpop.f32.mrb[0].mxu0
        %v1614 = vadd.f32 %v1357, %v1613
        %v1615 = vpop.f32.mrb[0].mxu0
        %v1616 = vpop.f32.mrb[0].mxu0
        %v1617 = vadd.f32 %v1360, %v1616
        %v1618 = vpop.f32.mrb[0].mxu0
        %1619 = vmatprep.mubr.bf16.mxu0 %v938
        %1620 = vmatmul.mubr.bf16.gmra.mrb[0].mxu0 %v874
        %v1621 = vpop.f32.mrb[0].mxu0
        %v1622 = vadd.f32 %v1365, %v1621
        %v1623 = vpop.f32.mrb[0].mxu0
        %v1624 = vpop.f32.mrb[0].mxu0
        %v1625 = vadd.f32 %v1368, %v1624
        %v1626 = vpop.f32.mrb[0].mxu0
        %1627 = vmatprep.mubr.bf16.mxu0 %v939
        %1628 = vmatmul.mubr.bf16.gmra.mrb[0].mxu0 %v875
        %v1629 = vpop.f32.mrb[0].mxu0
        %v1630 = vadd.f32 %v1373, %v1629
        %v1631 = vpop.f32.mrb[0].mxu0
        %v1632 = vpop.f32.mrb[0].mxu0
        %v1633 = vadd.f32 %v1376, %v1632
        %v1634 = vpop.f32.mrb[0].mxu0
        %1635 = vmatprep.mubr.bf16.mxu0 %v940
        %1636 = vmatmul.mubr.bf16.gmra.mrb[0].mxu0 %v876
        %v1637 = vpop.f32.mrb[0].mxu0
        %v1638 = vadd.f32 %v1381, %v1637
        %v1639 = vpop.f32.mrb[0].mxu0
        %v1640 = vpop.f32.mrb[0].mxu0
        %v1641 = vadd.f32 %v1384, %v1640
        %v1642 = vpop.f32.mrb[0].mxu0
        %1643 = vmatprep.mubr.bf16.mxu0 %v941
        %1644 = vmatmul.mubr.bf16.gmra.mrb[0].mxu0 %v877
        %v1645 = vpop.f32.mrb[0].mxu0
        %v1646 = vadd.f32 %v1389, %v1645
        %v1647 = vpop.f32.mrb[0].mxu0
        %v1648 = vpop.f32.mrb[0].mxu0
        %v1649 = vadd.f32 %v1392, %v1648
        %v1650 = vpop.f32.mrb[0].mxu0
        %1651 = vmatprep.mubr.bf16.mxu0 %v942
        %1652 = vmatmul.mubr.bf16.gmra.mrb[0].mxu0 %v878
        %v1653 = vpop.f32.mrb[0].mxu0
        %v1654 = vadd.f32 %v1397, %v1653
        %v1655 = vpop.f32.mrb[0].mxu0
        %v1656 = vpop.f32.mrb[0].mxu0
        %v1657 = vadd.f32 %v1400, %v1656
        %v1658 = vpop.f32.mrb[0].mxu0
        %1659 = vmatprep.mubr.bf16.mxu0 %v943
        %1660 = vmatmul.mubr.bf16.gmra.mrb[0].mxu0 %v879
        %v1661 = vpop.f32.mrb[0].mxu0
        %v1662 = vadd.f32 %v1405, %v1661
        %v1663 = vpop.f32.mrb[0].mxu0
        %v1664 = vpop.f32.mrb[0].mxu0
        %v1665 = vadd.f32 %v1408, %v1664
        %v1666 = vpop.f32.mrb[0].mxu0
        %1667 = vmatprep.mubr.bf16.mxu0 %v944
        %1668 = vmatmul.mubr.bf16.gmra.mrb[0].mxu0 %v880
        %v1669 = vpop.f32.mrb[0].mxu0
        %v1670 = vadd.f32 %v1413, %v1669
        %v1671 = vpop.f32.mrb[0].mxu0
        %v1672 = vpop.f32.mrb[0].mxu0
        %v1673 = vadd.f32 %v1416, %v1672
        %v1674 = vpop.f32.mrb[0].mxu0
        %1675 = vdwg.mxu0
        %v1677 = vshrl.u32 %v264, 16
        %v1679 = vrot.slane %v1677, 4
        %v1680 = vshll.u32 %v264, 16
        %v1682 = vrot.slane %v1680, 5
        %v1683 = vor.u32 %v1679, %v1682
        %v1684 = vrot.slane %v1683, 4
        %v1686 = vshll.u32 %v265, 16
        %v1688 = vrot.slane %v1686, 5
        %v1689 = vsel %vm416, %v1684, %v1688
        %v1690 = vshrl.u32 %v265, 16
        %v1692 = vrot.slane %v1690, 4
        %v1693 = vor.u32 %v1692, %v1688
        %v1694 = vrot.slane %v1693, 4
        %v1696 = vshll.u32 %v266, 16
        %v1698 = vrot.slane %v1696, 5
        %v1699 = vsel %vm416, %v1694, %v1698
        %v1701 = vrot.slane %v264, 5
        %v1702 = vrot.slane %v1701, 4
        %v1703 = vrot.slane %v265, 5
        %v1704 = vsel %vm979, %v1702, %v1703
        %v1705 = vrot.slane %v1703, 4
        %v1706 = vrot.slane %v266, 5
        %v1707 = vsel %vm979, %v1705, %v1706
        %v1708 = vunpack.c.l.b16 %v1689
        %v1709 = vunpack.c.l.b16 %v1699
        %v1710 = vpack.c.b16 %v1709, %v1708
        %v1712 = vunpack.c.l.b16 %v1704
        %v1713 = vunpack.c.l.b16 %v1707
        %v1714 = vpack.c.b16 %v1713, %v1712
        %v1748 = vunpack.c.l.b16 %v334
        %v1749 = vunpack.c.l.b16 %v335
        %v1750 = vunpack.c.l.b16 %v336
        %v1751 = vunpack.c.l.b16 %v337
        %v1752 = vunpack.c.l.b16 %v338
        %v1753 = vunpack.c.l.b16 %v339
        %v1754 = vunpack.c.l.b16 %v340
        %v1755 = vunpack.c.l.b16 %v341
        %v1756 = vunpack.c.l.b16 %v342
        %v1757 = vunpack.c.l.b16 %v343
        %v1758 = vunpack.c.l.b16 %v344
        %v1759 = vunpack.c.l.b16 %v345
        %v1760 = vunpack.c.l.b16 %v346
        %v1761 = vunpack.c.l.b16 %v347
        %v1762 = vunpack.c.l.b16 %v348
        %v1763 = vunpack.c.l.b16 %v349
        %v1764 = vunpack.c.l.b16 %v350
        %v1765 = vunpack.c.l.b16 %v351
        %v1766 = vunpack.c.l.b16 %v352
        %v1767 = vunpack.c.l.b16 %v353
        %v1768 = vunpack.c.l.b16 %v354
        %v1769 = vunpack.c.l.b16 %v355
        %v1770 = vunpack.c.l.b16 %v356
        %v1771 = vunpack.c.l.b16 %v357
        %v1772 = vunpack.c.l.b16 %v358
        %v1773 = vunpack.c.l.b16 %v359
        %v1774 = vunpack.c.l.b16 %v360
        %v1775 = vunpack.c.l.b16 %v361
        %v1776 = vunpack.c.l.b16 %v362
        %v1777 = vunpack.c.l.b16 %v363
        %v1778 = vunpack.c.l.b16 %v364
        %v1779 = vunpack.c.l.b16 %v365
        %v1780 = vpack.c.b16 %v1749, %v1748
        %v1781 = vpack.c.b16 %v1751, %v1750
        %v1782 = vpack.c.b16 %v1753, %v1752
        %v1783 = vpack.c.b16 %v1755, %v1754
        %v1784 = vpack.c.b16 %v1757, %v1756
        %v1785 = vpack.c.b16 %v1759, %v1758
        %v1786 = vpack.c.b16 %v1761, %v1760
        %v1787 = vpack.c.b16 %v1763, %v1762
        %v1788 = vpack.c.b16 %v1765, %v1764
        %v1789 = vpack.c.b16 %v1767, %v1766
        %v1790 = vpack.c.b16 %v1769, %v1768
        %v1791 = vpack.c.b16 %v1771, %v1770
        %v1792 = vpack.c.b16 %v1773, %v1772
        %v1793 = vpack.c.b16 %v1775, %v1774
        %v1794 = vpack.c.b16 %v1777, %v1776
        %v1795 = vpack.c.b16 %v1779, %v1778
        %1812 = vmatprep.subr.bf16.mxu0 0
        %1813 = vmatpush1.bf16.msra.mxu0 %v1780
        %1814 = vmatprep.subr.bf16.mxu0 0
        %1815 = vmatpush1.bf16.msra.mxu0 %v1781
        %1816 = vmatprep.subr.bf16.mxu0 0
        %1817 = vmatpush1.bf16.msra.mxu0 %v1782
        %1818 = vmatprep.subr.bf16.mxu0 0
        %1819 = vmatpush1.bf16.msra.mxu0 %v1783
        %1820 = vmatprep.subr.bf16.mxu0 0
        %1821 = vmatpush1.bf16.msra.mxu0 %v1784
        %1822 = vmatprep.subr.bf16.mxu0 0
        %1823 = vmatpush1.bf16.msra.mxu0 %v1785
        %1824 = vmatprep.subr.bf16.mxu0 0
        %1825 = vmatpush1.bf16.msra.mxu0 %v1786
        %1826 = vmatprep.subr.bf16.mxu0 0
        %1827 = vmatpush1.bf16.msra.mxu0 %v1787
        %1828 = vmatprep.subr.bf16.mxu0 0
        %1829 = vmatpush1.bf16.msra.mxu0 %v1788
        %1830 = vmatprep.subr.bf16.mxu0 0
        %1831 = vmatpush1.bf16.msra.mxu0 %v1789
        %1832 = vmatprep.subr.bf16.mxu0 0
        %1833 = vmatpush1.bf16.msra.mxu0 %v1790
        %1834 = vmatprep.subr.bf16.mxu0 0
        %1835 = vmatpush1.bf16.msra.mxu0 %v1791
        %1836 = vmatprep.subr.bf16.mxu0 0
        %1837 = vmatpush1.bf16.msra.mxu0 %v1792
        %1838 = vmatprep.subr.bf16.mxu0 0
        %1839 = vmatpush1.bf16.msra.mxu0 %v1793
        %1840 = vmatprep.subr.bf16.mxu0 0
        %1841 = vmatpush1.bf16.msra.mxu0 %v1794
        %1842 = vmatprep.subr.bf16.mxu0 0
        %1843 = vmatpush1.bf16.msra.mxu0 %v1795
        %1844 = vmatprep.mubr.bf16.mxu0 %v1125
        %1845 = vmatmul.mubr.bf16.gmra.mrb[0].mxu0 %v930
        %v1846 = vpop.f32.mrb[0].mxu0
        %v1847 = vadd.f32 0.0, %v1846
        %v1848 = vpop.f32.mrb[0].mxu0
        %v1849 = vpop.f32.mrb[0].mxu0
        %v1850 = vadd.f32 0.0, %v1849
        %v1851 = vpop.f32.mrb[0].mxu0
        %1852 = vmatprep.mubr.bf16.mxu0 %v1126
        %1853 = vmatmul.mubr.bf16.gmra.mrb[0].mxu0 %v931
        %v1854 = vpop.f32.mrb[0].mxu0
        %v1855 = vadd.f32 0.0, %v1854
        %v1856 = vpop.f32.mrb[0].mxu0
        %v1857 = vpop.f32.mrb[0].mxu0
        %v1858 = vadd.f32 0.0, %v1857
        %v1859 = vpop.f32.mrb[0].mxu0
        %1860 = vmatprep.mubr.bf16.mxu0 %v1127
        %1861 = vmatmul.mubr.bf16.gmra.mrb[0].mxu0 %v932
        %v1862 = vpop.f32.mrb[0].mxu0
        %v1863 = vadd.f32 0.0, %v1862
        %v1864 = vpop.f32.mrb[0].mxu0
        %v1865 = vpop.f32.mrb[0].mxu0
        %v1866 = vadd.f32 0.0, %v1865
        %v1867 = vpop.f32.mrb[0].mxu0
        %1868 = vmatprep.mubr.bf16.mxu0 %v1128
        %1869 = vmatmul.mubr.bf16.gmra.mrb[0].mxu0 %v933
        %v1870 = vpop.f32.mrb[0].mxu0
        %v1871 = vadd.f32 0.0, %v1870
        %v1872 = vpop.f32.mrb[0].mxu0
        %v1873 = vpop.f32.mrb[0].mxu0
        %v1874 = vadd.f32 0.0, %v1873
        %v1875 = vpop.f32.mrb[0].mxu0
        %1876 = vmatprep.mubr.bf16.mxu0 %v1129
        %1877 = vmatmul.mubr.bf16.gmra.mrb[0].mxu0 %v934
        %v1878 = vpop.f32.mrb[0].mxu0
        %v1879 = vadd.f32 0.0, %v1878
        %v1880 = vpop.f32.mrb[0].mxu0
        %v1881 = vpop.f32.mrb[0].mxu0
        %v1882 = vadd.f32 0.0, %v1881
        %v1883 = vpop.f32.mrb[0].mxu0
        %1884 = vmatprep.mubr.bf16.mxu0 %v1130
        %1885 = vmatmul.mubr.bf16.gmra.mrb[0].mxu0 %v935
        %v1886 = vpop.f32.mrb[0].mxu0
        %v1887 = vadd.f32 0.0, %v1886
        %v1888 = vpop.f32.mrb[0].mxu0
        %v1889 = vpop.f32.mrb[0].mxu0
        %v1890 = vadd.f32 0.0, %v1889
        %v1891 = vpop.f32.mrb[0].mxu0
        %1892 = vmatprep.mubr.bf16.mxu0 %v1131
        %1893 = vmatmul.mubr.bf16.gmra.mrb[0].mxu0 %v936
        %v1894 = vpop.f32.mrb[0].mxu0
        %v1895 = vadd.f32 0.0, %v1894
        %v1896 = vpop.f32.mrb[0].mxu0
        %v1897 = vpop.f32.mrb[0].mxu0
        %v1898 = vadd.f32 0.0, %v1897
        %v1899 = vpop.f32.mrb[0].mxu0
        %1900 = vmatprep.mubr.bf16.mxu0 %v1132
        %1901 = vmatmul.mubr.bf16.gmra.mrb[0].mxu0 %v937
        %v1902 = vpop.f32.mrb[0].mxu0
        %v1903 = vadd.f32 0.0, %v1902
        %v1904 = vpop.f32.mrb[0].mxu0
        %v1905 = vpop.f32.mrb[0].mxu0
        %v1906 = vadd.f32 0.0, %v1905
        %v1907 = vpop.f32.mrb[0].mxu0
        %1908 = vmatprep.mubr.bf16.mxu0 %v1133
        %1909 = vmatmul.mubr.bf16.gmra.mrb[0].mxu0 %v938
        %v1910 = vpop.f32.mrb[0].mxu0
        %v1911 = vadd.f32 0.0, %v1910
        %v1912 = vpop.f32.mrb[0].mxu0
        %v1913 = vpop.f32.mrb[0].mxu0
        %v1914 = vadd.f32 0.0, %v1913
        %v1915 = vpop.f32.mrb[0].mxu0
        %1916 = vmatprep.mubr.bf16.mxu0 %v1134
        %1917 = vmatmul.mubr.bf16.gmra.mrb[0].mxu0 %v939
        %v1918 = vpop.f32.mrb[0].mxu0
        %v1919 = vadd.f32 0.0, %v1918
        %v1920 = vpop.f32.mrb[0].mxu0
        %v1921 = vpop.f32.mrb[0].mxu0
        %v1922 = vadd.f32 0.0, %v1921
        %v1923 = vpop.f32.mrb[0].mxu0
        %1924 = vmatprep.mubr.bf16.mxu0 %v1135
        %1925 = vmatmul.mubr.bf16.gmra.mrb[0].mxu0 %v940
        %v1926 = vpop.f32.mrb[0].mxu0
        %v1927 = vadd.f32 0.0, %v1926
        %v1928 = vpop.f32.mrb[0].mxu0
        %v1929 = vpop.f32.mrb[0].mxu0
        %v1930 = vadd.f32 0.0, %v1929
        %v1931 = vpop.f32.mrb[0].mxu0
        %1932 = vmatprep.mubr.bf16.mxu0 %v1136
        %1933 = vmatmul.mubr.bf16.gmra.mrb[0].mxu0 %v941
        %v1934 = vpop.f32.mrb[0].mxu0
        %v1935 = vadd.f32 0.0, %v1934
        %v1936 = vpop.f32.mrb[0].mxu0
        %v1937 = vpop.f32.mrb[0].mxu0
        %v1938 = vadd.f32 0.0, %v1937
        %v1939 = vpop.f32.mrb[0].mxu0
        %1940 = vmatprep.mubr.bf16.mxu0 %v1137
        %1941 = vmatmul.mubr.bf16.gmra.mrb[0].mxu0 %v942
        %v1942 = vpop.f32.mrb[0].mxu0
        %v1943 = vadd.f32 0.0, %v1942
        %v1944 = vpop.f32.mrb[0].mxu0
        %v1945 = vpop.f32.mrb[0].mxu0
        %v1946 = vadd.f32 0.0, %v1945
        %v1947 = vpop.f32.mrb[0].mxu0
        %1948 = vmatprep.mubr.bf16.mxu0 %v1138
        %1949 = vmatmul.mubr.bf16.gmra.mrb[0].mxu0 %v943
        %v1950 = vpop.f32.mrb[0].mxu0
        %v1951 = vadd.f32 0.0, %v1950
        %v1952 = vpop.f32.mrb[0].mxu0
        %v1953 = vpop.f32.mrb[0].mxu0
        %v1954 = vadd.f32 0.0, %v1953
        %v1955 = vpop.f32.mrb[0].mxu0
        %1956 = vmatprep.mubr.bf16.mxu0 %v1139
        %1957 = vmatmul.mubr.bf16.gmra.mrb[0].mxu0 %v944
        %v1958 = vpop.f32.mrb[0].mxu0
        %v1959 = vadd.f32 0.0, %v1958
        %v1960 = vpop.f32.mrb[0].mxu0
        %v1961 = vpop.f32.mrb[0].mxu0
        %v1962 = vadd.f32 0.0, %v1961
        %v1963 = vpop.f32.mrb[0].mxu0
        %1964 = vmatprep.mubr.bf16.mxu0 %v1714
        %1965 = vmatmul.mubr.bf16.gmra.mrb[0].mxu0 %v1710
        %v1966 = vpop.f32.mrb[0].mxu0
        %v1967 = vadd.f32 0.0, %v1966
        %v1968 = vpop.f32.mrb[0].mxu0
        %v1969 = vpop.f32.mrb[0].mxu0
        %v1970 = vadd.f32 0.0, %v1969
        %v1971 = vpop.f32.mrb[0].mxu0
        %1972 = vdwg.mxu0
        %v1973 = vadd.f32 %v1550, %v1847
        %v1974 = vadd.f32 %v1553, %v1850
        %v1975 = vadd.f32 %v1558, %v1855
        %v1976 = vadd.f32 %v1561, %v1858
        %v1977 = vadd.f32 %v1566, %v1863
        %v1978 = vadd.f32 %v1569, %v1866
        %v1979 = vadd.f32 %v1574, %v1871
        %v1980 = vadd.f32 %v1577, %v1874
        %v1981 = vadd.f32 %v1582, %v1879
        %v1982 = vadd.f32 %v1585, %v1882
        %v1983 = vadd.f32 %v1590, %v1887
        %v1984 = vadd.f32 %v1593, %v1890
        %v1985 = vadd.f32 %v1598, %v1895
        %v1986 = vadd.f32 %v1601, %v1898
        %v1987 = vadd.f32 %v1606, %v1903
        %v1988 = vadd.f32 %v1609, %v1906
        %v1989 = vadd.f32 %v1614, %v1911
        %v1990 = vadd.f32 %v1617, %v1914
        %v1991 = vadd.f32 %v1622, %v1919
        %v1992 = vadd.f32 %v1625, %v1922
        %v1993 = vadd.f32 %v1630, %v1927
        %v1994 = vadd.f32 %v1633, %v1930
        %v1995 = vadd.f32 %v1638, %v1935
        %v1996 = vadd.f32 %v1641, %v1938
        %v1997 = vadd.f32 %v1646, %v1943
        %v1998 = vadd.f32 %v1649, %v1946
        %v1999 = vadd.f32 %v1654, %v1951
        %v2000 = vadd.f32 %v1657, %v1954
        %v2001 = vadd.f32 %v1662, %v1959
        %v2002 = vadd.f32 %v1665, %v1962
        %v2003 = vadd.f32 %v1670, %v1967
        %v2004 = vadd.f32 %v1673, %v1970
        %v2006 = vshrl.u32 %v267, 16
        %v2008 = vrot.slane %v2006, 4
        %v2009 = vshll.u32 %v267, 16
        %v2011 = vrot.slane %v2009, 5
        %v2012 = vor.u32 %v2008, %v2011
        %v2013 = vrot.slane %v2012, 4
        %v2015 = vshll.u32 %v268, 16
        %v2017 = vrot.slane %v2015, 5
        %v2018 = vsel %vm416, %v2013, %v2017
        %v2019 = vshrl.u32 %v268, 16
        %v2021 = vrot.slane %v2019, 4
        %v2022 = vor.u32 %v2021, %v2017
        %v2023 = vrot.slane %v2022, 4
        %v2025 = vshll.u32 %v269, 16
        %v2027 = vrot.slane %v2025, 5
        %v2028 = vsel %vm416, %v2023, %v2027
        %v2031 = vunpack.c.l.b16 %v267
        %v2032 = vunpack.c.l.b16 %v268
        %v2033 = vpack.c.b16 %v2032, %v2031
        %v2035 = vunpack.c.l.b16 %v2018
        %v2036 = vunpack.c.l.b16 %v2028
        %v2037 = vpack.c.b16 %v2036, %v2035
        %v2071 = vunpack.c.l.b16 %v366
        %v2072 = vunpack.c.l.b16 %v367
        %v2073 = vunpack.c.l.b16 %v368
        %v2074 = vunpack.c.l.b16 %v369
        %v2075 = vunpack.c.l.b16 %v370
        %v2076 = vunpack.c.l.b16 %v371
        %v2077 = vunpack.c.l.b16 %v372
        %v2078 = vunpack.c.l.b16 %v373
        %v2079 = vunpack.c.l.b16 %v374
        %v2080 = vunpack.c.l.b16 %v375
        %v2081 = vunpack.c.l.b16 %v376
        %v2082 = vunpack.c.l.b16 %v377
        %v2083 = vunpack.c.l.b16 %v378
        %v2084 = vunpack.c.l.b16 %v379
        %v2085 = vunpack.c.l.b16 %v380
        %v2086 = vunpack.c.l.b16 %v381
        %v2087 = vunpack.c.l.b16 %v382
        %v2088 = vunpack.c.l.b16 %v383
        %v2089 = vunpack.c.l.b16 %v384
        %v2090 = vunpack.c.l.b16 %v385
        %v2091 = vunpack.c.l.b16 %v386
        %v2092 = vunpack.c.l.b16 %v387
        %v2093 = vunpack.c.l.b16 %v388
        %v2094 = vunpack.c.l.b16 %v389
        %v2095 = vunpack.c.l.b16 %v390
        %v2096 = vunpack.c.l.b16 %v391
        %v2097 = vunpack.c.l.b16 %v392
        %v2098 = vunpack.c.l.b16 %v393
        %v2099 = vunpack.c.l.b16 %v394
        %v2100 = vunpack.c.l.b16 %v395
        %v2101 = vunpack.c.l.b16 %v396
        %v2102 = vunpack.c.l.b16 %v397
        %v2103 = vpack.c.b16 %v2072, %v2071
        %v2104 = vpack.c.b16 %v2074, %v2073
        %v2105 = vpack.c.b16 %v2076, %v2075
        %v2106 = vpack.c.b16 %v2078, %v2077
        %v2107 = vpack.c.b16 %v2080, %v2079
        %v2108 = vpack.c.b16 %v2082, %v2081
        %v2109 = vpack.c.b16 %v2084, %v2083
        %v2110 = vpack.c.b16 %v2086, %v2085
        %v2111 = vpack.c.b16 %v2088, %v2087
        %v2112 = vpack.c.b16 %v2090, %v2089
        %v2113 = vpack.c.b16 %v2092, %v2091
        %v2114 = vpack.c.b16 %v2094, %v2093
        %v2115 = vpack.c.b16 %v2096, %v2095
        %v2116 = vpack.c.b16 %v2098, %v2097
        %v2117 = vpack.c.b16 %v2100, %v2099
        %v2118 = vpack.c.b16 %v2102, %v2101
        %2135 = vmatprep.subr.bf16.mxu0 0
        %2136 = vmatpush1.bf16.msra.mxu0 %v2103
        %2137 = vmatprep.subr.bf16.mxu0 0
        %2138 = vmatpush1.bf16.msra.mxu0 %v2104
        %2139 = vmatprep.subr.bf16.mxu0 0
        %2140 = vmatpush1.bf16.msra.mxu0 %v2105
        %2141 = vmatprep.subr.bf16.mxu0 0
        %2142 = vmatpush1.bf16.msra.mxu0 %v2106
        %2143 = vmatprep.subr.bf16.mxu0 0
        %2144 = vmatpush1.bf16.msra.mxu0 %v2107
        %2145 = vmatprep.subr.bf16.mxu0 0
        %2146 = vmatpush1.bf16.msra.mxu0 %v2108
        %2147 = vmatprep.subr.bf16.mxu0 0
        %2148 = vmatpush1.bf16.msra.mxu0 %v2109
        %2149 = vmatprep.subr.bf16.mxu0 0
        %2150 = vmatpush1.bf16.msra.mxu0 %v2110
        %2151 = vmatprep.subr.bf16.mxu0 0
        %2152 = vmatpush1.bf16.msra.mxu0 %v2111
        %2153 = vmatprep.subr.bf16.mxu0 0
        %2154 = vmatpush1.bf16.msra.mxu0 %v2112
        %2155 = vmatprep.subr.bf16.mxu0 0
        %2156 = vmatpush1.bf16.msra.mxu0 %v2113
        %2157 = vmatprep.subr.bf16.mxu0 0
        %2158 = vmatpush1.bf16.msra.mxu0 %v2114
        %2159 = vmatprep.subr.bf16.mxu0 0
        %2160 = vmatpush1.bf16.msra.mxu0 %v2115
        %2161 = vmatprep.subr.bf16.mxu0 0
        %2162 = vmatpush1.bf16.msra.mxu0 %v2116
        %2163 = vmatprep.subr.bf16.mxu0 0
        %2164 = vmatpush1.bf16.msra.mxu0 %v2117
        %2165 = vmatprep.subr.bf16.mxu0 0
        %2166 = vmatpush1.bf16.msra.mxu0 %v2118
        %2167 = vmatprep.mubr.bf16.mxu0 %v931
        %2168 = vmatmul.mubr.bf16.gmra.mrb[0].mxu0 %v867
        %v2169 = vpop.f32.mrb[0].mxu0
        %v2170 = vadd.f32 0.0, %v2169
        %v2171 = vpop.f32.mrb[0].mxu0
        %v2172 = vpop.f32.mrb[0].mxu0
        %v2173 = vadd.f32 0.0, %v2172
        %v2174 = vpop.f32.mrb[0].mxu0
        %2175 = vmatprep.mubr.bf16.mxu0 %v932
        %2176 = vmatmul.mubr.bf16.gmra.mrb[0].mxu0 %v868
        %v2177 = vpop.f32.mrb[0].mxu0
        %v2178 = vadd.f32 0.0, %v2177
        %v2179 = vpop.f32.mrb[0].mxu0
        %v2180 = vpop.f32.mrb[0].mxu0
        %v2181 = vadd.f32 0.0, %v2180
        %v2182 = vpop.f32.mrb[0].mxu0
        %2183 = vmatprep.mubr.bf16.mxu0 %v933
        %2184 = vmatmul.mubr.bf16.gmra.mrb[0].mxu0 %v869
        %v2185 = vpop.f32.mrb[0].mxu0
        %v2186 = vadd.f32 0.0, %v2185
        %v2187 = vpop.f32.mrb[0].mxu0
        %v2188 = vpop.f32.mrb[0].mxu0
        %v2189 = vadd.f32 0.0, %v2188
        %v2190 = vpop.f32.mrb[0].mxu0
        %2191 = vmatprep.mubr.bf16.mxu0 %v934
        %2192 = vmatmul.mubr.bf16.gmra.mrb[0].mxu0 %v870
        %v2193 = vpop.f32.mrb[0].mxu0
        %v2194 = vadd.f32 0.0, %v2193
        %v2195 = vpop.f32.mrb[0].mxu0
        %v2196 = vpop.f32.mrb[0].mxu0
        %v2197 = vadd.f32 0.0, %v2196
        %v2198 = vpop.f32.mrb[0].mxu0
        %2199 = vmatprep.mubr.bf16.mxu0 %v935
        %2200 = vmatmul.mubr.bf16.gmra.mrb[0].mxu0 %v871
        %v2201 = vpop.f32.mrb[0].mxu0
        %v2202 = vadd.f32 0.0, %v2201
        %v2203 = vpop.f32.mrb[0].mxu0
        %v2204 = vpop.f32.mrb[0].mxu0
        %v2205 = vadd.f32 0.0, %v2204
        %v2206 = vpop.f32.mrb[0].mxu0
        %2207 = vmatprep.mubr.bf16.mxu0 %v936
        %2208 = vmatmul.mubr.bf16.gmra.mrb[0].mxu0 %v872
        %v2209 = vpop.f32.mrb[0].mxu0
        %v2210 = vadd.f32 0.0, %v2209
        %v2211 = vpop.f32.mrb[0].mxu0
        %v2212 = vpop.f32.mrb[0].mxu0
        %v2213 = vadd.f32 0.0, %v2212
        %v2214 = vpop.f32.mrb[0].mxu0
        %2215 = vmatprep.mubr.bf16.mxu0 %v937
        %2216 = vmatmul.mubr.bf16.gmra.mrb[0].mxu0 %v873
        %v2217 = vpop.f32.mrb[0].mxu0
        %v2218 = vadd.f32 0.0, %v2217
        %v2219 = vpop.f32.mrb[0].mxu0
        %v2220 = vpop.f32.mrb[0].mxu0
        %v2221 = vadd.f32 0.0, %v2220
        %v2222 = vpop.f32.mrb[0].mxu0
        %2223 = vmatprep.mubr.bf16.mxu0 %v938
        %2224 = vmatmul.mubr.bf16.gmra.mrb[0].mxu0 %v874
        %v2225 = vpop.f32.mrb[0].mxu0
        %v2226 = vadd.f32 0.0, %v2225
        %v2227 = vpop.f32.mrb[0].mxu0
        %v2228 = vpop.f32.mrb[0].mxu0
        %v2229 = vadd.f32 0.0, %v2228
        %v2230 = vpop.f32.mrb[0].mxu0
        %2231 = vmatprep.mubr.bf16.mxu0 %v939
        %2232 = vmatmul.mubr.bf16.gmra.mrb[0].mxu0 %v875
        %v2233 = vpop.f32.mrb[0].mxu0
        %v2234 = vadd.f32 0.0, %v2233
        %v2235 = vpop.f32.mrb[0].mxu0
        %v2236 = vpop.f32.mrb[0].mxu0
        %v2237 = vadd.f32 0.0, %v2236
        %v2238 = vpop.f32.mrb[0].mxu0
        %2239 = vmatprep.mubr.bf16.mxu0 %v940
        %2240 = vmatmul.mubr.bf16.gmra.mrb[0].mxu0 %v876
        %v2241 = vpop.f32.mrb[0].mxu0
        %v2242 = vadd.f32 0.0, %v2241
        %v2243 = vpop.f32.mrb[0].mxu0
        %v2244 = vpop.f32.mrb[0].mxu0
        %v2245 = vadd.f32 0.0, %v2244
        %v2246 = vpop.f32.mrb[0].mxu0
        %2247 = vmatprep.mubr.bf16.mxu0 %v941
        %2248 = vmatmul.mubr.bf16.gmra.mrb[0].mxu0 %v877
        %v2249 = vpop.f32.mrb[0].mxu0
        %v2250 = vadd.f32 0.0, %v2249
        %v2251 = vpop.f32.mrb[0].mxu0
        %v2252 = vpop.f32.mrb[0].mxu0
        %v2253 = vadd.f32 0.0, %v2252
        %v2254 = vpop.f32.mrb[0].mxu0
        %2255 = vmatprep.mubr.bf16.mxu0 %v942
        %2256 = vmatmul.mubr.bf16.gmra.mrb[0].mxu0 %v878
        %v2257 = vpop.f32.mrb[0].mxu0
        %v2258 = vadd.f32 0.0, %v2257
        %v2259 = vpop.f32.mrb[0].mxu0
        %v2260 = vpop.f32.mrb[0].mxu0
        %v2261 = vadd.f32 0.0, %v2260
        %v2262 = vpop.f32.mrb[0].mxu0
        %2263 = vmatprep.mubr.bf16.mxu0 %v943
        %2264 = vmatmul.mubr.bf16.gmra.mrb[0].mxu0 %v879
        %v2265 = vpop.f32.mrb[0].mxu0
        %v2266 = vadd.f32 0.0, %v2265
        %v2267 = vpop.f32.mrb[0].mxu0
        %v2268 = vpop.f32.mrb[0].mxu0
        %v2269 = vadd.f32 0.0, %v2268
        %v2270 = vpop.f32.mrb[0].mxu0
        %2271 = vmatprep.mubr.bf16.mxu0 %v944
        %2272 = vmatmul.mubr.bf16.gmra.mrb[0].mxu0 %v880
        %v2273 = vpop.f32.mrb[0].mxu0
        %v2274 = vadd.f32 0.0, %v2273
        %v2275 = vpop.f32.mrb[0].mxu0
        %v2276 = vpop.f32.mrb[0].mxu0
        %v2277 = vadd.f32 0.0, %v2276
        %v2278 = vpop.f32.mrb[0].mxu0
        %2279 = vmatprep.mubr.bf16.mxu0 %v1710
        %2280 = vmatmul.mubr.bf16.gmra.mrb[0].mxu0 %v1160
        %v2281 = vpop.f32.mrb[0].mxu0
        %v2282 = vadd.f32 0.0, %v2281
        %v2283 = vpop.f32.mrb[0].mxu0
        %v2284 = vpop.f32.mrb[0].mxu0
        %v2285 = vadd.f32 0.0, %v2284
        %v2286 = vpop.f32.mrb[0].mxu0
        %2287 = vmatprep.mubr.bf16.mxu0 %v2037
        %2288 = vmatmul.mubr.bf16.gmra.mrb[0].mxu0 %v2033
        %v2289 = vpop.f32.mrb[0].mxu0
        %v2290 = vadd.f32 0.0, %v2289
        %v2291 = vpop.f32.mrb[0].mxu0
        %v2292 = vpop.f32.mrb[0].mxu0
        %v2293 = vadd.f32 0.0, %v2292
        %v2294 = vpop.f32.mrb[0].mxu0
        %2295 = vdwg.mxu0
        %v2296 = vadd.f32 %v1973, %v2170
        %v2297 = vadd.f32 %v1974, %v2173
        %v2298 = vadd.f32 %v1975, %v2178
        %v2299 = vadd.f32 %v1976, %v2181
        %v2300 = vadd.f32 %v1977, %v2186
        %v2301 = vadd.f32 %v1978, %v2189
        %v2302 = vadd.f32 %v1979, %v2194
        %v2303 = vadd.f32 %v1980, %v2197
        %v2304 = vadd.f32 %v1981, %v2202
        %v2305 = vadd.f32 %v1982, %v2205
        %v2306 = vadd.f32 %v1983, %v2210
        %v2307 = vadd.f32 %v1984, %v2213
        %v2308 = vadd.f32 %v1985, %v2218
        %v2309 = vadd.f32 %v1986, %v2221
        %v2310 = vadd.f32 %v1987, %v2226
        %v2311 = vadd.f32 %v1988, %v2229
        %v2312 = vadd.f32 %v1989, %v2234
        %v2313 = vadd.f32 %v1990, %v2237
        %v2314 = vadd.f32 %v1991, %v2242
        %v2315 = vadd.f32 %v1992, %v2245
        %v2316 = vadd.f32 %v1993, %v2250
        %v2317 = vadd.f32 %v1994, %v2253
        %v2318 = vadd.f32 %v1995, %v2258
        %v2319 = vadd.f32 %v1996, %v2261
        %v2320 = vadd.f32 %v1997, %v2266
        %v2321 = vadd.f32 %v1998, %v2269
        %v2322 = vadd.f32 %v1999, %v2274
        %v2323 = vadd.f32 %v2000, %v2277
        %v2324 = vadd.f32 %v2001, %v2282
        %v2325 = vadd.f32 %v2002, %v2285
        %v2326 = vadd.f32 %v2003, %v2290
        %v2327 = vadd.f32 %v2004, %v2293
        %v2329 = vrot.slane %v267, 5
        %v2330 = vrot.slane %v2329, 4
        %v2331 = vrot.slane %v268, 5
        %v2332 = vsel %vm979, %v2330, %v2331
        %v2333 = vrot.slane %v2331, 4
        %v2334 = vrot.slane %v269, 5
        %v2335 = vsel %vm979, %v2333, %v2334
        %v2336 = vunpack.c.l.b16 %v2332
        %v2337 = vunpack.c.l.b16 %v2335
        %v2338 = vpack.c.b16 %v2337, %v2336
        %v2356 = vunpack.c.l.b16 %v398
        %v2357 = vunpack.c.l.b16 %v399
        %v2358 = vunpack.c.l.b16 %v400
        %v2359 = vunpack.c.l.b16 %v401
        %v2360 = vunpack.c.l.b16 %v402
        %v2361 = vunpack.c.l.b16 %v403
        %v2362 = vunpack.c.l.b16 %v404
        %v2363 = vunpack.c.l.b16 %v405
        %v2364 = vunpack.c.l.b16 %v406
        %v2365 = vunpack.c.l.b16 %v407
        %v2366 = vunpack.c.l.b16 %v408
        %v2367 = vunpack.c.l.b16 %v409
        %v2368 = vunpack.c.l.b16 %v410
        %v2369 = vunpack.c.l.b16 %v411
        %v2370 = vunpack.c.l.b16 %v412
        %v2371 = vunpack.c.l.b16 %v413
        %v2372 = vpack.c.b16 %v2357, %v2356
        %v2373 = vpack.c.b16 %v2359, %v2358
        %v2374 = vpack.c.b16 %v2361, %v2360
        %v2375 = vpack.c.b16 %v2363, %v2362
        %v2376 = vpack.c.b16 %v2365, %v2364
        %v2377 = vpack.c.b16 %v2367, %v2366
        %v2378 = vpack.c.b16 %v2369, %v2368
        %v2379 = vpack.c.b16 %v2371, %v2370
        %2388 = vmatprep.subr.bf16.mxu0 0
        %2389 = vmatpush1.bf16.msra.mxu0 %v2372
        %2390 = vmatprep.subr.bf16.mxu0 0
        %2391 = vmatpush1.bf16.msra.mxu0 %v2373
        %2392 = vmatprep.subr.bf16.mxu0 0
        %2393 = vmatpush1.bf16.msra.mxu0 %v2374
        %2394 = vmatprep.subr.bf16.mxu0 0
        %2395 = vmatpush1.bf16.msra.mxu0 %v2375
        %2396 = vmatprep.subr.bf16.mxu0 0
        %2397 = vmatpush1.bf16.msra.mxu0 %v2376
        %2398 = vmatprep.subr.bf16.mxu0 0
        %2399 = vmatpush1.bf16.msra.mxu0 %v2377
        %2400 = vmatprep.subr.bf16.mxu0 0
        %2401 = vmatpush1.bf16.msra.mxu0 %v2378
        %2402 = vmatprep.subr.bf16.mxu0 0
        %2403 = vmatpush1.bf16.msra.mxu0 %v2379
        %2404 = vmatprep.subr.bf16.mxu0 0
        %2405 = vmatpush1.bf16.msra.mxu0 0
        %2406 = vmatprep.subr.bf16.mxu0 0
        %2407 = vmatpush1.bf16.msra.mxu0 0
        %2408 = vmatprep.subr.bf16.mxu0 0
        %2409 = vmatpush1.bf16.msra.mxu0 0
        %2410 = vmatprep.subr.bf16.mxu0 0
        %2411 = vmatpush1.bf16.msra.mxu0 0
        %2412 = vmatprep.subr.bf16.mxu0 0
        %2413 = vmatpush1.bf16.msra.mxu0 0
        %2414 = vmatprep.subr.bf16.mxu0 0
        %2415 = vmatpush1.bf16.msra.mxu0 0
        %2416 = vmatprep.subr.bf16.mxu0 0
        %2417 = vmatpush1.bf16.msra.mxu0 0
        %2418 = vmatprep.subr.bf16.mxu0 0
        %2419 = vmatpush1.bf16.msra.mxu0 0
        %2420 = vmatprep.mubr.bf16.mxu0 0
        %2421 = vmatmul.mubr.bf16.gmra.mrb[0].mxu0 %v1126
        %v2422 = vpop.f32.mrb[0].mxu0
        %v2423 = vadd.f32 0.0, %v2422
        %v2424 = vpop.f32.mrb[0].mxu0
        %v2425 = vpop.f32.mrb[0].mxu0
        %v2426 = vadd.f32 0.0, %v2425
        %v2427 = vpop.f32.mrb[0].mxu0
        %2428 = vmatprep.mubr.bf16.mxu0 0
        %2429 = vmatmul.mubr.bf16.gmra.mrb[0].mxu0 %v1127
        %v2430 = vpop.f32.mrb[0].mxu0
        %v2431 = vadd.f32 0.0, %v2430
        %v2432 = vpop.f32.mrb[0].mxu0
        %v2433 = vpop.f32.mrb[0].mxu0
        %v2434 = vadd.f32 0.0, %v2433
        %v2435 = vpop.f32.mrb[0].mxu0
        %2436 = vmatprep.mubr.bf16.mxu0 0
        %2437 = vmatmul.mubr.bf16.gmra.mrb[0].mxu0 %v1128
        %v2438 = vpop.f32.mrb[0].mxu0
        %v2439 = vadd.f32 0.0, %v2438
        %v2440 = vpop.f32.mrb[0].mxu0
        %v2441 = vpop.f32.mrb[0].mxu0
        %v2442 = vadd.f32 0.0, %v2441
        %v2443 = vpop.f32.mrb[0].mxu0
        %2444 = vmatprep.mubr.bf16.mxu0 0
        %2445 = vmatmul.mubr.bf16.gmra.mrb[0].mxu0 %v1129
        %v2446 = vpop.f32.mrb[0].mxu0
        %v2447 = vadd.f32 0.0, %v2446
        %v2448 = vpop.f32.mrb[0].mxu0
        %v2449 = vpop.f32.mrb[0].mxu0
        %v2450 = vadd.f32 0.0, %v2449
        %v2451 = vpop.f32.mrb[0].mxu0
        %2452 = vmatprep.mubr.bf16.mxu0 0
        %2453 = vmatmul.mubr.bf16.gmra.mrb[0].mxu0 %v1130
        %v2454 = vpop.f32.mrb[0].mxu0
        %v2455 = vadd.f32 0.0, %v2454
        %v2456 = vpop.f32.mrb[0].mxu0
        %v2457 = vpop.f32.mrb[0].mxu0
        %v2458 = vadd.f32 0.0, %v2457
        %v2459 = vpop.f32.mrb[0].mxu0
        %2460 = vmatprep.mubr.bf16.mxu0 0
        %2461 = vmatmul.mubr.bf16.gmra.mrb[0].mxu0 %v1131
        %v2462 = vpop.f32.mrb[0].mxu0
        %v2463 = vadd.f32 0.0, %v2462
        %v2464 = vpop.f32.mrb[0].mxu0
        %v2465 = vpop.f32.mrb[0].mxu0
        %v2466 = vadd.f32 0.0, %v2465
        %v2467 = vpop.f32.mrb[0].mxu0
        %2468 = vmatprep.mubr.bf16.mxu0 0
        %2469 = vmatmul.mubr.bf16.gmra.mrb[0].mxu0 %v1132
        %v2470 = vpop.f32.mrb[0].mxu0
        %v2471 = vadd.f32 0.0, %v2470
        %v2472 = vpop.f32.mrb[0].mxu0
        %v2473 = vpop.f32.mrb[0].mxu0
        %v2474 = vadd.f32 0.0, %v2473
        %v2475 = vpop.f32.mrb[0].mxu0
        %2476 = vmatprep.mubr.bf16.mxu0 0
        %2477 = vmatmul.mubr.bf16.gmra.mrb[0].mxu0 %v1133
        %v2478 = vpop.f32.mrb[0].mxu0
        %v2479 = vadd.f32 0.0, %v2478
        %v2480 = vpop.f32.mrb[0].mxu0
        %v2481 = vpop.f32.mrb[0].mxu0
        %v2482 = vadd.f32 0.0, %v2481
        %v2483 = vpop.f32.mrb[0].mxu0
        %2484 = vmatprep.mubr.bf16.mxu0 0
        %2485 = vmatmul.mubr.bf16.gmra.mrb[0].mxu0 %v1134
        %v2486 = vpop.f32.mrb[0].mxu0
        %v2487 = vadd.f32 0.0, %v2486
        %v2488 = vpop.f32.mrb[0].mxu0
        %v2489 = vpop.f32.mrb[0].mxu0
        %v2490 = vadd.f32 0.0, %v2489
        %v2491 = vpop.f32.mrb[0].mxu0
        %2492 = vmatprep.mubr.bf16.mxu0 0
        %2493 = vmatmul.mubr.bf16.gmra.mrb[0].mxu0 %v1135
        %v2494 = vpop.f32.mrb[0].mxu0
        %v2495 = vadd.f32 0.0, %v2494
        %v2496 = vpop.f32.mrb[0].mxu0
        %v2497 = vpop.f32.mrb[0].mxu0
        %v2498 = vadd.f32 0.0, %v2497
        %v2499 = vpop.f32.mrb[0].mxu0
        %2500 = vmatprep.mubr.bf16.mxu0 0
        %2501 = vmatmul.mubr.bf16.gmra.mrb[0].mxu0 %v1136
        %v2502 = vpop.f32.mrb[0].mxu0
        %v2503 = vadd.f32 0.0, %v2502
        %v2504 = vpop.f32.mrb[0].mxu0
        %v2505 = vpop.f32.mrb[0].mxu0
        %v2506 = vadd.f32 0.0, %v2505
        %v2507 = vpop.f32.mrb[0].mxu0
        %2508 = vmatprep.mubr.bf16.mxu0 0
        %2509 = vmatmul.mubr.bf16.gmra.mrb[0].mxu0 %v1137
        %v2510 = vpop.f32.mrb[0].mxu0
        %v2511 = vadd.f32 0.0, %v2510
        %v2512 = vpop.f32.mrb[0].mxu0
        %v2513 = vpop.f32.mrb[0].mxu0
        %v2514 = vadd.f32 0.0, %v2513
        %v2515 = vpop.f32.mrb[0].mxu0
        %2516 = vmatprep.mubr.bf16.mxu0 0
        %2517 = vmatmul.mubr.bf16.gmra.mrb[0].mxu0 %v1138
        %v2518 = vpop.f32.mrb[0].mxu0
        %v2519 = vadd.f32 0.0, %v2518
        %v2520 = vpop.f32.mrb[0].mxu0
        %v2521 = vpop.f32.mrb[0].mxu0
        %v2522 = vadd.f32 0.0, %v2521
        %v2523 = vpop.f32.mrb[0].mxu0
        %2524 = vmatprep.mubr.bf16.mxu0 0
        %2525 = vmatmul.mubr.bf16.gmra.mrb[0].mxu0 %v1139
        %v2526 = vpop.f32.mrb[0].mxu0
        %v2527 = vadd.f32 0.0, %v2526
        %v2528 = vpop.f32.mrb[0].mxu0
        %v2529 = vpop.f32.mrb[0].mxu0
        %v2530 = vadd.f32 0.0, %v2529
        %v2531 = vpop.f32.mrb[0].mxu0
        %2532 = vmatprep.mubr.bf16.mxu0 0
        %2533 = vmatmul.mubr.bf16.gmra.mrb[0].mxu0 %v1714
        %v2534 = vpop.f32.mrb[0].mxu0
        %v2535 = vadd.f32 0.0, %v2534
        %v2536 = vpop.f32.mrb[0].mxu0
        %v2537 = vpop.f32.mrb[0].mxu0
        %v2538 = vadd.f32 0.0, %v2537
        %v2539 = vpop.f32.mrb[0].mxu0
        %2540 = vmatprep.mubr.bf16.mxu0 0
        %2541 = vmatmul.mubr.bf16.gmra.mrb[0].mxu0 %v2338
        %v2542 = vpop.f32.mrb[0].mxu0
        %v2543 = vadd.f32 0.0, %v2542
        %v2544 = vpop.f32.mrb[0].mxu0
        %v2545 = vpop.f32.mrb[0].mxu0
        %v2546 = vadd.f32 0.0, %v2545
        %v2547 = vpop.f32.mrb[0].mxu0
        %2548 = vdwg.mxu0
        %v2549 = vadd.f32 %v2296, %v2423
        %v2550 = vadd.f32 %v2297, %v2426
        %v2551 = vadd.f32 %v2298, %v2431
        %v2552 = vadd.f32 %v2299, %v2434
        %v2553 = vadd.f32 %v2300, %v2439
        %v2554 = vadd.f32 %v2301, %v2442
        %v2555 = vadd.f32 %v2302, %v2447
        %v2556 = vadd.f32 %v2303, %v2450
        %v2557 = vadd.f32 %v2304, %v2455
        %v2558 = vadd.f32 %v2305, %v2458
        %v2559 = vadd.f32 %v2306, %v2463
        %v2560 = vadd.f32 %v2307, %v2466
        %v2561 = vadd.f32 %v2308, %v2471
        %v2562 = vadd.f32 %v2309, %v2474
        %v2563 = vadd.f32 %v2310, %v2479
        %v2564 = vadd.f32 %v2311, %v2482
        %v2565 = vadd.f32 %v2312, %v2487
        %v2566 = vadd.f32 %v2313, %v2490
        %v2567 = vadd.f32 %v2314, %v2495
        %v2568 = vadd.f32 %v2315, %v2498
        %v2569 = vadd.f32 %v2316, %v2503
        %v2570 = vadd.f32 %v2317, %v2506
        %v2571 = vadd.f32 %v2318, %v2511
        %v2572 = vadd.f32 %v2319, %v2514
        %v2573 = vadd.f32 %v2320, %v2519
        %v2574 = vadd.f32 %v2321, %v2522
        %v2575 = vadd.f32 %v2322, %v2527
        %v2576 = vadd.f32 %v2323, %v2530
        %v2577 = vadd.f32 %v2324, %v2535
        %v2578 = vadd.f32 %v2325, %v2538
        %v2579 = vadd.f32 %v2326, %v2543
        %v2580 = vadd.f32 %v2327, %v2546
        %v2581 = vpack.c.bf16 %v2550, %v2549
        %v2582 = vpack.c.bf16 %v2552, %v2551
        %v2583 = vpack.c.bf16 %v2554, %v2553
        %v2584 = vpack.c.bf16 %v2556, %v2555
        %v2585 = vpack.c.bf16 %v2558, %v2557
        %v2586 = vpack.c.bf16 %v2560, %v2559
        %v2587 = vpack.c.bf16 %v2562, %v2561
        %v2588 = vpack.c.bf16 %v2564, %v2563
        %v2589 = vpack.c.bf16 %v2566, %v2565
        %v2590 = vpack.c.bf16 %v2568, %v2567
        %v2591 = vpack.c.bf16 %v2570, %v2569
        %v2592 = vpack.c.bf16 %v2572, %v2571
        %v2593 = vpack.c.bf16 %v2574, %v2573
        %v2594 = vpack.c.bf16 %v2576, %v2575
        %v2595 = vpack.c.bf16 %v2578, %v2577
        %v2596 = vpack.c.bf16 %v2580, %v2579
        %v2613 = vunpack.c.l.b16 %v2581
        %v2614 = vunpack.c.h.b16 %v2581
        %v2615 = vunpack.c.l.b16 %v2582
        %v2616 = vunpack.c.h.b16 %v2582
        %v2617 = vunpack.c.l.b16 %v2583
        %v2618 = vunpack.c.h.b16 %v2583
        %v2619 = vunpack.c.l.b16 %v2584
        %v2620 = vunpack.c.h.b16 %v2584
        %v2621 = vunpack.c.l.b16 %v2585
        %v2622 = vunpack.c.h.b16 %v2585
        %v2623 = vunpack.c.l.b16 %v2586
        %v2624 = vunpack.c.h.b16 %v2586
        %v2625 = vunpack.c.l.b16 %v2587
        %v2626 = vunpack.c.h.b16 %v2587
        %v2627 = vunpack.c.l.b16 %v2588
        %v2628 = vunpack.c.h.b16 %v2588
        %v2629 = vunpack.c.l.b16 %v2589
        %v2630 = vunpack.c.h.b16 %v2589
        %v2631 = vunpack.c.l.b16 %v2590
        %v2632 = vunpack.c.h.b16 %v2590
        %v2633 = vunpack.c.l.b16 %v2591
        %v2634 = vunpack.c.h.b16 %v2591
        %v2635 = vunpack.c.l.b16 %v2592
        %v2636 = vunpack.c.h.b16 %v2592
        %v2637 = vunpack.c.l.b16 %v2593
        %v2638 = vunpack.c.h.b16 %v2593
        %v2639 = vunpack.c.l.b16 %v2594
        %v2640 = vunpack.c.h.b16 %v2594
        %v2641 = vunpack.c.l.b16 %v2595
        %v2642 = vunpack.c.h.b16 %v2595
        %v2643 = vunpack.c.l.b16 %v2596
        %v2644 = vunpack.c.h.b16 %v2596
        %v2645 = vpack.c.b16 %v2613, %v2613
        %v2646 = vpack.c.b16 %v2614, %v2614
        %v2647 = vpack.c.b16 %v2615, %v2615
        %v2648 = vpack.c.b16 %v2616, %v2616
        %v2649 = vpack.c.b16 %v2617, %v2617
        %v2650 = vpack.c.b16 %v2618, %v2618
        %v2651 = vpack.c.b16 %v2619, %v2619
        %v2652 = vpack.c.b16 %v2620, %v2620
        %v2653 = vpack.c.b16 %v2621, %v2621
        %v2654 = vpack.c.b16 %v2622, %v2622
        %v2655 = vpack.c.b16 %v2623, %v2623
        %v2656 = vpack.c.b16 %v2624, %v2624
        %v2657 = vpack.c.b16 %v2625, %v2625
        %v2658 = vpack.c.b16 %v2626, %v2626
        %v2659 = vpack.c.b16 %v2627, %v2627
        %v2660 = vpack.c.b16 %v2628, %v2628
        %v2661 = vpack.c.b16 %v2629, %v2629
        %v2662 = vpack.c.b16 %v2630, %v2630
        %v2663 = vpack.c.b16 %v2631, %v2631
        %v2664 = vpack.c.b16 %v2632, %v2632
        %v2665 = vpack.c.b16 %v2633, %v2633
        %v2666 = vpack.c.b16 %v2634, %v2634
        %v2667 = vpack.c.b16 %v2635, %v2635
        %v2668 = vpack.c.b16 %v2636, %v2636
        %v2669 = vpack.c.b16 %v2637, %v2637
        %v2670 = vpack.c.b16 %v2638, %v2638
        %v2671 = vpack.c.b16 %v2639, %v2639
        %v2672 = vpack.c.b16 %v2640, %v2640
        %v2673 = vpack.c.b16 %v2641, %v2641
        %v2674 = vpack.c.b16 %v2642, %v2642
        %v2675 = vpack.c.b16 %v2643, %v2643
        %v2676 = vpack.c.b16 %v2644, %v2644
        %2709 = vst [vmem:[%s207] sm:$0xf] %v2645
        %2710 = vst [vmem:[%s207 + $0x4] sm:$0xf] %v2646
        %2711 = vst [vmem:[%s207 + $0x8] sm:$0xf] %v2647
        %2712 = vst [vmem:[%s207 + $0xc] sm:$0xf] %v2648
        %2713 = vst [vmem:[%s207 + $0x10] sm:$0xf] %v2649
        %2714 = vst [vmem:[%s207 + $0x14] sm:$0xf] %v2650
        %2715 = vst [vmem:[%s207 + $0x18] sm:$0xf] %v2651
        %2716 = vst [vmem:[%s207 + $0x1c] sm:$0xf] %v2652
        %2717 = vst [vmem:[%s207 + $0x20] sm:$0xf] %v2653
        %2718 = vst [vmem:[%s207 + $0x24] sm:$0xf] %v2654
        %2719 = vst [vmem:[%s207 + $0x28] sm:$0xf] %v2655
        %2720 = vst [vmem:[%s207 + $0x2c] sm:$0xf] %v2656
        %2721 = vst [vmem:[%s207 + $0x30] sm:$0xf] %v2657
        %2722 = vst [vmem:[%s207 + $0x34] sm:$0xf] %v2658
        %2723 = vst [vmem:[%s207 + $0x38] sm:$0xf] %v2659
        %2724 = vst [vmem:[%s207 + $0x3c] sm:$0xf] %v2660
        %2725 = vst [vmem:[%s207 + $0x40] sm:$0xf] %v2661
        %2726 = vst [vmem:[%s207 + $0x44] sm:$0xf] %v2662
        %2727 = vst [vmem:[%s207 + $0x48] sm:$0xf] %v2663
        %2728 = vst [vmem:[%s207 + $0x4c] sm:$0xf] %v2664
        %2729 = vst [vmem:[%s207 + $0x50] sm:$0xf] %v2665
        %2730 = vst [vmem:[%s207 + $0x54] sm:$0xf] %v2666
        %2731 = vst [vmem:[%s207 + $0x58] sm:$0xf] %v2667
        %2732 = vst [vmem:[%s207 + $0x5c] sm:$0xf] %v2668
        %2733 = vst [vmem:[%s207 + $0x60] sm:$0xf] %v2669
        %2734 = vst [vmem:[%s207 + $0x64] sm:$0xf] %v2670
        %2735 = vst [vmem:[%s207 + $0x68] sm:$0xf] %v2671
        %2736 = vst [vmem:[%s207 + $0x6c] sm:$0xf] %v2672
        %2737 = vst [vmem:[%s207 + $0x70] sm:$0xf] %v2673
        %2738 = vst [vmem:[%s207 + $0x74] sm:$0xf] %v2674
        %2739 = vst [vmem:[%s207 + $0x78] sm:$0xf] %v2675
        %2740 = vst [vmem:[%s207 + $0x7c] sm:$0xf] %v2676
        %v2741 = vadd.f32 %v2549, %v2550
        %v2742 = vadd.f32 %v2741, %v2551
        %v2743 = vadd.f32 %v2742, %v2552
        %v2744 = vadd.f32 %v2743, %v2553
        %v2745 = vadd.f32 %v2744, %v2554
        %v2746 = vadd.f32 %v2745, %v2555
        %v2747 = vadd.f32 %v2746, %v2556
        %v2748 = vadd.f32 %v2747, %v2557
        %v2749 = vadd.f32 %v2748, %v2558
        %v2750 = vadd.f32 %v2749, %v2559
        %v2751 = vadd.f32 %v2750, %v2560
        %v2752 = vadd.f32 %v2751, %v2561
        %v2753 = vadd.f32 %v2752, %v2562
        %v2754 = vadd.f32 %v2753, %v2563
        %v2755 = vadd.f32 %v2754, %v2564
        %v2756 = vadd.f32 %v2755, %v2565
        %v2757 = vadd.f32 %v2756, %v2566
        %v2758 = vadd.f32 %v2757, %v2567
        %v2759 = vadd.f32 %v2758, %v2568
        %v2760 = vadd.f32 %v2759, %v2569
        %v2761 = vadd.f32 %v2760, %v2570
        %v2762 = vadd.f32 %v2761, %v2571
        %v2763 = vadd.f32 %v2762, %v2572
        %v2764 = vadd.f32 %v2763, %v2573
        %v2765 = vadd.f32 %v2764, %v2574
        %v2766 = vadd.f32 %v2765, %v2575
        %v2767 = vadd.f32 %v2766, %v2576
        %v2768 = vadd.f32 %v2767, %v2577
        %v2769 = vadd.f32 %v2768, %v2578
        %v2770 = vadd.f32 %v2769, %v2579
        %v2771 = vadd.f32 %v2770, %v2580
        %v2772 = vrot.slane %v2771, 4
        %v2773 = vadd.f32 %v2771, %v2772
        %v2774 = vrot.slane %v2773, 2
        %v2775 = vadd.f32 %v2773, %v2774
        %v2776 = vrot.slane %v2775, 1
        %v2777 = vadd.f32 %v2775, %v2776
        %v2778 = vmul.f32 %v2777, 0.00390625
        %v2779 = vsub.f32 %v2549, %v2778
        %v2780 = vsub.f32 %v2550, %v2778
        %v2781 = vsub.f32 %v2551, %v2778
        %v2782 = vsub.f32 %v2552, %v2778
        %v2783 = vsub.f32 %v2553, %v2778
        %v2784 = vsub.f32 %v2554, %v2778
        %v2785 = vsub.f32 %v2555, %v2778
        %v2786 = vsub.f32 %v2556, %v2778
        %v2787 = vsub.f32 %v2557, %v2778
        %v2788 = vsub.f32 %v2558, %v2778
        %v2789 = vsub.f32 %v2559, %v2778
        %v2790 = vsub.f32 %v2560, %v2778
        %v2791 = vsub.f32 %v2561, %v2778
        %v2792 = vsub.f32 %v2562, %v2778
        %v2793 = vsub.f32 %v2563, %v2778
        %v2794 = vsub.f32 %v2564, %v2778
        %v2795 = vsub.f32 %v2565, %v2778
        %v2796 = vsub.f32 %v2566, %v2778
        %v2797 = vsub.f32 %v2567, %v2778
        %v2798 = vsub.f32 %v2568, %v2778
        %v2799 = vsub.f32 %v2569, %v2778
        %v2800 = vsub.f32 %v2570, %v2778
        %v2801 = vsub.f32 %v2571, %v2778
        %v2802 = vsub.f32 %v2572, %v2778
        %v2803 = vsub.f32 %v2573, %v2778
        %v2804 = vsub.f32 %v2574, %v2778
        %v2805 = vsub.f32 %v2575, %v2778
        %v2806 = vsub.f32 %v2576, %v2778
        %v2807 = vsub.f32 %v2577, %v2778
        %v2808 = vsub.f32 %v2578, %v2778
        %v2809 = vsub.f32 %v2579, %v2778
        %v2810 = vsub.f32 %v2580, %v2778
        %2811 = vst [vmem:[%s214] sm:$0x1] %v2777
        %v2812 = vmul.f32 %v2779, %v2779
        %v2813 = vmul.f32 %v2780, %v2780
        %v2814 = vmul.f32 %v2781, %v2781
        %v2815 = vmul.f32 %v2782, %v2782
        %v2816 = vmul.f32 %v2783, %v2783
        %v2817 = vmul.f32 %v2784, %v2784
        %v2818 = vmul.f32 %v2785, %v2785
        %v2819 = vmul.f32 %v2786, %v2786
        %v2820 = vmul.f32 %v2787, %v2787
        %v2821 = vmul.f32 %v2788, %v2788
        %v2822 = vmul.f32 %v2789, %v2789
        %v2823 = vmul.f32 %v2790, %v2790
        %v2824 = vmul.f32 %v2791, %v2791
        %v2825 = vmul.f32 %v2792, %v2792
        %v2826 = vmul.f32 %v2793, %v2793
        %v2827 = vmul.f32 %v2794, %v2794
        %v2828 = vmul.f32 %v2795, %v2795
        %v2829 = vmul.f32 %v2796, %v2796
        %v2830 = vmul.f32 %v2797, %v2797
        %v2831 = vmul.f32 %v2798, %v2798
        %v2832 = vmul.f32 %v2799, %v2799
        %v2833 = vmul.f32 %v2800, %v2800
        %v2834 = vmul.f32 %v2801, %v2801
        %v2835 = vmul.f32 %v2802, %v2802
        %v2836 = vmul.f32 %v2803, %v2803
        %v2837 = vmul.f32 %v2804, %v2804
        %v2838 = vmul.f32 %v2805, %v2805
        %v2839 = vmul.f32 %v2806, %v2806
        %v2840 = vmul.f32 %v2807, %v2807
        %v2841 = vmul.f32 %v2808, %v2808
        %v2842 = vmul.f32 %v2809, %v2809
        %v2843 = vmul.f32 %v2810, %v2810
        %v2844 = vadd.f32 %v2812, %v2813
        %v2845 = vadd.f32 %v2844, %v2814
        %v2846 = vadd.f32 %v2845, %v2815
        %v2847 = vadd.f32 %v2846, %v2816
        %v2848 = vadd.f32 %v2847, %v2817
        %v2849 = vadd.f32 %v2848, %v2818
        %v2850 = vadd.f32 %v2849, %v2819
        %v2851 = vadd.f32 %v2850, %v2820
        %v2852 = vadd.f32 %v2851, %v2821
        %v2853 = vadd.f32 %v2852, %v2822
        %v2854 = vadd.f32 %v2853, %v2823
        %v2855 = vadd.f32 %v2854, %v2824
        %v2856 = vadd.f32 %v2855, %v2825
        %v2857 = vadd.f32 %v2856, %v2826
        %v2858 = vadd.f32 %v2857, %v2827
        %v2859 = vadd.f32 %v2858, %v2828
        %v2860 = vadd.f32 %v2859, %v2829
        %v2861 = vadd.f32 %v2860, %v2830
        %v2862 = vadd.f32 %v2861, %v2831
        %v2863 = vadd.f32 %v2862, %v2832
        %v2864 = vadd.f32 %v2863, %v2833
        %v2865 = vadd.f32 %v2864, %v2834
        %v2866 = vadd.f32 %v2865, %v2835
        %v2867 = vadd.f32 %v2866, %v2836
        %v2868 = vadd.f32 %v2867, %v2837
        %v2869 = vadd.f32 %v2868, %v2838
        %v2870 = vadd.f32 %v2869, %v2839
        %v2871 = vadd.f32 %v2870, %v2840
        %v2872 = vadd.f32 %v2871, %v2841
        %v2873 = vadd.f32 %v2872, %v2842
        %v2874 = vadd.f32 %v2873, %v2843
        %v2875 = vrot.slane %v2874, 4
        %v2876 = vadd.f32 %v2874, %v2875
        %v2877 = vrot.slane %v2876, 2
        %v2878 = vadd.f32 %v2876, %v2877
        %v2879 = vrot.slane %v2878, 1
        %v2880 = vadd.f32 %v2878, %v2879
        %2881 = vst [vmem:[%s214 + $0x1] sm:$0x1] %v2880
        %s2882 = sand.u32 %s80, 1
        %s2883 = scalar_lea.sflag [#allocation4], %s2882
        %s2884 = sand.u32 %s80, 1
        %s2885 = smul.addr %s2884, 128
        %s2886 = scalar_lea.vmem [#allocation7], %s2885
        %s2887 = sand.u32 %s106, 1
        %s2888 = scalar_lea.sflag [#allocation9], %s2887
        %s2889 = sand.u32 %s106, 1
        %s2890 = smul.addr %s2889, 2
        %s2891 = scalar_lea.vmem [#allocation8], %s2890
        // Predicated region
        $region37: #{residual_forward.3} parent=27 // pred_check
          %p2892 = pneg %p90
        $region38: #{residual_forward.3} parent=27 // pred_check_branch
          %2894 = sbr.rel (%p2892) target = $region40
        $region39: #{residual_forward.3} parent=27 // pred_region
          %s2896 = ssub.s32 2048, 2048
          %2897 = vsyncadd %s2883, %s2896
          %s2898 = smul.addr %s25, 32
          %s2899 = smul.addr %s2898, 64
          %s2900 = scalar_lea.hbm %s2, %s2899
          %s2901 = sshll.u32 %s2886, 4
          %s2902 = int_to_ptr.vmem [resolvable:$true] %s2901
          %2907 = dma.vmem_to_hbm [thread:$0]  %s2902, 2048, %s2900, %s2883, 64, 64, 4
        $region40: #{residual_forward.3} parent=27 // pred_fallthru
          _
        // Predicated region
        $region41: #{residual_forward.3} parent=27 // pred_check
          %p2908 = pneg %p116
        $region42: #{residual_forward.3} parent=27 // pred_check_branch
          %2910 = sbr.rel (%p2908) target = $region44
        $region43: #{residual_forward.3} parent=27 // pred_region
          %s2912 = ssub.s32 32, 32
          %2913 = vsyncadd %s2888, %s2912
          %s2914 = smul.addr %s25, 32
          %s2915 = scalar_lea.hbm %s3, %s2914
          %s2917 = sshll.u32 %s2891, 4
          %s2918 = int_to_ptr.vmem [resolvable:$true] %s2917
          %2920 = dma.vmem_to_hbm [thread:$0]  %s2918, 32, %s2915, %s2888
        $region44: #{residual_forward.3} parent=27 // pred_fallthru
          _
      $region28: #{residual_forward.3} parent=5 // pred_fallthru
        _
      %p2921 = scmp.le.s32.totalorder 2, %s20
      // Predicated region
      $region45: #{residual_forward.3} parent=5 // pred_check
        %p2922 = pneg %p2921
      $region46: #{residual_forward.3} parent=5 // pred_check_branch
        %2924 = sbr.rel (%p2922) target = $region48
      $region47: #{residual_forward.3} parent=5 // pred_region
        %s2925 = ssub.s32 %s20, 2
        // Predicated region
        $region49: #{residual_forward.3} parent=47 // pred_check
          %p2926 = pneg %p96
        $region50: #{residual_forward.3} parent=47 // pred_check_branch
          %2928 = sbr.rel (%p2926) target = $region52
        $region51: #{residual_forward.3} parent=47 // pred_region
          %s2929 = sand.u32 %s81, 1
          %s2930 = scalar_lea.sflag [#allocation4], %s2929
          %s2931 = sand.u32 %s81, 1
          %s2932 = smul.addr %s2931, 128
          %s2933 = scalar_lea.vmem [#allocation7], %s2932
          %2934 = dma.done %s2930, 2048
        $region52: #{residual_forward.3} parent=47 // pred_fallthru
          _
        // Predicated region
        $region53: #{residual_forward.3} parent=47 // pred_check
          %p2935 = pneg %p122
        $region54: #{residual_forward.3} parent=47 // pred_check_branch
          %2937 = sbr.rel (%p2935) target = $region56
        $region55: #{residual_forward.3} parent=47 // pred_region
          %s2938 = sand.u32 %s107, 1
          %s2939 = scalar_lea.sflag [#allocation9], %s2938
          %s2940 = sand.u32 %s107, 1
          %s2941 = smul.addr %s2940, 2
          %s2942 = scalar_lea.vmem [#allocation8], %s2941
          %2943 = dma.done %s2939, 32
        $region56: #{residual_forward.3} parent=47 // pred_fallthru
          _
      $region48: #{residual_forward.3} parent=5 // pred_fallthru
        _
    $region6: #{residual_forward.3} parent=1 // loop_footer
      %s24 = sadd.s32 1, %s20
    $region7: #{residual_forward.3} parent=1 // loop_footer_branch
      %19 = sbr.rel target = $region3
    $region8: #{residual_forward.3} parent=1 // loop_exit
      _
    %2944 = vsyncpa [#allocation3], 1
    %s2945 = scalar_lea.sflag [#allocation3], 1
    %2946 = vsyncpa %s2945, 1
    %2947 = vsyncpa [#allocation6], 1
    %2948 = vsyncpa [#allocation4], 1
    %s2949 = scalar_lea.sflag [#allocation4], 1
    %2950 = vsyncpa %s2949, 1
    %2951 = vsyncpa [#allocation9], 1
    %s2952 = scalar_lea.sflag [#allocation9], 1
    %2953 = vsyncpa %s2952, 1

// kernel: residual_forward.4
$region0: #{residual_forward.4}
  #allocation0 [shape = 'u32[]', space=smem, size = 0x4, offset = 0x4, fixed_abs, tag = 'smem constant byte address 0x4 - core index']
  #allocation1 [shape = 'u32[144,128]{1,0:T(1,128)}', space=vmem, size = 0x12000, scoped, tag = 'internal scratch']
  #allocation2 [shape = 'f32[1,18,18,128]{3,2,1,0:T(8,128)}', space=vmem, size = 0x36000, scoped, tag = 'scratch operand']
  %s0 = inlined_call_operand.hbm [shape: bf16[2,16,16,128], index: 0, kind: input, shape index: {}]
  %s1 = inlined_call_operand.hbm [shape: f32[1,128], index: 1, kind: input, shape index: {}]
  %s2 = inlined_call_operand.hbm [shape: f32[1,128], index: 2, kind: input, shape index: {}]
  %s3 = inlined_call_operand.hbm [shape: bf16[1152,128], index: 3, kind: input, shape index: {}]
  %s4 = inlined_call_operand.hbm [shape: bf16[2,16,16,128], index: 4, kind: output, shape index: {0}]
  %s5 = inlined_call_operand.hbm [shape: f32[2,2,128], index: 5, kind: output, shape index: {1}]
  %6 = xla_tuple %s4, %s5
  %s7 = sld [smem:[#allocation0]]
  $region73: #{residual_forward.4} parent=0
    _
  %s9 = ssub.s32 1, %s7
  %s10 = scalar_select 0, %s9, %s7
  $region1: #{residual_forward.4} parent=0
    #allocation3 [shape = 'u8[131072]{0}', space=vmem, size = 0x20000, scoped, tag = 'input window, operand 0']
    #allocation4 [shape = 's32[2]{0}', space=sflag, size = 0x8, scoped, tag = 'scoped memory for residual_forward.4']
    #allocation5 [shape = 's32[2]{0}', space=sflag, size = 0x8, scoped, tag = 'scoped memory for residual_forward.4']
    #allocation6 [shape = 'u8[512]{0}', space=vmem, size = 0x400, scoped, tag = 'input window, operand 1, single buffered']
    #allocation7 [shape = 's32[1]{0}', space=sflag, size = 0x4, scoped, tag = 'scoped memory for residual_forward.4']
    #allocation8 [shape = 'u8[512]{0}', space=vmem, size = 0x400, scoped, tag = 'input window, operand 2, single buffered']
    #allocation9 [shape = 'u8[294912]{0}', space=vmem, size = 0x48000, scoped, tag = 'input window, operand 3, single buffered']
    #allocation10 [shape = 's32[1]{0}', space=sflag, size = 0x4, scoped, tag = 'scoped memory for residual_forward.4']
    #allocation11 [shape = 'u8[131072]{0}', space=vmem, size = 0x20000, scoped, tag = 'output window, operand 0']
    #allocation12 [shape = 'u8[2048]{0}', space=vmem, size = 0x800, scoped, tag = 'output window, operand 1']
    #allocation13 [shape = 's32[2]{0}', space=sflag, size = 0x8, scoped, tag = 'scoped memory for residual_forward.4']
    %11 = vsyncpa [#allocation4], 0
    %s12 = scalar_lea.sflag [#allocation4], 1
    %13 = vsyncpa %s12, 0
    %14 = vsyncpa [#allocation7], 0
    %15 = vsyncpa [#allocation10], 0
    %16 = vsyncpa [#allocation5], 0
    %s17 = scalar_lea.sflag [#allocation5], 1
    %18 = vsyncpa %s17, 0
    %19 = vsyncpa [#allocation13], 0
    %s20 = scalar_lea.sflag [#allocation13], 1
    %21 = vsyncpa %s20, 0
    loop: start=0, step=1, limit=4
    $region2: #{residual_forward.4} parent=1 // loop_pre_header
      _
    $region3: #{residual_forward.4} parent=1 // loop_header
      %s23 = sphi 0, %s27
      %p24 = scmp.ge.s32.totalorder %s23, 4
      %s33 = sphi 0, %s35
      %s36 = sphi 0, %s33
      %s37 = sphi 0, %s36
      %s53 = sphi 0, %s37
      %s57 = sphi 0, %s57
      %s59 = sphi 0, %s57
      %s60 = sphi 0, %s59
      %s74 = sphi 0, %s60
      %s78 = sphi 0, %s78
      %s80 = sphi 0, %s78
      %s81 = sphi 0, %s80
      %s95 = sphi 0, %s81
      %s99 = sphi 0, %s99
      %s101 = sphi 0, %s99
      %s102 = sphi 0, %s101
      %s116 = sphi 0, %s102
      %s122 = sphi 0, %s124
      %s125 = sphi 0, %s122
      %s126 = sphi 0, %s125
      %s142 = sphi 0, %s126
      %s148 = sphi 0, %s150
      %s151 = sphi 0, %s148
      %s152 = sphi 0, %s151
      %s168 = sphi 0, %s152
    $region4: #{residual_forward.4} parent=1 // loop_header_branch
      %26 = sbr.rel (%p24) target = $region8
    $region5: #{residual_forward.4} parent=1 // loop_body
      %s28 = ssub.s32 %s23, 1
      %s29 = ssub.s32 %s23, 2
      %s30 = sadd.s32 %s23, 1
      %s31 = ssub.s32 %s23, %s30
      %p32 = scmp.eq.s32.totalorder %s31, 0
      %s34 = sadd.s32 %s33, 1
      %s35 = scalar_select %p32, %s33, %s34
      %p38 = pneg %p32
      %p39 = scmp.eq.s32.totalorder %s23, 1
      %p40 = por %p38, %p39
      %p41 = scmp.ne.s32.totalorder %s33, %s36
      %p42 = scmp.eq.s32.totalorder %s23, 0
      %p43 = por %p41, %p42
      %p44 = scmp.ne.s32.totalorder %s33, %s36
      %p45 = scmp.eq.s32.totalorder %s28, 1
      %p46 = por %p44, %p45
      %p47 = scmp.ne.s32.totalorder %s36, %s37
      %p48 = scmp.eq.s32.totalorder %s28, 0
      %p49 = por %p47, %p48
      %p50 = scmp.ne.s32.totalorder %s36, %s37
      %p51 = scmp.eq.s32.totalorder %s29, 1
      %p52 = por %p50, %p51
      %p54 = scmp.ne.s32.totalorder %s37, %s53
      %p55 = scmp.eq.s32.totalorder %s29, 0
      %p56 = por %p54, %p55
      %s58 = sadd.s32 %s57, 1
      %p61 = scmp.eq.s32.totalorder %s23, 1
      %p62 = scmp.ne.s32.totalorder %s57, %s59
      %p63 = scmp.eq.s32.totalorder %s23, 0
      %p64 = por %p62, %p63
      %p65 = scmp.ne.s32.totalorder %s57, %s59
      %p66 = scmp.eq.s32.totalorder %s28, 1
      %p67 = por %p65, %p66
      %p68 = scmp.ne.s32.totalorder %s59, %s60
      %p69 = scmp.eq.s32.totalorder %s28, 0
      %p70 = por %p68, %p69
      %p71 = scmp.ne.s32.totalorder %s59, %s60
      %p72 = scmp.eq.s32.totalorder %s29, 1
      %p73 = por %p71, %p72
      %p75 = scmp.ne.s32.totalorder %s60, %s74
      %p76 = scmp.eq.s32.totalorder %s29, 0
      %p77 = por %p75, %p76
      %s79 = sadd.s32 %s78, 1
      %p82 = scmp.eq.s32.totalorder %s23, 1
      %p83 = scmp.ne.s32.totalorder %s78, %s80
      %p84 = scmp.eq.s32.totalorder %s23, 0
      %p85 = por %p83, %p84
      %p86 = scmp.ne.s32.totalorder %s78, %s80
      %p87 = scmp.eq.s32.totalorder %s28, 1
      %p88 = por %p86, %p87
      %p89 = scmp.ne.s32.totalorder %s80, %s81
      %p90 = scmp.eq.s32.totalorder %s28, 0
      %p91 = por %p89, %p90
      %p92 = scmp.ne.s32.totalorder %s80, %s81
      %p93 = scmp.eq.s32.totalorder %s29, 1
      %p94 = por %p92, %p93
      %p96 = scmp.ne.s32.totalorder %s81, %s95
      %p97 = scmp.eq.s32.totalorder %s29, 0
      %p98 = por %p96, %p97
      %s100 = sadd.s32 %s99, 1
      %p103 = scmp.eq.s32.totalorder %s23, 1
      %p104 = scmp.ne.s32.totalorder %s99, %s101
      %p105 = scmp.eq.s32.totalorder %s23, 0
      %p106 = por %p104, %p105
      %p107 = scmp.ne.s32.totalorder %s99, %s101
      %p108 = scmp.eq.s32.totalorder %s28, 1
      %p109 = por %p107, %p108
      %p110 = scmp.ne.s32.totalorder %s101, %s102
      %p111 = scmp.eq.s32.totalorder %s28, 0
      %p112 = por %p110, %p111
      %p113 = scmp.ne.s32.totalorder %s101, %s102
      %p114 = scmp.eq.s32.totalorder %s29, 1
      %p115 = por %p113, %p114
      %p117 = scmp.ne.s32.totalorder %s102, %s116
      %p118 = scmp.eq.s32.totalorder %s29, 0
      %p119 = por %p117, %p118
      %s120 = ssub.s32 %s23, %s30
      %p121 = scmp.eq.s32.totalorder %s120, 0
      %s123 = sadd.s32 %s122, 1
      %s124 = scalar_select %p121, %s122, %s123
      %p127 = pneg %p121
      %p128 = scmp.eq.s32.totalorder %s23, 1
      %p129 = por %p127, %p128
      %p130 = scmp.ne.s32.totalorder %s122, %s125
      %p131 = scmp.eq.s32.totalorder %s23, 0
      %p132 = por %p130, %p131
      %p133 = scmp.ne.s32.totalorder %s122, %s125
      %p134 = scmp.eq.s32.totalorder %s28, 1
      %p135 = por %p133, %p134
      %p136 = scmp.ne.s32.totalorder %s125, %s126
      %p137 = scmp.eq.s32.totalorder %s28, 0
      %p138 = por %p136, %p137
      %p139 = scmp.ne.s32.totalorder %s125, %s126
      %p140 = scmp.eq.s32.totalorder %s29, 1
      %p141 = por %p139, %p140
      %p143 = scmp.ne.s32.totalorder %s126, %s142
      %p144 = scmp.eq.s32.totalorder %s29, 0
      %p145 = por %p143, %p144
      %s146 = ssub.s32 %s23, %s30
      %p147 = scmp.eq.s32.totalorder %s146, 0
      %s149 = sadd.s32 %s148, 1
      %s150 = scalar_select %p147, %s148, %s149
      %p153 = pneg %p147
      %p154 = scmp.eq.s32.totalorder %s23, 1
      %p155 = por %p153, %p154
      %p156 = scmp.ne.s32.totalorder %s148, %s151
      %p157 = scmp.eq.s32.totalorder %s23, 0
      %p158 = por %p156, %p157
      %p159 = scmp.ne.s32.totalorder %s148, %s151
      %p160 = scmp.eq.s32.totalorder %s28, 1
      %p161 = por %p159, %p160
      %p162 = scmp.ne.s32.totalorder %s151, %s152
      %p163 = scmp.eq.s32.totalorder %s28, 0
      %p164 = por %p162, %p163
      %p165 = scmp.ne.s32.totalorder %s151, %s152
      %p166 = scmp.eq.s32.totalorder %s29, 1
      %p167 = por %p165, %p166
      %p169 = scmp.ne.s32.totalorder %s152, %s168
      %p170 = scmp.eq.s32.totalorder %s29, 0
      %p171 = por %p169, %p170
      %p172 = scmp.le.s32.totalorder 1, %s23
      %p173 = scmp.lt.s32.totalorder %s23, 3
      %p174 = pnand %p172, %p173
      %p175 = pneg %p174
      // Predicated region
      $region9: #{residual_forward.4} parent=5 // pred_check
        _
      $region10: #{residual_forward.4} parent=5 // pred_check_branch
        %177 = sbr.rel (%p174) target = $region12
      $region11: #{residual_forward.4} parent=5 // pred_region
        %s178 = ssub.s32 %s23, 1
        // Predicated region
        $region13: #{residual_forward.4} parent=11 // pred_check
          %p179 = pneg %p70
        $region14: #{residual_forward.4} parent=11 // pred_check_branch
          %181 = sbr.rel (%p179) target = $region16
        $region15: #{residual_forward.4} parent=11 // pred_region
          %s183 = ssub.s32 16, 16
          %184 = vsyncadd [#allocation7], %s183
          %s186 = sshll.u32 [#allocation6], 4
          %s187 = int_to_ptr.vmem [resolvable:$true] %s186
          %189 = dma.hbm_to_vmem [thread:$0]  %s1, 16, %s187, [#allocation7]
        $region16: #{residual_forward.4} parent=11 // pred_fallthru
          _
        // Predicated region
        $region17: #{residual_forward.4} parent=11 // pred_check
          %p190 = pneg %p91
        $region18: #{residual_forward.4} parent=11 // pred_check_branch
          %192 = sbr.rel (%p190) target = $region20
        $region19: #{residual_forward.4} parent=11 // pred_region
          %s194 = ssub.s32 16, 16
          %195 = vsyncadd [#allocation7], %s194
          %s197 = sshll.u32 [#allocation8], 4
          %s198 = int_to_ptr.vmem [resolvable:$true] %s197
          %200 = dma.hbm_to_vmem [thread:$0]  %s2, 16, %s198, [#allocation7]
        $region20: #{residual_forward.4} parent=11 // pred_fallthru
          _
        // Predicated region
        $region21: #{residual_forward.4} parent=11 // pred_check
          %p201 = pneg %p112
        $region22: #{residual_forward.4} parent=11 // pred_check_branch
          %203 = sbr.rel (%p201) target = $region24
        $region23: #{residual_forward.4} parent=11 // pred_region
          %s205 = ssub.s32 9216, 9216
          %206 = vsyncadd [#allocation10], %s205
          %s207 = sshll.u32 [#allocation9], 4
          %s208 = int_to_ptr.vmem [resolvable:$true] %s207
          %213 = dma.hbm_to_vmem [thread:$0]  %s3, 9216, %s208, [#allocation10], 64, 64, 4
        $region24: #{residual_forward.4} parent=11 // pred_fallthru
          _
      $region12: #{residual_forward.4} parent=5 // pred_fallthru
        _
      %p214 = scmp.lt.s32.totalorder %s23, 2
      // Predicated region
      $region25: #{residual_forward.4} parent=5 // pred_check
        %p215 = pneg %p214
      $region26: #{residual_forward.4} parent=5 // pred_check_branch
        %217 = sbr.rel (%p215) target = $region28
      $region27: #{residual_forward.4} parent=5 // pred_region
        // Predicated region
        $region29: #{residual_forward.4} parent=27 // pred_check
          %p218 = pneg %p43
        $region30: #{residual_forward.4} parent=27 // pred_check_branch
          %220 = sbr.rel (%p218) target = $region32
        $region31: #{residual_forward.4} parent=27 // pred_region
          %s221 = sand.u32 %s33, 1
          %s222 = scalar_lea.sflag [#allocation4], %s221
          %s223 = sand.u32 %s33, 1
          %s224 = smul.addr %s223, 128
          %s225 = scalar_lea.vmem [#allocation3], %s224
          %s227 = ssub.s32 2048, 2048
          %228 = vsyncadd %s222, %s227
          %s229 = smul.addr %s23, 32
          %s230 = smul.addr %s229, 64
          %s231 = scalar_lea.hbm %s0, %s230
          %s232 = sshll.u32 %s225, 4
          %s233 = int_to_ptr.vmem [resolvable:$true] %s232
          %238 = dma.hbm_to_vmem [thread:$0]  %s231, 2048, %s233, %s222, 64, 64, 4
        $region32: #{residual_forward.4} parent=27 // pred_fallthru
          _
      $region28: #{residual_forward.4} parent=5 // pred_fallthru
        _
      %p239 = scmp.le.s32.totalorder 1, %s23
      %p240 = scmp.lt.s32.totalorder %s23, 3
      %p241 = pnand %p239, %p240
      %p242 = pneg %p241
      // Predicated region
      $region33: #{residual_forward.4} parent=5 // pred_check
        _
      $region34: #{residual_forward.4} parent=5 // pred_check_branch
        %244 = sbr.rel (%p241) target = $region36
      $region35: #{residual_forward.4} parent=5 // pred_region
        %s245 = ssub.s32 %s23, 1
        %s246 = sand.u32 %s36, 1
        %s247 = scalar_lea.sflag [#allocation4], %s246
        %s248 = sand.u32 %s36, 1
        %s249 = smul.addr %s248, 128
        %s250 = scalar_lea.vmem [#allocation3], %s249
        // Predicated region
        $region37: #{residual_forward.4} parent=35 // pred_check
          %p251 = pneg %p49
        $region38: #{residual_forward.4} parent=35 // pred_check_branch
          %253 = sbr.rel (%p251) target = $region40
        $region39: #{residual_forward.4} parent=35 // pred_region
          %254 = dma.done %s247, 2048
        $region40: #{residual_forward.4} parent=35 // pred_fallthru
          _
        // Predicated region
        $region41: #{residual_forward.4} parent=35 // pred_check
          %p255 = pneg %p70
        $region42: #{residual_forward.4} parent=35 // pred_check_branch
          %257 = sbr.rel (%p255) target = $region44
        $region43: #{residual_forward.4} parent=35 // pred_region
          %258 = dma.done [#allocation7], 16
        $region44: #{residual_forward.4} parent=35 // pred_fallthru
          _
        // Predicated region
        $region45: #{residual_forward.4} parent=35 // pred_check
          %p259 = pneg %p91
        $region46: #{residual_forward.4} parent=35 // pred_check_branch
          %261 = sbr.rel (%p259) target = $region48
        $region47: #{residual_forward.4} parent=35 // pred_region
          %262 = dma.done [#allocation7], 16
        $region48: #{residual_forward.4} parent=35 // pred_fallthru
          _
        // Predicated region
        $region49: #{residual_forward.4} parent=35 // pred_check
          %p263 = pneg %p112
        $region50: #{residual_forward.4} parent=35 // pred_check_branch
          %265 = sbr.rel (%p263) target = $region52
        $region51: #{residual_forward.4} parent=35 // pred_region
          %266 = dma.done [#allocation10], 9216
        $region52: #{residual_forward.4} parent=35 // pred_fallthru
          _
        %s267 = sand.u32 %s36, 1
        %s268 = scalar_lea.sflag [#allocation4], %s267
        %s269 = sand.u32 %s36, 1
        %s270 = smul.addr %s269, 128
        %s271 = scalar_lea.vmem [#allocation3], %s270
        %p272 = pneg %p49
        %p273 = pneg %p46
        %p274 = pneg %p70
        %p275 = pneg %p67
        %p276 = pneg %p91
        %p277 = pneg %p88
        %p278 = pneg %p112
        %p279 = pneg %p109
        %p280 = pneg %p138
        %p281 = pneg %p135
        %s282 = sand.u32 %s125, 1
        %s283 = scalar_lea.sflag [#allocation5], %s282
        %s284 = sand.u32 %s125, 1
        %s285 = smul.addr %s284, 128
        %s286 = scalar_lea.vmem [#allocation11], %s285
        %p287 = pneg %p164
        %p288 = pneg %p161
        %s289 = sand.u32 %s151, 1
        %s290 = scalar_lea.sflag [#allocation13], %s289
        %s291 = sand.u32 %s151, 1
        %s292 = smul.addr %s291, 2
        %s293 = scalar_lea.vmem [#allocation12], %s292
        %v295 = vld [vmem:[#allocation6] sm:$0x1]
        %v296 = vld [vmem:[#allocation8] sm:$0x1]
        %v297 = vld [vmem:[%s250] sm:$0xf]
        %v298 = vld [vmem:[%s250 + $0x4] sm:$0xf]
        %v299 = vld [vmem:[%s250 + $0x8] sm:$0xf]
        %v300 = vld [vmem:[%s250 + $0xc] sm:$0xf]
        %v301 = vld [vmem:[%s250 + $0x10] sm:$0xf]
        %v302 = vld [vmem:[%s250 + $0x14] sm:$0xf]
        %v303 = vld [vmem:[%s250 + $0x18] sm:$0xf]
        %v304 = vld [vmem:[%s250 + $0x1c] sm:$0xf]
        %v305 = vld [vmem:[%s250 + $0x20] sm:$0xf]
        %v306 = vld [vmem:[%s250 + $0x24] sm:$0xf]
        %v307 = vld [vmem:[%s250 + $0x28] sm:$0xf]
        %v308 = vld [vmem:[%s250 + $0x2c] sm:$0xf]
        %v309 = vld [vmem:[%s250 + $0x30] sm:$0xf]
        %v310 = vld [vmem:[%s250 + $0x34] sm:$0xf]
        %v311 = vld [vmem:[%s250 + $0x38] sm:$0xf]
        %v312 = vld [vmem:[%s250 + $0x3c] sm:$0xf]
        %v313 = vld [vmem:[%s250 + $0x40] sm:$0xf]
        %v314 = vld [vmem:[%s250 + $0x44] sm:$0xf]
        %v315 = vld [vmem:[%s250 + $0x48] sm:$0xf]
        %v316 = vld [vmem:[%s250 + $0x4c] sm:$0xf]
        %v317 = vld [vmem:[%s250 + $0x50] sm:$0xf]
        %v318 = vld [vmem:[%s250 + $0x54] sm:$0xf]
        %v319 = vld [vmem:[%s250 + $0x58] sm:$0xf]
        %v320 = vld [vmem:[%s250 + $0x5c] sm:$0xf]
        %v321 = vld [vmem:[%s250 + $0x60] sm:$0xf]
        %v322 = vld [vmem:[%s250 + $0x64] sm:$0xf]
        %v323 = vld [vmem:[%s250 + $0x68] sm:$0xf]
        %v324 = vld [vmem:[%s250 + $0x6c] sm:$0xf]
        %v325 = vld [vmem:[%s250 + $0x70] sm:$0xf]
        %v326 = vld [vmem:[%s250 + $0x74] sm:$0xf]
        %v327 = vld [vmem:[%s250 + $0x78] sm:$0xf]
        %v328 = vld [vmem:[%s250 + $0x7c] sm:$0xf]
        %v329 = vunpack.c.l.bf16 %v297
        %v330 = vunpack.c.l.bf16 %v298
        %v331 = vunpack.c.l.bf16 %v299
        %v332 = vunpack.c.l.bf16 %v300
        %v333 = vunpack.c.l.bf16 %v301
        %v334 = vunpack.c.l.bf16 %v302
        %v335 = vunpack.c.l.bf16 %v303
        %v336 = vunpack.c.l.bf16 %v304
        %v337 = vunpack.c.l.bf16 %v305
        %v338 = vunpack.c.l.bf16 %v306
        %v339 = vunpack.c.l.bf16 %v307
        %v340 = vunpack.c.l.bf16 %v308
        %v341 = vunpack.c.l.bf16 %v309
        %v342 = vunpack.c.l.bf16 %v310
        %v343 = vunpack.c.l.bf16 %v311
        %v344 = vunpack.c.l.bf16 %v312
        %v345 = vunpack.c.l.bf16 %v313
        %v346 = vunpack.c.l.bf16 %v314
        %v347 = vunpack.c.l.bf16 %v315
        %v348 = vunpack.c.l.bf16 %v316
        %v349 = vunpack.c.l.bf16 %v317
        %v350 = vunpack.c.l.bf16 %v318
        %v351 = vunpack.c.l.bf16 %v319
        %v352 = vunpack.c.l.bf16 %v320
        %v353 = vunpack.c.l.bf16 %v321
        %v354 = vunpack.c.l.bf16 %v322
        %v355 = vunpack.c.l.bf16 %v323
        %v356 = vunpack.c.l.bf16 %v324
        %v357 = vunpack.c.l.bf16 %v325
        %v358 = vunpack.c.l.bf16 %v326
        %v359 = vunpack.c.l.bf16 %v327
        %v360 = vunpack.c.l.bf16 %v328
        %v362 = vlaneseq
        %v363 = vshrl.u32 %v362, 7
        %v364 = vsub.s32 0, %v363
        %v365 = vrot.slane %v295, %v364
        %v367 = vmul.f32 %v329, %v365
        %v368 = vmul.f32 %v330, %v365
        %v369 = vmul.f32 %v331, %v365
        %v370 = vmul.f32 %v332, %v365
        %v371 = vmul.f32 %v333, %v365
        %v372 = vmul.f32 %v334, %v365
        %v373 = vmul.f32 %v335, %v365
        %v374 = vmul.f32 %v336, %v365
        %v375 = vmul.f32 %v337, %v365
        %v376 = vmul.f32 %v338, %v365
        %v377 = vmul.f32 %v339, %v365
        %v378 = vmul.f32 %v340, %v365
        %v379 = vmul.f32 %v341, %v365
        %v380 = vmul.f32 %v342, %v365
        %v381 = vmul.f32 %v343, %v365
        %v382 = vmul.f32 %v344, %v365
        %v383 = vmul.f32 %v345, %v365
        %v384 = vmul.f32 %v346, %v365
        %v385 = vmul.f32 %v347, %v365
        %v386 = vmul.f32 %v348, %v365
        %v387 = vmul.f32 %v349, %v365
        %v388 = vmul.f32 %v350, %v365
        %v389 = vmul.f32 %v351, %v365
        %v390 = vmul.f32 %v352, %v365
        %v391 = vmul.f32 %v353, %v365
        %v392 = vmul.f32 %v354, %v365
        %v393 = vmul.f32 %v355, %v365
        %v394 = vmul.f32 %v356, %v365
        %v395 = vmul.f32 %v357, %v365
        %v396 = vmul.f32 %v358, %v365
        %v397 = vmul.f32 %v359, %v365
        %v398 = vmul.f32 %v360, %v365
        %v400 = vlaneseq
        %v401 = vshrl.u32 %v400, 7
        %v402 = vsub.s32 0, %v401
        %v403 = vrot.slane %v296, %v402
        %v405 = vadd.f32 %v367, %v403
        %v406 = vadd.f32 %v368, %v403
        %v407 = vadd.f32 %v369, %v403
        %v408 = vadd.f32 %v370, %v403
        %v409 = vadd.f32 %v371, %v403
        %v410 = vadd.f32 %v372, %v403
        %v411 = vadd.f32 %v373, %v403
        %v412 = vadd.f32 %v374, %v403
        %v413 = vadd.f32 %v375, %v403
        %v414 = vadd.f32 %v376, %v403
        %v415 = vadd.f32 %v377, %v403
        %v416 = vadd.f32 %v378, %v403
        %v417 = vadd.f32 %v379, %v403
        %v418 = vadd.f32 %v380, %v403
        %v419 = vadd.f32 %v381, %v403
        %v420 = vadd.f32 %v382, %v403
        %v421 = vadd.f32 %v383, %v403
        %v422 = vadd.f32 %v384, %v403
        %v423 = vadd.f32 %v385, %v403
        %v424 = vadd.f32 %v386, %v403
        %v425 = vadd.f32 %v387, %v403
        %v426 = vadd.f32 %v388, %v403
        %v427 = vadd.f32 %v389, %v403
        %v428 = vadd.f32 %v390, %v403
        %v429 = vadd.f32 %v391, %v403
        %v430 = vadd.f32 %v392, %v403
        %v431 = vadd.f32 %v393, %v403
        %v432 = vadd.f32 %v394, %v403
        %v433 = vadd.f32 %v395, %v403
        %v434 = vadd.f32 %v396, %v403
        %v435 = vadd.f32 %v397, %v403
        %v436 = vadd.f32 %v398, %v403
        %v437 = vmax.f32 %v405, 0.0
        %v438 = vmax.f32 %v406, 0.0
        %v439 = vmax.f32 %v407, 0.0
        %v440 = vmax.f32 %v408, 0.0
        %v441 = vmax.f32 %v409, 0.0
        %v442 = vmax.f32 %v410, 0.0
        %v443 = vmax.f32 %v411, 0.0
        %v444 = vmax.f32 %v412, 0.0
        %v445 = vmax.f32 %v413, 0.0
        %v446 = vmax.f32 %v414, 0.0
        %v447 = vmax.f32 %v415, 0.0
        %v448 = vmax.f32 %v416, 0.0
        %v449 = vmax.f32 %v417, 0.0
        %v450 = vmax.f32 %v418, 0.0
        %v451 = vmax.f32 %v419, 0.0
        %v452 = vmax.f32 %v420, 0.0
        %v453 = vmax.f32 %v421, 0.0
        %v454 = vmax.f32 %v422, 0.0
        %v455 = vmax.f32 %v423, 0.0
        %v456 = vmax.f32 %v424, 0.0
        %v457 = vmax.f32 %v425, 0.0
        %v458 = vmax.f32 %v426, 0.0
        %v459 = vmax.f32 %v427, 0.0
        %v460 = vmax.f32 %v428, 0.0
        %v461 = vmax.f32 %v429, 0.0
        %v462 = vmax.f32 %v430, 0.0
        %v463 = vmax.f32 %v431, 0.0
        %v464 = vmax.f32 %v432, 0.0
        %v465 = vmax.f32 %v433, 0.0
        %v466 = vmax.f32 %v434, 0.0
        %v467 = vmax.f32 %v435, 0.0
        %v468 = vmax.f32 %v436, 0.0
        %469 = vst [vmem:[#allocation2] sm:$0xff] 0.0
        %470 = vst [vmem:[#allocation2 + $0x8] sm:$0xff] 0.0
        %471 = vst [vmem:[#allocation2 + $0x10] sm:$0x3] 0.0
        %s472 = scalar_lea.vmem [#allocation2], 408
        %473 = vst [vmem:[%s472] sm:$0xff] 0.0
        %474 = vst [vmem:[%s472 + $0x8] sm:$0xff] 0.0
        %475 = vst [vmem:[%s472 + $0x10] sm:$0x3] 0.0
        %476 = vst [vmem:[#allocation2] sm:$0x1] 0.0
        %477 = vst [vmem:[#allocation2 + $0x18] sm:$0x1] 0.0
        %478 = vst [vmem:[#allocation2 + $0x30] sm:$0x1] 0.0
        %479 = vst [vmem:[#allocation2 + $0x48] sm:$0x1] 0.0
        %480 = vst [vmem:[#allocation2 + $0x60] sm:$0x1] 0.0
        %481 = vst [vmem:[#allocation2 + $0x78] sm:$0x1] 0.0
        %482 = vst [vmem:[#allocation2 + $0x90] sm:$0x1] 0.0
        %483 = vst [vmem:[#allocation2 + $0xa8] sm:$0x1] 0.0
        %484 = vst [vmem:[#allocation2 + $0xc0] sm:$0x1] 0.0
        %485 = vst [vmem:[#allocation2 + $0xd8] sm:$0x1] 0.0
        %486 = vst [vmem:[#allocation2 + $0xf0] sm:$0x1] 0.0
        %487 = vst [vmem:[#allocation2 + $0x108] sm:$0x1] 0.0
        %488 = vst [vmem:[#allocation2 + $0x120] sm:$0x1] 0.0
        %489 = vst [vmem:[#allocation2 + $0x138] sm:$0x1] 0.0
        %490 = vst [vmem:[#allocation2 + $0x150] sm:$0x1] 0.0
        %491 = vst [vmem:[#allocation2 + $0x168] sm:$0x1] 0.0
        %492 = vst [vmem:[#allocation2 + $0x180] sm:$0x1] 0.0
        %493 = vst [vmem:[#allocation2 + $0x198] sm:$0x1] 0.0
        %494 = vst [vmem:[#allocation2 + $0x11] sm:$0x1] 0.0
        %495 = vst [vmem:[#allocation2 + $0x29] sm:$0x1] 0.0
        %496 = vst [vmem:[#allocation2 + $0x41] sm:$0x1] 0.0
        %497 = vst [vmem:[#allocation2 + $0x59] sm:$0x1] 0.0
        %498 = vst [vmem:[#allocation2 + $0x71] sm:$0x1] 0.0
        %499 = vst [vmem:[#allocation2 + $0x89] sm:$0x1] 0.0
        %500 = vst [vmem:[#allocation2 + $0xa1] sm:$0x1] 0.0
        %501 = vst [vmem:[#allocation2 + $0xb9] sm:$0x1] 0.0
        %502 = vst [vmem:[#allocation2 + $0xd1] sm:$0x1] 0.0
        %503 = vst [vmem:[#allocation2 + $0xe9] sm:$0x1] 0.0
        %504 = vst [vmem:[#allocation2 + $0x101] sm:$0x1] 0.0
        %505 = vst [vmem:[#allocation2 + $0x119] sm:$0x1] 0.0
        %506 = vst [vmem:[#allocation2 + $0x131] sm:$0x1] 0.0
        %507 = vst [vmem:[#allocation2 + $0x149] sm:$0x1] 0.0
        %508 = vst [vmem:[#allocation2 + $0x161] sm:$0x1] 0.0
        %509 = vst [vmem:[#allocation2 + $0x179] sm:$0x1] 0.0
        %510 = vst [vmem:[#allocation2 + $0x191] sm:$0x1] 0.0
        %511 = vst [vmem:[#allocation2 + $0x1a9] sm:$0x1] 0.0
        %s512 = scalar_lea.vmem [#allocation2], 24
        %513 = vst [vmem:[%s512 + $0x1] sm:$0xff] %v437
        %514 = vst [vmem:[%s512 + $0x9] sm:$0xff] %v438
        %515 = vst [vmem:[%s512 + $0x19] sm:$0xff] %v439
        %516 = vst [vmem:[%s512 + $0x21] sm:$0xff] %v440
        %517 = vst [vmem:[%s512 + $0x31] sm:$0xff] %v441
        %518 = vst [vmem:[%s512 + $0x39] sm:$0xff] %v442
        %519 = vst [vmem:[%s512 + $0x49] sm:$0xff] %v443
        %520 = vst [vmem:[%s512 + $0x51] sm:$0xff] %v444
        %521 = vst [vmem:[%s512 + $0x61] sm:$0xff] %v445
        %522 = vst [vmem:[%s512 + $0x69] sm:$0xff] %v446
        %523 = vst [vmem:[%s512 + $0x79] sm:$0xff] %v447
        %524 = vst [vmem:[%s512 + $0x81] sm:$0xff] %v448
        %525 = vst [vmem:[%s512 + $0x91] sm:$0xff] %v449
        %526 = vst [vmem:[%s512 + $0x99] sm:$0xff] %v450
        %527 = vst [vmem:[%s512 + $0xa9] sm:$0xff] %v451
        %528 = vst [vmem:[%s512 + $0xb1] sm:$0xff] %v452
        %529 = vst [vmem:[%s512 + $0xc1] sm:$0xff] %v453
        %530 = vst [vmem:[%s512 + $0xc9] sm:$0xff] %v454
        %531 = vst [vmem:[%s512 + $0xd9] sm:$0xff] %v455
        %532 = vst [vmem:[%s512 + $0xe1] sm:$0xff] %v456
        %533 = vst [vmem:[%s512 + $0xf1] sm:$0xff] %v457
        %534 = vst [vmem:[%s512 + $0xf9] sm:$0xff] %v458
        %535 = vst [vmem:[%s512 + $0x109] sm:$0xff] %v459
        %536 = vst [vmem:[%s512 + $0x111] sm:$0xff] %v460
        %537 = vst [vmem:[%s512 + $0x121] sm:$0xff] %v461
        %538 = vst [vmem:[%s512 + $0x129] sm:$0xff] %v462
        %539 = vst [vmem:[%s512 + $0x139] sm:$0xff] %v463
        %540 = vst [vmem:[%s512 + $0x141] sm:$0xff] %v464
        %541 = vst [vmem:[%s512 + $0x151] sm:$0xff] %v465
        %542 = vst [vmem:[%s512 + $0x159] sm:$0xff] %v466
        %543 = vst [vmem:[%s512 + $0x169] sm:$0xff] %v467
        %544 = vst [vmem:[%s512 + $0x171] sm:$0xff] %v468
        %v545 = vld [vmem:[#allocation2] sm:$0xff]
        %v546 = vld [vmem:[#allocation2 + $0x8] sm:$0xff]
        %v547 = vld [vmem:[#allocation2 + $0x10] sm:$0x3]
        %v548 = vld [vmem:[#allocation2 + $0x18] sm:$0xff]
        %v549 = vld [vmem:[#allocation2 + $0x20] sm:$0xff]
        %v550 = vld [vmem:[#allocation2 + $0x28] sm:$0x3]
        %v551 = vld [vmem:[#allocation2 + $0x30] sm:$0xff]
        %v552 = vld [vmem:[#allocation2 + $0x38] sm:$0xff]
        %v553 = vld [vmem:[#allocation2 + $0x40] sm:$0x3]
        %v554 = vld [vmem:[#allocation2 + $0x48] sm:$0xff]
        %v555 = vld [vmem:[#allocation2 + $0x50] sm:$0xff]
        %v556 = vld [vmem:[#allocation2 + $0x58] sm:$0x3]
        %v557 = vld [vmem:[#allocation2 + $0x60] sm:$0xff]
        %v558 = vld [vmem:[#allocation2 + $0x68] sm:$0xff]
        %v559 = vld [vmem:[#allocation2 + $0x70] sm:$0x3]
        %v560 = vld [vmem:[#allocation2 + $0x78] sm:$0xff]
        %v561 = vld [vmem:[#allocation2 + $0x80] sm:$0xff]
        %v562 = vld [vmem:[#allocation2 + $0x88] sm:$0x3]
        %v563 = vld [vmem:[#allocation2 + $0x90] sm:$0xff]
        %v564 = vld [vmem:[#allocation2 + $0x98] sm:$0xff]
        %v565 = vld [vmem:[#allocation2 + $0xa0] sm:$0x3]
        %v566 = vld [vmem:[#allocation2 + $0xa8] sm:$0xff]
        %v567 = vld [vmem:[#allocation2 + $0xb0] sm:$0xff]
        %v568 = vld [vmem:[#allocation2 + $0xb8] sm:$0x3]
        %v569 = vld [vmem:[#allocation2 + $0xc0] sm:$0xff]
        %v570 = vld [vmem:[#allocation2 + $0xc8] sm:$0xff]
        %v571 = vld [vmem:[#allocation2 + $0xd0] sm:$0x3]
        %v572 = vld [vmem:[#allocation2 + $0xd8] sm:$0xff]
        %v573 = vld [vmem:[#allocation2 + $0xe0] sm:$0xff]
        %v574 = vld [vmem:[#allocation2 + $0xe8] sm:$0x3]
        %v575 = vld [vmem:[#allocation2 + $0xf0] sm:$0xff]
        %v576 = vld [vmem:[#allocation2 + $0xf8] sm:$0xff]
        %v577 = vld [vmem:[#allocation2 + $0x100] sm:$0x3]
        %v578 = vld [vmem:[#allocation2 + $0x108] sm:$0xff]
        %v579 = vld [vmem:[#allocation2 + $0x110] sm:$0xff]
        %v580 = vld [vmem:[#allocation2 + $0x118] sm:$0x3]
        %v581 = vld [vmem:[#allocation2 + $0x120] sm:$0xff]
        %v582 = vld [vmem:[#allocation2 + $0x128] sm:$0xff]
        %v583 = vld [vmem:[#allocation2 + $0x130] sm:$0x3]
        %v584 = vld [vmem:[#allocation2 + $0x138] sm:$0xff]
        %v585 = vld [vmem:[#allocation2 + $0x140] sm:$0xff]
        %v586 = vld [vmem:[#allocation2 + $0x148] sm:$0x3]
        %v587 = vld [vmem:[#allocation2 + $0x150] sm:$0xff]
        %v588 = vld [vmem:[#allocation2 + $0x158] sm:$0xff]
        %v589 = vld [vmem:[#allocation2 + $0x160] sm:$0x3]
        %v590 = vld [vmem:[#allocation2 + $0x168] sm:$0xff]
        %v591 = vld [vmem:[#allocation2 + $0x170] sm:$0xff]
        %v592 = vld [vmem:[#allocation2 + $0x178] sm:$0x3]
        %v593 = vld [vmem:[#allocation2 + $0x180] sm:$0xff]
        %v594 = vld [vmem:[#allocation2 + $0x188] sm:$0xff]
        %v595 = vld [vmem:[#allocation2 + $0x190] sm:$0x3]
        %v596 = vld [vmem:[#allocation2 + $0x198] sm:$0xff]
        %v597 = vld [vmem:[#allocation2 + $0x1a0] sm:$0xff]
        %v598 = vld [vmem:[#allocation2 + $0x1a8] sm:$0x3]
        %v599 = vld [vmem:[#allocation9] sm:$0xf]
        %v600 = vld [vmem:[#allocation9 + $0x4] sm:$0xf]
        %v601 = vld [vmem:[#allocation9 + $0x8] sm:$0xf]
        %v602 = vld [vmem:[#allocation9 + $0xc] sm:$0xf]
        %v603 = vld [vmem:[#allocation9 + $0x10] sm:$0xf]
        %v604 = vld [vmem:[#allocation9 + $0x14] sm:$0xf]
        %v605 = vld [vmem:[#allocation9 + $0x18] sm:$0xf]
        %v606 = vld [vmem:[#allocation9 + $0x1c] sm:$0xf]
        %v607 = vld [vmem:[#allocation9 + $0x20] sm:$0xf]
        %v608 = vld [vmem:[#allocation9 + $0x24] sm:$0xf]
        %v609 = vld [vmem:[#allocation9 + $0x28] sm:$0xf]
        %v610 = vld [vmem:[#allocation9 + $0x2c] sm:$0xf]
        %v611 = vld [vmem:[#allocation9 + $0x30] sm:$0xf]
        %v612 = vld [vmem:[#allocation9 + $0x34] sm:$0xf]
        %v613 = vld [vmem:[#allocation9 + $0x38] sm:$0xf]
        %v614 = vld [vmem:[#allocation9 + $0x3c] sm:$0xf]
        %v615 = vld [vmem:[#allocation9 + $0x40] sm:$0xf]
        %v616 = vld [vmem:[#allocation9 + $0x44] sm:$0xf]
        %v617 = vld [vmem:[#allocation9 + $0x48] sm:$0xf]
        %v618 = vld [vmem:[#allocation9 + $0x4c] sm:$0xf]
        %v619 = vld [vmem:[#allocation9 + $0x50] sm:$0xf]
        %v620 = vld [vmem:[#allocation9 + $0x54] sm:$0xf]
        %v621 = vld [vmem:[#allocation9 + $0x58] sm:$0xf]
        %v622 = vld [vmem:[#allocation9 + $0x5c] sm:$0xf]
        %v623 = vld [vmem:[#allocation9 + $0x60] sm:$0xf]
        %v624 = vld [vmem:[#allocation9 + $0x64] sm:$0xf]
        %v625 = vld [vmem:[#allocation9 + $0x68] sm:$0xf]
        %v626 = vld [vmem:[#allocation9 + $0x6c] sm:$0xf]
        %v627 = vld [vmem:[#allocation9 + $0x70] sm:$0xf]
        %v628 = vld [vmem:[#allocation9 + $0x74] sm:$0xf]
        %v629 = vld [vmem:[#allocation9 + $0x78] sm:$0xf]
        %v630 = vld [vmem:[#allocation9 + $0x7c] sm:$0xf]
        %v631 = vld [vmem:[#allocation9 + $0x80] sm:$0xf]
        %v632 = vld [vmem:[#allocation9 + $0x84] sm:$0xf]
        %v633 = vld [vmem:[#allocation9 + $0x88] sm:$0xf]
        %v634 = vld [vmem:[#allocation9 + $0x8c] sm:$0xf]
        %v635 = vld [vmem:[#allocation9 + $0x90] sm:$0xf]
        %v636 = vld [vmem:[#allocation9 + $0x94] sm:$0xf]
        %v637 = vld [vmem:[#allocation9 + $0x98] sm:$0xf]
        %v638 = vld [vmem:[#allocation9 + $0x9c] sm:$0xf]
        %v639 = vld [vmem:[#allocation9 + $0xa0] sm:$0xf]
        %v640 = vld [vmem:[#allocation9 + $0xa4] sm:$0xf]
        %v641 = vld [vmem:[#allocation9 + $0xa8] sm:$0xf]
        %v642 = vld [vmem:[#allocation9 + $0xac] sm:$0xf]
        %v643 = vld [vmem:[#allocation9 + $0xb0] sm:$0xf]
        %v644 = vld [vmem:[#allocation9 + $0xb4] sm:$0xf]
        %v645 = vld [vmem:[#allocation9 + $0xb8] sm:$0xf]
        %v646 = vld [vmem:[#allocation9 + $0xbc] sm:$0xf]
        %v647 = vld [vmem:[#allocation9 + $0xc0] sm:$0xf]
        %v648 = vld [vmem:[#allocation9 + $0xc4] sm:$0xf]
        %v649 = vld [vmem:[#allocation9 + $0xc8] sm:$0xf]
        %v650 = vld [vmem:[#allocation9 + $0xcc] sm:$0xf]
        %v651 = vld [vmem:[#allocation9 + $0xd0] sm:$0xf]
        %v652 = vld [vmem:[#allocation9 + $0xd4] sm:$0xf]
        %v653 = vld [vmem:[#allocation9 + $0xd8] sm:$0xf]
        %v654 = vld [vmem:[#allocation9 + $0xdc] sm:$0xf]
        %v655 = vld [vmem:[#allocation9 + $0xe0] sm:$0xf]
        %v656 = vld [vmem:[#allocation9 + $0xe4] sm:$0xf]
        %v657 = vld [vmem:[#allocation9 + $0xe8] sm:$0xf]
        %v658 = vld [vmem:[#allocation9 + $0xec] sm:$0xf]
        %v659 = vld [vmem:[#allocation9 + $0xf0] sm:$0xf]
        %v660 = vld [vmem:[#allocation9 + $0xf4] sm:$0xf]
        %v661 = vld [vmem:[#allocation9 + $0xf8] sm:$0xf]
        %v662 = vld [vmem:[#allocation9 + $0xfc] sm:$0xf]
        %v663 = vld [vmem:[#allocation9 + $0x100] sm:$0xf]
        %v664 = vld [vmem:[#allocation9 + $0x104] sm:$0xf]
        %v665 = vld [vmem:[#allocation9 + $0x108] sm:$0xf]
        %v666 = vld [vmem:[#allocation9 + $0x10c] sm:$0xf]
        %v667 = vld [vmem:[#allocation9 + $0x110] sm:$0xf]
        %v668 = vld [vmem:[#allocation9 + $0x114] sm:$0xf]
        %v669 = vld [vmem:[#allocation9 + $0x118] sm:$0xf]
        %v670 = vld [vmem:[#allocation9 + $0x11c] sm:$0xf]
        %v671 = vld [vmem:[#allocation9 + $0x120] sm:$0xf]
        %v672 = vld [vmem:[#allocation9 + $0x124] sm:$0xf]
        %v673 = vld [vmem:[#allocation9 + $0x128] sm:$0xf]
        %v674 = vld [vmem:[#allocation9 + $0x12c] sm:$0xf]
        %v675 = vld [vmem:[#allocation9 + $0x130] sm:$0xf]
        %v676 = vld [vmem:[#allocation9 + $0x134] sm:$0xf]
        %v677 = vld [vmem:[#allocation9 + $0x138] sm:$0xf]
        %v678 = vld [vmem:[#allocation9 + $0x13c] sm:$0xf]
        %v679 = vld [vmem:[#allocation9 + $0x140] sm:$0xf]
        %v680 = vld [vmem:[#allocation9 + $0x144] sm:$0xf]
        %v681 = vld [vmem:[#allocation9 + $0x148] sm:$0xf]
        %v682 = vld [vmem:[#allocation9 + $0x14c] sm:$0xf]
        %v683 = vld [vmem:[#allocation9 + $0x150] sm:$0xf]
        %v684 = vld [vmem:[#allocation9 + $0x154] sm:$0xf]
        %v685 = vld [vmem:[#allocation9 + $0x158] sm:$0xf]
        %v686 = vld [vmem:[#allocation9 + $0x15c] sm:$0xf]
        %v687 = vld [vmem:[#allocation9 + $0x160] sm:$0xf]
        %v688 = vld [vmem:[#allocation9 + $0x164] sm:$0xf]
        %v689 = vld [vmem:[#allocation9 + $0x168] sm:$0xf]
        %v690 = vld [vmem:[#allocation9 + $0x16c] sm:$0xf]
        %v691 = vld [vmem:[#allocation9 + $0x170] sm:$0xf]
        %v692 = vld [vmem:[#allocation9 + $0x174] sm:$0xf]
        %v693 = vld [vmem:[#allocation9 + $0x178] sm:$0xf]
        %v694 = vld [vmem:[#allocation9 + $0x17c] sm:$0xf]
        %v695 = vld [vmem:[#allocation9 + $0x180] sm:$0xf]
        %v696 = vld [vmem:[#allocation9 + $0x184] sm:$0xf]
        %v697 = vld [vmem:[#allocation9 + $0x188] sm:$0xf]
        %v698 = vld [vmem:[#allocation9 + $0x18c] sm:$0xf]
        %v699 = vld [vmem:[#allocation9 + $0x190] sm:$0xf]
        %v700 = vld [vmem:[#allocation9 + $0x194] sm:$0xf]
        %v701 = vld [vmem:[#allocation9 + $0x198] sm:$0xf]
        %v702 = vld [vmem:[#allocation9 + $0x19c] sm:$0xf]
        %v703 = vld [vmem:[#allocation9 + $0x1a0] sm:$0xf]
        %v704 = vld [vmem:[#allocation9 + $0x1a4] sm:$0xf]
        %v705 = vld [vmem:[#allocation9 + $0x1a8] sm:$0xf]
        %v706 = vld [vmem:[#allocation9 + $0x1ac] sm:$0xf]
        %v707 = vld [vmem:[#allocation9 + $0x1b0] sm:$0xf]
        %v708 = vld [vmem:[#allocation9 + $0x1b4] sm:$0xf]
        %v709 = vld [vmem:[#allocation9 + $0x1b8] sm:$0xf]
        %v710 = vld [vmem:[#allocation9 + $0x1bc] sm:$0xf]
        %v711 = vld [vmem:[#allocation9 + $0x1c0] sm:$0xf]
        %v712 = vld [vmem:[#allocation9 + $0x1c4] sm:$0xf]
        %v713 = vld [vmem:[#allocation9 + $0x1c8] sm:$0xf]
        %v714 = vld [vmem:[#allocation9 + $0x1cc] sm:$0xf]
        %v715 = vld [vmem:[#allocation9 + $0x1d0] sm:$0xf]
        %v716 = vld [vmem:[#allocation9 + $0x1d4] sm:$0xf]
        %v717 = vld [vmem:[#allocation9 + $0x1d8] sm:$0xf]
        %v718 = vld [vmem:[#allocation9 + $0x1dc] sm:$0xf]
        %v719 = vld [vmem:[#allocation9 + $0x1e0] sm:$0xf]
        %v720 = vld [vmem:[#allocation9 + $0x1e4] sm:$0xf]
        %v721 = vld [vmem:[#allocation9 + $0x1e8] sm:$0xf]
        %v722 = vld [vmem:[#allocation9 + $0x1ec] sm:$0xf]
        %v723 = vld [vmem:[#allocation9 + $0x1f0] sm:$0xf]
        %v724 = vld [vmem:[#allocation9 + $0x1f4] sm:$0xf]
        %v725 = vld [vmem:[#allocation9 + $0x1f8] sm:$0xf]
        %v726 = vld [vmem:[#allocation9 + $0x1fc] sm:$0xf]
        %v727 = vld [vmem:[#allocation9 + $0x200] sm:$0xf]
        %v728 = vld [vmem:[#allocation9 + $0x204] sm:$0xf]
        %v729 = vld [vmem:[#allocation9 + $0x208] sm:$0xf]
        %v730 = vld [vmem:[#allocation9 + $0x20c] sm:$0xf]
        %v731 = vld [vmem:[#allocation9 + $0x210] sm:$0xf]
        %v732 = vld [vmem:[#allocation9 + $0x214] sm:$0xf]
        %v733 = vld [vmem:[#allocation9 + $0x218] sm:$0xf]
        %v734 = vld [vmem:[#allocation9 + $0x21c] sm:$0xf]
        %v735 = vld [vmem:[#allocation9 + $0x220] sm:$0xf]
        %v736 = vld [vmem:[#allocation9 + $0x224] sm:$0xf]
        %v737 = vld [vmem:[#allocation9 + $0x228] sm:$0xf]
        %v738 = vld [vmem:[#allocation9 + $0x22c] sm:$0xf]
        %v739 = vld [vmem:[#allocation9 + $0x230] sm:$0xf]
        %v740 = vld [vmem:[#allocation9 + $0x234] sm:$0xf]
        %v741 = vld [vmem:[#allocation9 + $0x238] sm:$0xf]
        %v742 = vld [vmem:[#allocation9 + $0x23c] sm:$0xf]
        %v743 = vpack.c.bf16 %v546, %v545
        %v744 = vpack.c.bf16 %v549, %v548
        %v745 = vpack.c.bf16 %v552, %v551
        %v746 = vpack.c.bf16 %v555, %v554
        %v747 = vpack.c.bf16 %v558, %v557
        %v748 = vpack.c.bf16 %v561, %v560
        %v749 = vpack.c.bf16 %v564, %v563
        %v750 = vpack.c.bf16 %v567, %v566
        %v751 = vpack.c.bf16 %v570, %v569
        %v752 = vpack.c.bf16 %v573, %v572
        %v753 = vpack.c.bf16 %v576, %v575
        %v754 = vpack.c.bf16 %v579, %v578
        %v755 = vpack.c.bf16 %v582, %v581
        %v756 = vpack.c.bf16 %v585, %v584
        %v757 = vpack.c.bf16 %v588, %v587
        %v758 = vpack.c.bf16 %v591, %v590
        %vm807 = vcmask 1046528
        %v808 = vrot.slane %v545, 1
        %v809 = vrot.slane %v546, 1
        %v810 = vsel %vm807, %v808, %v809
        %v811 = vrot.slane %v547, 1
        %v812 = vsel %vm807, %v809, %v811
        %v813 = vrot.slane %v548, 1
        %v814 = vrot.slane %v549, 1
        %v815 = vsel %vm807, %v813, %v814
        %v816 = vrot.slane %v550, 1
        %v817 = vsel %vm807, %v814, %v816
        %v818 = vrot.slane %v551, 1
        %v819 = vrot.slane %v552, 1
        %v820 = vsel %vm807, %v818, %v819
        %v821 = vrot.slane %v553, 1
        %v822 = vsel %vm807, %v819, %v821
        %v823 = vrot.slane %v554, 1
        %v824 = vrot.slane %v555, 1
        %v825 = vsel %vm807, %v823, %v824
        %v826 = vrot.slane %v556, 1
        %v827 = vsel %vm807, %v824, %v826
        %v828 = vrot.slane %v557, 1
        %v829 = vrot.slane %v558, 1
        %v830 = vsel %vm807, %v828, %v829
        %v831 = vrot.slane %v559, 1
        %v832 = vsel %vm807, %v829, %v831
        %v833 = vrot.slane %v560, 1
        %v834 = vrot.slane %v561, 1
        %v835 = vsel %vm807, %v833, %v834
        %v836 = vrot.slane %v562, 1
        %v837 = vsel %vm807, %v834, %v836
        %v838 = vrot.slane %v563, 1
        %v839 = vrot.slane %v564, 1
        %v840 = vsel %vm807, %v838, %v839
        %v841 = vrot.slane %v565, 1
        %v842 = vsel %vm807, %v839, %v841
        %v843 = vrot.slane %v566, 1
        %v844 = vrot.slane %v567, 1
        %v845 = vsel %vm807, %v843, %v844
        %v846 = vrot.slane %v568, 1
        %v847 = vsel %vm807, %v844, %v846
        %v848 = vrot.slane %v569, 1
        %v849 = vrot.slane %v570, 1
        %v850 = vsel %vm807, %v848, %v849
        %v851 = vrot.slane %v571, 1
        %v852 = vsel %vm807, %v849, %v851
        %v853 = vrot.slane %v572, 1
        %v854 = vrot.slane %v573, 1
        %v855 = vsel %vm807, %v853, %v854
        %v856 = vrot.slane %v574, 1
        %v857 = vsel %vm807, %v854, %v856
        %v858 = vrot.slane %v575, 1
        %v859 = vrot.slane %v576, 1
        %v860 = vsel %vm807, %v858, %v859
        %v861 = vrot.slane %v577, 1
        %v862 = vsel %vm807, %v859, %v861
        %v863 = vrot.slane %v578, 1
        %v864 = vrot.slane %v579, 1
        %v865 = vsel %vm807, %v863, %v864
        %v866 = vrot.slane %v580, 1
        %v867 = vsel %vm807, %v864, %v866
        %v868 = vrot.slane %v581, 1
        %v869 = vrot.slane %v582, 1
        %v870 = vsel %vm807, %v868, %v869
        %v871 = vrot.slane %v583, 1
        %v872 = vsel %vm807, %v869, %v871
        %v873 = vrot.slane %v584, 1
        %v874 = vrot.slane %v585, 1
        %v875 = vsel %vm807, %v873, %v874
        %v876 = vrot.slane %v586, 1
        %v877 = vsel %vm807, %v874, %v876
        %v878 = vrot.slane %v587, 1
        %v879 = vrot.slane %v588, 1
        %v880 = vsel %vm807, %v878, %v879
        %v881 = vrot.slane %v589, 1
        %v882 = vsel %vm807, %v879, %v881
        %v883 = vrot.slane %v590, 1
        %v884 = vrot.slane %v591, 1
        %v885 = vsel %vm807, %v883, %v884
        %v886 = vrot.slane %v592, 1
        %v887 = vsel %vm807, %v884, %v886
        %v920 = vpack.c.bf16 %v812, %v810
        %v921 = vpack.c.bf16 %v817, %v815
        %v922 = vpack.c.bf16 %v822, %v820
        %v923 = vpack.c.bf16 %v827, %v825
        %v924 = vpack.c.bf16 %v832, %v830
        %v925 = vpack.c.bf16 %v837, %v835
        %v926 = vpack.c.bf16 %v842, %v840
        %v927 = vpack.c.bf16 %v847, %v845
        %v928 = vpack.c.bf16 %v852, %v850
        %v929 = vpack.c.bf16 %v857, %v855
        %v930 = vpack.c.bf16 %v862, %v860
        %v931 = vpack.c.bf16 %v867, %v865
        %v932 = vpack.c.bf16 %v872, %v870
        %v933 = vpack.c.bf16 %v877, %v875
        %v934 = vpack.c.bf16 %v882, %v880
        %v935 = vpack.c.bf16 %v887, %v885
        %vm936 = vcmask 1045504
        %v937 = vrot.slane %v545, 2
        %v938 = vrot.slane %v546, 2
        %v939 = vsel %vm936, %v937, %v938
        %v940 = vrot.slane %v547, 2
        %v941 = vsel %vm936, %v938, %v940
        %v942 = vrot.slane %v548, 2
        %v943 = vrot.slane %v549, 2
        %v944 = vsel %vm936, %v942, %v943
        %v945 = vrot.slane %v550, 2
        %v946 = vsel %vm936, %v943, %v945
        %v947 = vrot.slane %v551, 2
        %v948 = vrot.slane %v552, 2
        %v949 = vsel %vm936, %v947, %v948
        %v950 = vrot.slane %v553, 2
        %v951 = vsel %vm936, %v948, %v950
        %v952 = vrot.slane %v554, 2
        %v953 = vrot.slane %v555, 2
        %v954 = vsel %vm936, %v952, %v953
        %v955 = vrot.slane %v556, 2
        %v956 = vsel %vm936, %v953, %v955
        %v957 = vrot.slane %v557, 2
        %v958 = vrot.slane %v558, 2
        %v959 = vsel %vm936, %v957, %v958
        %v960 = vrot.slane %v559, 2
        %v961 = vsel %vm936, %v958, %v960
        %v962 = vrot.slane %v560, 2
        %v963 = vrot.slane %v561, 2
        %v964 = vsel %vm936, %v962, %v963
        %v965 = vrot.slane %v562, 2
        %v966 = vsel %vm936, %v963, %v965
        %v967 = vrot.slane %v563, 2
        %v968 = vrot.slane %v564, 2
        %v969 = vsel %vm936, %v967, %v968
        %v970 = vrot.slane %v565, 2
        %v971 = vsel %vm936, %v968, %v970
        %v972 = vrot.slane %v566, 2
        %v973 = vrot.slane %v567, 2
        %v974 = vsel %vm936, %v972, %v973
        %v975 = vrot.slane %v568, 2
        %v976 = vsel %vm936, %v973, %v975
        %v977 = vrot.slane %v569, 2
        %v978 = vrot.slane %v570, 2
        %v979 = vsel %vm936, %v977, %v978
        %v980 = vrot.slane %v571, 2
        %v981 = vsel %vm936, %v978, %v980
        %v982 = vrot.slane %v572, 2
        %v983 = vrot.slane %v573, 2
        %v984 = vsel %vm936, %v982, %v983
        %v985 = vrot.slane %v574, 2
        %v986 = vsel %vm936, %v983, %v985
        %v987 = vrot.slane %v575, 2
        %v988 = vrot.slane %v576, 2
        %v989 = vsel %vm936, %v987, %v988
        %v990 = vrot.slane %v577, 2
        %v991 = vsel %vm936, %v988, %v990
        %v992 = vrot.slane %v578, 2
        %v993 = vrot.slane %v579, 2
        %v994 = vsel %vm936, %v992, %v993
        %v995 = vrot.slane %v580, 2
        %v996 = vsel %vm936, %v993, %v995
        %v997 = vrot.slane %v581, 2
        %v998 = vrot.slane %v582, 2
        %v999 = vsel %vm936, %v997, %v998
        %v1000 = vrot.slane %v583, 2
        %v1001 = vsel %vm936, %v998, %v1000
        %v1002 = vrot.slane %v584, 2
        %v1003 = vrot.slane %v585, 2
        %v1004 = vsel %vm936, %v1002, %v1003
        %v1005 = vrot.slane %v586, 2
        %v1006 = vsel %vm936, %v1003, %v1005
        %v1007 = vrot.slane %v587, 2
        %v1008 = vrot.slane %v588, 2
        %v1009 = vsel %vm936, %v1007, %v1008
        %v1010 = vrot.slane %v589, 2
        %v1011 = vsel %vm936, %v1008, %v1010
        %v1012 = vrot.slane %v590, 2
        %v1013 = vrot.slane %v591, 2
        %v1014 = vsel %vm936, %v1012, %v1013
        %v1015 = vrot.slane %v592, 2
        %v1016 = vsel %vm936, %v1013, %v1015
        %v1049 = vpack.c.bf16 %v941, %v939
        %v1050 = vpack.c.bf16 %v946, %v944
        %v1051 = vpack.c.bf16 %v951, %v949
        %v1052 = vpack.c.bf16 %v956, %v954
        %v1053 = vpack.c.bf16 %v961, %v959
        %v1054 = vpack.c.bf16 %v966, %v964
        %v1055 = vpack.c.bf16 %v971, %v969
        %v1056 = vpack.c.bf16 %v976, %v974
        %v1057 = vpack.c.bf16 %v981, %v979
        %v1058 = vpack.c.bf16 %v986, %v984
        %v1059 = vpack.c.bf16 %v991, %v989
        %v1060 = vpack.c.bf16 %v996, %v994
        %v1061 = vpack.c.bf16 %v1001, %v999
        %v1062 = vpack.c.bf16 %v1006, %v1004
        %v1063 = vpack.c.bf16 %v1011, %v1009
        %v1064 = vpack.c.bf16 %v1016, %v1014
        %v1065 = vpack.c.bf16 %v594, %v593
        %v1098 = vunpack.c.l.b16 %v631
        %v1099 = vunpack.c.l.b16 %v632
        %v1100 = vunpack.c.l.b16 %v633
        %v1101 = vunpack.c.l.b16 %v634
        %v1102 = vunpack.c.l.b16 %v635
        %v1103 = vunpack.c.l.b16 %v636
        %v1104 = vunpack.c.l.b16 %v637
        %v1105 = vunpack.c.l.b16 %v638
        %v1106 = vunpack.c.l.b16 %v639
        %v1107 = vunpack.c.l.b16 %v640
        %v1108 = vunpack.c.l.b16 %v641
        %v1109 = vunpack.c.l.b16 %v642
        %v1110 = vunpack.c.l.b16 %v643
        %v1111 = vunpack.c.l.b16 %v644
        %v1112 = vunpack.c.l.b16 %v645
        %v1113 = vunpack.c.l.b16 %v646
        %v1114 = vunpack.c.l.b16 %v647
        %v1115 = vunpack.c.l.b16 %v648
        %v1116 = vunpack.c.l.b16 %v649
        %v1117 = vunpack.c.l.b16 %v650
        %v1118 = vunpack.c.l.b16 %v651
        %v1119 = vunpack.c.l.b16 %v652
        %v1120 = vunpack.c.l.b16 %v653
        %v1121 = vunpack.c.l.b16 %v654
        %v1122 = vunpack.c.l.b16 %v655
        %v1123 = vunpack.c.l.b16 %v656
        %v1124 = vunpack.c.l.b16 %v657
        %v1125 = vunpack.c.l.b16 %v658
        %v1126 = vunpack.c.l.b16 %v659
        %v1127 = vunpack.c.l.b16 %v660
        %v1128 = vunpack.c.l.b16 %v661
        %v1129 = vunpack.c.l.b16 %v662
        %v1130 = vpack.c.b16 %v1099, %v1098
        %v1131 = vpack.c.b16 %v1101, %v1100
        %v1132 = vpack.c.b16 %v1103, %v1102
        %v1133 = vpack.c.b16 %v1105, %v1104
        %v1134 = vpack.c.b16 %v1107, %v1106
        %v1135 = vpack.c.b16 %v1109, %v1108
        %v1136 = vpack.c.b16 %v1111, %v1110
        %v1137 = vpack.c.b16 %v1113, %v1112
        %v1138 = vpack.c.b16 %v1115, %v1114
        %v1139 = vpack.c.b16 %v1117, %v1116
        %v1140 = vpack.c.b16 %v1119, %v1118
        %v1141 = vpack.c.b16 %v1121, %v1120
        %v1142 = vpack.c.b16 %v1123, %v1122
        %v1143 = vpack.c.b16 %v1125, %v1124
        %v1144 = vpack.c.b16 %v1127, %v1126
        %v1145 = vpack.c.b16 %v1129, %v1128
        %1162 = vmatprep.subr.bf16.mxu0 0
        %1163 = vmatpush1.bf16.msra.mxu0 %v1130
        %1164 = vmatprep.subr.bf16.mxu0 0
        %1165 = vmatpush1.bf16.msra.mxu0 %v1131
        %1166 = vmatprep.subr.bf16.mxu0 0
        %1167 = vmatpush1.bf16.msra.mxu0 %v1132
        %1168 = vmatprep.subr.bf16.mxu0 0
        %1169 = vmatpush1.bf16.msra.mxu0 %v1133
        %1170 = vmatprep.subr.bf16.mxu0 0
        %1171 = vmatpush1.bf16.msra.mxu0 %v1134
        %1172 = vmatprep.subr.bf16.mxu0 0
        %1173 = vmatpush1.bf16.msra.mxu0 %v1135
        %1174 = vmatprep.subr.bf16.mxu0 0
        %1175 = vmatpush1.bf16.msra.mxu0 %v1136
        %1176 = vmatprep.subr.bf16.mxu0 0
        %1177 = vmatpush1.bf16.msra.mxu0 %v1137
        %1178 = vmatprep.subr.bf16.mxu0 0
        %1179 = vmatpush1.bf16.msra.mxu0 %v1138
        %1180 = vmatprep.subr.bf16.mxu0 0
        %1181 = vmatpush1.bf16.msra.mxu0 %v1139
        %1182 = vmatprep.subr.bf16.mxu0 0
        %1183 = vmatpush1.bf16.msra.mxu0 %v1140
        %1184 = vmatprep.subr.bf16.mxu0 0
        %1185 = vmatpush1.bf16.msra.mxu0 %v1141
        %1186 = vmatprep.subr.bf16.mxu0 0
        %1187 = vmatpush1.bf16.msra.mxu0 %v1142
        %1188 = vmatprep.subr.bf16.mxu0 0
        %1189 = vmatpush1.bf16.msra.mxu0 %v1143
        %1190 = vmatprep.subr.bf16.mxu0 0
        %1191 = vmatpush1.bf16.msra.mxu0 %v1144
        %1192 = vmatprep.subr.bf16.mxu0 0
        %1193 = vmatpush1.bf16.msra.mxu0 %v1145
        %1194 = vmatprep.mubr.bf16.mxu0 %v744
        %1195 = vmatmul.mubr.bf16.gmra.mrb[0].mxu0 %v1049
        %v1196 = vpop.f32.mrb[0].mxu0
        %v1197 = vadd.f32 0.0, %v1196
        %v1198 = vpop.f32.mrb[0].mxu0
        %v1199 = vpop.f32.mrb[0].mxu0
        %v1200 = vadd.f32 0.0, %v1199
        %v1201 = vpop.f32.mrb[0].mxu0
        %1202 = vmatprep.mubr.bf16.mxu0 %v745
        %1203 = vmatmul.mubr.bf16.gmra.mrb[0].mxu0 %v1050
        %v1204 = vpop.f32.mrb[0].mxu0
        %v1205 = vadd.f32 0.0, %v1204
        %v1206 = vpop.f32.mrb[0].mxu0
        %v1207 = vpop.f32.mrb[0].mxu0
        %v1208 = vadd.f32 0.0, %v1207
        %v1209 = vpop.f32.mrb[0].mxu0
        %1210 = vmatprep.mubr.bf16.mxu0 %v746
        %1211 = vmatmul.mubr.bf16.gmra.mrb[0].mxu0 %v1051
        %v1212 = vpop.f32.mrb[0].mxu0
        %v1213 = vadd.f32 0.0, %v1212
        %v1214 = vpop.f32.mrb[0].mxu0
        %v1215 = vpop.f32.mrb[0].mxu0
        %v1216 = vadd.f32 0.0, %v1215
        %v1217 = vpop.f32.mrb[0].mxu0
        %1218 = vmatprep.mubr.bf16.mxu0 %v747
        %1219 = vmatmul.mubr.bf16.gmra.mrb[0].mxu0 %v1052
        %v1220 = vpop.f32.mrb[0].mxu0
        %v1221 = vadd.f32 0.0, %v1220
        %v1222 = vpop.f32.mrb[0].mxu0
        %v1223 = vpop.f32.mrb[0].mxu0
        %v1224 = vadd.f32 0.0, %v1223
        %v1225 = vpop.f32.mrb[0].mxu0
        %1226 = vmatprep.mubr.bf16.mxu0 %v748
        %1227 = vmatmul.mubr.bf16.gmra.mrb[0].mxu0 %v1053
        %v1228 = vpop.f32.mrb[0].mxu0
        %v1229 = vadd.f32 0.0, %v1228
        %v1230 = vpop.f32.mrb[0].mxu0
        %v1231 = vpop.f32.mrb[0].mxu0
        %v1232 = vadd.f32 0.0, %v1231
        %v1233 = vpop.f32.mrb[0].mxu0
        %1234 = vmatprep.mubr.bf16.mxu0 %v749
        %1235 = vmatmul.mubr.bf16.gmra.mrb[0].mxu0 %v1054
        %v1236 = vpop.f32.mrb[0].mxu0
        %v1237 = vadd.f32 0.0, %v1236
        %v1238 = vpop.f32.mrb[0].mxu0
        %v1239 = vpop.f32.mrb[0].mxu0
        %v1240 = vadd.f32 0.0, %v1239
        %v1241 = vpop.f32.mrb[0].mxu0
        %1242 = vmatprep.mubr.bf16.mxu0 %v750
        %1243 = vmatmul.mubr.bf16.gmra.mrb[0].mxu0 %v1055
        %v1244 = vpop.f32.mrb[0].mxu0
        %v1245 = vadd.f32 0.0, %v1244
        %v1246 = vpop.f32.mrb[0].mxu0
        %v1247 = vpop.f32.mrb[0].mxu0
        %v1248 = vadd.f32 0.0, %v1247
        %v1249 = vpop.f32.mrb[0].mxu0
        %1250 = vmatprep.mubr.bf16.mxu0 %v751
        %1251 = vmatmul.mubr.bf16.gmra.mrb[0].mxu0 %v1056
        %v1252 = vpop.f32.mrb[0].mxu0
        %v1253 = vadd.f32 0.0, %v1252
        %v1254 = vpop.f32.mrb[0].mxu0
        %v1255 = vpop.f32.mrb[0].mxu0
        %v1256 = vadd.f32 0.0, %v1255
        %v1257 = vpop.f32.mrb[0].mxu0
        %1258 = vmatprep.mubr.bf16.mxu0 %v752
        %1259 = vmatmul.mubr.bf16.gmra.mrb[0].mxu0 %v1057
        %v1260 = vpop.f32.mrb[0].mxu0
        %v1261 = vadd.f32 0.0, %v1260
        %v1262 = vpop.f32.mrb[0].mxu0
        %v1263 = vpop.f32.mrb[0].mxu0
        %v1264 = vadd.f32 0.0, %v1263
        %v1265 = vpop.f32.mrb[0].mxu0
        %1266 = vmatprep.mubr.bf16.mxu0 %v753
        %1267 = vmatmul.mubr.bf16.gmra.mrb[0].mxu0 %v1058
        %v1268 = vpop.f32.mrb[0].mxu0
        %v1269 = vadd.f32 0.0, %v1268
        %v1270 = vpop.f32.mrb[0].mxu0
        %v1271 = vpop.f32.mrb[0].mxu0
        %v1272 = vadd.f32 0.0, %v1271
        %v1273 = vpop.f32.mrb[0].mxu0
        %1274 = vmatprep.mubr.bf16.mxu0 %v754
        %1275 = vmatmul.mubr.bf16.gmra.mrb[0].mxu0 %v1059
        %v1276 = vpop.f32.mrb[0].mxu0
        %v1277 = vadd.f32 0.0, %v1276
        %v1278 = vpop.f32.mrb[0].mxu0
        %v1279 = vpop.f32.mrb[0].mxu0
        %v1280 = vadd.f32 0.0, %v1279
        %v1281 = vpop.f32.mrb[0].mxu0
        %1282 = vmatprep.mubr.bf16.mxu0 %v755
        %1283 = vmatmul.mubr.bf16.gmra.mrb[0].mxu0 %v1060
        %v1284 = vpop.f32.mrb[0].mxu0
        %v1285 = vadd.f32 0.0, %v1284
        %v1286 = vpop.f32.mrb[0].mxu0
        %v1287 = vpop.f32.mrb[0].mxu0
        %v1288 = vadd.f32 0.0, %v1287
        %v1289 = vpop.f32.mrb[0].mxu0
        %1290 = vmatprep.mubr.bf16.mxu0 %v756
        %1291 = vmatmul.mubr.bf16.gmra.mrb[0].mxu0 %v1061
        %v1292 = vpop.f32.mrb[0].mxu0
        %v1293 = vadd.f32 0.0, %v1292
        %v1294 = vpop.f32.mrb[0].mxu0
        %v1295 = vpop.f32.mrb[0].mxu0
        %v1296 = vadd.f32 0.0, %v1295
        %v1297 = vpop.f32.mrb[0].mxu0
        %1298 = vmatprep.mubr.bf16.mxu0 %v757
        %1299 = vmatmul.mubr.bf16.gmra.mrb[0].mxu0 %v1062
        %v1300 = vpop.f32.mrb[0].mxu0
        %v1301 = vadd.f32 0.0, %v1300
        %v1302 = vpop.f32.mrb[0].mxu0
        %v1303 = vpop.f32.mrb[0].mxu0
        %v1304 = vadd.f32 0.0, %v1303
        %v1305 = vpop.f32.mrb[0].mxu0
        %1306 = vmatprep.mubr.bf16.mxu0 %v758
        %1307 = vmatmul.mubr.bf16.gmra.mrb[0].mxu0 %v1063
        %v1308 = vpop.f32.mrb[0].mxu0
        %v1309 = vadd.f32 0.0, %v1308
        %v1310 = vpop.f32.mrb[0].mxu0
        %v1311 = vpop.f32.mrb[0].mxu0
        %v1312 = vadd.f32 0.0, %v1311
        %v1313 = vpop.f32.mrb[0].mxu0
        %1314 = vmatprep.mubr.bf16.mxu0 %v1065
        %1315 = vmatmul.mubr.bf16.gmra.mrb[0].mxu0 %v1064
        %v1316 = vpop.f32.mrb[0].mxu0
        %v1317 = vadd.f32 0.0, %v1316
        %v1318 = vpop.f32.mrb[0].mxu0
        %v1319 = vpop.f32.mrb[0].mxu0
        %v1320 = vadd.f32 0.0, %v1319
        %v1321 = vpop.f32.mrb[0].mxu0
        %1322 = vdwg.mxu0
        %v1355 = vunpack.c.l.b16 %v599
        %v1356 = vunpack.c.l.b16 %v600
        %v1357 = vunpack.c.l.b16 %v601
        %v1358 = vunpack.c.l.b16 %v602
        %v1359 = vunpack.c.l.b16 %v603
        %v1360 = vunpack.c.l.b16 %v604
        %v1361 = vunpack.c.l.b16 %v605
        %v1362 = vunpack.c.l.b16 %v606
        %v1363 = vunpack.c.l.b16 %v607
        %v1364 = vunpack.c.l.b16 %v608
        %v1365 = vunpack.c.l.b16 %v609
        %v1366 = vunpack.c.l.b16 %v610
        %v1367 = vunpack.c.l.b16 %v611
        %v1368 = vunpack.c.l.b16 %v612
        %v1369 = vunpack.c.l.b16 %v613
        %v1370 = vunpack.c.l.b16 %v614
        %v1371 = vunpack.c.l.b16 %v615
        %v1372 = vunpack.c.l.b16 %v616
        %v1373 = vunpack.c.l.b16 %v617
        %v1374 = vunpack.c.l.b16 %v618
        %v1375 = vunpack.c.l.b16 %v619
        %v1376 = vunpack.c.l.b16 %v620
        %v1377 = vunpack.c.l.b16 %v621
        %v1378 = vunpack.c.l.b16 %v622
        %v1379 = vunpack.c.l.b16 %v623
        %v1380 = vunpack.c.l.b16 %v624
        %v1381 = vunpack.c.l.b16 %v625
        %v1382 = vunpack.c.l.b16 %v626
        %v1383 = vunpack.c.l.b16 %v627
        %v1384 = vunpack.c.l.b16 %v628
        %v1385 = vunpack.c.l.b16 %v629
        %v1386 = vunpack.c.l.b16 %v630
        %v1387 = vpack.c.b16 %v1356, %v1355
        %v1388 = vpack.c.b16 %v1358, %v1357
        %v1389 = vpack.c.b16 %v1360, %v1359
        %v1390 = vpack.c.b16 %v1362, %v1361
        %v1391 = vpack.c.b16 %v1364, %v1363
        %v1392 = vpack.c.b16 %v1366, %v1365
        %v1393 = vpack.c.b16 %v1368, %v1367
        %v1394 = vpack.c.b16 %v1370, %v1369
        %v1395 = vpack.c.b16 %v1372, %v1371
        %v1396 = vpack.c.b16 %v1374, %v1373
        %v1397 = vpack.c.b16 %v1376, %v1375
        %v1398 = vpack.c.b16 %v1378, %v1377
        %v1399 = vpack.c.b16 %v1380, %v1379
        %v1400 = vpack.c.b16 %v1382, %v1381
        %v1401 = vpack.c.b16 %v1384, %v1383
        %v1402 = vpack.c.b16 %v1386, %v1385
        %1419 = vmatprep.subr.bf16.mxu0 0
        %1420 = vmatpush1.bf16.msra.mxu0 %v1387
        %1421 = vmatprep.subr.bf16.mxu0 0
        %1422 = vmatpush1.bf16.msra.mxu0 %v1388
        %1423 = vmatprep.subr.bf16.mxu0 0
        %1424 = vmatpush1.bf16.msra.mxu0 %v1389
        %1425 = vmatprep.subr.bf16.mxu0 0
        %1426 = vmatpush1.bf16.msra.mxu0 %v1390
        %1427 = vmatprep.subr.bf16.mxu0 0
        %1428 = vmatpush1.bf16.msra.mxu0 %v1391
        %1429 = vmatprep.subr.bf16.mxu0 0
        %1430 = vmatpush1.bf16.msra.mxu0 %v1392
        %1431 = vmatprep.subr.bf16.mxu0 0
        %1432 = vmatpush1.bf16.msra.mxu0 %v1393
        %1433 = vmatprep.subr.bf16.mxu0 0
        %1434 = vmatpush1.bf16.msra.mxu0 %v1394
        %1435 = vmatprep.subr.bf16.mxu0 0
        %1436 = vmatpush1.bf16.msra.mxu0 %v1395
        %1437 = vmatprep.subr.bf16.mxu0 0
        %1438 = vmatpush1.bf16.msra.mxu0 %v1396
        %1439 = vmatprep.subr.bf16.mxu0 0
        %1440 = vmatpush1.bf16.msra.mxu0 %v1397
        %1441 = vmatprep.subr.bf16.mxu0 0
        %1442 = vmatpush1.bf16.msra.mxu0 %v1398
        %1443 = vmatprep.subr.bf16.mxu0 0
        %1444 = vmatpush1.bf16.msra.mxu0 %v1399
        %1445 = vmatprep.subr.bf16.mxu0 0
        %1446 = vmatpush1.bf16.msra.mxu0 %v1400
        %1447 = vmatprep.subr.bf16.mxu0 0
        %1448 = vmatpush1.bf16.msra.mxu0 %v1401
        %1449 = vmatprep.subr.bf16.mxu0 0
        %1450 = vmatpush1.bf16.msra.mxu0 %v1402
        %1451 = vmatprep.mubr.bf16.mxu0 %v920
        %1452 = vmatmul.mubr.bf16.gmra.mrb[0].mxu0 %v743
        %v1453 = vpop.f32.mrb[0].mxu0
        %v1454 = vadd.f32 %v1197, %v1453
        %v1455 = vpop.f32.mrb[0].mxu0
        %v1456 = vpop.f32.mrb[0].mxu0
        %v1457 = vadd.f32 %v1200, %v1456
        %v1458 = vpop.f32.mrb[0].mxu0
        %1459 = vmatprep.mubr.bf16.mxu0 %v921
        %1460 = vmatmul.mubr.bf16.gmra.mrb[0].mxu0 %v744
        %v1461 = vpop.f32.mrb[0].mxu0
        %v1462 = vadd.f32 %v1205, %v1461
        %v1463 = vpop.f32.mrb[0].mxu0
        %v1464 = vpop.f32.mrb[0].mxu0
        %v1465 = vadd.f32 %v1208, %v1464
        %v1466 = vpop.f32.mrb[0].mxu0
        %1467 = vmatprep.mubr.bf16.mxu0 %v922
        %1468 = vmatmul.mubr.bf16.gmra.mrb[0].mxu0 %v745
        %v1469 = vpop.f32.mrb[0].mxu0
        %v1470 = vadd.f32 %v1213, %v1469
        %v1471 = vpop.f32.mrb[0].mxu0
        %v1472 = vpop.f32.mrb[0].mxu0
        %v1473 = vadd.f32 %v1216, %v1472
        %v1474 = vpop.f32.mrb[0].mxu0
        %1475 = vmatprep.mubr.bf16.mxu0 %v923
        %1476 = vmatmul.mubr.bf16.gmra.mrb[0].mxu0 %v746
        %v1477 = vpop.f32.mrb[0].mxu0
        %v1478 = vadd.f32 %v1221, %v1477
        %v1479 = vpop.f32.mrb[0].mxu0
        %v1480 = vpop.f32.mrb[0].mxu0
        %v1481 = vadd.f32 %v1224, %v1480
        %v1482 = vpop.f32.mrb[0].mxu0
        %1483 = vmatprep.mubr.bf16.mxu0 %v924
        %1484 = vmatmul.mubr.bf16.gmra.mrb[0].mxu0 %v747
        %v1485 = vpop.f32.mrb[0].mxu0
        %v1486 = vadd.f32 %v1229, %v1485
        %v1487 = vpop.f32.mrb[0].mxu0
        %v1488 = vpop.f32.mrb[0].mxu0
        %v1489 = vadd.f32 %v1232, %v1488
        %v1490 = vpop.f32.mrb[0].mxu0
        %1491 = vmatprep.mubr.bf16.mxu0 %v925
        %1492 = vmatmul.mubr.bf16.gmra.mrb[0].mxu0 %v748
        %v1493 = vpop.f32.mrb[0].mxu0
        %v1494 = vadd.f32 %v1237, %v1493
        %v1495 = vpop.f32.mrb[0].mxu0
        %v1496 = vpop.f32.mrb[0].mxu0
        %v1497 = vadd.f32 %v1240, %v1496
        %v1498 = vpop.f32.mrb[0].mxu0
        %1499 = vmatprep.mubr.bf16.mxu0 %v926
        %1500 = vmatmul.mubr.bf16.gmra.mrb[0].mxu0 %v749
        %v1501 = vpop.f32.mrb[0].mxu0
        %v1502 = vadd.f32 %v1245, %v1501
        %v1503 = vpop.f32.mrb[0].mxu0
        %v1504 = vpop.f32.mrb[0].mxu0
        %v1505 = vadd.f32 %v1248, %v1504
        %v1506 = vpop.f32.mrb[0].mxu0
        %1507 = vmatprep.mubr.bf16.mxu0 %v927
        %1508 = vmatmul.mubr.bf16.gmra.mrb[0].mxu0 %v750
        %v1509 = vpop.f32.mrb[0].mxu0
        %v1510 = vadd.f32 %v1253, %v1509
        %v1511 = vpop.f32.mrb[0].mxu0
        %v1512 = vpop.f32.mrb[0].mxu0
        %v1513 = vadd.f32 %v1256, %v1512
        %v1514 = vpop.f32.mrb[0].mxu0
        %1515 = vmatprep.mubr.bf16.mxu0 %v928
        %1516 = vmatmul.mubr.bf16.gmra.mrb[0].mxu0 %v751
        %v1517 = vpop.f32.mrb[0].mxu0
        %v1518 = vadd.f32 %v1261, %v1517
        %v1519 = vpop.f32.mrb[0].mxu0
        %v1520 = vpop.f32.mrb[0].mxu0
        %v1521 = vadd.f32 %v1264, %v1520
        %v1522 = vpop.f32.mrb[0].mxu0
        %1523 = vmatprep.mubr.bf16.mxu0 %v929
        %1524 = vmatmul.mubr.bf16.gmra.mrb[0].mxu0 %v752
        %v1525 = vpop.f32.mrb[0].mxu0
        %v1526 = vadd.f32 %v1269, %v1525
        %v1527 = vpop.f32.mrb[0].mxu0
        %v1528 = vpop.f32.mrb[0].mxu0
        %v1529 = vadd.f32 %v1272, %v1528
        %v1530 = vpop.f32.mrb[0].mxu0
        %1531 = vmatprep.mubr.bf16.mxu0 %v930
        %1532 = vmatmul.mubr.bf16.gmra.mrb[0].mxu0 %v753
        %v1533 = vpop.f32.mrb[0].mxu0
        %v1534 = vadd.f32 %v1277, %v1533
        %v1535 = vpop.f32.mrb[0].mxu0
        %v1536 = vpop.f32.mrb[0].mxu0
        %v1537 = vadd.f32 %v1280, %v1536
        %v1538 = vpop.f32.mrb[0].mxu0
        %1539 = vmatprep.mubr.bf16.mxu0 %v931
        %1540 = vmatmul.mubr.bf16.gmra.mrb[0].mxu0 %v754
        %v1541 = vpop.f32.mrb[0].mxu0
        %v1542 = vadd.f32 %v1285, %v1541
        %v1543 = vpop.f32.mrb[0].mxu0
        %v1544 = vpop.f32.mrb[0].mxu0
        %v1545 = vadd.f32 %v1288, %v1544
        %v1546 = vpop.f32.mrb[0].mxu0
        %1547 = vmatprep.mubr.bf16.mxu0 %v932
        %1548 = vmatmul.mubr.bf16.gmra.mrb[0].mxu0 %v755
        %v1549 = vpop.f32.mrb[0].mxu0
        %v1550 = vadd.f32 %v1293, %v1549
        %v1551 = vpop.f32.mrb[0].mxu0
        %v1552 = vpop.f32.mrb[0].mxu0
        %v1553 = vadd.f32 %v1296, %v1552
        %v1554 = vpop.f32.mrb[0].mxu0
        %1555 = vmatprep.mubr.bf16.mxu0 %v933
        %1556 = vmatmul.mubr.bf16.gmra.mrb[0].mxu0 %v756
        %v1557 = vpop.f32.mrb[0].mxu0
        %v1558 = vadd.f32 %v1301, %v1557
        %v1559 = vpop.f32.mrb[0].mxu0
        %v1560 = vpop.f32.mrb[0].mxu0
        %v1561 = vadd.f32 %v1304, %v1560
        %v1562 = vpop.f32.mrb[0].mxu0
        %1563 = vmatprep.mubr.bf16.mxu0 %v934
        %1564 = vmatmul.mubr.bf16.gmra.mrb[0].mxu0 %v757
        %v1565 = vpop.f32.mrb[0].mxu0
        %v1566 = vadd.f32 %v1309, %v1565
        %v1567 = vpop.f32.mrb[0].mxu0
        %v1568 = vpop.f32.mrb[0].mxu0
        %v1569 = vadd.f32 %v1312, %v1568
        %v1570 = vpop.f32.mrb[0].mxu0
        %1571 = vmatprep.mubr.bf16.mxu0 %v935
        %1572 = vmatmul.mubr.bf16.gmra.mrb[0].mxu0 %v758
        %v1573 = vpop.f32.mrb[0].mxu0
        %v1574 = vadd.f32 %v1317, %v1573
        %v1575 = vpop.f32.mrb[0].mxu0
        %v1576 = vpop.f32.mrb[0].mxu0
        %v1577 = vadd.f32 %v1320, %v1576
        %v1578 = vpop.f32.mrb[0].mxu0
        %1579 = vdwg.mxu0
        %v1583 = vrot.slane %v593, 1
        %v1584 = vrot.slane %v594, 1
        %v1585 = vsel %vm807, %v1583, %v1584
        %v1586 = vrot.slane %v595, 1
        %v1587 = vsel %vm807, %v1584, %v1586
        %v1590 = vpack.c.bf16 %v1587, %v1585
        %v1591 = vrot.slane %v593, 2
        %v1592 = vrot.slane %v594, 2
        %v1593 = vsel %vm936, %v1591, %v1592
        %v1594 = vrot.slane %v595, 2
        %v1595 = vsel %vm936, %v1592, %v1594
        %v1598 = vpack.c.bf16 %v1595, %v1593
        %v1631 = vunpack.c.l.b16 %v663
        %v1632 = vunpack.c.l.b16 %v664
        %v1633 = vunpack.c.l.b16 %v665
        %v1634 = vunpack.c.l.b16 %v666
        %v1635 = vunpack.c.l.b16 %v667
        %v1636 = vunpack.c.l.b16 %v668
        %v1637 = vunpack.c.l.b16 %v669
        %v1638 = vunpack.c.l.b16 %v670
        %v1639 = vunpack.c.l.b16 %v671
        %v1640 = vunpack.c.l.b16 %v672
        %v1641 = vunpack.c.l.b16 %v673
        %v1642 = vunpack.c.l.b16 %v674
        %v1643 = vunpack.c.l.b16 %v675
        %v1644 = vunpack.c.l.b16 %v676
        %v1645 = vunpack.c.l.b16 %v677
        %v1646 = vunpack.c.l.b16 %v678
        %v1647 = vunpack.c.l.b16 %v679
        %v1648 = vunpack.c.l.b16 %v680
        %v1649 = vunpack.c.l.b16 %v681
        %v1650 = vunpack.c.l.b16 %v682
        %v1651 = vunpack.c.l.b16 %v683
        %v1652 = vunpack.c.l.b16 %v684
        %v1653 = vunpack.c.l.b16 %v685
        %v1654 = vunpack.c.l.b16 %v686
        %v1655 = vunpack.c.l.b16 %v687
        %v1656 = vunpack.c.l.b16 %v688
        %v1657 = vunpack.c.l.b16 %v689
        %v1658 = vunpack.c.l.b16 %v690
        %v1659 = vunpack.c.l.b16 %v691
        %v1660 = vunpack.c.l.b16 %v692
        %v1661 = vunpack.c.l.b16 %v693
        %v1662 = vunpack.c.l.b16 %v694
        %v1663 = vpack.c.b16 %v1632, %v1631
        %v1664 = vpack.c.b16 %v1634, %v1633
        %v1665 = vpack.c.b16 %v1636, %v1635
        %v1666 = vpack.c.b16 %v1638, %v1637
        %v1667 = vpack.c.b16 %v1640, %v1639
        %v1668 = vpack.c.b16 %v1642, %v1641
        %v1669 = vpack.c.b16 %v1644, %v1643
        %v1670 = vpack.c.b16 %v1646, %v1645
        %v1671 = vpack.c.b16 %v1648, %v1647
        %v1672 = vpack.c.b16 %v1650, %v1649
        %v1673 = vpack.c.b16 %v1652, %v1651
        %v1674 = vpack.c.b16 %v1654, %v1653
        %v1675 = vpack.c.b16 %v1656, %v1655
        %v1676 = vpack.c.b16 %v1658, %v1657
        %v1677 = vpack.c.b16 %v1660, %v1659
        %v1678 = vpack.c.b16 %v1662, %v1661
        %1695 = vmatprep.subr.bf16.mxu0 0
        %1696 = vmatpush1.bf16.msra.mxu0 %v1663
        %1697 = vmatprep.subr.bf16.mxu0 0
        %1698 = vmatpush1.bf16.msra.mxu0 %v1664
        %1699 = vmatprep.subr.bf16.mxu0 0
        %1700 = vmatpush1.bf16.msra.mxu0 %v1665
        %1701 = vmatprep.subr.bf16.mxu0 0
        %1702 = vmatpush1.bf16.msra.mxu0 %v1666
        %1703 = vmatprep.subr.bf16.mxu0 0
        %1704 = vmatpush1.bf16.msra.mxu0 %v1667
        %1705 = vmatprep.subr.bf16.mxu0 0
        %1706 = vmatpush1.bf16.msra.mxu0 %v1668
        %1707 = vmatprep.subr.bf16.mxu0 0
        %1708 = vmatpush1.bf16.msra.mxu0 %v1669
        %1709 = vmatprep.subr.bf16.mxu0 0
        %1710 = vmatpush1.bf16.msra.mxu0 %v1670
        %1711 = vmatprep.subr.bf16.mxu0 0
        %1712 = vmatpush1.bf16.msra.mxu0 %v1671
        %1713 = vmatprep.subr.bf16.mxu0 0
        %1714 = vmatpush1.bf16.msra.mxu0 %v1672
        %1715 = vmatprep.subr.bf16.mxu0 0
        %1716 = vmatpush1.bf16.msra.mxu0 %v1673
        %1717 = vmatprep.subr.bf16.mxu0 0
        %1718 = vmatpush1.bf16.msra.mxu0 %v1674
        %1719 = vmatprep.subr.bf16.mxu0 0
        %1720 = vmatpush1.bf16.msra.mxu0 %v1675
        %1721 = vmatprep.subr.bf16.mxu0 0
        %1722 = vmatpush1.bf16.msra.mxu0 %v1676
        %1723 = vmatprep.subr.bf16.mxu0 0
        %1724 = vmatpush1.bf16.msra.mxu0 %v1677
        %1725 = vmatprep.subr.bf16.mxu0 0
        %1726 = vmatpush1.bf16.msra.mxu0 %v1678
        %1727 = vmatprep.mubr.bf16.mxu0 %v1050
        %1728 = vmatmul.mubr.bf16.gmra.mrb[0].mxu0 %v921
        %v1729 = vpop.f32.mrb[0].mxu0
        %v1730 = vadd.f32 0.0, %v1729
        %v1731 = vpop.f32.mrb[0].mxu0
        %v1732 = vpop.f32.mrb[0].mxu0
        %v1733 = vadd.f32 0.0, %v1732
        %v1734 = vpop.f32.mrb[0].mxu0
        %1735 = vmatprep.mubr.bf16.mxu0 %v1051
        %1736 = vmatmul.mubr.bf16.gmra.mrb[0].mxu0 %v922
        %v1737 = vpop.f32.mrb[0].mxu0
        %v1738 = vadd.f32 0.0, %v1737
        %v1739 = vpop.f32.mrb[0].mxu0
        %v1740 = vpop.f32.mrb[0].mxu0
        %v1741 = vadd.f32 0.0, %v1740
        %v1742 = vpop.f32.mrb[0].mxu0
        %1743 = vmatprep.mubr.bf16.mxu0 %v1052
        %1744 = vmatmul.mubr.bf16.gmra.mrb[0].mxu0 %v923
        %v1745 = vpop.f32.mrb[0].mxu0
        %v1746 = vadd.f32 0.0, %v1745
        %v1747 = vpop.f32.mrb[0].mxu0
        %v1748 = vpop.f32.mrb[0].mxu0
        %v1749 = vadd.f32 0.0, %v1748
        %v1750 = vpop.f32.mrb[0].mxu0
        %1751 = vmatprep.mubr.bf16.mxu0 %v1053
        %1752 = vmatmul.mubr.bf16.gmra.mrb[0].mxu0 %v924
        %v1753 = vpop.f32.mrb[0].mxu0
        %v1754 = vadd.f32 0.0, %v1753
        %v1755 = vpop.f32.mrb[0].mxu0
        %v1756 = vpop.f32.mrb[0].mxu0
        %v1757 = vadd.f32 0.0, %v1756
        %v1758 = vpop.f32.mrb[0].mxu0
        %1759 = vmatprep.mubr.bf16.mxu0 %v1054
        %1760 = vmatmul.mubr.bf16.gmra.mrb[0].mxu0 %v925
        %v1761 = vpop.f32.mrb[0].mxu0
        %v1762 = vadd.f32 0.0, %v1761
        %v1763 = vpop.f32.mrb[0].mxu0
        %v1764 = vpop.f32.mrb[0].mxu0
        %v1765 = vadd.f32 0.0, %v1764
        %v1766 = vpop.f32.mrb[0].mxu0
        %1767 = vmatprep.mubr.bf16.mxu0 %v1055
        %1768 = vmatmul.mubr.bf16.gmra.mrb[0].mxu0 %v926
        %v1769 = vpop.f32.mrb[0].mxu0
        %v1770 = vadd.f32 0.0, %v1769
        %v1771 = vpop.f32.mrb[0].mxu0
        %v1772 = vpop.f32.mrb[0].mxu0
        %v1773 = vadd.f32 0.0, %v1772
        %v1774 = vpop.f32.mrb[0].mxu0
        %1775 = vmatprep.mubr.bf16.mxu0 %v1056
        %1776 = vmatmul.mubr.bf16.gmra.mrb[0].mxu0 %v927
        %v1777 = vpop.f32.mrb[0].mxu0
        %v1778 = vadd.f32 0.0, %v1777
        %v1779 = vpop.f32.mrb[0].mxu0
        %v1780 = vpop.f32.mrb[0].mxu0
        %v1781 = vadd.f32 0.0, %v1780
        %v1782 = vpop.f32.mrb[0].mxu0
        %1783 = vmatprep.mubr.bf16.mxu0 %v1057
        %1784 = vmatmul.mubr.bf16.gmra.mrb[0].mxu0 %v928
        %v1785 = vpop.f32.mrb[0].mxu0
        %v1786 = vadd.f32 0.0, %v1785
        %v1787 = vpop.f32.mrb[0].mxu0
        %v1788 = vpop.f32.mrb[0].mxu0
        %v1789 = vadd.f32 0.0, %v1788
        %v1790 = vpop.f32.mrb[0].mxu0
        %1791 = vmatprep.mubr.bf16.mxu0 %v1058
        %1792 = vmatmul.mubr.bf16.gmra.mrb[0].mxu0 %v929
        %v1793 = vpop.f32.mrb[0].mxu0
        %v1794 = vadd.f32 0.0, %v1793
        %v1795 = vpop.f32.mrb[0].mxu0
        %v1796 = vpop.f32.mrb[0].mxu0
        %v1797 = vadd.f32 0.0, %v1796
        %v1798 = vpop.f32.mrb[0].mxu0
        %1799 = vmatprep.mubr.bf16.mxu0 %v1059
        %1800 = vmatmul.mubr.bf16.gmra.mrb[0].mxu0 %v930
        %v1801 = vpop.f32.mrb[0].mxu0
        %v1802 = vadd.f32 0.0, %v1801
        %v1803 = vpop.f32.mrb[0].mxu0
        %v1804 = vpop.f32.mrb[0].mxu0
        %v1805 = vadd.f32 0.0, %v1804
        %v1806 = vpop.f32.mrb[0].mxu0
        %1807 = vmatprep.mubr.bf16.mxu0 %v1060
        %1808 = vmatmul.mubr.bf16.gmra.mrb[0].mxu0 %v931
        %v1809 = vpop.f32.mrb[0].mxu0
        %v1810 = vadd.f32 0.0, %v1809
        %v1811 = vpop.f32.mrb[0].mxu0
        %v1812 = vpop.f32.mrb[0].mxu0
        %v1813 = vadd.f32 0.0, %v1812
        %v1814 = vpop.f32.mrb[0].mxu0
        %1815 = vmatprep.mubr.bf16.mxu0 %v1061
        %1816 = vmatmul.mubr.bf16.gmra.mrb[0].mxu0 %v932
        %v1817 = vpop.f32.mrb[0].mxu0
        %v1818 = vadd.f32 0.0, %v1817
        %v1819 = vpop.f32.mrb[0].mxu0
        %v1820 = vpop.f32.mrb[0].mxu0
        %v1821 = vadd.f32 0.0, %v1820
        %v1822 = vpop.f32.mrb[0].mxu0
        %1823 = vmatprep.mubr.bf16.mxu0 %v1062
        %1824 = vmatmul.mubr.bf16.gmra.mrb[0].mxu0 %v933
        %v1825 = vpop.f32.mrb[0].mxu0
        %v1826 = vadd.f32 0.0, %v1825
        %v1827 = vpop.f32.mrb[0].mxu0
        %v1828 = vpop.f32.mrb[0].mxu0
        %v1829 = vadd.f32 0.0, %v1828
        %v1830 = vpop.f32.mrb[0].mxu0
        %1831 = vmatprep.mubr.bf16.mxu0 %v1063
        %1832 = vmatmul.mubr.bf16.gmra.mrb[0].mxu0 %v934
        %v1833 = vpop.f32.mrb[0].mxu0
        %v1834 = vadd.f32 0.0, %v1833
        %v1835 = vpop.f32.mrb[0].mxu0
        %v1836 = vpop.f32.mrb[0].mxu0
        %v1837 = vadd.f32 0.0, %v1836
        %v1838 = vpop.f32.mrb[0].mxu0
        %1839 = vmatprep.mubr.bf16.mxu0 %v1064
        %1840 = vmatmul.mubr.bf16.gmra.mrb[0].mxu0 %v935
        %v1841 = vpop.f32.mrb[0].mxu0
        %v1842 = vadd.f32 0.0, %v1841
        %v1843 = vpop.f32.mrb[0].mxu0
        %v1844 = vpop.f32.mrb[0].mxu0
        %v1845 = vadd.f32 0.0, %v1844
        %v1846 = vpop.f32.mrb[0].mxu0
        %1847 = vmatprep.mubr.bf16.mxu0 %v1598
        %1848 = vmatmul.mubr.bf16.gmra.mrb[0].mxu0 %v1590
        %v1849 = vpop.f32.mrb[0].mxu0
        %v1850 = vadd.f32 0.0, %v1849
        %v1851 = vpop.f32.mrb[0].mxu0
        %v1852 = vpop.f32.mrb[0].mxu0
        %v1853 = vadd.f32 0.0, %v1852
        %v1854 = vpop.f32.mrb[0].mxu0
        %1855 = vdwg.mxu0
        %v1856 = vadd.f32 %v1454, %v1730
        %v1857 = vadd.f32 %v1457, %v1733
        %v1858 = vadd.f32 %v1462, %v1738
        %v1859 = vadd.f32 %v1465, %v1741
        %v1860 = vadd.f32 %v1470, %v1746
        %v1861 = vadd.f32 %v1473, %v1749
        %v1862 = vadd.f32 %v1478, %v1754
        %v1863 = vadd.f32 %v1481, %v1757
        %v1864 = vadd.f32 %v1486, %v1762
        %v1865 = vadd.f32 %v1489, %v1765
        %v1866 = vadd.f32 %v1494, %v1770
        %v1867 = vadd.f32 %v1497, %v1773
        %v1868 = vadd.f32 %v1502, %v1778
        %v1869 = vadd.f32 %v1505, %v1781
        %v1870 = vadd.f32 %v1510, %v1786
        %v1871 = vadd.f32 %v1513, %v1789
        %v1872 = vadd.f32 %v1518, %v1794
        %v1873 = vadd.f32 %v1521, %v1797
        %v1874 = vadd.f32 %v1526, %v1802
        %v1875 = vadd.f32 %v1529, %v1805
        %v1876 = vadd.f32 %v1534, %v1810
        %v1877 = vadd.f32 %v1537, %v1813
        %v1878 = vadd.f32 %v1542, %v1818
        %v1879 = vadd.f32 %v1545, %v1821
        %v1880 = vadd.f32 %v1550, %v1826
        %v1881 = vadd.f32 %v1553, %v1829
        %v1882 = vadd.f32 %v1558, %v1834
        %v1883 = vadd.f32 %v1561, %v1837
        %v1884 = vadd.f32 %v1566, %v1842
        %v1885 = vadd.f32 %v1569, %v1845
        %v1886 = vadd.f32 %v1574, %v1850
        %v1887 = vadd.f32 %v1577, %v1853
        %v1888 = vpack.c.bf16 %v597, %v596
        %v1892 = vrot.slane %v596, 1
        %v1893 = vrot.slane %v597, 1
        %v1894 = vsel %vm807, %v1892, %v1893
        %v1895 = vrot.slane %v598, 1
        %v1896 = vsel %vm807, %v1893, %v1895
        %v1899 = vpack.c.bf16 %v1896, %v1894
        %v1932 = vunpack.c.l.b16 %v695
        %v1933 = vunpack.c.l.b16 %v696
        %v1934 = vunpack.c.l.b16 %v697
        %v1935 = vunpack.c.l.b16 %v698
        %v1936 = vunpack.c.l.b16 %v699
        %v1937 = vunpack.c.l.b16 %v700
        %v1938 = vunpack.c.l.b16 %v701
        %v1939 = vunpack.c.l.b16 %v702
        %v1940 = vunpack.c.l.b16 %v703
        %v1941 = vunpack.c.l.b16 %v704
        %v1942 = vunpack.c.l.b16 %v705
        %v1943 = vunpack.c.l.b16 %v706
        %v1944 = vunpack.c.l.b16 %v707
        %v1945 = vunpack.c.l.b16 %v708
        %v1946 = vunpack.c.l.b16 %v709
        %v1947 = vunpack.c.l.b16 %v710
        %v1948 = vunpack.c.l.b16 %v711
        %v1949 = vunpack.c.l.b16 %v712
        %v1950 = vunpack.c.l.b16 %v713
        %v1951 = vunpack.c.l.b16 %v714
        %v1952 = vunpack.c.l.b16 %v715
        %v1953 = vunpack.c.l.b16 %v716
        %v1954 = vunpack.c.l.b16 %v717
        %v1955 = vunpack.c.l.b16 %v718
        %v1956 = vunpack.c.l.b16 %v719
        %v1957 = vunpack.c.l.b16 %v720
        %v1958 = vunpack.c.l.b16 %v721
        %v1959 = vunpack.c.l.b16 %v722
        %v1960 = vunpack.c.l.b16 %v723
        %v1961 = vunpack.c.l.b16 %v724
        %v1962 = vunpack.c.l.b16 %v725
        %v1963 = vunpack.c.l.b16 %v726
        %v1964 = vpack.c.b16 %v1933, %v1932
        %v1965 = vpack.c.b16 %v1935, %v1934
        %v1966 = vpack.c.b16 %v1937, %v1936
        %v1967 = vpack.c.b16 %v1939, %v1938
        %v1968 = vpack.c.b16 %v1941, %v1940
        %v1969 = vpack.c.b16 %v1943, %v1942
        %v1970 = vpack.c.b16 %v1945, %v1944
        %v1971 = vpack.c.b16 %v1947, %v1946
        %v1972 = vpack.c.b16 %v1949, %v1948
        %v1973 = vpack.c.b16 %v1951, %v1950
        %v1974 = vpack.c.b16 %v1953, %v1952
        %v1975 = vpack.c.b16 %v1955, %v1954
        %v1976 = vpack.c.b16 %v1957, %v1956
        %v1977 = vpack.c.b16 %v1959, %v1958
        %v1978 = vpack.c.b16 %v1961, %v1960
        %v1979 = vpack.c.b16 %v1963, %v1962
        %1996 = vmatprep.subr.bf16.mxu0 0
        %1997 = vmatpush1.bf16.msra.mxu0 %v1964
        %1998 = vmatprep.subr.bf16.mxu0 0
        %1999 = vmatpush1.bf16.msra.mxu0 %v1965
        %2000 = vmatprep.subr.bf16.mxu0 0
        %2001 = vmatpush1.bf16.msra.mxu0 %v1966
        %2002 = vmatprep.subr.bf16.mxu0 0
        %2003 = vmatpush1.bf16.msra.mxu0 %v1967
        %2004 = vmatprep.subr.bf16.mxu0 0
        %2005 = vmatpush1.bf16.msra.mxu0 %v1968
        %2006 = vmatprep.subr.bf16.mxu0 0
        %2007 = vmatpush1.bf16.msra.mxu0 %v1969
        %2008 = vmatprep.subr.bf16.mxu0 0
        %2009 = vmatpush1.bf16.msra.mxu0 %v1970
        %2010 = vmatprep.subr.bf16.mxu0 0
        %2011 = vmatpush1.bf16.msra.mxu0 %v1971
        %2012 = vmatprep.subr.bf16.mxu0 0
        %2013 = vmatpush1.bf16.msra.mxu0 %v1972
        %2014 = vmatprep.subr.bf16.mxu0 0
        %2015 = vmatpush1.bf16.msra.mxu0 %v1973
        %2016 = vmatprep.subr.bf16.mxu0 0
        %2017 = vmatpush1.bf16.msra.mxu0 %v1974
        %2018 = vmatprep.subr.bf16.mxu0 0
        %2019 = vmatpush1.bf16.msra.mxu0 %v1975
        %2020 = vmatprep.subr.bf16.mxu0 0
        %2021 = vmatpush1.bf16.msra.mxu0 %v1976
        %2022 = vmatprep.subr.bf16.mxu0 0
        %2023 = vmatpush1.bf16.msra.mxu0 %v1977
        %2024 = vmatprep.subr.bf16.mxu0 0
        %2025 = vmatpush1.bf16.msra.mxu0 %v1978
        %2026 = vmatprep.subr.bf16.mxu0 0
        %2027 = vmatpush1.bf16.msra.mxu0 %v1979
        %2028 = vmatprep.mubr.bf16.mxu0 %v922
        %2029 = vmatmul.mubr.bf16.gmra.mrb[0].mxu0 %v745
        %v2030 = vpop.f32.mrb[0].mxu0
        %v2031 = vadd.f32 0.0, %v2030
        %v2032 = vpop.f32.mrb[0].mxu0
        %v2033 = vpop.f32.mrb[0].mxu0
        %v2034 = vadd.f32 0.0, %v2033
        %v2035 = vpop.f32.mrb[0].mxu0
        %2036 = vmatprep.mubr.bf16.mxu0 %v923
        %2037 = vmatmul.mubr.bf16.gmra.mrb[0].mxu0 %v746
        %v2038 = vpop.f32.mrb[0].mxu0
        %v2039 = vadd.f32 0.0, %v2038
        %v2040 = vpop.f32.mrb[0].mxu0
        %v2041 = vpop.f32.mrb[0].mxu0
        %v2042 = vadd.f32 0.0, %v2041
        %v2043 = vpop.f32.mrb[0].mxu0
        %2044 = vmatprep.mubr.bf16.mxu0 %v924
        %2045 = vmatmul.mubr.bf16.gmra.mrb[0].mxu0 %v747
        %v2046 = vpop.f32.mrb[0].mxu0
        %v2047 = vadd.f32 0.0, %v2046
        %v2048 = vpop.f32.mrb[0].mxu0
        %v2049 = vpop.f32.mrb[0].mxu0
        %v2050 = vadd.f32 0.0, %v2049
        %v2051 = vpop.f32.mrb[0].mxu0
        %2052 = vmatprep.mubr.bf16.mxu0 %v925
        %2053 = vmatmul.mubr.bf16.gmra.mrb[0].mxu0 %v748
        %v2054 = vpop.f32.mrb[0].mxu0
        %v2055 = vadd.f32 0.0, %v2054
        %v2056 = vpop.f32.mrb[0].mxu0
        %v2057 = vpop.f32.mrb[0].mxu0
        %v2058 = vadd.f32 0.0, %v2057
        %v2059 = vpop.f32.mrb[0].mxu0
        %2060 = vmatprep.mubr.bf16.mxu0 %v926
        %2061 = vmatmul.mubr.bf16.gmra.mrb[0].mxu0 %v749
        %v2062 = vpop.f32.mrb[0].mxu0
        %v2063 = vadd.f32 0.0, %v2062
        %v2064 = vpop.f32.mrb[0].mxu0
        %v2065 = vpop.f32.mrb[0].mxu0
        %v2066 = vadd.f32 0.0, %v2065
        %v2067 = vpop.f32.mrb[0].mxu0
        %2068 = vmatprep.mubr.bf16.mxu0 %v927
        %2069 = vmatmul.mubr.bf16.gmra.mrb[0].mxu0 %v750
        %v2070 = vpop.f32.mrb[0].mxu0
        %v2071 = vadd.f32 0.0, %v2070
        %v2072 = vpop.f32.mrb[0].mxu0
        %v2073 = vpop.f32.mrb[0].mxu0
        %v2074 = vadd.f32 0.0, %v2073
        %v2075 = vpop.f32.mrb[0].mxu0
        %2076 = vmatprep.mubr.bf16.mxu0 %v928
        %2077 = vmatmul.mubr.bf16.gmra.mrb[0].mxu0 %v751
        %v2078 = vpop.f32.mrb[0].mxu0
        %v2079 = vadd.f32 0.0, %v2078
        %v2080 = vpop.f32.mrb[0].mxu0
        %v2081 = vpop.f32.mrb[0].mxu0
        %v2082 = vadd.f32 0.0, %v2081
        %v2083 = vpop.f32.mrb[0].mxu0
        %2084 = vmatprep.mubr.bf16.mxu0 %v929
        %2085 = vmatmul.mubr.bf16.gmra.mrb[0].mxu0 %v752
        %v2086 = vpop.f32.mrb[0].mxu0
        %v2087 = vadd.f32 0.0, %v2086
        %v2088 = vpop.f32.mrb[0].mxu0
        %v2089 = vpop.f32.mrb[0].mxu0
        %v2090 = vadd.f32 0.0, %v2089
        %v2091 = vpop.f32.mrb[0].mxu0
        %2092 = vmatprep.mubr.bf16.mxu0 %v930
        %2093 = vmatmul.mubr.bf16.gmra.mrb[0].mxu0 %v753
        %v2094 = vpop.f32.mrb[0].mxu0
        %v2095 = vadd.f32 0.0, %v2094
        %v2096 = vpop.f32.mrb[0].mxu0
        %v2097 = vpop.f32.mrb[0].mxu0
        %v2098 = vadd.f32 0.0, %v2097
        %v2099 = vpop.f32.mrb[0].mxu0
        %2100 = vmatprep.mubr.bf16.mxu0 %v931
        %2101 = vmatmul.mubr.bf16.gmra.mrb[0].mxu0 %v754
        %v2102 = vpop.f32.mrb[0].mxu0
        %v2103 = vadd.f32 0.0, %v2102
        %v2104 = vpop.f32.mrb[0].mxu0
        %v2105 = vpop.f32.mrb[0].mxu0
        %v2106 = vadd.f32 0.0, %v2105
        %v2107 = vpop.f32.mrb[0].mxu0
        %2108 = vmatprep.mubr.bf16.mxu0 %v932
        %2109 = vmatmul.mubr.bf16.gmra.mrb[0].mxu0 %v755
        %v2110 = vpop.f32.mrb[0].mxu0
        %v2111 = vadd.f32 0.0, %v2110
        %v2112 = vpop.f32.mrb[0].mxu0
        %v2113 = vpop.f32.mrb[0].mxu0
        %v2114 = vadd.f32 0.0, %v2113
        %v2115 = vpop.f32.mrb[0].mxu0
        %2116 = vmatprep.mubr.bf16.mxu0 %v933
        %2117 = vmatmul.mubr.bf16.gmra.mrb[0].mxu0 %v756
        %v2118 = vpop.f32.mrb[0].mxu0
        %v2119 = vadd.f32 0.0, %v2118
        %v2120 = vpop.f32.mrb[0].mxu0
        %v2121 = vpop.f32.mrb[0].mxu0
        %v2122 = vadd.f32 0.0, %v2121
        %v2123 = vpop.f32.mrb[0].mxu0
        %2124 = vmatprep.mubr.bf16.mxu0 %v934
        %2125 = vmatmul.mubr.bf16.gmra.mrb[0].mxu0 %v757
        %v2126 = vpop.f32.mrb[0].mxu0
        %v2127 = vadd.f32 0.0, %v2126
        %v2128 = vpop.f32.mrb[0].mxu0
        %v2129 = vpop.f32.mrb[0].mxu0
        %v2130 = vadd.f32 0.0, %v2129
        %v2131 = vpop.f32.mrb[0].mxu0
        %2132 = vmatprep.mubr.bf16.mxu0 %v935
        %2133 = vmatmul.mubr.bf16.gmra.mrb[0].mxu0 %v758
        %v2134 = vpop.f32.mrb[0].mxu0
        %v2135 = vadd.f32 0.0, %v2134
        %v2136 = vpop.f32.mrb[0].mxu0
        %v2137 = vpop.f32.mrb[0].mxu0
        %v2138 = vadd.f32 0.0, %v2137
        %v2139 = vpop.f32.mrb[0].mxu0
        %2140 = vmatprep.mubr.bf16.mxu0 %v1590
        %2141 = vmatmul.mubr.bf16.gmra.mrb[0].mxu0 %v1065
        %v2142 = vpop.f32.mrb[0].mxu0
        %v2143 = vadd.f32 0.0, %v2142
        %v2144 = vpop.f32.mrb[0].mxu0
        %v2145 = vpop.f32.mrb[0].mxu0
        %v2146 = vadd.f32 0.0, %v2145
        %v2147 = vpop.f32.mrb[0].mxu0
        %2148 = vmatprep.mubr.bf16.mxu0 %v1899
        %2149 = vmatmul.mubr.bf16.gmra.mrb[0].mxu0 %v1888
        %v2150 = vpop.f32.mrb[0].mxu0
        %v2151 = vadd.f32 0.0, %v2150
        %v2152 = vpop.f32.mrb[0].mxu0
        %v2153 = vpop.f32.mrb[0].mxu0
        %v2154 = vadd.f32 0.0, %v2153
        %v2155 = vpop.f32.mrb[0].mxu0
        %2156 = vdwg.mxu0
        %v2157 = vadd.f32 %v1856, %v2031
        %v2158 = vadd.f32 %v1857, %v2034
        %v2159 = vadd.f32 %v1858, %v2039
        %v2160 = vadd.f32 %v1859, %v2042
        %v2161 = vadd.f32 %v1860, %v2047
        %v2162 = vadd.f32 %v1861, %v2050
        %v2163 = vadd.f32 %v1862, %v2055
        %v2164 = vadd.f32 %v1863, %v2058
        %v2165 = vadd.f32 %v1864, %v2063
        %v2166 = vadd.f32 %v1865, %v2066
        %v2167 = vadd.f32 %v1866, %v2071
        %v2168 = vadd.f32 %v1867, %v2074
        %v2169 = vadd.f32 %v1868, %v2079
        %v2170 = vadd.f32 %v1869, %v2082
        %v2171 = vadd.f32 %v1870, %v2087
        %v2172 = vadd.f32 %v1871, %v2090
        %v2173 = vadd.f32 %v1872, %v2095
        %v2174 = vadd.f32 %v1873, %v2098
        %v2175 = vadd.f32 %v1874, %v2103
        %v2176 = vadd.f32 %v1875, %v2106
        %v2177 = vadd.f32 %v1876, %v2111
        %v2178 = vadd.f32 %v1877, %v2114
        %v2179 = vadd.f32 %v1878, %v2119
        %v2180 = vadd.f32 %v1879, %v2122
        %v2181 = vadd.f32 %v1880, %v2127
        %v2182 = vadd.f32 %v1881, %v2130
        %v2183 = vadd.f32 %v1882, %v2135
        %v2184 = vadd.f32 %v1883, %v2138
        %v2185 = vadd.f32 %v1884, %v2143
        %v2186 = vadd.f32 %v1885, %v2146
        %v2187 = vadd.f32 %v1886, %v2151
        %v2188 = vadd.f32 %v1887, %v2154
        %v2189 = vrot.slane %v596, 2
        %v2190 = vrot.slane %v597, 2
        %v2191 = vsel %vm936, %v2189, %v2190
        %v2192 = vrot.slane %v598, 2
        %v2193 = vsel %vm936, %v2190, %v2192
        %v2196 = vpack.c.bf16 %v2193, %v2191
        %v2213 = vunpack.c.l.b16 %v727
        %v2214 = vunpack.c.l.b16 %v728
        %v2215 = vunpack.c.l.b16 %v729
        %v2216 = vunpack.c.l.b16 %v730
        %v2217 = vunpack.c.l.b16 %v731
        %v2218 = vunpack.c.l.b16 %v732
        %v2219 = vunpack.c.l.b16 %v733
        %v2220 = vunpack.c.l.b16 %v734
        %v2221 = vunpack.c.l.b16 %v735
        %v2222 = vunpack.c.l.b16 %v736
        %v2223 = vunpack.c.l.b16 %v737
        %v2224 = vunpack.c.l.b16 %v738
        %v2225 = vunpack.c.l.b16 %v739
        %v2226 = vunpack.c.l.b16 %v740
        %v2227 = vunpack.c.l.b16 %v741
        %v2228 = vunpack.c.l.b16 %v742
        %v2229 = vpack.c.b16 %v2214, %v2213
        %v2230 = vpack.c.b16 %v2216, %v2215
        %v2231 = vpack.c.b16 %v2218, %v2217
        %v2232 = vpack.c.b16 %v2220, %v2219
        %v2233 = vpack.c.b16 %v2222, %v2221
        %v2234 = vpack.c.b16 %v2224, %v2223
        %v2235 = vpack.c.b16 %v2226, %v2225
        %v2236 = vpack.c.b16 %v2228, %v2227
        %2245 = vmatprep.subr.bf16.mxu0 0
        %2246 = vmatpush1.bf16.msra.mxu0 %v2229
        %2247 = vmatprep.subr.bf16.mxu0 0
        %2248 = vmatpush1.bf16.msra.mxu0 %v2230
        %2249 = vmatprep.subr.bf16.mxu0 0
        %2250 = vmatpush1.bf16.msra.mxu0 %v2231
        %2251 = vmatprep.subr.bf16.mxu0 0
        %2252 = vmatpush1.bf16.msra.mxu0 %v2232
        %2253 = vmatprep.subr.bf16.mxu0 0
        %2254 = vmatpush1.bf16.msra.mxu0 %v2233
        %2255 = vmatprep.subr.bf16.mxu0 0
        %2256 = vmatpush1.bf16.msra.mxu0 %v2234
        %2257 = vmatprep.subr.bf16.mxu0 0
        %2258 = vmatpush1.bf16.msra.mxu0 %v2235
        %2259 = vmatprep.subr.bf16.mxu0 0
        %2260 = vmatpush1.bf16.msra.mxu0 %v2236
        %2261 = vmatprep.subr.bf16.mxu0 0
        %2262 = vmatpush1.bf16.msra.mxu0 0
        %2263 = vmatprep.subr.bf16.mxu0 0
        %2264 = vmatpush1.bf16.msra.mxu0 0
        %2265 = vmatprep.subr.bf16.mxu0 0
        %2266 = vmatpush1.bf16.msra.mxu0 0
        %2267 = vmatprep.subr.bf16.mxu0 0
        %2268 = vmatpush1.bf16.msra.mxu0 0
        %2269 = vmatprep.subr.bf16.mxu0 0
        %2270 = vmatpush1.bf16.msra.mxu0 0
        %2271 = vmatprep.subr.bf16.mxu0 0
        %2272 = vmatpush1.bf16.msra.mxu0 0
        %2273 = vmatprep.subr.bf16.mxu0 0
        %2274 = vmatpush1.bf16.msra.mxu0 0
        %2275 = vmatprep.subr.bf16.mxu0 0
        %2276 = vmatpush1.bf16.msra.mxu0 0
        %2277 = vmatprep.mubr.bf16.mxu0 0
        %2278 = vmatmul.mubr.bf16.gmra.mrb[0].mxu0 %v1051
        %v2279 = vpop.f32.mrb[0].mxu0
        %v2280 = vadd.f32 0.0, %v2279
        %v2281 = vpop.f32.mrb[0].mxu0
        %v2282 = vpop.f32.mrb[0].mxu0
        %v2283 = vadd.f32 0.0, %v2282
        %v2284 = vpop.f32.mrb[0].mxu0
        %2285 = vmatprep.mubr.bf16.mxu0 0
        %2286 = vmatmul.mubr.bf16.gmra.mrb[0].mxu0 %v1052
        %v2287 = vpop.f32.mrb[0].mxu0
        %v2288 = vadd.f32 0.0, %v2287
        %v2289 = vpop.f32.mrb[0].mxu0
        %v2290 = vpop.f32.mrb[0].mxu0
        %v2291 = vadd.f32 0.0, %v2290
        %v2292 = vpop.f32.mrb[0].mxu0
        %2293 = vmatprep.mubr.bf16.mxu0 0
        %2294 = vmatmul.mubr.bf16.gmra.mrb[0].mxu0 %v1053
        %v2295 = vpop.f32.mrb[0].mxu0
        %v2296 = vadd.f32 0.0, %v2295
        %v2297 = vpop.f32.mrb[0].mxu0
        %v2298 = vpop.f32.mrb[0].mxu0
        %v2299 = vadd.f32 0.0, %v2298
        %v2300 = vpop.f32.mrb[0].mxu0
        %2301 = vmatprep.mubr.bf16.mxu0 0
        %2302 = vmatmul.mubr.bf16.gmra.mrb[0].mxu0 %v1054
        %v2303 = vpop.f32.mrb[0].mxu0
        %v2304 = vadd.f32 0.0, %v2303
        %v2305 = vpop.f32.mrb[0].mxu0
        %v2306 = vpop.f32.mrb[0].mxu0
        %v2307 = vadd.f32 0.0, %v2306
        %v2308 = vpop.f32.mrb[0].mxu0
        %2309 = vmatprep.mubr.bf16.mxu0 0
        %2310 = vmatmul.mubr.bf16.gmra.mrb[0].mxu0 %v1055
        %v2311 = vpop.f32.mrb[0].mxu0
        %v2312 = vadd.f32 0.0, %v2311
        %v2313 = vpop.f32.mrb[0].mxu0
        %v2314 = vpop.f32.mrb[0].mxu0
        %v2315 = vadd.f32 0.0, %v2314
        %v2316 = vpop.f32.mrb[0].mxu0
        %2317 = vmatprep.mubr.bf16.mxu0 0
        %2318 = vmatmul.mubr.bf16.gmra.mrb[0].mxu0 %v1056
        %v2319 = vpop.f32.mrb[0].mxu0
        %v2320 = vadd.f32 0.0, %v2319
        %v2321 = vpop.f32.mrb[0].mxu0
        %v2322 = vpop.f32.mrb[0].mxu0
        %v2323 = vadd.f32 0.0, %v2322
        %v2324 = vpop.f32.mrb[0].mxu0
        %2325 = vmatprep.mubr.bf16.mxu0 0
        %2326 = vmatmul.mubr.bf16.gmra.mrb[0].mxu0 %v1057
        %v2327 = vpop.f32.mrb[0].mxu0
        %v2328 = vadd.f32 0.0, %v2327
        %v2329 = vpop.f32.mrb[0].mxu0
        %v2330 = vpop.f32.mrb[0].mxu0
        %v2331 = vadd.f32 0.0, %v2330
        %v2332 = vpop.f32.mrb[0].mxu0
        %2333 = vmatprep.mubr.bf16.mxu0 0
        %2334 = vmatmul.mubr.bf16.gmra.mrb[0].mxu0 %v1058
        %v2335 = vpop.f32.mrb[0].mxu0
        %v2336 = vadd.f32 0.0, %v2335
        %v2337 = vpop.f32.mrb[0].mxu0
        %v2338 = vpop.f32.mrb[0].mxu0
        %v2339 = vadd.f32 0.0, %v2338
        %v2340 = vpop.f32.mrb[0].mxu0
        %2341 = vmatprep.mubr.bf16.mxu0 0
        %2342 = vmatmul.mubr.bf16.gmra.mrb[0].mxu0 %v1059
        %v2343 = vpop.f32.mrb[0].mxu0
        %v2344 = vadd.f32 0.0, %v2343
        %v2345 = vpop.f32.mrb[0].mxu0
        %v2346 = vpop.f32.mrb[0].mxu0
        %v2347 = vadd.f32 0.0, %v2346
        %v2348 = vpop.f32.mrb[0].mxu0
        %2349 = vmatprep.mubr.bf16.mxu0 0
        %2350 = vmatmul.mubr.bf16.gmra.mrb[0].mxu0 %v1060
        %v2351 = vpop.f32.mrb[0].mxu0
        %v2352 = vadd.f32 0.0, %v2351
        %v2353 = vpop.f32.mrb[0].mxu0
        %v2354 = vpop.f32.mrb[0].mxu0
        %v2355 = vadd.f32 0.0, %v2354
        %v2356 = vpop.f32.mrb[0].mxu0
        %2357 = vmatprep.mubr.bf16.mxu0 0
        %2358 = vmatmul.mubr.bf16.gmra.mrb[0].mxu0 %v1061
        %v2359 = vpop.f32.mrb[0].mxu0
        %v2360 = vadd.f32 0.0, %v2359
        %v2361 = vpop.f32.mrb[0].mxu0
        %v2362 = vpop.f32.mrb[0].mxu0
        %v2363 = vadd.f32 0.0, %v2362
        %v2364 = vpop.f32.mrb[0].mxu0
        %2365 = vmatprep.mubr.bf16.mxu0 0
        %2366 = vmatmul.mubr.bf16.gmra.mrb[0].mxu0 %v1062
        %v2367 = vpop.f32.mrb[0].mxu0
        %v2368 = vadd.f32 0.0, %v2367
        %v2369 = vpop.f32.mrb[0].mxu0
        %v2370 = vpop.f32.mrb[0].mxu0
        %v2371 = vadd.f32 0.0, %v2370
        %v2372 = vpop.f32.mrb[0].mxu0
        %2373 = vmatprep.mubr.bf16.mxu0 0
        %2374 = vmatmul.mubr.bf16.gmra.mrb[0].mxu0 %v1063
        %v2375 = vpop.f32.mrb[0].mxu0
        %v2376 = vadd.f32 0.0, %v2375
        %v2377 = vpop.f32.mrb[0].mxu0
        %v2378 = vpop.f32.mrb[0].mxu0
        %v2379 = vadd.f32 0.0, %v2378
        %v2380 = vpop.f32.mrb[0].mxu0
        %2381 = vmatprep.mubr.bf16.mxu0 0
        %2382 = vmatmul.mubr.bf16.gmra.mrb[0].mxu0 %v1064
        %v2383 = vpop.f32.mrb[0].mxu0
        %v2384 = vadd.f32 0.0, %v2383
        %v2385 = vpop.f32.mrb[0].mxu0
        %v2386 = vpop.f32.mrb[0].mxu0
        %v2387 = vadd.f32 0.0, %v2386
        %v2388 = vpop.f32.mrb[0].mxu0
        %2389 = vmatprep.mubr.bf16.mxu0 0
        %2390 = vmatmul.mubr.bf16.gmra.mrb[0].mxu0 %v1598
        %v2391 = vpop.f32.mrb[0].mxu0
        %v2392 = vadd.f32 0.0, %v2391
        %v2393 = vpop.f32.mrb[0].mxu0
        %v2394 = vpop.f32.mrb[0].mxu0
        %v2395 = vadd.f32 0.0, %v2394
        %v2396 = vpop.f32.mrb[0].mxu0
        %2397 = vmatprep.mubr.bf16.mxu0 0
        %2398 = vmatmul.mubr.bf16.gmra.mrb[0].mxu0 %v2196
        %v2399 = vpop.f32.mrb[0].mxu0
        %v2400 = vadd.f32 0.0, %v2399
        %v2401 = vpop.f32.mrb[0].mxu0
        %v2402 = vpop.f32.mrb[0].mxu0
        %v2403 = vadd.f32 0.0, %v2402
        %v2404 = vpop.f32.mrb[0].mxu0
        %2405 = vdwg.mxu0
        %v2406 = vadd.f32 %v2157, %v2280
        %v2407 = vadd.f32 %v2158, %v2283
        %v2408 = vadd.f32 %v2159, %v2288
        %v2409 = vadd.f32 %v2160, %v2291
        %v2410 = vadd.f32 %v2161, %v2296
        %v2411 = vadd.f32 %v2162, %v2299
        %v2412 = vadd.f32 %v2163, %v2304
        %v2413 = vadd.f32 %v2164, %v2307
        %v2414 = vadd.f32 %v2165, %v2312
        %v2415 = vadd.f32 %v2166, %v2315
        %v2416 = vadd.f32 %v2167, %v2320
        %v2417 = vadd.f32 %v2168, %v2323
        %v2418 = vadd.f32 %v2169, %v2328
        %v2419 = vadd.f32 %v2170, %v2331
        %v2420 = vadd.f32 %v2171, %v2336
        %v2421 = vadd.f32 %v2172, %v2339
        %v2422 = vadd.f32 %v2173, %v2344
        %v2423 = vadd.f32 %v2174, %v2347
        %v2424 = vadd.f32 %v2175, %v2352
        %v2425 = vadd.f32 %v2176, %v2355
        %v2426 = vadd.f32 %v2177, %v2360
        %v2427 = vadd.f32 %v2178, %v2363
        %v2428 = vadd.f32 %v2179, %v2368
        %v2429 = vadd.f32 %v2180, %v2371
        %v2430 = vadd.f32 %v2181, %v2376
        %v2431 = vadd.f32 %v2182, %v2379
        %v2432 = vadd.f32 %v2183, %v2384
        %v2433 = vadd.f32 %v2184, %v2387
        %v2434 = vadd.f32 %v2185, %v2392
        %v2435 = vadd.f32 %v2186, %v2395
        %v2436 = vadd.f32 %v2187, %v2400
        %v2437 = vadd.f32 %v2188, %v2403
        %v2438 = vpack.c.bf16 %v2407, %v2406
        %v2439 = vpack.c.bf16 %v2409, %v2408
        %v2440 = vpack.c.bf16 %v2411, %v2410
        %v2441 = vpack.c.bf16 %v2413, %v2412
        %v2442 = vpack.c.bf16 %v2415, %v2414
        %v2443 = vpack.c.bf16 %v2417, %v2416
        %v2444 = vpack.c.bf16 %v2419, %v2418
        %v2445 = vpack.c.bf16 %v2421, %v2420
        %v2446 = vpack.c.bf16 %v2423, %v2422
        %v2447 = vpack.c.bf16 %v2425, %v2424
        %v2448 = vpack.c.bf16 %v2427, %v2426
        %v2449 = vpack.c.bf16 %v2429, %v2428
        %v2450 = vpack.c.bf16 %v2431, %v2430
        %v2451 = vpack.c.bf16 %v2433, %v2432
        %v2452 = vpack.c.bf16 %v2435, %v2434
        %v2453 = vpack.c.bf16 %v2437, %v2436
        %v2470 = vunpack.c.l.b16 %v2438
        %v2471 = vunpack.c.h.b16 %v2438
        %v2472 = vunpack.c.l.b16 %v2439
        %v2473 = vunpack.c.h.b16 %v2439
        %v2474 = vunpack.c.l.b16 %v2440
        %v2475 = vunpack.c.h.b16 %v2440
        %v2476 = vunpack.c.l.b16 %v2441
        %v2477 = vunpack.c.h.b16 %v2441
        %v2478 = vunpack.c.l.b16 %v2442
        %v2479 = vunpack.c.h.b16 %v2442
        %v2480 = vunpack.c.l.b16 %v2443
        %v2481 = vunpack.c.h.b16 %v2443
        %v2482 = vunpack.c.l.b16 %v2444
        %v2483 = vunpack.c.h.b16 %v2444
        %v2484 = vunpack.c.l.b16 %v2445
        %v2485 = vunpack.c.h.b16 %v2445
        %v2486 = vunpack.c.l.b16 %v2446
        %v2487 = vunpack.c.h.b16 %v2446
        %v2488 = vunpack.c.l.b16 %v2447
        %v2489 = vunpack.c.h.b16 %v2447
        %v2490 = vunpack.c.l.b16 %v2448
        %v2491 = vunpack.c.h.b16 %v2448
        %v2492 = vunpack.c.l.b16 %v2449
        %v2493 = vunpack.c.h.b16 %v2449
        %v2494 = vunpack.c.l.b16 %v2450
        %v2495 = vunpack.c.h.b16 %v2450
        %v2496 = vunpack.c.l.b16 %v2451
        %v2497 = vunpack.c.h.b16 %v2451
        %v2498 = vunpack.c.l.b16 %v2452
        %v2499 = vunpack.c.h.b16 %v2452
        %v2500 = vunpack.c.l.b16 %v2453
        %v2501 = vunpack.c.h.b16 %v2453
        %v2502 = vpack.c.b16 %v2470, %v2470
        %v2503 = vpack.c.b16 %v2471, %v2471
        %v2504 = vpack.c.b16 %v2472, %v2472
        %v2505 = vpack.c.b16 %v2473, %v2473
        %v2506 = vpack.c.b16 %v2474, %v2474
        %v2507 = vpack.c.b16 %v2475, %v2475
        %v2508 = vpack.c.b16 %v2476, %v2476
        %v2509 = vpack.c.b16 %v2477, %v2477
        %v2510 = vpack.c.b16 %v2478, %v2478
        %v2511 = vpack.c.b16 %v2479, %v2479
        %v2512 = vpack.c.b16 %v2480, %v2480
        %v2513 = vpack.c.b16 %v2481, %v2481
        %v2514 = vpack.c.b16 %v2482, %v2482
        %v2515 = vpack.c.b16 %v2483, %v2483
        %v2516 = vpack.c.b16 %v2484, %v2484
        %v2517 = vpack.c.b16 %v2485, %v2485
        %v2518 = vpack.c.b16 %v2486, %v2486
        %v2519 = vpack.c.b16 %v2487, %v2487
        %v2520 = vpack.c.b16 %v2488, %v2488
        %v2521 = vpack.c.b16 %v2489, %v2489
        %v2522 = vpack.c.b16 %v2490, %v2490
        %v2523 = vpack.c.b16 %v2491, %v2491
        %v2524 = vpack.c.b16 %v2492, %v2492
        %v2525 = vpack.c.b16 %v2493, %v2493
        %v2526 = vpack.c.b16 %v2494, %v2494
        %v2527 = vpack.c.b16 %v2495, %v2495
        %v2528 = vpack.c.b16 %v2496, %v2496
        %v2529 = vpack.c.b16 %v2497, %v2497
        %v2530 = vpack.c.b16 %v2498, %v2498
        %v2531 = vpack.c.b16 %v2499, %v2499
        %v2532 = vpack.c.b16 %v2500, %v2500
        %v2533 = vpack.c.b16 %v2501, %v2501
        %2566 = vst [vmem:[%s286] sm:$0xf] %v2502
        %2567 = vst [vmem:[%s286 + $0x4] sm:$0xf] %v2503
        %2568 = vst [vmem:[%s286 + $0x8] sm:$0xf] %v2504
        %2569 = vst [vmem:[%s286 + $0xc] sm:$0xf] %v2505
        %2570 = vst [vmem:[%s286 + $0x10] sm:$0xf] %v2506
        %2571 = vst [vmem:[%s286 + $0x14] sm:$0xf] %v2507
        %2572 = vst [vmem:[%s286 + $0x18] sm:$0xf] %v2508
        %2573 = vst [vmem:[%s286 + $0x1c] sm:$0xf] %v2509
        %2574 = vst [vmem:[%s286 + $0x20] sm:$0xf] %v2510
        %2575 = vst [vmem:[%s286 + $0x24] sm:$0xf] %v2511
        %2576 = vst [vmem:[%s286 + $0x28] sm:$0xf] %v2512
        %2577 = vst [vmem:[%s286 + $0x2c] sm:$0xf] %v2513
        %2578 = vst [vmem:[%s286 + $0x30] sm:$0xf] %v2514
        %2579 = vst [vmem:[%s286 + $0x34] sm:$0xf] %v2515
        %2580 = vst [vmem:[%s286 + $0x38] sm:$0xf] %v2516
        %2581 = vst [vmem:[%s286 + $0x3c] sm:$0xf] %v2517
        %2582 = vst [vmem:[%s286 + $0x40] sm:$0xf] %v2518
        %2583 = vst [vmem:[%s286 + $0x44] sm:$0xf] %v2519
        %2584 = vst [vmem:[%s286 + $0x48] sm:$0xf] %v2520
        %2585 = vst [vmem:[%s286 + $0x4c] sm:$0xf] %v2521
        %2586 = vst [vmem:[%s286 + $0x50] sm:$0xf] %v2522
        %2587 = vst [vmem:[%s286 + $0x54] sm:$0xf] %v2523
        %2588 = vst [vmem:[%s286 + $0x58] sm:$0xf] %v2524
        %2589 = vst [vmem:[%s286 + $0x5c] sm:$0xf] %v2525
        %2590 = vst [vmem:[%s286 + $0x60] sm:$0xf] %v2526
        %2591 = vst [vmem:[%s286 + $0x64] sm:$0xf] %v2527
        %2592 = vst [vmem:[%s286 + $0x68] sm:$0xf] %v2528
        %2593 = vst [vmem:[%s286 + $0x6c] sm:$0xf] %v2529
        %2594 = vst [vmem:[%s286 + $0x70] sm:$0xf] %v2530
        %2595 = vst [vmem:[%s286 + $0x74] sm:$0xf] %v2531
        %2596 = vst [vmem:[%s286 + $0x78] sm:$0xf] %v2532
        %2597 = vst [vmem:[%s286 + $0x7c] sm:$0xf] %v2533
        %v2598 = vadd.f32 %v2406, %v2407
        %v2599 = vadd.f32 %v2598, %v2408
        %v2600 = vadd.f32 %v2599, %v2409
        %v2601 = vadd.f32 %v2600, %v2410
        %v2602 = vadd.f32 %v2601, %v2411
        %v2603 = vadd.f32 %v2602, %v2412
        %v2604 = vadd.f32 %v2603, %v2413
        %v2605 = vadd.f32 %v2604, %v2414
        %v2606 = vadd.f32 %v2605, %v2415
        %v2607 = vadd.f32 %v2606, %v2416
        %v2608 = vadd.f32 %v2607, %v2417
        %v2609 = vadd.f32 %v2608, %v2418
        %v2610 = vadd.f32 %v2609, %v2419
        %v2611 = vadd.f32 %v2610, %v2420
        %v2612 = vadd.f32 %v2611, %v2421
        %v2613 = vadd.f32 %v2612, %v2422
        %v2614 = vadd.f32 %v2613, %v2423
        %v2615 = vadd.f32 %v2614, %v2424
        %v2616 = vadd.f32 %v2615, %v2425
        %v2617 = vadd.f32 %v2616, %v2426
        %v2618 = vadd.f32 %v2617, %v2427
        %v2619 = vadd.f32 %v2618, %v2428
        %v2620 = vadd.f32 %v2619, %v2429
        %v2621 = vadd.f32 %v2620, %v2430
        %v2622 = vadd.f32 %v2621, %v2431
        %v2623 = vadd.f32 %v2622, %v2432
        %v2624 = vadd.f32 %v2623, %v2433
        %v2625 = vadd.f32 %v2624, %v2434
        %v2626 = vadd.f32 %v2625, %v2435
        %v2627 = vadd.f32 %v2626, %v2436
        %v2628 = vadd.f32 %v2627, %v2437
        %v2629 = vrot.slane %v2628, 4
        %v2630 = vadd.f32 %v2628, %v2629
        %v2631 = vrot.slane %v2630, 2
        %v2632 = vadd.f32 %v2630, %v2631
        %v2633 = vrot.slane %v2632, 1
        %v2634 = vadd.f32 %v2632, %v2633
        %v2635 = vmul.f32 %v2634, 0.00390625
        %v2636 = vsub.f32 %v2406, %v2635
        %v2637 = vsub.f32 %v2407, %v2635
        %v2638 = vsub.f32 %v2408, %v2635
        %v2639 = vsub.f32 %v2409, %v2635
        %v2640 = vsub.f32 %v2410, %v2635
        %v2641 = vsub.f32 %v2411, %v2635
        %v2642 = vsub.f32 %v2412, %v2635
        %v2643 = vsub.f32 %v2413, %v2635
        %v2644 = vsub.f32 %v2414, %v2635
        %v2645 = vsub.f32 %v2415, %v2635
        %v2646 = vsub.f32 %v2416, %v2635
        %v2647 = vsub.f32 %v2417, %v2635
        %v2648 = vsub.f32 %v2418, %v2635
        %v2649 = vsub.f32 %v2419, %v2635
        %v2650 = vsub.f32 %v2420, %v2635
        %v2651 = vsub.f32 %v2421, %v2635
        %v2652 = vsub.f32 %v2422, %v2635
        %v2653 = vsub.f32 %v2423, %v2635
        %v2654 = vsub.f32 %v2424, %v2635
        %v2655 = vsub.f32 %v2425, %v2635
        %v2656 = vsub.f32 %v2426, %v2635
        %v2657 = vsub.f32 %v2427, %v2635
        %v2658 = vsub.f32 %v2428, %v2635
        %v2659 = vsub.f32 %v2429, %v2635
        %v2660 = vsub.f32 %v2430, %v2635
        %v2661 = vsub.f32 %v2431, %v2635
        %v2662 = vsub.f32 %v2432, %v2635
        %v2663 = vsub.f32 %v2433, %v2635
        %v2664 = vsub.f32 %v2434, %v2635
        %v2665 = vsub.f32 %v2435, %v2635
        %v2666 = vsub.f32 %v2436, %v2635
        %v2667 = vsub.f32 %v2437, %v2635
        %2668 = vst [vmem:[%s293] sm:$0x1] %v2634
        %v2669 = vmul.f32 %v2636, %v2636
        %v2670 = vmul.f32 %v2637, %v2637
        %v2671 = vmul.f32 %v2638, %v2638
        %v2672 = vmul.f32 %v2639, %v2639
        %v2673 = vmul.f32 %v2640, %v2640
        %v2674 = vmul.f32 %v2641, %v2641
        %v2675 = vmul.f32 %v2642, %v2642
        %v2676 = vmul.f32 %v2643, %v2643
        %v2677 = vmul.f32 %v2644, %v2644
        %v2678 = vmul.f32 %v2645, %v2645
        %v2679 = vmul.f32 %v2646, %v2646
        %v2680 = vmul.f32 %v2647, %v2647
        %v2681 = vmul.f32 %v2648, %v2648
        %v2682 = vmul.f32 %v2649, %v2649
        %v2683 = vmul.f32 %v2650, %v2650
        %v2684 = vmul.f32 %v2651, %v2651
        %v2685 = vmul.f32 %v2652, %v2652
        %v2686 = vmul.f32 %v2653, %v2653
        %v2687 = vmul.f32 %v2654, %v2654
        %v2688 = vmul.f32 %v2655, %v2655
        %v2689 = vmul.f32 %v2656, %v2656
        %v2690 = vmul.f32 %v2657, %v2657
        %v2691 = vmul.f32 %v2658, %v2658
        %v2692 = vmul.f32 %v2659, %v2659
        %v2693 = vmul.f32 %v2660, %v2660
        %v2694 = vmul.f32 %v2661, %v2661
        %v2695 = vmul.f32 %v2662, %v2662
        %v2696 = vmul.f32 %v2663, %v2663
        %v2697 = vmul.f32 %v2664, %v2664
        %v2698 = vmul.f32 %v2665, %v2665
        %v2699 = vmul.f32 %v2666, %v2666
        %v2700 = vmul.f32 %v2667, %v2667
        %v2701 = vadd.f32 %v2669, %v2670
        %v2702 = vadd.f32 %v2701, %v2671
        %v2703 = vadd.f32 %v2702, %v2672
        %v2704 = vadd.f32 %v2703, %v2673
        %v2705 = vadd.f32 %v2704, %v2674
        %v2706 = vadd.f32 %v2705, %v2675
        %v2707 = vadd.f32 %v2706, %v2676
        %v2708 = vadd.f32 %v2707, %v2677
        %v2709 = vadd.f32 %v2708, %v2678
        %v2710 = vadd.f32 %v2709, %v2679
        %v2711 = vadd.f32 %v2710, %v2680
        %v2712 = vadd.f32 %v2711, %v2681
        %v2713 = vadd.f32 %v2712, %v2682
        %v2714 = vadd.f32 %v2713, %v2683
        %v2715 = vadd.f32 %v2714, %v2684
        %v2716 = vadd.f32 %v2715, %v2685
        %v2717 = vadd.f32 %v2716, %v2686
        %v2718 = vadd.f32 %v2717, %v2687
        %v2719 = vadd.f32 %v2718, %v2688
        %v2720 = vadd.f32 %v2719, %v2689
        %v2721 = vadd.f32 %v2720, %v2690
        %v2722 = vadd.f32 %v2721, %v2691
        %v2723 = vadd.f32 %v2722, %v2692
        %v2724 = vadd.f32 %v2723, %v2693
        %v2725 = vadd.f32 %v2724, %v2694
        %v2726 = vadd.f32 %v2725, %v2695
        %v2727 = vadd.f32 %v2726, %v2696
        %v2728 = vadd.f32 %v2727, %v2697
        %v2729 = vadd.f32 %v2728, %v2698
        %v2730 = vadd.f32 %v2729, %v2699
        %v2731 = vadd.f32 %v2730, %v2700
        %v2732 = vrot.slane %v2731, 4
        %v2733 = vadd.f32 %v2731, %v2732
        %v2734 = vrot.slane %v2733, 2
        %v2735 = vadd.f32 %v2733, %v2734
        %v2736 = vrot.slane %v2735, 1
        %v2737 = vadd.f32 %v2735, %v2736
        %2738 = vst [vmem:[%s293 + $0x1] sm:$0x1] %v2737
        %s2739 = sand.u32 %s125, 1
        %s2740 = scalar_lea.sflag [#allocation5], %s2739
        %s2741 = sand.u32 %s125, 1
        %s2742 = smul.addr %s2741, 128
        %s2743 = scalar_lea.vmem [#allocation11], %s2742
        %s2744 = sand.u32 %s151, 1
        %s2745 = scalar_lea.sflag [#allocation13], %s2744
        %s2746 = sand.u32 %s151, 1
        %s2747 = smul.addr %s2746, 2
        %s2748 = scalar_lea.vmem [#allocation12], %s2747
        // Predicated region
        $region53: #{residual_forward.4} parent=35 // pred_check
          %p2749 = pneg %p135
        $region54: #{residual_forward.4} parent=35 // pred_check_branch
          %2751 = sbr.rel (%p2749) target = $region56
        $region55: #{residual_forward.4} parent=35 // pred_region
          %s2753 = ssub.s32 2048, 2048
          %2754 = vsyncadd %s2740, %s2753
          %s2755 = smul.addr %s28, 32
          %s2756 = smul.addr %s2755, 64
          %s2757 = scalar_lea.hbm %s4, %s2756
          %s2758 = sshll.u32 %s2743, 4
          %s2759 = int_to_ptr.vmem [resolvable:$true] %s2758
          %2764 = dma.vmem_to_hbm [thread:$0]  %s2759, 2048, %s2757, %s2740, 64, 64, 4
        $region56: #{residual_forward.4} parent=35 // pred_fallthru
          _
        // Predicated region
        $region57: #{residual_forward.4} parent=35 // pred_check
          %p2765 = pneg %p161
        $region58: #{residual_forward.4} parent=35 // pred_check_branch
          %2767 = sbr.rel (%p2765) target = $region60
        $region59: #{residual_forward.4} parent=35 // pred_region
          %s2769 = ssub.s32 32, 32
          %2770 = vsyncadd %s2745, %s2769
          %s2771 = smul.addr %s28, 32
          %s2772 = scalar_lea.hbm %s5, %s2771
          %s2774 = sshll.u32 %s2748, 4
          %s2775 = int_to_ptr.vmem [resolvable:$true] %s2774
          %2777 = dma.vmem_to_hbm [thread:$0]  %s2775, 32, %s2772, %s2745
        $region60: #{residual_forward.4} parent=35 // pred_fallthru
          _
      $region36: #{residual_forward.4} parent=5 // pred_fallthru
        _
      %p2778 = scmp.le.s32.totalorder 2, %s23
      // Predicated region
      $region61: #{residual_forward.4} parent=5 // pred_check
        %p2779 = pneg %p2778
      $region62: #{residual_forward.4} parent=5 // pred_check_branch
        %2781 = sbr.rel (%p2779) target = $region64
      $region63: #{residual_forward.4} parent=5 // pred_region
        %s2782 = ssub.s32 %s23, 2
        // Predicated region
        $region65: #{residual_forward.4} parent=63 // pred_check
          %p2783 = pneg %p141
        $region66: #{residual_forward.4} parent=63 // pred_check_branch
          %2785 = sbr.rel (%p2783) target = $region68
        $region67: #{residual_forward.4} parent=63 // pred_region
          %s2786 = sand.u32 %s126, 1
          %s2787 = scalar_lea.sflag [#allocation5], %s2786
          %s2788 = sand.u32 %s126, 1
          %s2789 = smul.addr %s2788, 128
          %s2790 = scalar_lea.vmem [#allocation11], %s2789
          %2791 = dma.done %s2787, 2048
        $region68: #{residual_forward.4} parent=63 // pred_fallthru
          _
        // Predicated region
        $region69: #{residual_forward.4} parent=63 // pred_check
          %p2792 = pneg %p167
        $region70: #{residual_forward.4} parent=63 // pred_check_branch
          %2794 = sbr.rel (%p2792) target = $region72
        $region71: #{residual_forward.4} parent=63 // pred_region
          %s2795 = sand.u32 %s152, 1
          %s2796 = scalar_lea.sflag [#allocation13], %s2795
          %s2797 = sand.u32 %s152, 1
          %s2798 = smul.addr %s2797, 2
          %s2799 = scalar_lea.vmem [#allocation12], %s2798
          %2800 = dma.done %s2796, 32
        $region72: #{residual_forward.4} parent=63 // pred_fallthru
          _
      $region64: #{residual_forward.4} parent=5 // pred_fallthru
        _
    $region6: #{residual_forward.4} parent=1 // loop_footer
      %s27 = sadd.s32 1, %s23
    $region7: #{residual_forward.4} parent=1 // loop_footer_branch
      %22 = sbr.rel target = $region3
    $region8: #{residual_forward.4} parent=1 // loop_exit
      _
    %2801 = vsyncpa [#allocation4], 1
    %s2802 = scalar_lea.sflag [#allocation4], 1
    %2803 = vsyncpa %s2802, 1
    %2804 = vsyncpa [#allocation7], 1
    %2805 = vsyncpa [#allocation10], 1
    %2806 = vsyncpa [#allocation5], 1
    %s2807 = scalar_lea.sflag [#allocation5], 1
    %2808 = vsyncpa %s2807, 1
    %2809 = vsyncpa [#allocation13], 1
    %s2810 = scalar_lea.sflag [#allocation13], 1
    %2811 = vsyncpa %s2810, 1

</llo_original>
